<compile_context>
chip_gen: v6e
topology: v6e:2x2x1
jax: 0.10.0
libtpu: 0.0.40
codegen_flags: <defaults>
</compile_context>

<pallas_src>
import functools

import jax
import jax.numpy as jnp
from jax.experimental import pallas as pl
from jax.experimental.pallas import tpu as pltpu

EMBED_DIM = 768
NUM_HEADS = 8          # seq_len == 1 makes the head split a mathematical no-op
FF_DIM = 512
DENSE_DIM = 256
NUM_CLASSES = 10
IN_CH = 3
PATCH = 4
PATCH_FEAT = IN_CH * PATCH * PATCH    # 48
LN_EPS = 1e-5                         # PyTorch nn.LayerNorm default eps
_INV_SQRT2 = 0.7071067811865476
MAX_TILE_P = 1024                     # safe for v7x 64 MiB VMEM; v5e/v6e could use 2048

# rows of the stacked head bias/LN slab (all padded to EMBED_DIM lanes)
(_HV_BV, _HV_BO, _HV_LN1G, _HV_LN1B, _HV_B1, _HV_B2,
 _HV_LN2G, _HV_LN2B, _HV_LNG, _HV_LNB, _HV_BD, _HV_BC) = range(12)
N_HEAD_VECS = 12


# ---------------------------------------------------------------------------
# In-kernel helpers (plain jnp, f32) — also reused by the pure-JAX reference.
# ---------------------------------------------------------------------------
def _ln(x, g, b):
    mu = jnp.mean(x, axis=-1, keepdims=True)
    var = jnp.mean(jnp.square(x - mu), axis=-1, keepdims=True)
    return (x - mu) * jax.lax.rsqrt(var + LN_EPS) * g + b


# Abramowitz & Stegun 7.1.26 erf (max abs err ~1.5e-7): matches PyTorch's exact
# erf-based nn.GELU() while only needing exp/div (guaranteed Mosaic lowering).
_ERF_P = 0.3275911
_ERF_A = (0.254829592, -0.284496736, 1.421413741, -1.453152027, 1.061405429)


def _erf(x):
    a1, a2, a3, a4, a5 = _ERF_A
    ax = jnp.abs(x)
    t = 1.0 / (1.0 + _ERF_P * ax)
    poly = ((((a5 * t + a4) * t + a3) * t + a2) * t + a1) * t
    y = 1.0 - poly * jnp.exp(-ax * ax)
    return jnp.where(x >= 0, y, -y)


def _gelu(x):
    return 0.5 * x * (1.0 + _erf(x * _INV_SQRT2))


def _bf16(x):
    return x.astype(jnp.bfloat16)


def _round_up(x, m):
    return ((x + m - 1) // m) * m


# ---------------------------------------------------------------------------
# Kernel 1: streaming stem matmul + channel LN + global-average-pool accumulate.
# grid = (B, n_p_tiles); batch axis "parallel" (megacore), tile axis "arbitrary".
# ---------------------------------------------------------------------------
def _stem_pool_kernel(patches_ref,      # (1, tile_p, 48) bf16
                      stem_w_ref,       # (48, 768) bf16
                      stem_vecs_ref,    # (3, 768) f32: [bias; gamma; beta]
                      pooled_ref,       # (1, 1, 768) f32, VMEM-resident accumulator
                      *, p_real, tile_p, inv_p, mask_tail):
    p = pl.program_id(1)

    @pl.when(p == 0)
    def _init():
        pooled_ref[...] = jnp.zeros_like(pooled_ref)

    x = patches_ref[0]                                          # (tile_p, 48) bf16
    vecs = stem_vecs_ref[...]                                   # (3, 768) f32
    feat = jnp.dot(x, stem_w_ref[...],
                   preferred_element_type=jnp.float32) + vecs[0:1, :]
    feat = _ln(feat, vecs[1:2, :], vecs[2:3, :])                # (tile_p, 768) f32

    if mask_tail:
        # zero-padded tail rows would otherwise contribute bias/LN offsets to the pool
        row = p * tile_p + jax.lax.broadcasted_iota(jnp.int32, (tile_p, 1), 0)
        feat = jnp.where(row < p_real, feat, 0.0)

    # AdaptiveAvgPool2d(1): accumulate the per-image token mean.
    pooled_ref[...] += (jnp.sum(feat, axis=0, keepdims=True) * inv_p)[None]


# ---------------------------------------------------------------------------
# Kernel 2: batched transformer block + classification head (single grid step).
# ---------------------------------------------------------------------------
def _head_kernel(pooled_ref,            # (B, 1, 768) f32
                 wv_ref, wo_ref,        # (768, 768) bf16 each
                 w1_ref, w2_ref,        # (768, 512), (512, 768) bf16
                 wd_ref, wc_ref,        # (768, 256), (256, 10) bf16
                 vecs_ref,              # (12, 768) f32 stacked biases / LN params
                 out_ref):              # (B, NUM_CLASSES) f32
    x = pooled_ref[...][:, 0, :]                                # (B, 768) f32
    v = vecs_ref[...]

    def row(i, n=EMBED_DIM):
        return v[i:i + 1, :n]

    # nn.MultiheadAttention with a single token: softmax over one key is exactly 1
    # for every head, so attn_output == out_proj(v_proj(x)); q/k and the
    # 1/sqrt(d_head) scale cancel exactly.
    vp = jnp.dot(_bf16(x), wv_ref[...],
                 preferred_element_type=jnp.float32) + row(_HV_BV)
    attn = jnp.dot(_bf16(vp), wo_ref[...],
                   preferred_element_type=jnp.float32) + row(_HV_BO)

    out1 = _ln(x + attn, row(_HV_LN1G), row(_HV_LN1B))          # layer_norm1

    h = jnp.dot(_bf16(out1), w1_ref[...],
                preferred_element_type=jnp.float32) + row(_HV_B1, FF_DIM)
    h = _gelu(h)
    ffn = jnp.dot(_bf16(h), w2_ref[...],
                  preferred_element_type=jnp.float32) + row(_HV_B2)

    enc = _ln(out1 + ffn, row(_HV_LN2G), row(_HV_LN2B))         # layer_norm2
    z = _ln(enc, row(_HV_LNG), row(_HV_LNB))                    # layer_norm

    d = jnp.maximum(
        jnp.dot(_bf16(z), wd_ref[...],
                preferred_element_type=jnp.float32) + row(_HV_BD, DENSE_DIM),
        0.0)                                                    # dense1 + ReLU
    # nn.Dropout(0.3): eval/inference semantics -> identity.

    logits = jnp.dot(_bf16(d), wc_ref[...],
                     preferred_element_type=jnp.float32) + row(_HV_BC, NUM_CLASSES)
    m = jnp.max(logits, axis=-1, keepdims=True)
    e = jnp.exp(logits - m)
    out_ref[...] = e / jnp.sum(e, axis=-1, keepdims=True)       # softmax(dim=1)


# ---------------------------------------------------------------------------
# Tiling plan: fixed tile + padded P (masked tail) instead of a full-P fallback.
# ---------------------------------------------------------------------------
def _plan_patch_tiling(p_total, max_tile=MAX_TILE_P):
    n_tiles = max(1, -(-p_total // max_tile))          # ceil
    tile = _round_up(-(-p_total // n_tiles), 16)       # bf16 sublane pack
    return tile, n_tiles, tile * n_tiles


# ---------------------------------------------------------------------------
# Wrapper
# ---------------------------------------------------------------------------
def convnext_vit_forward(x_nchw, kp):
    B, C, H, W = x_nchw.shape
    Hp, Wp = H // PATCH, W // PATCH
    P = Hp * Wp
    tile_p, n_p_tiles, p_pad = _plan_patch_tiling(P)

    # Patchify: (B, C, H, W) -> (B, P, 48), the stride-4 4x4 stem conv's im2col.
    # Fused by XLA with the bf16 cast feeding the kernel.
    patches = x_nchw.reshape(B, C, Hp, PATCH, Wp, PATCH)
    patches = patches.transpose(0, 2, 4, 1, 3, 5).reshape(B, P, PATCH_FEAT)
    patches = patches.astype(jnp.bfloat16)
    if p_pad != P:
        patches = jnp.pad(patches, ((0, 0), (0, p_pad - P), (0, 0)))

    stem_kernel = functools.partial(
        _stem_pool_kernel, p_real=P, tile_p=tile_p,
        inv_p=1.0 / float(P), mask_tail=(p_pad != P))

    stem_cost = pl.CostEstimate(
        flops=int(2 * B * p_pad * PATCH_FEAT * EMBED_DIM + 8 * B * p_pad * EMBED_DIM),
        transcendentals=int(B * p_pad),
        bytes_accessed=int(B * p_pad * PATCH_FEAT * 2
                           + PATCH_FEAT * EMBED_DIM * 2 + 3 * EMBED_DIM * 4
                           + B * EMBED_DIM * 4))

    pooled = pl.pallas_call(
        stem_kernel,
        grid=(B, n_p_tiles),
        out_shape=jax.ShapeDtypeStruct((B, 1, EMBED_DIM), jnp.float32),
        in_specs=[
            pl.BlockSpec((1, tile_p, PATCH_FEAT), lambda b, p: (b, p, 0)),
            pl.BlockSpec((PATCH_FEAT, EMBED_DIM), lambda b, p: (0, 0)),
            pl.BlockSpec((3, EMBED_DIM), lambda b, p: (0, 0)),
        ],
        out_specs=pl.BlockSpec((1, 1, EMBED_DIM), lambda b, p: (b, 0, 0)),
        compiler_params=pltpu.CompilerParams(
            dimension_semantics=("parallel", "arbitrary"),
            vmem_limit_bytes=32 * 1024 * 1024),
        cost_estimate=stem_cost,
    )(patches, kp["stem_w"], kp["stem_vecs"])

    w_bytes = 2 * (2 * EMBED_DIM * EMBED_DIM + 2 * EMBED_DIM * FF_DIM
                   + EMBED_DIM * DENSE_DIM + DENSE_DIM * NUM_CLASSES)
    head_cost = pl.CostEstimate(
        flops=int(2 * B * (2 * EMBED_DIM * EMBED_DIM + 2 * EMBED_DIM * FF_DIM
                           + EMBED_DIM * DENSE_DIM + DENSE_DIM * NUM_CLASSES)),
        transcendentals=int(B * (FF_DIM + NUM_CLASSES + 8)),
        bytes_accessed=int(w_bytes + N_HEAD_VECS * EMBED_DIM * 4
                           + B * EMBED_DIM * 4 + B * NUM_CLASSES * 4))

    probs = pl.pallas_call(
        _head_kernel,
        grid=(1,),
        out_shape=jax.ShapeDtypeStruct((B, NUM_CLASSES), jnp.float32),
        in_specs=[
            pl.BlockSpec((B, 1, EMBED_DIM), lambda i: (0, 0, 0)),
            pl.BlockSpec((EMBED_DIM, EMBED_DIM), lambda i: (0, 0)),
            pl.BlockSpec((EMBED_DIM, EMBED_DIM), lambda i: (0, 0)),
            pl.BlockSpec((EMBED_DIM, FF_DIM), lambda i: (0, 0)),
            pl.BlockSpec((FF_DIM, EMBED_DIM), lambda i: (0, 0)),
            pl.BlockSpec((EMBED_DIM, DENSE_DIM), lambda i: (0, 0)),
            pl.BlockSpec((DENSE_DIM, NUM_CLASSES), lambda i: (0, 0)),
            pl.BlockSpec((N_HEAD_VECS, EMBED_DIM), lambda i: (0, 0)),
        ],
        out_specs=pl.BlockSpec((B, NUM_CLASSES), lambda i: (0, 0)),
        compiler_params=pltpu.CompilerParams(
            dimension_semantics=("arbitrary",),
            vmem_limit_bytes=32 * 1024 * 1024),
        cost_estimate=head_cost,
    )(pooled, kp["wv"], kp["wo"], kp["ffn_w1"], kp["ffn_w2"],
      kp["dense1_w"], kp["cls_w"], kp["head_vecs"])

    return probs


# ---------------------------------------------------------------------------
# Parameters: natural per-tensor form (mirrors the module) + kernel packing.
# ---------------------------------------------------------------------------
def init_params(key):
    ks = jax.random.split(key, 14)

    def w_bf16(k, din, dout, scale=0.02):
        return (scale * jax.random.normal(k, (din, dout), jnp.float32)).astype(jnp.bfloat16)

    def bias(k, dout, scale=0.01):
        return scale * jax.random.normal(k, (1, dout), jnp.float32)

    p = {}
    # synthetic backbone stem (3*4*4 -> 768) + channel LayerNorm
    p["stem_w"] = w_bf16(ks[0], PATCH_FEAT, EMBED_DIM)
    p["stem_b"] = bias(ks[1], EMBED_DIM)
    p["stem_g"] = jnp.ones((1, EMBED_DIM), jnp.float32)
    p["stem_beta"] = jnp.zeros((1, EMBED_DIM), jnp.float32)
    # MultiheadAttention: only the V and out projections matter at seq_len == 1
    p["wv"] = w_bf16(ks[2], EMBED_DIM, EMBED_DIM)
    p["bv"] = bias(ks[3], EMBED_DIM)
    p["wo"] = w_bf16(ks[4], EMBED_DIM, EMBED_DIM)
    p["bo"] = bias(ks[5], EMBED_DIM)
    # LayerNorms (PyTorch init: weight=1, bias=0)
    for name in ("ln1", "ln2", "ln"):
        p[f"{name}_g"] = jnp.ones((1, EMBED_DIM), jnp.float32)
        p[f"{name}_b"] = jnp.zeros((1, EMBED_DIM), jnp.float32)
    # FFN 768 -> 512 -> 768
    p["ffn_w1"] = w_bf16(ks[6], EMBED_DIM, FF_DIM)
    p["ffn_b1"] = bias(ks[7], FF_DIM)
    p["ffn_w2"] = w_bf16(ks[8], FF_DIM, EMBED_DIM)
    p["ffn_b2"] = bias(ks[9], EMBED_DIM)
    # head: dense1 (768 -> 256), classifier (256 -> num_classes)
    p["dense1_w"] = w_bf16(ks[10], EMBED_DIM, DENSE_DIM)
    p["dense1_b"] = bias(ks[11], DENSE_DIM)
    p["cls_w"] = w_bf16(ks[12], DENSE_DIM, NUM_CLASSES)
    p["cls_b"] = bias(ks[13], NUM_CLASSES)
    return p


def pack_params(p):
    """Pack the small bias/LN vectors into two f32 slabs (fewer kernel operands)."""
    def pad_row(v):
        return jnp.pad(v, ((0, 0), (0, EMBED_DIM - v.shape[1])))

    head_vecs = jnp.concatenate([
        p["bv"], p["bo"], p["ln1_g"], p["ln1_b"],
        pad_row(p["ffn_b1"]), p["ffn_b2"], p["ln2_g"], p["ln2_b"],
        p["ln_g"], p["ln_b"], pad_row(p["dense1_b"]), pad_row(p["cls_b"]),
    ], axis=0).astype(jnp.float32)                      # (12, 768)
    stem_vecs = jnp.concatenate(
        [p["stem_b"], p["stem_g"], p["stem_beta"]], axis=0).astype(jnp.float32)
    return {
        "stem_w": p["stem_w"], "stem_vecs": stem_vecs,
        "wv": p["wv"], "wo": p["wo"],
        "ffn_w1": p["ffn_w1"], "ffn_w2": p["ffn_w2"],
        "dense1_w": p["dense1_w"], "cls_w": p["cls_w"],
        "head_vecs": head_vecs,
    }


# ---------------------------------------------------------------------------
# Pure-JAX reference (f32 math on the same bf16-stored weights) for validation.
# ---------------------------------------------------------------------------
def reference_forward(x_nchw, p):
    B, C, H, W = x_nchw.shape
    Hp, Wp = H // PATCH, W // PATCH
    P = Hp * Wp
    f32 = lambda a: a.astype(jnp.float32)
    patches = x_nchw.reshape(B, C, Hp, PATCH, Wp, PATCH)
    patches = patches.transpose(0, 2, 4, 1, 3, 5).reshape(B, P, PATCH_FEAT)
    feat = _ln(patches @ f32(p["stem_w"]) + p["stem_b"], p["stem_g"], p["stem_beta"])
    x = jnp.mean(feat, axis=1)                                   # global avg pool
    attn = (x @ f32(p["wv"]) + p["bv"]) @ f32(p["wo"]) + p["bo"]
    out1 = _ln(x + attn, p["ln1_g"], p["ln1_b"])
    h = _gelu(out1 @ f32(p["ffn_w1"]) + p["ffn_b1"])
    ffn = h @ f32(p["ffn_w2"]) + p["ffn_b2"]
    enc = _ln(out1 + ffn, p["ln2_g"], p["ln2_b"])
    z = _ln(enc, p["ln_g"], p["ln_b"])
    d = jnp.maximum(z @ f32(p["dense1_w"]) + p["dense1_b"], 0.0)
    logits = d @ f32(p["cls_w"]) + p["cls_b"]
    return jax.nn.softmax(logits, axis=-1)


if __name__ == "__main__":
    key = jax.random.PRNGKey(0)
    k_x, k_p = jax.random.split(key)

    # NCHW input like the PyTorch module (small shapes: B=2, C=3, 16x16).
    x = jax.random.normal(k_x, (2, IN_CH, 16, 16), jnp.float32)
    params = init_params(k_p)
    packed = pack_params(params)

    fwd = jax.jit(convnext_vit_forward)
    out = jax.block_until_ready(fwd(x, packed))

    assert out.shape == (2, NUM_CLASSES)
    assert bool(jnp.all(jnp.abs(jnp.sum(out, axis=-1) - 1.0) < 1e-4))   # softmax rows
    ref = reference_forward(x, params)
    assert bool(jnp.max(jnp.abs(out - ref)) < 2e-2)                     # bf16 tolerance
    print("KERNEL_OK")
</pallas_src>

<mosaic_0001>
module attributes {stable_mosaic.version = 11 : i64} {
  func.func @_stem_pool_kernel(%arg0: i32, %arg1: i32, %arg2: memref<1x16x48xbf16, #tpu.memory_space<vmem>>, %arg3: memref<48x768xbf16, #tpu.memory_space<vmem>>, %arg4: memref<3x768xf32, #tpu.memory_space<vmem>>, %arg5: memref<1x1x768xf32, #tpu.memory_space<vmem>>) attributes {dimension_semantics = [#tpu.dimension_semantics<parallel>, #tpu.dimension_semantics<arbitrary>], iteration_bounds = array<i64: 2, 1>, scalar_prefetch = 0 : i64, scratch_operands = 0 : i64, tpu.core_type = #tpu.core_type<tc>, window_params = [{transform_indices = @transform_0, window_bounds = array<i64: 1, 16, 48>}, {pipeline_mode = #tpu.pipeline_mode<synchronous>, transform_indices = @transform_1, window_bounds = array<i64: 48, 768>}, {pipeline_mode = #tpu.pipeline_mode<synchronous>, transform_indices = @transform_2, window_bounds = array<i64: 3, 768>}, {transform_indices = @transform_3, window_bounds = array<i64: 1, 1, 768>}]} {
    %c0_i32 = arith.constant 0 : i32
    %0 = arith.cmpi eq, %arg1, %c0_i32 : i32
    %1 = arith.extui %0 : i1 to i32
    %c0_i32_0 = arith.constant 0 : i32
    %2 = arith.cmpi ne, %1, %c0_i32_0 : i32
    scf.if %2 {
      %cst_20 = arith.constant 0.000000e+00 : f32
      %43 = vector.broadcast %cst_20 : f32 to vector<1x1x768xf32>
      %c0_21 = arith.constant 0 : index
      %c0_22 = arith.constant 0 : index
      %c0_23 = arith.constant 0 : index
      %44 = vector.load %arg5[%c0_21, %c0_22, %c0_23] : memref<1x1x768xf32, #tpu.memory_space<vmem>>, vector<1x1x768xf32>
      tpu.vector_store %arg5[%c0_21, %c0_22, %c0_23], %43 {strides = array<i32>} : memref<1x1x768xf32, #tpu.memory_space<vmem>>, vector<1x1x768xf32>,
    } else {
    }
    %c0 = arith.constant 0 : index
    %c0_1 = arith.constant 0 : index
    %c0_2 = arith.constant 0 : index
    %3 = vector.load %arg2[%c0, %c0_1, %c0_2] : memref<1x16x48xbf16, #tpu.memory_space<vmem>>, vector<1x16x48xbf16>
    %4 = vector.shape_cast %3 : vector<1x16x48xbf16> to vector<16x48xbf16>
    %c0_3 = arith.constant 0 : index
    %c0_4 = arith.constant 0 : index
    %5 = vector.load %arg4[%c0_3, %c0_4] : memref<3x768xf32, #tpu.memory_space<vmem>>, vector<3x768xf32>
    %c0_5 = arith.constant 0 : index
    %c0_6 = arith.constant 0 : index
    %6 = vector.load %arg3[%c0_5, %c0_6] : memref<48x768xbf16, #tpu.memory_space<vmem>>, vector<48x768xbf16>
    %cst = arith.constant dense<0.000000e+00> : vector<16x768xf32>
    %7 = tpu.matmul %4, %6, %cst {dimension_numbers = #tpu.dot_dimension_numbers<[1], [0], [0], [1], [0, 0, 1, 1], [], []>} : vector<16x48xbf16>, vector<48x768xbf16>, vector<16x768xf32> -> vector<16x768xf32>
    %8 = vector.extract_strided_slice %5 {offsets = [0, 0], sizes = [1, 768], strides = [1, 1]} : vector<3x768xf32> to vector<1x768xf32>
    %9 = vector.broadcast %8 : vector<1x768xf32> to vector<16x768xf32>
    %10 = arith.addf %7, %9 : vector<16x768xf32>
    %11 = vector.extract_strided_slice %5 {offsets = [1, 0], sizes = [1, 768], strides = [1, 1]} : vector<3x768xf32> to vector<1x768xf32>
    %12 = vector.extract_strided_slice %5 {offsets = [2, 0], sizes = [1, 768], strides = [1, 1]} : vector<3x768xf32> to vector<1x768xf32>
    %cst_7 = arith.constant dense<0.000000e+00> : vector<16xf32>
    %13 = vector.multi_reduction <add>, %10, %cst_7 [1] : vector<16x768xf32> to vector<16xf32>
    %14 = vector.shape_cast %13 : vector<16xf32> to vector<16x1xf32>
    %cst_8 = arith.constant 7.680000e+02 : f32
    %15 = vector.broadcast %cst_8 : f32 to vector<16x1xf32>
    %16 = arith.divf %14, %15 : vector<16x1xf32>
    %17 = vector.broadcast %16 : vector<16x1xf32> to vector<16x768xf32>
    %18 = arith.subf %10, %17 : vector<16x768xf32>
    %19 = arith.mulf %18, %18 : vector<16x768xf32>
    %cst_9 = arith.constant dense<0.000000e+00> : vector<16xf32>
    %20 = vector.multi_reduction <add>, %19, %cst_9 [1] : vector<16x768xf32> to vector<16xf32>
    %21 = vector.shape_cast %20 : vector<16xf32> to vector<16x1xf32>
    %cst_10 = arith.constant 7.680000e+02 : f32
    %22 = vector.broadcast %cst_10 : f32 to vector<16x1xf32>
    %23 = arith.divf %21, %22 : vector<16x1xf32>
    %24 = vector.broadcast %16 : vector<16x1xf32> to vector<16x768xf32>
    %25 = arith.subf %10, %24 : vector<16x768xf32>
    %cst_11 = arith.constant 9.99999974E-6 : f32
    %26 = vector.broadcast %cst_11 : f32 to vector<16x1xf32>
    %27 = arith.addf %23, %26 : vector<16x1xf32>
    %28 = math.rsqrt %27 : vector<16x1xf32>
    %29 = vector.broadcast %28 : vector<16x1xf32> to vector<16x768xf32>
    %30 = arith.mulf %25, %29 : vector<16x768xf32>
    %31 = vector.broadcast %11 : vector<1x768xf32> to vector<16x768xf32>
    %32 = arith.mulf %30, %31 : vector<16x768xf32>
    %33 = vector.broadcast %12 : vector<1x768xf32> to vector<16x768xf32>
    %34 = arith.addf %32, %33 : vector<16x768xf32>
    %c0_12 = arith.constant 0 : index
    %c0_13 = arith.constant 0 : index
    %c0_14 = arith.constant 0 : index
    %35 = vector.load %arg5[%c0_12, %c0_13, %c0_14] : memref<1x1x768xf32, #tpu.memory_space<vmem>>, vector<1x1x768xf32>
    %cst_15 = arith.constant dense<0.000000e+00> : vector<768xf32>
    %36 = vector.multi_reduction <add>, %34, %cst_15 [0] : vector<16x768xf32> to vector<768xf32>
    %37 = vector.shape_cast %36 : vector<768xf32> to vector<1x768xf32>
    %cst_16 = arith.constant 6.250000e-02 : f32
    %38 = vector.broadcast %cst_16 : f32 to vector<1x768xf32>
    %39 = arith.mulf %37, %38 : vector<1x768xf32>
    %40 = vector.shape_cast %39 : vector<1x768xf32> to vector<1x1x768xf32>
    %41 = arith.addf %35, %40 : vector<1x1x768xf32>
    %c0_17 = arith.constant 0 : index
    %c0_18 = arith.constant 0 : index
    %c0_19 = arith.constant 0 : index
    %42 = vector.load %arg5[%c0_17, %c0_18, %c0_19] : memref<1x1x768xf32, #tpu.memory_space<vmem>>, vector<1x1x768xf32>
    tpu.vector_store %arg5[%c0_17, %c0_18, %c0_19], %41 {strides = array<i32>} : memref<1x1x768xf32, #tpu.memory_space<vmem>>, vector<1x1x768xf32>,
    return
  }
  func.func @transform_0(%arg0: i32, %arg1: i32) -> (i32, i32, i32) {
    %c0_i32 = arith.constant 0 : i32
    %c0_i32_0 = arith.constant 0 : i32
    return %arg0, %arg1, %c0_i32 : i32, i32, i32
  }
  func.func @transform_1(%arg0: i32, %arg1: i32) -> (i32, i32) {
    %c0_i32 = arith.constant 0 : i32
    %c0_i32_0 = arith.constant 0 : i32
    %c0_i32_1 = arith.constant 0 : i32
    return %c0_i32, %c0_i32_0 : i32, i32
  }
  func.func @transform_2(%arg0: i32, %arg1: i32) -> (i32, i32) {
    %c0_i32 = arith.constant 0 : i32
    %c0_i32_0 = arith.constant 0 : i32
    %c0_i32_1 = arith.constant 0 : i32
    return %c0_i32, %c0_i32_0 : i32, i32
  }
  func.func @transform_3(%arg0: i32, %arg1: i32) -> (i32, i32, i32) {
    %c0_i32 = arith.constant 0 : i32
    %c0_i32_0 = arith.constant 0 : i32
    %c0_i32_1 = arith.constant 0 : i32
    return %arg0, %c0_i32, %c0_i32_0 : i32, i32, i32
  }
}

module attributes {stable_mosaic.version = 11 : i64} {
  func.func @_head_kernel(%arg0: i32, %arg1: memref<2x1x768xf32, #tpu.memory_space<vmem>>, %arg2: memref<768x768xbf16, #tpu.memory_space<vmem>>, %arg3: memref<768x768xbf16, #tpu.memory_space<vmem>>, %arg4: memref<768x512xbf16, #tpu.memory_space<vmem>>, %arg5: memref<512x768xbf16, #tpu.memory_space<vmem>>, %arg6: memref<768x256xbf16, #tpu.memory_space<vmem>>, %arg7: memref<256x10xbf16, #tpu.memory_space<vmem>>, %arg8: memref<12x768xf32, #tpu.memory_space<vmem>>, %arg9: memref<2x10xf32, #tpu.memory_space<vmem>>) attributes {dimension_semantics = [#tpu.dimension_semantics<arbitrary>], iteration_bounds = array<i64: 1>, scalar_prefetch = 0 : i64, scratch_operands = 0 : i64, tpu.core_type = #tpu.core_type<tc>, window_params = [{pipeline_mode = #tpu.pipeline_mode<synchronous>, transform_indices = @transform_0, window_bounds = array<i64: 2, 1, 768>}, {pipeline_mode = #tpu.pipeline_mode<synchronous>, transform_indices = @transform_1, window_bounds = array<i64: 768, 768>}, {pipeline_mode = #tpu.pipeline_mode<synchronous>, transform_indices = @transform_2, window_bounds = array<i64: 768, 768>}, {pipeline_mode = #tpu.pipeline_mode<synchronous>, transform_indices = @transform_3, window_bounds = array<i64: 768, 512>}, {pipeline_mode = #tpu.pipeline_mode<synchronous>, transform_indices = @transform_4, window_bounds = array<i64: 512, 768>}, {pipeline_mode = #tpu.pipeline_mode<synchronous>, transform_indices = @transform_5, window_bounds = array<i64: 768, 256>}, {pipeline_mode = #tpu.pipeline_mode<synchronous>, transform_indices = @transform_6, window_bounds = array<i64: 256, 10>}, {pipeline_mode = #tpu.pipeline_mode<synchronous>, transform_indices = @transform_7, window_bounds = array<i64: 12, 768>}, {pipeline_mode = #tpu.pipeline_mode<synchronous>, transform_indices = @transform_8, window_bounds = array<i64: 2, 10>}]} {
    %c0 = arith.constant 0 : index
    %c0_0 = arith.constant 0 : index
    %c0_1 = arith.constant 0 : index
    %0 = vector.load %arg1[%c0, %c0_0, %c0_1] : memref<2x1x768xf32, #tpu.memory_space<vmem>>, vector<2x1x768xf32>
    %1 = vector.shape_cast %0 : vector<2x1x768xf32> to vector<2x768xf32>
    %c0_2 = arith.constant 0 : index
    %c0_3 = arith.constant 0 : index
    %2 = vector.load %arg8[%c0_2, %c0_3] : memref<12x768xf32, #tpu.memory_space<vmem>>, vector<12x768xf32>
    %3 = arith.truncf %1 : vector<2x768xf32> to vector<2x768xbf16>
    %c0_4 = arith.constant 0 : index
    %c0_5 = arith.constant 0 : index
    %4 = vector.load %arg2[%c0_4, %c0_5] : memref<768x768xbf16, #tpu.memory_space<vmem>>, vector<768x768xbf16>
    %cst = arith.constant dense<0.000000e+00> : vector<2x768xf32>
    %5 = tpu.matmul %3, %4, %cst {dimension_numbers = #tpu.dot_dimension_numbers<[1], [0], [0], [1], [0, 0, 1, 1], [], []>} : vector<2x768xbf16>, vector<768x768xbf16>, vector<2x768xf32> -> vector<2x768xf32>
    %6 = vector.extract_strided_slice %2 {offsets = [0, 0], sizes = [1, 768], strides = [1, 1]} : vector<12x768xf32> to vector<1x768xf32>
    %7 = vector.broadcast %6 : vector<1x768xf32> to vector<2x768xf32>
    %8 = arith.addf %5, %7 : vector<2x768xf32>
    %9 = arith.truncf %8 : vector<2x768xf32> to vector<2x768xbf16>
    %c0_6 = arith.constant 0 : index
    %c0_7 = arith.constant 0 : index
    %10 = vector.load %arg3[%c0_6, %c0_7] : memref<768x768xbf16, #tpu.memory_space<vmem>>, vector<768x768xbf16>
    %cst_8 = arith.constant dense<0.000000e+00> : vector<2x768xf32>
    %11 = tpu.matmul %9, %10, %cst_8 {dimension_numbers = #tpu.dot_dimension_numbers<[1], [0], [0], [1], [0, 0, 1, 1], [], []>} : vector<2x768xbf16>, vector<768x768xbf16>, vector<2x768xf32> -> vector<2x768xf32>
    %12 = vector.extract_strided_slice %2 {offsets = [1, 0], sizes = [1, 768], strides = [1, 1]} : vector<12x768xf32> to vector<1x768xf32>
    %13 = vector.broadcast %12 : vector<1x768xf32> to vector<2x768xf32>
    %14 = arith.addf %11, %13 : vector<2x768xf32>
    %15 = arith.addf %1, %14 : vector<2x768xf32>
    %16 = vector.extract_strided_slice %2 {offsets = [2, 0], sizes = [1, 768], strides = [1, 1]} : vector<12x768xf32> to vector<1x768xf32>
    %17 = vector.extract_strided_slice %2 {offsets = [3, 0], sizes = [1, 768], strides = [1, 1]} : vector<12x768xf32> to vector<1x768xf32>
    %cst_9 = arith.constant dense<0.000000e+00> : vector<2xf32>
    %18 = vector.multi_reduction <add>, %15, %cst_9 [1] : vector<2x768xf32> to vector<2xf32>
    %19 = vector.shape_cast %18 : vector<2xf32> to vector<2x1xf32>
    %cst_10 = arith.constant 7.680000e+02 : f32
    %20 = vector.broadcast %cst_10 : f32 to vector<2x1xf32>
    %21 = arith.divf %19, %20 : vector<2x1xf32>
    %22 = vector.broadcast %21 : vector<2x1xf32> to vector<2x768xf32>
    %23 = arith.subf %15, %22 : vector<2x768xf32>
    %24 = arith.mulf %23, %23 : vector<2x768xf32>
    %cst_11 = arith.constant dense<0.000000e+00> : vector<2xf32>
    %25 = vector.multi_reduction <add>, %24, %cst_11 [1] : vector<2x768xf32> to vector<2xf32>
    %26 = vector.shape_cast %25 : vector<2xf32> to vector<2x1xf32>
    %cst_12 = arith.constant 7.680000e+02 : f32
    %27 = vector.broadcast %cst_12 : f32 to vector<2x1xf32>
    %28 = arith.divf %26, %27 : vector<2x1xf32>
    %29 = vector.broadcast %21 : vector<2x1xf32> to vector<2x768xf32>
    %30 = arith.subf %15, %29 : vector<2x768xf32>
    %cst_13 = arith.constant 9.99999974E-6 : f32
    %31 = vector.broadcast %cst_13 : f32 to vector<2x1xf32>
    %32 = arith.addf %28, %31 : vector<2x1xf32>
    %33 = math.rsqrt %32 : vector<2x1xf32>
    %34 = vector.broadcast %33 : vector<2x1xf32> to vector<2x768xf32>
    %35 = arith.mulf %30, %34 : vector<2x768xf32>
    %36 = vector.broadcast %16 : vector<1x768xf32> to vector<2x768xf32>
    %37 = arith.mulf %35, %36 : vector<2x768xf32>
    %38 = vector.broadcast %17 : vector<1x768xf32> to vector<2x768xf32>
    %39 = arith.addf %37, %38 : vector<2x768xf32>
    %40 = arith.truncf %39 : vector<2x768xf32> to vector<2x768xbf16>
    %c0_14 = arith.constant 0 : index
    %c0_15 = arith.constant 0 : index
    %41 = vector.load %arg4[%c0_14, %c0_15] : memref<768x512xbf16, #tpu.memory_space<vmem>>, vector<768x512xbf16>
    %cst_16 = arith.constant dense<0.000000e+00> : vector<2x512xf32>
    %42 = tpu.matmul %40, %41, %cst_16 {dimension_numbers = #tpu.dot_dimension_numbers<[1], [0], [0], [1], [0, 0, 1, 1], [], []>} : vector<2x768xbf16>, vector<768x512xbf16>, vector<2x512xf32> -> vector<2x512xf32>
    %43 = vector.extract_strided_slice %2 {offsets = [4, 0], sizes = [1, 512], strides = [1, 1]} : vector<12x768xf32> to vector<1x512xf32>
    %44 = vector.broadcast %43 : vector<1x512xf32> to vector<2x512xf32>
    %45 = arith.addf %42, %44 : vector<2x512xf32>
    %cst_17 = arith.constant 5.000000e-01 : f32
    %46 = vector.broadcast %cst_17 : f32 to vector<2x512xf32>
    %47 = arith.mulf %46, %45 : vector<2x512xf32>
    %cst_18 = arith.constant 0.707106769 : f32
    %48 = vector.broadcast %cst_18 : f32 to vector<2x512xf32>
    %49 = arith.mulf %45, %48 : vector<2x512xf32>
    %50 = math.absf %49 : vector<2x512xf32>
    %cst_19 = arith.constant 0.327591091 : f32
    %51 = vector.broadcast %cst_19 : f32 to vector<2x512xf32>
    %52 = arith.mulf %51, %50 : vector<2x512xf32>
    %cst_20 = arith.constant 1.000000e+00 : f32
    %53 = vector.broadcast %cst_20 : f32 to vector<2x512xf32>
    %54 = arith.addf %53, %52 : vector<2x512xf32>
    %cst_21 = arith.constant 1.000000e+00 : f32
    %55 = vector.broadcast %cst_21 : f32 to vector<2x512xf32>
    %56 = arith.divf %55, %54 : vector<2x512xf32>
    %cst_22 = arith.constant 1.06140542 : f32
    %57 = vector.broadcast %cst_22 : f32 to vector<2x512xf32>
    %58 = arith.mulf %57, %56 : vector<2x512xf32>
    %cst_23 = arith.constant -1.45315206 : f32
    %59 = vector.broadcast %cst_23 : f32 to vector<2x512xf32>
    %60 = arith.addf %58, %59 : vector<2x512xf32>
    %61 = arith.mulf %60, %56 : vector<2x512xf32>
    %cst_24 = arith.constant 1.42141378 : f32
    %62 = vector.broadcast %cst_24 : f32 to vector<2x512xf32>
    %63 = arith.addf %61, %62 : vector<2x512xf32>
    %64 = arith.mulf %63, %56 : vector<2x512xf32>
    %cst_25 = arith.constant -0.284496725 : f32
    %65 = vector.broadcast %cst_25 : f32 to vector<2x512xf32>
    %66 = arith.addf %64, %65 : vector<2x512xf32>
    %67 = arith.mulf %66, %56 : vector<2x512xf32>
    %cst_26 = arith.constant 0.254829586 : f32
    %68 = vector.broadcast %cst_26 : f32 to vector<2x512xf32>
    %69 = arith.addf %67, %68 : vector<2x512xf32>
    %70 = arith.mulf %69, %56 : vector<2x512xf32>
    %cst_27 = arith.constant 0.000000e+00 : f32
    %71 = vector.broadcast %cst_27 : f32 to vector<2x512xf32>
    %72 = arith.subf %71, %50 : vector<2x512xf32>
    %73 = arith.mulf %72, %50 : vector<2x512xf32>
    %74 = math.exp %73 : vector<2x512xf32>
    %75 = arith.mulf %70, %74 : vector<2x512xf32>
    %cst_28 = arith.constant 1.000000e+00 : f32
    %76 = vector.broadcast %cst_28 : f32 to vector<2x512xf32>
    %77 = arith.subf %76, %75 : vector<2x512xf32>
    %cst_29 = arith.constant 0.000000e+00 : f32
    %78 = vector.broadcast %cst_29 : f32 to vector<2x512xf32>
    %79 = arith.cmpf oge, %49, %78 : vector<2x512xf32>
    %cst_30 = arith.constant 0.000000e+00 : f32
    %80 = vector.broadcast %cst_30 : f32 to vector<2x512xf32>
    %81 = arith.subf %80, %77 : vector<2x512xf32>
    %82 = arith.select %79, %77, %81 : vector<2x512xi1>, vector<2x512xf32>
    %cst_31 = arith.constant 1.000000e+00 : f32
    %83 = vector.broadcast %cst_31 : f32 to vector<2x512xf32>
    %84 = arith.addf %83, %82 : vector<2x512xf32>
    %85 = arith.mulf %47, %84 : vector<2x512xf32>
    %86 = arith.truncf %85 : vector<2x512xf32> to vector<2x512xbf16>
    %c0_32 = arith.constant 0 : index
    %c0_33 = arith.constant 0 : index
    %87 = vector.load %arg5[%c0_32, %c0_33] : memref<512x768xbf16, #tpu.memory_space<vmem>>, vector<512x768xbf16>
    %cst_34 = arith.constant dense<0.000000e+00> : vector<2x768xf32>
    %88 = tpu.matmul %86, %87, %cst_34 {dimension_numbers = #tpu.dot_dimension_numbers<[1], [0], [0], [1], [0, 0, 1, 1], [], []>} : vector<2x512xbf16>, vector<512x768xbf16>, vector<2x768xf32> -> vector<2x768xf32>
    %89 = vector.extract_strided_slice %2 {offsets = [5, 0], sizes = [1, 768], strides = [1, 1]} : vector<12x768xf32> to vector<1x768xf32>
    %90 = vector.broadcast %89 : vector<1x768xf32> to vector<2x768xf32>
    %91 = arith.addf %88, %90 : vector<2x768xf32>
    %92 = arith.addf %39, %91 : vector<2x768xf32>
    %93 = vector.extract_strided_slice %2 {offsets = [6, 0], sizes = [1, 768], strides = [1, 1]} : vector<12x768xf32> to vector<1x768xf32>
    %94 = vector.extract_strided_slice %2 {offsets = [7, 0], sizes = [1, 768], strides = [1, 1]} : vector<12x768xf32> to vector<1x768xf32>
    %cst_35 = arith.constant dense<0.000000e+00> : vector<2xf32>
    %95 = vector.multi_reduction <add>, %92, %cst_35 [1] : vector<2x768xf32> to vector<2xf32>
    %96 = vector.shape_cast %95 : vector<2xf32> to vector<2x1xf32>
    %cst_36 = arith.constant 7.680000e+02 : f32
    %97 = vector.broadcast %cst_36 : f32 to vector<2x1xf32>
    %98 = arith.divf %96, %97 : vector<2x1xf32>
    %99 = vector.broadcast %98 : vector<2x1xf32> to vector<2x768xf32>
    %100 = arith.subf %92, %99 : vector<2x768xf32>
    %101 = arith.mulf %100, %100 : vector<2x768xf32>
    %cst_37 = arith.constant dense<0.000000e+00> : vector<2xf32>
    %102 = vector.multi_reduction <add>, %101, %cst_37 [1] : vector<2x768xf32> to vector<2xf32>
    %103 = vector.shape_cast %102 : vector<2xf32> to vector<2x1xf32>
    %cst_38 = arith.constant 7.680000e+02 : f32
    %104 = vector.broadcast %cst_38 : f32 to vector<2x1xf32>
    %105 = arith.divf %103, %104 : vector<2x1xf32>
    %106 = vector.broadcast %98 : vector<2x1xf32> to vector<2x768xf32>
    %107 = arith.subf %92, %106 : vector<2x768xf32>
    %cst_39 = arith.constant 9.99999974E-6 : f32
    %108 = vector.broadcast %cst_39 : f32 to vector<2x1xf32>
    %109 = arith.addf %105, %108 : vector<2x1xf32>
    %110 = math.rsqrt %109 : vector<2x1xf32>
    %111 = vector.broadcast %110 : vector<2x1xf32> to vector<2x768xf32>
    %112 = arith.mulf %107, %111 : vector<2x768xf32>
    %113 = vector.broadcast %93 : vector<1x768xf32> to vector<2x768xf32>
    %114 = arith.mulf %112, %113 : vector<2x768xf32>
    %115 = vector.broadcast %94 : vector<1x768xf32> to vector<2x768xf32>
    %116 = arith.addf %114, %115 : vector<2x768xf32>
    %117 = vector.extract_strided_slice %2 {offsets = [8, 0], sizes = [1, 768], strides = [1, 1]} : vector<12x768xf32> to vector<1x768xf32>
    %118 = vector.extract_strided_slice %2 {offsets = [9, 0], sizes = [1, 768], strides = [1, 1]} : vector<12x768xf32> to vector<1x768xf32>
    %cst_40 = arith.constant dense<0.000000e+00> : vector<2xf32>
    %119 = vector.multi_reduction <add>, %116, %cst_40 [1] : vector<2x768xf32> to vector<2xf32>
    %120 = vector.shape_cast %119 : vector<2xf32> to vector<2x1xf32>
    %cst_41 = arith.constant 7.680000e+02 : f32
    %121 = vector.broadcast %cst_41 : f32 to vector<2x1xf32>
    %122 = arith.divf %120, %121 : vector<2x1xf32>
    %123 = vector.broadcast %122 : vector<2x1xf32> to vector<2x768xf32>
    %124 = arith.subf %116, %123 : vector<2x768xf32>
    %125 = arith.mulf %124, %124 : vector<2x768xf32>
    %cst_42 = arith.constant dense<0.000000e+00> : vector<2xf32>
    %126 = vector.multi_reduction <add>, %125, %cst_42 [1] : vector<2x768xf32> to vector<2xf32>
    %127 = vector.shape_cast %126 : vector<2xf32> to vector<2x1xf32>
    %cst_43 = arith.constant 7.680000e+02 : f32
    %128 = vector.broadcast %cst_43 : f32 to vector<2x1xf32>
    %129 = arith.divf %127, %128 : vector<2x1xf32>
    %130 = vector.broadcast %122 : vector<2x1xf32> to vector<2x768xf32>
    %131 = arith.subf %116, %130 : vector<2x768xf32>
    %cst_44 = arith.constant 9.99999974E-6 : f32
    %132 = vector.broadcast %cst_44 : f32 to vector<2x1xf32>
    %133 = arith.addf %129, %132 : vector<2x1xf32>
    %134 = math.rsqrt %133 : vector<2x1xf32>
    %135 = vector.broadcast %134 : vector<2x1xf32> to vector<2x768xf32>
    %136 = arith.mulf %131, %135 : vector<2x768xf32>
    %137 = vector.broadcast %117 : vector<1x768xf32> to vector<2x768xf32>
    %138 = arith.mulf %136, %137 : vector<2x768xf32>
    %139 = vector.broadcast %118 : vector<1x768xf32> to vector<2x768xf32>
    %140 = arith.addf %138, %139 : vector<2x768xf32>
    %141 = arith.truncf %140 : vector<2x768xf32> to vector<2x768xbf16>
    %c0_45 = arith.constant 0 : index
    %c0_46 = arith.constant 0 : index
    %142 = vector.load %arg6[%c0_45, %c0_46] : memref<768x256xbf16, #tpu.memory_space<vmem>>, vector<768x256xbf16>
    %cst_47 = arith.constant dense<0.000000e+00> : vector<2x256xf32>
    %143 = tpu.matmul %141, %142, %cst_47 {dimension_numbers = #tpu.dot_dimension_numbers<[1], [0], [0], [1], [0, 0, 1, 1], [], []>} : vector<2x768xbf16>, vector<768x256xbf16>, vector<2x256xf32> -> vector<2x256xf32>
    %144 = vector.extract_strided_slice %2 {offsets = [10, 0], sizes = [1, 256], strides = [1, 1]} : vector<12x768xf32> to vector<1x256xf32>
    %145 = vector.broadcast %144 : vector<1x256xf32> to vector<2x256xf32>
    %146 = arith.addf %143, %145 : vector<2x256xf32>
    %cst_48 = arith.constant 0.000000e+00 : f32
    %147 = vector.broadcast %cst_48 : f32 to vector<2x256xf32>
    %148 = arith.maximumf %146, %147 : vector<2x256xf32>
    %149 = arith.truncf %148 : vector<2x256xf32> to vector<2x256xbf16>
    %c0_49 = arith.constant 0 : index
    %c0_50 = arith.constant 0 : index
    %150 = vector.load %arg7[%c0_49, %c0_50] : memref<256x10xbf16, #tpu.memory_space<vmem>>, vector<256x10xbf16>
    %cst_51 = arith.constant dense<0.000000e+00> : vector<2x10xf32>
    %151 = tpu.matmul %149, %150, %cst_51 {dimension_numbers = #tpu.dot_dimension_numbers<[1], [0], [0], [1], [0, 0, 1, 1], [], []>} : vector<2x256xbf16>, vector<256x10xbf16>, vector<2x10xf32> -> vector<2x10xf32>
    %152 = vector.extract_strided_slice %2 {offsets = [11, 0], sizes = [1, 10], strides = [1, 1]} : vector<12x768xf32> to vector<1x10xf32>
    %153 = vector.broadcast %152 : vector<1x10xf32> to vector<2x10xf32>
    %154 = arith.addf %151, %153 : vector<2x10xf32>
    %cst_52 = arith.constant dense<0xFF800000> : vector<2xf32>
    %155 = vector.multi_reduction <maximumf>, %154, %cst_52 [1] : vector<2x10xf32> to vector<2xf32>
    %156 = vector.shape_cast %155 : vector<2xf32> to vector<2x1xf32>
    %157 = vector.broadcast %156 : vector<2x1xf32> to vector<2x10xf32>
    %158 = arith.subf %154, %157 : vector<2x10xf32>
    %159 = math.exp %158 : vector<2x10xf32>
    %cst_53 = arith.constant dense<0.000000e+00> : vector<2xf32>
    %160 = vector.multi_reduction <add>, %159, %cst_53 [1] : vector<2x10xf32> to vector<2xf32>
    %161 = vector.shape_cast %160 : vector<2xf32> to vector<2x1xf32>
    %162 = vector.broadcast %161 : vector<2x1xf32> to vector<2x10xf32>
    %163 = arith.divf %159, %162 : vector<2x10xf32>
    %c0_54 = arith.constant 0 : index
    %c0_55 = arith.constant 0 : index
    %164 = vector.load %arg9[%c0_54, %c0_55] : memref<2x10xf32, #tpu.memory_space<vmem>>, vector<2x10xf32>
    tpu.vector_store %arg9[%c0_54, %c0_55], %163 {strides = array<i32>} : memref<2x10xf32, #tpu.memory_space<vmem>>, vector<2x10xf32>,
    return
  }
  func.func @transform_0(%arg0: i32) -> (i32, i32, i32) {
    %c0_i32 = arith.constant 0 : i32
    %c0_i32_0 = arith.constant 0 : i32
    %c0_i32_1 = arith.constant 0 : i32
    %c0_i32_2 = arith.constant 0 : i32
    return %c0_i32, %c0_i32_0, %c0_i32_1 : i32, i32, i32
  }
  func.func @transform_1(%arg0: i32) -> (i32, i32) {
    %c0_i32 = arith.constant 0 : i32
    %c0_i32_0 = arith.constant 0 : i32
    %c0_i32_1 = arith.constant 0 : i32
    return %c0_i32, %c0_i32_0 : i32, i32
  }
  func.func @transform_2(%arg0: i32) -> (i32, i32) {
    %c0_i32 = arith.constant 0 : i32
    %c0_i32_0 = arith.constant 0 : i32
    %c0_i32_1 = arith.constant 0 : i32
    return %c0_i32, %c0_i32_0 : i32, i32
  }
  func.func @transform_3(%arg0: i32) -> (i32, i32) {
    %c0_i32 = arith.constant 0 : i32
    %c0_i32_0 = arith.constant 0 : i32
    %c0_i32_1 = arith.constant 0 : i32
    return %c0_i32, %c0_i32_0 : i32, i32
  }
  func.func @transform_4(%arg0: i32) -> (i32, i32) {
    %c0_i32 = arith.constant 0 : i32
    %c0_i32_0 = arith.constant 0 : i32
    %c0_i32_1 = arith.constant 0 : i32
    return %c0_i32, %c0_i32_0 : i32, i32
  }
  func.func @transform_5(%arg0: i32) -> (i32, i32) {
    %c0_i32 = arith.constant 0 : i32
    %c0_i32_0 = arith.constant 0 : i32
    %c0_i32_1 = arith.constant 0 : i32
    return %c0_i32, %c0_i32_0 : i32, i32
  }
  func.func @transform_6(%arg0: i32) -> (i32, i32) {
    %c0_i32 = arith.constant 0 : i32
    %c0_i32_0 = arith.constant 0 : i32
    %c0_i32_1 = arith.constant 0 : i32
    return %c0_i32, %c0_i32_0 : i32, i32
  }
  func.func @transform_7(%arg0: i32) -> (i32, i32) {
    %c0_i32 = arith.constant 0 : i32
    %c0_i32_0 = arith.constant 0 : i32
    %c0_i32_1 = arith.constant 0 : i32
    return %c0_i32, %c0_i32_0 : i32, i32
  }
  func.func @transform_8(%arg0: i32) -> (i32, i32) {
    %c0_i32 = arith.constant 0 : i32
    %c0_i32_0 = arith.constant 0 : i32
    %c0_i32_1 = arith.constant 0 : i32
    return %c0_i32, %c0_i32_0 : i32, i32
  }
}

</mosaic_0001>

<llo_original>
// kernel: convnext_vit_forward.2
$region0: #{convnext_vit_forward.2}
  #allocation0 [shape = 'u32[]', space=smem, size = 0x4, offset = 0x4, fixed_abs, tag = 'smem constant byte address 0x4 - core index']
  #allocation1 [shape = 'u32[144,128]{1,0:T(1,128)}', space=vmem, size = 0x12000, scoped, tag = 'internal scratch']
  %s0 = inlined_call_operand.vmem [shape: bf16[2,16,48], index: 0, kind: input, shape index: {}]
  %s1 = inlined_call_operand.hbm [shape: bf16[48,768], index: 1, kind: input, shape index: {}]
  %s2 = inlined_call_operand.hbm [shape: f32[3,768], index: 2, kind: input, shape index: {}]
  %s3 = inlined_call_operand.vmem [shape: f32[2,1,768], index: 3, kind: output, shape index: {}]
  %s4 = sld [smem:[#allocation0]]
  $region57: #{convnext_vit_forward.2} parent=0
    _
  %s6 = ssub.s32 1, %s4
  %s7 = scalar_select 0, %s6, %s4
  $region1: #{convnext_vit_forward.2} parent=0
    #allocation2 [shape = 'u8[73728]{0}', space=vmem, size = 0x12000, scoped, tag = 'input window, operand 1, single buffered']
    #allocation3 [shape = 's32[2]{0}', space=sflag, size = 0x8, scoped, tag = 'scoped memory for convnext_vit_forward.2']
    #allocation4 [shape = 'u8[12288]{0}', space=vmem, size = 0x3000, scoped, tag = 'input window, operand 2, single buffered']
    #allocation5 [shape = 's32[1]{0}', space=sflag, size = 0x4, scoped, tag = 'scoped memory for convnext_vit_forward.2']
    %8 = vsyncpa [#allocation3], 0
    %9 = vsyncpa [#allocation5], 0
    loop: start=0, step=1, limit=4
    $region2: #{convnext_vit_forward.2} parent=1 // loop_pre_header
      _
    $region3: #{convnext_vit_forward.2} parent=1 // loop_header
      %s11 = sphi 0, %s15
      %p12 = scmp.ge.s32.totalorder %s11, 4
      %s18 = sphi 0, %s30
      %s19 = sphi 0, %s26
      %s20 = sphi 0, %s18
      %s21 = sphi 0, %s19
      %s22 = sphi 0, %s20
      %s23 = sphi 0, %s21
      %s35 = sphi 0, %s37
      %s38 = sphi 0, %s35
      %s39 = sphi 0, %s38
      %s55 = sphi 0, %s39
      %s59 = sphi 0, %s59
      %s61 = sphi 0, %s59
      %s62 = sphi 0, %s61
      %s76 = sphi 0, %s62
      %s80 = sphi 0, %s80
      %s82 = sphi 0, %s80
      %s83 = sphi 0, %s82
      %s97 = sphi 0, %s83
      %s103 = sphi 0, %s105
      %s106 = sphi 0, %s103
      %s107 = sphi 0, %s106
      %s123 = sphi 0, %s107
    $region4: #{convnext_vit_forward.2} parent=1 // loop_header_branch
      %14 = sbr.rel (%p12) target = $region8
    $region5: #{convnext_vit_forward.2} parent=1 // loop_body
      %s16 = ssub.s32 %s11, 1
      %s17 = ssub.s32 %s11, 2
      %s24 = sadd.s32 1, %s19
      %p25 = scmp.ge.s32.totalorder %s24, 1
      %s26 = scalar_select %p25, 0, %s24
      %s27 = sadd.s32 1, %s18
      %s28 = scalar_select %p25, %s27, %s18
      %p29 = scmp.ge.s32.totalorder %s28, 2
      %s30 = scalar_select %p29, 0, %s28
      %s31 = ssub.s32 %s18, %s30
      %s32 = ssub.s32 %s19, %s26
      %s33 = sor.u32 %s31, %s32
      %p34 = scmp.eq.s32.totalorder %s33, 0
      %s36 = sadd.s32 %s35, 1
      %s37 = scalar_select %p34, %s35, %s36
      %p40 = pneg %p34
      %p41 = scmp.eq.s32.totalorder %s11, 1
      %p42 = por %p40, %p41
      %p43 = scmp.ne.s32.totalorder %s35, %s38
      %p44 = scmp.eq.s32.totalorder %s11, 0
      %p45 = por %p43, %p44
      %p46 = scmp.ne.s32.totalorder %s35, %s38
      %p47 = scmp.eq.s32.totalorder %s16, 1
      %p48 = por %p46, %p47
      %p49 = scmp.ne.s32.totalorder %s38, %s39
      %p50 = scmp.eq.s32.totalorder %s16, 0
      %p51 = por %p49, %p50
      %p52 = scmp.ne.s32.totalorder %s38, %s39
      %p53 = scmp.eq.s32.totalorder %s17, 1
      %p54 = por %p52, %p53
      %p56 = scmp.ne.s32.totalorder %s39, %s55
      %p57 = scmp.eq.s32.totalorder %s17, 0
      %p58 = por %p56, %p57
      %s60 = sadd.s32 %s59, 1
      %p63 = scmp.eq.s32.totalorder %s11, 1
      %p64 = scmp.ne.s32.totalorder %s59, %s61
      %p65 = scmp.eq.s32.totalorder %s11, 0
      %p66 = por %p64, %p65
      %p67 = scmp.ne.s32.totalorder %s59, %s61
      %p68 = scmp.eq.s32.totalorder %s16, 1
      %p69 = por %p67, %p68
      %p70 = scmp.ne.s32.totalorder %s61, %s62
      %p71 = scmp.eq.s32.totalorder %s16, 0
      %p72 = por %p70, %p71
      %p73 = scmp.ne.s32.totalorder %s61, %s62
      %p74 = scmp.eq.s32.totalorder %s17, 1
      %p75 = por %p73, %p74
      %p77 = scmp.ne.s32.totalorder %s62, %s76
      %p78 = scmp.eq.s32.totalorder %s17, 0
      %p79 = por %p77, %p78
      %s81 = sadd.s32 %s80, 1
      %p84 = scmp.eq.s32.totalorder %s11, 1
      %p85 = scmp.ne.s32.totalorder %s80, %s82
      %p86 = scmp.eq.s32.totalorder %s11, 0
      %p87 = por %p85, %p86
      %p88 = scmp.ne.s32.totalorder %s80, %s82
      %p89 = scmp.eq.s32.totalorder %s16, 1
      %p90 = por %p88, %p89
      %p91 = scmp.ne.s32.totalorder %s82, %s83
      %p92 = scmp.eq.s32.totalorder %s16, 0
      %p93 = por %p91, %p92
      %p94 = scmp.ne.s32.totalorder %s82, %s83
      %p95 = scmp.eq.s32.totalorder %s17, 1
      %p96 = por %p94, %p95
      %p98 = scmp.ne.s32.totalorder %s83, %s97
      %p99 = scmp.eq.s32.totalorder %s17, 0
      %p100 = por %p98, %p99
      %s101 = ssub.s32 %s18, %s30
      %p102 = scmp.eq.s32.totalorder %s101, 0
      %s104 = sadd.s32 %s103, 1
      %s105 = scalar_select %p102, %s103, %s104
      %p108 = pneg %p102
      %p109 = scmp.eq.s32.totalorder %s11, 1
      %p110 = por %p108, %p109
      %p111 = scmp.ne.s32.totalorder %s103, %s106
      %p112 = scmp.eq.s32.totalorder %s11, 0
      %p113 = por %p111, %p112
      %p114 = scmp.ne.s32.totalorder %s103, %s106
      %p115 = scmp.eq.s32.totalorder %s16, 1
      %p116 = por %p114, %p115
      %p117 = scmp.ne.s32.totalorder %s106, %s107
      %p118 = scmp.eq.s32.totalorder %s16, 0
      %p119 = por %p117, %p118
      %p120 = scmp.ne.s32.totalorder %s106, %s107
      %p121 = scmp.eq.s32.totalorder %s17, 1
      %p122 = por %p120, %p121
      %p124 = scmp.ne.s32.totalorder %s107, %s123
      %p125 = scmp.eq.s32.totalorder %s17, 0
      %p126 = por %p124, %p125
      %p127 = scmp.le.s32.totalorder 1, %s11
      %p128 = scmp.lt.s32.totalorder %s11, 3
      %p129 = pnand %p127, %p128
      %p130 = pneg %p129
      // Predicated region
      $region9: #{convnext_vit_forward.2} parent=5 // pred_check
        _
      $region10: #{convnext_vit_forward.2} parent=5 // pred_check_branch
        %132 = sbr.rel (%p129) target = $region12
      $region11: #{convnext_vit_forward.2} parent=5 // pred_region
        %s133 = ssub.s32 %s11, 1
        // Predicated region
        $region13: #{convnext_vit_forward.2} parent=11 // pred_check
          %p134 = pneg %p72
        $region14: #{convnext_vit_forward.2} parent=11 // pred_check_branch
          %136 = sbr.rel (%p134) target = $region16
        $region15: #{convnext_vit_forward.2} parent=11 // pred_region
          %s138 = ssub.s32 2304, 2304
          %139 = vsyncadd [#allocation3], %s138
          %s140 = sshll.u32 [#allocation2], 4
          %s141 = int_to_ptr.vmem [resolvable:$true] %s140
          %146 = dma.hbm_to_vmem [thread:$0]  %s1, 2304, %s141, [#allocation3], 384, 384, 24
        $region16: #{convnext_vit_forward.2} parent=11 // pred_fallthru
          _
        // Predicated region
        $region17: #{convnext_vit_forward.2} parent=11 // pred_check
          %p147 = pneg %p93
        $region18: #{convnext_vit_forward.2} parent=11 // pred_check_branch
          %149 = sbr.rel (%p147) target = $region20
        $region19: #{convnext_vit_forward.2} parent=11 // pred_region
          %s151 = ssub.s32 384, 384
          %152 = vsyncadd [#allocation5], %s151
          %s154 = sshll.u32 [#allocation4], 4
          %s155 = int_to_ptr.vmem [resolvable:$true] %s154
          %157 = dma.hbm_to_vmem [thread:$0]  %s2, 384, %s155, [#allocation5]
        $region20: #{convnext_vit_forward.2} parent=11 // pred_fallthru
          _
      $region12: #{convnext_vit_forward.2} parent=5 // pred_fallthru
        _
      %p158 = scmp.lt.s32.totalorder %s11, 2
      // Predicated region
      $region21: #{convnext_vit_forward.2} parent=5 // pred_check
        %p159 = pneg %p158
      $region22: #{convnext_vit_forward.2} parent=5 // pred_check_branch
        %161 = sbr.rel (%p159) target = $region24
      $region23: #{convnext_vit_forward.2} parent=5 // pred_region
        // Predicated region
        $region25: #{convnext_vit_forward.2} parent=23 // pred_check
          %p162 = pneg %p45
        $region26: #{convnext_vit_forward.2} parent=23 // pred_check_branch
          %164 = sbr.rel (%p162) target = $region28
        $region27: #{convnext_vit_forward.2} parent=23 // pred_region
          %s165 = smul.u32 2, %s19
          %p166 = scmp.lt.s32.totalorder %s18, 1
          %s167 = scalar_select %p166, %s18, 1
          %p168 = scmp.lt.s32.totalorder %s165, 1
          %s169 = scalar_select %p168, %s165, 1
          %s170 = smul.addr %s167, 2
          %s171 = sadd.s32 %s169, %s170
          %s172 = smul.addr %s171, 4
          %s173 = scalar_lea.vmem %s0, %s172
          %s174 = smul.u32 2, %s19
        $region28: #{convnext_vit_forward.2} parent=23 // pred_fallthru
          _
      $region24: #{convnext_vit_forward.2} parent=5 // pred_fallthru
        _
      %p175 = scmp.le.s32.totalorder 1, %s11
      %p176 = scmp.lt.s32.totalorder %s11, 3
      %p177 = pnand %p175, %p176
      %p178 = pneg %p177
      // Predicated region
      $region29: #{convnext_vit_forward.2} parent=5 // pred_check
        _
      $region30: #{convnext_vit_forward.2} parent=5 // pred_check_branch
        %180 = sbr.rel (%p177) target = $region32
      $region31: #{convnext_vit_forward.2} parent=5 // pred_region
        %s181 = ssub.s32 %s11, 1
        // Predicated region
        $region33: #{convnext_vit_forward.2} parent=31 // pred_check
          %p182 = pneg %p72
        $region34: #{convnext_vit_forward.2} parent=31 // pred_check_branch
          %184 = sbr.rel (%p182) target = $region36
        $region35: #{convnext_vit_forward.2} parent=31 // pred_region
          %185 = dma.done [#allocation3], 2304
        $region36: #{convnext_vit_forward.2} parent=31 // pred_fallthru
          _
        // Predicated region
        $region37: #{convnext_vit_forward.2} parent=31 // pred_check
          %p186 = pneg %p93
        $region38: #{convnext_vit_forward.2} parent=31 // pred_check_branch
          %188 = sbr.rel (%p186) target = $region40
        $region39: #{convnext_vit_forward.2} parent=31 // pred_region
          %189 = dma.done [#allocation5], 384
        $region40: #{convnext_vit_forward.2} parent=31 // pred_fallthru
          _
        %s190 = smul.u32 2, %s21
        %p191 = scmp.lt.s32.totalorder %s20, 1
        %s192 = scalar_select %p191, %s20, 1
        %p193 = scmp.lt.s32.totalorder %s190, 1
        %s194 = scalar_select %p193, %s190, 1
        %s195 = smul.addr %s192, 2
        %s196 = sadd.s32 %s194, %s195
        %s197 = smul.addr %s196, 4
        %s198 = scalar_lea.vmem %s0, %s197
        %p199 = pneg %p51
        %p200 = pneg %p48
        %p201 = pneg %p72
        %p202 = pneg %p69
        %p203 = pneg %p93
        %p204 = pneg %p90
        %p205 = pneg %p119
        %p206 = pneg %p116
        %p207 = scmp.lt.s32.totalorder %s20, 1
        %s208 = scalar_select %p207, %s20, 1
        %s209 = smul.addr %s208, 6
        %s210 = scalar_lea.vmem %s3, %s209
        %s211 = smul.u32 2, %s21
        %p212 = scmp.lt.s32.totalorder %s20, 1
        %s213 = scalar_select %p212, %s20, 1
        %p214 = scmp.lt.s32.totalorder %s211, 1
        %s215 = scalar_select %p214, %s211, 1
        %s216 = smul.addr %s213, 2
        %s217 = sadd.s32 %s215, %s216
        %s218 = smul.addr %s217, 4
        %s219 = scalar_lea.vmem %s0, %s218
        %s220 = smul.u32 2, %s21
        %p221 = scmp.lt.s32.totalorder %s20, 1
        %s222 = scalar_select %p221, %s20, 1
        %s223 = smul.addr %s222, 6
        %s224 = scalar_lea.vmem %s3, %s223
        %p226 = scmp.eq.s32.totalorder %s21, 0
        // Predicated region
        $region41: #{convnext_vit_forward.2} parent=31 // pred_check
          %p227 = pneg %p226
        $region42: #{convnext_vit_forward.2} parent=31 // pred_check_branch
          %229 = sbr.rel (%p227) target = $region44
        $region43: #{convnext_vit_forward.2} parent=31 // pred_region
          %v230 = vlaneseq
          %vm231 = vcmp.ge.s32.totalorder %v230, 0
          %vm232 = vcmp.lt.s32.totalorder %v230, 768
          %vm233 = vmand %vm231, %vm232
          %234 = vst.msk [vmem:[%s224] sm:$0x3f] %vm233, 0.0
        $region44: #{convnext_vit_forward.2} parent=31 // pred_fallthru
          _
        %v235 = vld [vmem:[%s219] sm:$0xf]
        %v236 = vld [vmem:[%s219 + $0x4] sm:$0xf]
        %v237 = vld [vmem:[#allocation4] sm:$0x77]
        %v238 = vld [vmem:[#allocation4 + $0x8] sm:$0x77]
        %v239 = vld [vmem:[#allocation4 + $0x10] sm:$0x77]
        %v240 = vld [vmem:[#allocation2] sm:$0xff]
        %v241 = vld [vmem:[#allocation2 + $0x8] sm:$0xff]
        %v242 = vld [vmem:[#allocation2 + $0x10] sm:$0xff]
        %v243 = vld [vmem:[#allocation2 + $0x18] sm:$0xff]
        %v244 = vld [vmem:[#allocation2 + $0x20] sm:$0xff]
        %v245 = vld [vmem:[#allocation2 + $0x28] sm:$0xff]
        %v246 = vld [vmem:[#allocation2 + $0x30] sm:$0xff]
        %v247 = vld [vmem:[#allocation2 + $0x38] sm:$0xff]
        %v248 = vld [vmem:[#allocation2 + $0x40] sm:$0xff]
        %v249 = vld [vmem:[#allocation2 + $0x48] sm:$0xff]
        %v250 = vld [vmem:[#allocation2 + $0x50] sm:$0xff]
        %v251 = vld [vmem:[#allocation2 + $0x58] sm:$0xff]
        %v252 = vld [vmem:[#allocation2 + $0x60] sm:$0xff]
        %v253 = vld [vmem:[#allocation2 + $0x68] sm:$0xff]
        %v254 = vld [vmem:[#allocation2 + $0x70] sm:$0xff]
        %v255 = vld [vmem:[#allocation2 + $0x78] sm:$0xff]
        %v256 = vld [vmem:[#allocation2 + $0x80] sm:$0xff]
        %v257 = vld [vmem:[#allocation2 + $0x88] sm:$0xff]
        %v261 = vlaneseq
        %v262 = vshrl.u32 %v261, 7
        %v263 = vsub.s32 0, %v262
        %v264 = vrot.slane %v237, %v263
        %v265 = vlaneseq
        %v266 = vshrl.u32 %v265, 7
        %v267 = vsub.s32 4, %v266
        %v268 = vrot.slane %v237, %v267
        %v269 = vlaneseq
        %v270 = vshrl.u32 %v269, 7
        %v271 = vsub.s32 0, %v270
        %v272 = vrot.slane %v238, %v271
        %v273 = vlaneseq
        %v274 = vshrl.u32 %v273, 7
        %v275 = vsub.s32 4, %v274
        %v276 = vrot.slane %v238, %v275
        %v277 = vlaneseq
        %v278 = vshrl.u32 %v277, 7
        %v279 = vsub.s32 0, %v278
        %v280 = vrot.slane %v239, %v279
        %v281 = vlaneseq
        %v282 = vshrl.u32 %v281, 7
        %v283 = vsub.s32 4, %v282
        %v284 = vrot.slane %v239, %v283
        %v291 = vlaneseq
        %v292 = vshrl.u32 %v291, 7
        %v293 = vsub.s32 0, %v292
        %v294 = vrot.slane %v264, %v293
        %v295 = vlaneseq
        %v296 = vshrl.u32 %v295, 7
        %v297 = vsub.s32 0, %v296
        %v298 = vrot.slane %v268, %v297
        %v299 = vlaneseq
        %v300 = vshrl.u32 %v299, 7
        %v301 = vsub.s32 0, %v300
        %v302 = vrot.slane %v272, %v301
        %v303 = vlaneseq
        %v304 = vshrl.u32 %v303, 7
        %v305 = vsub.s32 0, %v304
        %v306 = vrot.slane %v276, %v305
        %v307 = vlaneseq
        %v308 = vshrl.u32 %v307, 7
        %v309 = vsub.s32 0, %v308
        %v310 = vrot.slane %v280, %v309
        %v311 = vlaneseq
        %v312 = vshrl.u32 %v311, 7
        %v313 = vsub.s32 0, %v312
        %v314 = vrot.slane %v284, %v313
        %v317 = vunpack.c.l.b16 %v235
        %v318 = vunpack.c.l.b16 %v236
        %v319 = vpack.c.b16 %v318, %v317
        %v338 = vunpack.c.l.b16 %v240
        %v339 = vunpack.c.h.b16 %v240
        %v340 = vunpack.c.l.b16 %v241
        %v341 = vunpack.c.h.b16 %v241
        %v342 = vunpack.c.l.b16 %v242
        %v343 = vunpack.c.h.b16 %v242
        %v344 = vunpack.c.l.b16 %v243
        %v345 = vunpack.c.h.b16 %v243
        %v346 = vunpack.c.l.b16 %v244
        %v347 = vunpack.c.h.b16 %v244
        %v348 = vunpack.c.l.b16 %v245
        %v349 = vunpack.c.h.b16 %v245
        %v350 = vunpack.c.l.b16 %v246
        %v351 = vunpack.c.h.b16 %v246
        %v352 = vunpack.c.l.b16 %v247
        %v353 = vunpack.c.h.b16 %v247
        %v354 = vunpack.c.l.b16 %v248
        %v355 = vunpack.c.h.b16 %v248
        %v356 = vunpack.c.l.b16 %v249
        %v357 = vunpack.c.h.b16 %v249
        %v358 = vunpack.c.l.b16 %v250
        %v359 = vunpack.c.h.b16 %v250
        %v360 = vunpack.c.l.b16 %v251
        %v361 = vunpack.c.h.b16 %v251
        %v362 = vunpack.c.l.b16 %v252
        %v363 = vunpack.c.h.b16 %v252
        %v364 = vunpack.c.l.b16 %v253
        %v365 = vunpack.c.h.b16 %v253
        %v366 = vunpack.c.l.b16 %v254
        %v367 = vunpack.c.h.b16 %v254
        %v368 = vunpack.c.l.b16 %v255
        %v369 = vunpack.c.h.b16 %v255
        %v370 = vunpack.c.l.b16 %v256
        %v371 = vunpack.c.h.b16 %v256
        %v372 = vunpack.c.l.b16 %v257
        %v373 = vunpack.c.h.b16 %v257
        %v374 = vpack.c.b16 %v344, %v338
        %v375 = vpack.c.b16 %v345, %v339
        %v376 = vpack.c.b16 %v346, %v340
        %v377 = vpack.c.b16 %v347, %v341
        %v378 = vpack.c.b16 %v348, %v342
        %v379 = vpack.c.b16 %v349, %v343
        %v380 = vpack.c.b16 %v356, %v350
        %v381 = vpack.c.b16 %v357, %v351
        %v382 = vpack.c.b16 %v358, %v352
        %v383 = vpack.c.b16 %v359, %v353
        %v384 = vpack.c.b16 %v360, %v354
        %v385 = vpack.c.b16 %v361, %v355
        %v386 = vpack.c.b16 %v368, %v362
        %v387 = vpack.c.b16 %v369, %v363
        %v388 = vpack.c.b16 %v370, %v364
        %v389 = vpack.c.b16 %v371, %v365
        %v390 = vpack.c.b16 %v372, %v366
        %v391 = vpack.c.b16 %v373, %v367
        %vm410 = vcmask 392192
        %v412 = vsel %vm410, %v319, 0
        %414 = vmatprep.subr.bf16.mxu0 0
        %415 = vmatpush1.bf16.msra.mxu0 0
        %416 = vmatprep.subr.bf16.mxu0 0
        %417 = vmatpush1.bf16.msra.mxu0 0
        %418 = vmatprep.subr.bf16.mxu0 0
        %419 = vmatpush1.bf16.msra.mxu0 0
        %420 = vmatprep.subr.bf16.mxu0 0
        %421 = vmatpush1.bf16.msra.mxu0 0
        %422 = vmatprep.subr.bf16.mxu0 0
        %423 = vmatpush1.bf16.msra.mxu0 0
        %424 = vmatprep.subr.bf16.mxu0 %v387
        %425 = vmatpush1.bf16.msra.mxu0 %v386
        %426 = vmatprep.subr.bf16.mxu0 %v381
        %427 = vmatpush1.bf16.msra.mxu0 %v380
        %428 = vmatprep.subr.bf16.mxu0 %v375
        %429 = vmatpush1.bf16.msra.mxu0 %v374
        %430 = vmatprep.subr.bf16.mxu0 0
        %431 = vmatpush2.bf16.msra.mxu0 0
        %432 = vmatprep.subr.bf16.mxu0 0
        %433 = vmatpush2.bf16.msra.mxu0 0
        %434 = vmatprep.subr.bf16.mxu0 0
        %435 = vmatpush2.bf16.msra.mxu0 0
        %436 = vmatprep.subr.bf16.mxu0 0
        %437 = vmatpush2.bf16.msra.mxu0 0
        %438 = vmatprep.subr.bf16.mxu0 0
        %439 = vmatpush2.bf16.msra.mxu0 0
        %440 = vmatprep.subr.bf16.mxu0 0
        %441 = vmatpush2.bf16.msra.mxu0 0
        %442 = vmatprep.subr.bf16.mxu0 0
        %443 = vmatpush2.bf16.msra.mxu0 0
        %444 = vmatprep.subr.bf16.mxu0 0
        %445 = vmatpush2.bf16.msra.mxu0 0
        %446 = vmatprep.mubr.bf16.mxu0 0
        %447 = vmatmul.mubr.bf16.gmra.mxu0 %v412
        %v448 = vpop.f32.mrf.mxu0
        %v449 = vadd.f32 %v294, %v448
        %v450 = vpop.f32.mrf.mxu0
        %v451 = vadd.f32 %v298, %v450
        %v452 = vpop.f32.mrf.mxu0
        %v453 = vadd.f32 %v294, %v452
        %v454 = vpop.f32.mrf.mxu0
        %v455 = vadd.f32 %v298, %v454
        %456 = vdwg.mxu0
        %457 = vmatprep.subr.bf16.mxu0 0
        %458 = vmatpush1.bf16.msra.mxu0 0
        %459 = vmatprep.subr.bf16.mxu0 0
        %460 = vmatpush1.bf16.msra.mxu0 0
        %461 = vmatprep.subr.bf16.mxu0 0
        %462 = vmatpush1.bf16.msra.mxu0 0
        %463 = vmatprep.subr.bf16.mxu0 0
        %464 = vmatpush1.bf16.msra.mxu0 0
        %465 = vmatprep.subr.bf16.mxu0 0
        %466 = vmatpush1.bf16.msra.mxu0 0
        %467 = vmatprep.subr.bf16.mxu0 %v389
        %468 = vmatpush1.bf16.msra.mxu0 %v388
        %469 = vmatprep.subr.bf16.mxu0 %v383
        %470 = vmatpush1.bf16.msra.mxu0 %v382
        %471 = vmatprep.subr.bf16.mxu0 %v377
        %472 = vmatpush1.bf16.msra.mxu0 %v376
        %473 = vmatprep.subr.bf16.mxu0 0
        %474 = vmatpush2.bf16.msra.mxu0 0
        %475 = vmatprep.subr.bf16.mxu0 0
        %476 = vmatpush2.bf16.msra.mxu0 0
        %477 = vmatprep.subr.bf16.mxu0 0
        %478 = vmatpush2.bf16.msra.mxu0 0
        %479 = vmatprep.subr.bf16.mxu0 0
        %480 = vmatpush2.bf16.msra.mxu0 0
        %481 = vmatprep.subr.bf16.mxu0 0
        %482 = vmatpush2.bf16.msra.mxu0 0
        %483 = vmatprep.subr.bf16.mxu0 0
        %484 = vmatpush2.bf16.msra.mxu0 0
        %485 = vmatprep.subr.bf16.mxu0 0
        %486 = vmatpush2.bf16.msra.mxu0 0
        %487 = vmatprep.subr.bf16.mxu0 0
        %488 = vmatpush2.bf16.msra.mxu0 0
        %489 = vmatprep.mubr.bf16.mxu0 0
        %490 = vmatmul.mubr.bf16.gmra.mxu0 %v412
        %v491 = vpop.f32.mrf.mxu0
        %v492 = vadd.f32 %v302, %v491
        %v493 = vpop.f32.mrf.mxu0
        %v494 = vadd.f32 %v306, %v493
        %v495 = vpop.f32.mrf.mxu0
        %v496 = vadd.f32 %v302, %v495
        %v497 = vpop.f32.mrf.mxu0
        %v498 = vadd.f32 %v306, %v497
        %499 = vdwg.mxu0
        %500 = vmatprep.subr.bf16.mxu0 0
        %501 = vmatpush1.bf16.msra.mxu0 0
        %502 = vmatprep.subr.bf16.mxu0 0
        %503 = vmatpush1.bf16.msra.mxu0 0
        %504 = vmatprep.subr.bf16.mxu0 0
        %505 = vmatpush1.bf16.msra.mxu0 0
        %506 = vmatprep.subr.bf16.mxu0 0
        %507 = vmatpush1.bf16.msra.mxu0 0
        %508 = vmatprep.subr.bf16.mxu0 0
        %509 = vmatpush1.bf16.msra.mxu0 0
        %510 = vmatprep.subr.bf16.mxu0 %v391
        %511 = vmatpush1.bf16.msra.mxu0 %v390
        %512 = vmatprep.subr.bf16.mxu0 %v385
        %513 = vmatpush1.bf16.msra.mxu0 %v384
        %514 = vmatprep.subr.bf16.mxu0 %v379
        %515 = vmatpush1.bf16.msra.mxu0 %v378
        %516 = vmatprep.subr.bf16.mxu0 0
        %517 = vmatpush2.bf16.msra.mxu0 0
        %518 = vmatprep.subr.bf16.mxu0 0
        %519 = vmatpush2.bf16.msra.mxu0 0
        %520 = vmatprep.subr.bf16.mxu0 0
        %521 = vmatpush2.bf16.msra.mxu0 0
        %522 = vmatprep.subr.bf16.mxu0 0
        %523 = vmatpush2.bf16.msra.mxu0 0
        %524 = vmatprep.subr.bf16.mxu0 0
        %525 = vmatpush2.bf16.msra.mxu0 0
        %526 = vmatprep.subr.bf16.mxu0 0
        %527 = vmatpush2.bf16.msra.mxu0 0
        %528 = vmatprep.subr.bf16.mxu0 0
        %529 = vmatpush2.bf16.msra.mxu0 0
        %530 = vmatprep.subr.bf16.mxu0 0
        %531 = vmatpush2.bf16.msra.mxu0 0
        %532 = vmatprep.mubr.bf16.mxu0 0
        %533 = vmatmul.mubr.bf16.gmra.mxu0 %v412
        %v534 = vpop.f32.mrf.mxu0
        %v535 = vadd.f32 %v310, %v534
        %v536 = vpop.f32.mrf.mxu0
        %v537 = vadd.f32 %v314, %v536
        %v538 = vpop.f32.mrf.mxu0
        %v539 = vadd.f32 %v310, %v538
        %v540 = vpop.f32.mrf.mxu0
        %v541 = vadd.f32 %v314, %v540
        %542 = vdwg.mxu0
        %v543 = vadd.f32 %v449, %v451
        %v544 = vadd.f32 %v543, %v492
        %v545 = vadd.f32 %v544, %v494
        %v546 = vadd.f32 %v545, %v535
        %v547 = vadd.f32 %v546, %v537
        %548 = vadd.xlane.f32.xlu0 %v547
        %v549 = vpop.xlane.xlu0 %548
        %v550 = vadd.f32 %v453, %v455
        %v551 = vadd.f32 %v550, %v496
        %v552 = vadd.f32 %v551, %v498
        %v553 = vadd.f32 %v552, %v539
        %v554 = vadd.f32 %v553, %v541
        %555 = vadd.xlane.f32.xlu0 %v554
        %v556 = vpop.xlane.xlu0 %555
        %v557 = vrcp.pop 768.0
        %v558 = vmul.f32 %v549, %v557
        %v559 = vmul.f32 %v556, %v557
        %v560 = vsub.f32 %v449, %v558
        %v561 = vsub.f32 %v451, %v558
        %v562 = vsub.f32 %v492, %v558
        %v563 = vsub.f32 %v494, %v558
        %v564 = vsub.f32 %v535, %v558
        %v565 = vsub.f32 %v537, %v558
        %v566 = vsub.f32 %v453, %v559
        %v567 = vsub.f32 %v455, %v559
        %v568 = vsub.f32 %v496, %v559
        %v569 = vsub.f32 %v498, %v559
        %v570 = vsub.f32 %v539, %v559
        %v571 = vsub.f32 %v541, %v559
        %v572 = vmul.f32 %v560, %v560
        %v573 = vmul.f32 %v561, %v561
        %v574 = vmul.f32 %v562, %v562
        %v575 = vmul.f32 %v563, %v563
        %v576 = vmul.f32 %v564, %v564
        %v577 = vmul.f32 %v565, %v565
        %v578 = vmul.f32 %v566, %v566
        %v579 = vmul.f32 %v567, %v567
        %v580 = vmul.f32 %v568, %v568
        %v581 = vmul.f32 %v569, %v569
        %v582 = vmul.f32 %v570, %v570
        %v583 = vmul.f32 %v571, %v571
        %v584 = vadd.f32 %v572, %v573
        %v585 = vadd.f32 %v584, %v574
        %v586 = vadd.f32 %v585, %v575
        %v587 = vadd.f32 %v586, %v576
        %v588 = vadd.f32 %v587, %v577
        %589 = vadd.xlane.f32.xlu0 %v588
        %v590 = vpop.xlane.xlu0 %589
        %v591 = vadd.f32 %v578, %v579
        %v592 = vadd.f32 %v591, %v580
        %v593 = vadd.f32 %v592, %v581
        %v594 = vadd.f32 %v593, %v582
        %v595 = vadd.f32 %v594, %v583
        %596 = vadd.xlane.f32.xlu0 %v595
        %v597 = vpop.xlane.xlu0 %596
        %v598 = vmul.f32 %v590, %v557
        %v599 = vmul.f32 %v597, %v557
        %v600 = vadd.f32 %v598, 1e-05
        %v601 = vadd.f32 %v599, 1e-05
        %v602 = vrsqrt.pop %v600
        %v603 = vrsqrt.pop %v601
        %v604 = vmul.f32 %v560, %v602
        %v605 = vmul.f32 %v561, %v602
        %v606 = vmul.f32 %v562, %v602
        %v607 = vmul.f32 %v563, %v602
        %v608 = vmul.f32 %v564, %v602
        %v609 = vmul.f32 %v565, %v602
        %v610 = vmul.f32 %v566, %v603
        %v611 = vmul.f32 %v567, %v603
        %v612 = vmul.f32 %v568, %v603
        %v613 = vmul.f32 %v569, %v603
        %v614 = vmul.f32 %v570, %v603
        %v615 = vmul.f32 %v571, %v603
        %v616 = vlaneseq
        %v617 = vshrl.u32 %v616, 7
        %v618 = vsub.s32 1, %v617
        %v619 = vrot.slane %v237, %v618
        %v620 = vlaneseq
        %v621 = vshrl.u32 %v620, 7
        %v622 = vsub.s32 5, %v621
        %v623 = vrot.slane %v237, %v622
        %v624 = vlaneseq
        %v625 = vshrl.u32 %v624, 7
        %v626 = vsub.s32 1, %v625
        %v627 = vrot.slane %v238, %v626
        %v628 = vlaneseq
        %v629 = vshrl.u32 %v628, 7
        %v630 = vsub.s32 5, %v629
        %v631 = vrot.slane %v238, %v630
        %v632 = vlaneseq
        %v633 = vshrl.u32 %v632, 7
        %v634 = vsub.s32 1, %v633
        %v635 = vrot.slane %v239, %v634
        %v636 = vlaneseq
        %v637 = vshrl.u32 %v636, 7
        %v638 = vsub.s32 5, %v637
        %v639 = vrot.slane %v239, %v638
        %v646 = vlaneseq
        %v647 = vshrl.u32 %v646, 7
        %v648 = vsub.s32 1, %v647
        %v649 = vrot.slane %v619, %v648
        %v650 = vlaneseq
        %v651 = vshrl.u32 %v650, 7
        %v652 = vsub.s32 1, %v651
        %v653 = vrot.slane %v623, %v652
        %v654 = vlaneseq
        %v655 = vshrl.u32 %v654, 7
        %v656 = vsub.s32 1, %v655
        %v657 = vrot.slane %v627, %v656
        %v658 = vlaneseq
        %v659 = vshrl.u32 %v658, 7
        %v660 = vsub.s32 1, %v659
        %v661 = vrot.slane %v631, %v660
        %v662 = vlaneseq
        %v663 = vshrl.u32 %v662, 7
        %v664 = vsub.s32 1, %v663
        %v665 = vrot.slane %v635, %v664
        %v666 = vlaneseq
        %v667 = vshrl.u32 %v666, 7
        %v668 = vsub.s32 1, %v667
        %v669 = vrot.slane %v639, %v668
        %v670 = vmul.f32 %v604, %v649
        %v671 = vmul.f32 %v605, %v653
        %v672 = vmul.f32 %v606, %v657
        %v673 = vmul.f32 %v607, %v661
        %v674 = vmul.f32 %v608, %v665
        %v675 = vmul.f32 %v609, %v669
        %v676 = vmul.f32 %v610, %v649
        %v677 = vmul.f32 %v611, %v653
        %v678 = vmul.f32 %v612, %v657
        %v679 = vmul.f32 %v613, %v661
        %v680 = vmul.f32 %v614, %v665
        %v681 = vmul.f32 %v615, %v669
        %v682 = vlaneseq
        %v683 = vshrl.u32 %v682, 7
        %v684 = vsub.s32 2, %v683
        %v685 = vrot.slane %v237, %v684
        %v686 = vlaneseq
        %v687 = vshrl.u32 %v686, 7
        %v688 = vsub.s32 6, %v687
        %v689 = vrot.slane %v237, %v688
        %v690 = vlaneseq
        %v691 = vshrl.u32 %v690, 7
        %v692 = vsub.s32 2, %v691
        %v693 = vrot.slane %v238, %v692
        %v694 = vlaneseq
        %v695 = vshrl.u32 %v694, 7
        %v696 = vsub.s32 6, %v695
        %v697 = vrot.slane %v238, %v696
        %v698 = vlaneseq
        %v699 = vshrl.u32 %v698, 7
        %v700 = vsub.s32 2, %v699
        %v701 = vrot.slane %v239, %v700
        %v702 = vlaneseq
        %v703 = vshrl.u32 %v702, 7
        %v704 = vsub.s32 6, %v703
        %v705 = vrot.slane %v239, %v704
        %v712 = vlaneseq
        %v713 = vshrl.u32 %v712, 7
        %v714 = vsub.s32 2, %v713
        %v715 = vrot.slane %v685, %v714
        %v716 = vlaneseq
        %v717 = vshrl.u32 %v716, 7
        %v718 = vsub.s32 2, %v717
        %v719 = vrot.slane %v689, %v718
        %v720 = vlaneseq
        %v721 = vshrl.u32 %v720, 7
        %v722 = vsub.s32 2, %v721
        %v723 = vrot.slane %v693, %v722
        %v724 = vlaneseq
        %v725 = vshrl.u32 %v724, 7
        %v726 = vsub.s32 2, %v725
        %v727 = vrot.slane %v697, %v726
        %v728 = vlaneseq
        %v729 = vshrl.u32 %v728, 7
        %v730 = vsub.s32 2, %v729
        %v731 = vrot.slane %v701, %v730
        %v732 = vlaneseq
        %v733 = vshrl.u32 %v732, 7
        %v734 = vsub.s32 2, %v733
        %v735 = vrot.slane %v705, %v734
        %v736 = vadd.f32 %v670, %v715
        %v737 = vadd.f32 %v671, %v719
        %v738 = vadd.f32 %v672, %v723
        %v739 = vadd.f32 %v673, %v727
        %v740 = vadd.f32 %v674, %v731
        %v741 = vadd.f32 %v675, %v735
        %v742 = vadd.f32 %v676, %v715
        %v743 = vadd.f32 %v677, %v719
        %v744 = vadd.f32 %v678, %v723
        %v745 = vadd.f32 %v679, %v727
        %v746 = vadd.f32 %v680, %v731
        %v747 = vadd.f32 %v681, %v735
        %v748 = vld [vmem:[%s224] sm:$0x3f]
        %v749 = vadd.f32 %v736, %v742
        %v750 = vrot.slane %v749, 4
        %v751 = vadd.f32 %v749, %v750
        %v752 = vrot.slane %v751, 2
        %v753 = vadd.f32 %v751, %v752
        %v754 = vrot.slane %v753, 1
        %v755 = vadd.f32 %v753, %v754
        %v756 = vadd.f32 %v737, %v743
        %v757 = vrot.slane %v756, 4
        %v758 = vadd.f32 %v756, %v757
        %v759 = vrot.slane %v758, 2
        %v760 = vadd.f32 %v758, %v759
        %v761 = vrot.slane %v760, 1
        %v762 = vadd.f32 %v760, %v761
        %v763 = vadd.f32 %v738, %v744
        %v764 = vrot.slane %v763, 4
        %v765 = vadd.f32 %v763, %v764
        %v766 = vrot.slane %v765, 2
        %v767 = vadd.f32 %v765, %v766
        %v768 = vrot.slane %v767, 1
        %v769 = vadd.f32 %v767, %v768
        %v770 = vadd.f32 %v739, %v745
        %v771 = vrot.slane %v770, 4
        %v772 = vadd.f32 %v770, %v771
        %v773 = vrot.slane %v772, 2
        %v774 = vadd.f32 %v772, %v773
        %v775 = vrot.slane %v774, 1
        %v776 = vadd.f32 %v774, %v775
        %v777 = vadd.f32 %v740, %v746
        %v778 = vrot.slane %v777, 4
        %v779 = vadd.f32 %v777, %v778
        %v780 = vrot.slane %v779, 2
        %v781 = vadd.f32 %v779, %v780
        %v782 = vrot.slane %v781, 1
        %v783 = vadd.f32 %v781, %v782
        %v784 = vadd.f32 %v741, %v747
        %v785 = vrot.slane %v784, 4
        %v786 = vadd.f32 %v784, %v785
        %v787 = vrot.slane %v786, 2
        %v788 = vadd.f32 %v786, %v787
        %v789 = vrot.slane %v788, 1
        %v790 = vadd.f32 %v788, %v789
        %v791 = vmul.f32 %v755, 0.0625
        %v792 = vmul.f32 %v762, 0.0625
        %v793 = vmul.f32 %v769, 0.0625
        %v794 = vmul.f32 %v776, 0.0625
        %v795 = vmul.f32 %v783, 0.0625
        %v796 = vmul.f32 %v790, 0.0625
        %v803 = vcombine.low %v791, %v792
        %v804 = vcombine.low %v793, %v794
        %v805 = vcombine.low %v795, %v796
        %v807 = vunpack.c.l.s4 1966171168
        %v808 = vunpack.c.0.s8 %v807
        %v809 = vlaneseq
        %v810 = vshrl.u32 %v809, 7
        %v811 = vsub.s32 %v808, %v810
        %v812 = vrot.slane %v803, %v811
        %v814 = vunpack.c.l.s4 1966171168
        %v815 = vunpack.c.0.s8 %v814
        %v816 = vlaneseq
        %v817 = vshrl.u32 %v816, 7
        %v818 = vsub.s32 %v815, %v817
        %v819 = vrot.slane %v804, %v818
        %v821 = vunpack.c.l.s4 1966171168
        %v822 = vunpack.c.0.s8 %v821
        %v823 = vlaneseq
        %v824 = vshrl.u32 %v823, 7
        %v825 = vsub.s32 %v822, %v824
        %v826 = vrot.slane %v805, %v825
        %v827 = vcombine.low %v812, %v819
        %v829 = vunpack.c.l.s4 1966171168
        %v830 = vunpack.c.0.s8 %v829
        %v831 = vlaneseq
        %v832 = vshrl.u32 %v831, 7
        %v833 = vsub.s32 %v830, %v832
        %v834 = vrot.slane %v827, %v833
        %v836 = vunpack.c.l.s4 1966171168
        %v837 = vunpack.c.0.s8 %v836
        %v838 = vlaneseq
        %v839 = vshrl.u32 %v838, 7
        %v840 = vsub.s32 %v837, %v839
        %v841 = vrot.slane %v826, %v840
        %v842 = vcombine.low %v834, %v841
        %v844 = vadd.f32 %v748, %v842
        %v845 = vlaneseq
        %vm846 = vcmp.ge.s32.totalorder %v845, 0
        %vm847 = vcmp.lt.s32.totalorder %v845, 768
        %vm848 = vmand %vm846, %vm847
        %849 = vst.msk [vmem:[%s224] sm:$0x3f] %vm848, %v844
        %p850 = scmp.lt.s32.totalorder %s20, 1
        %s851 = scalar_select %p850, %s20, 1
        %s852 = smul.addr %s851, 6
        %s853 = scalar_lea.vmem %s3, %s852
        // Predicated region
        $region45: #{convnext_vit_forward.2} parent=31 // pred_check
          %p854 = pneg %p116
        $region46: #{convnext_vit_forward.2} parent=31 // pred_check_branch
          %856 = sbr.rel (%p854) target = $region48
        $region47: #{convnext_vit_forward.2} parent=31 // pred_region
          _
        $region48: #{convnext_vit_forward.2} parent=31 // pred_fallthru
          _
      $region32: #{convnext_vit_forward.2} parent=5 // pred_fallthru
        _
      %p857 = scmp.le.s32.totalorder 2, %s11
      // Predicated region
      $region49: #{convnext_vit_forward.2} parent=5 // pred_check
        %p858 = pneg %p857
      $region50: #{convnext_vit_forward.2} parent=5 // pred_check_branch
        %860 = sbr.rel (%p858) target = $region52
      $region51: #{convnext_vit_forward.2} parent=5 // pred_region
        %s861 = ssub.s32 %s11, 2
        // Predicated region
        $region53: #{convnext_vit_forward.2} parent=51 // pred_check
          %p862 = pneg %p122
        $region54: #{convnext_vit_forward.2} parent=51 // pred_check_branch
          %864 = sbr.rel (%p862) target = $region56
        $region55: #{convnext_vit_forward.2} parent=51 // pred_region
          %p865 = scmp.lt.s32.totalorder %s22, 1
          %s866 = scalar_select %p865, %s22, 1
          %s867 = smul.addr %s866, 6
          %s868 = scalar_lea.vmem %s3, %s867
        $region56: #{convnext_vit_forward.2} parent=51 // pred_fallthru
          _
      $region52: #{convnext_vit_forward.2} parent=5 // pred_fallthru
        _
    $region6: #{convnext_vit_forward.2} parent=1 // loop_footer
      %s15 = sadd.s32 1, %s11
    $region7: #{convnext_vit_forward.2} parent=1 // loop_footer_branch
      %10 = sbr.rel target = $region3
    $region8: #{convnext_vit_forward.2} parent=1 // loop_exit
      _
    %869 = vsyncpa [#allocation3], 1
    %s870 = scalar_lea.sflag [#allocation3], 1
    %871 = vsyncpa %s870, 1
    %872 = vsyncpa [#allocation5], 1

// kernel: convnext_vit_forward.3
$region0: #{convnext_vit_forward.3}
  #allocation0 [shape = 'u32[]', space=smem, size = 0x4, offset = 0x4, fixed_abs, tag = 'smem constant byte address 0x4 - core index']
  #allocation1 [shape = 'u32[144,128]{1,0:T(1,128)}', space=vmem, size = 0x12000, scoped, tag = 'internal scratch']
  %s0 = inlined_call_operand.vmem [shape: f32[2,1,768], index: 0, kind: input, shape index: {}]
  %s1 = inlined_call_operand.hbm [shape: bf16[768,768], index: 1, kind: input, shape index: {}]
  %s2 = inlined_call_operand.hbm [shape: bf16[768,768], index: 2, kind: input, shape index: {}]
  %s3 = inlined_call_operand.hbm [shape: bf16[768,512], index: 3, kind: input, shape index: {}]
  %s4 = inlined_call_operand.hbm [shape: bf16[512,768], index: 4, kind: input, shape index: {}]
  %s5 = inlined_call_operand.hbm [shape: bf16[768,256], index: 5, kind: input, shape index: {}]
  %s6 = inlined_call_operand.vmem [shape: bf16[256,10], index: 6, kind: input, shape index: {}]
  %s7 = inlined_call_operand.hbm [shape: f32[12,768], index: 7, kind: input, shape index: {}]
  %s8 = inlined_call_operand.hbm [shape: f32[2,10], index: 8, kind: output, shape index: {}]
  %s9 = sld [smem:[#allocation0]]
  $region66: #{convnext_vit_forward.3} parent=0
    _
  %s11 = ssub.s32 1, %s9
  %s12 = scalar_select 0, %s11, %s9
  $region1: #{convnext_vit_forward.3} parent=0
    #allocation2 [shape = 'u8[1179648]{0}', space=vmem, size = 0x120000, scoped, tag = 'input window, operand 1, single buffered']
    #allocation3 [shape = 's32[1]{0}', space=sflag, size = 0x4, scoped, tag = 'scoped memory for convnext_vit_forward.3']
    #allocation4 [shape = 's32[1]{0}', space=sflag, size = 0x4, scoped, tag = 'scoped memory for convnext_vit_forward.3']
    #allocation5 [shape = 'u8[1179648]{0}', space=vmem, size = 0x120000, scoped, tag = 'input window, operand 2, single buffered']
    #allocation6 [shape = 's32[1]{0}', space=sflag, size = 0x4, scoped, tag = 'scoped memory for convnext_vit_forward.3']
    #allocation7 [shape = 'u8[786432]{0}', space=vmem, size = 0xc0000, scoped, tag = 'input window, operand 3, single buffered']
    #allocation8 [shape = 'u8[786432]{0}', space=vmem, size = 0xc0000, scoped, tag = 'input window, operand 4, single buffered']
    #allocation9 [shape = 's32[1]{0}', space=sflag, size = 0x4, scoped, tag = 'scoped memory for convnext_vit_forward.3']
    #allocation10 [shape = 'u8[393216]{0}', space=vmem, size = 0x60000, scoped, tag = 'input window, operand 5, single buffered']
    #allocation11 [shape = 'u8[49152]{0}', space=vmem, size = 0xc000, scoped, tag = 'input window, operand 7, single buffered']
    #allocation12 [shape = 's32[1]{0}', space=sflag, size = 0x4, scoped, tag = 'scoped memory for convnext_vit_forward.3']
    #allocation13 [shape = 'u8[1024]{0}', space=vmem, size = 0x400, scoped, tag = 'output window, operand 0, single buffered']
    %13 = vsyncpa [#allocation3], 0
    %14 = vsyncpa [#allocation6], 0
    %15 = vsyncpa [#allocation9], 0
    %16 = vsyncpa [#allocation12], 0
    %17 = vsyncpa [#allocation4], 0
    // Predicated region
    $region2: #{convnext_vit_forward.3} parent=1 // pred_check
      _
    $region3: #{convnext_vit_forward.3} parent=1 // pred_check_branch
      %19 = sbr.rel (0) target = $region5
    $region4: #{convnext_vit_forward.3} parent=1 // pred_region
      _
    $region5: #{convnext_vit_forward.3} parent=1 // pred_fallthru
      _
    // Predicated region
    $region6: #{convnext_vit_forward.3} parent=1 // pred_check
      _
    $region7: #{convnext_vit_forward.3} parent=1 // pred_check_branch
      %21 = sbr.rel (0) target = $region9
    $region8: #{convnext_vit_forward.3} parent=1 // pred_region
      %s23 = ssub.s32 36864, 36864
      %24 = vsyncadd [#allocation3], %s23
      %s25 = sshll.u32 [#allocation2], 4
      %s26 = int_to_ptr.vmem [resolvable:$true] %s25
      %31 = dma.hbm_to_vmem [thread:$0]  %s1, 36864, %s26, [#allocation3], 384, 384, 24
    $region9: #{convnext_vit_forward.3} parent=1 // pred_fallthru
      _
    // Predicated region
    $region10: #{convnext_vit_forward.3} parent=1 // pred_check
      _
    $region11: #{convnext_vit_forward.3} parent=1 // pred_check_branch
      %33 = sbr.rel (0) target = $region13
    $region12: #{convnext_vit_forward.3} parent=1 // pred_region
      %s35 = ssub.s32 36864, 36864
      %36 = vsyncadd [#allocation6], %s35
      %s37 = sshll.u32 [#allocation5], 4
      %s38 = int_to_ptr.vmem [resolvable:$true] %s37
      %43 = dma.hbm_to_vmem [thread:$0]  %s2, 36864, %s38, [#allocation6], 384, 384, 24
    $region13: #{convnext_vit_forward.3} parent=1 // pred_fallthru
      _
    // Predicated region
    $region14: #{convnext_vit_forward.3} parent=1 // pred_check
      _
    $region15: #{convnext_vit_forward.3} parent=1 // pred_check_branch
      %45 = sbr.rel (0) target = $region17
    $region16: #{convnext_vit_forward.3} parent=1 // pred_region
      %s47 = ssub.s32 24576, 24576
      %48 = vsyncadd [#allocation6], %s47
      %s49 = sshll.u32 [#allocation7], 4
      %s50 = int_to_ptr.vmem [resolvable:$true] %s49
      %55 = dma.hbm_to_vmem [thread:$0]  %s3, 24576, %s50, [#allocation6], 256, 256, 16
    $region17: #{convnext_vit_forward.3} parent=1 // pred_fallthru
      _
    // Predicated region
    $region18: #{convnext_vit_forward.3} parent=1 // pred_check
      _
    $region19: #{convnext_vit_forward.3} parent=1 // pred_check_branch
      %57 = sbr.rel (0) target = $region21
    $region20: #{convnext_vit_forward.3} parent=1 // pred_region
      %s59 = ssub.s32 24576, 24576
      %60 = vsyncadd [#allocation9], %s59
      %s61 = sshll.u32 [#allocation8], 4
      %s62 = int_to_ptr.vmem [resolvable:$true] %s61
      %67 = dma.hbm_to_vmem [thread:$0]  %s4, 24576, %s62, [#allocation9], 384, 384, 24
    $region21: #{convnext_vit_forward.3} parent=1 // pred_fallthru
      _
    // Predicated region
    $region22: #{convnext_vit_forward.3} parent=1 // pred_check
      _
    $region23: #{convnext_vit_forward.3} parent=1 // pred_check_branch
      %69 = sbr.rel (0) target = $region25
    $region24: #{convnext_vit_forward.3} parent=1 // pred_region
      %s71 = ssub.s32 12288, 12288
      %72 = vsyncadd [#allocation9], %s71
      %s73 = sshll.u32 [#allocation10], 4
      %s74 = int_to_ptr.vmem [resolvable:$true] %s73
      %79 = dma.hbm_to_vmem [thread:$0]  %s5, 12288, %s74, [#allocation9], 128, 128, 8
    $region25: #{convnext_vit_forward.3} parent=1 // pred_fallthru
      _
    // Predicated region
    $region26: #{convnext_vit_forward.3} parent=1 // pred_check
      _
    $region27: #{convnext_vit_forward.3} parent=1 // pred_check_branch
      %81 = sbr.rel (0) target = $region29
    $region28: #{convnext_vit_forward.3} parent=1 // pred_region
      _
    $region29: #{convnext_vit_forward.3} parent=1 // pred_fallthru
      _
    // Predicated region
    $region30: #{convnext_vit_forward.3} parent=1 // pred_check
      _
    $region31: #{convnext_vit_forward.3} parent=1 // pred_check_branch
      %83 = sbr.rel (0) target = $region33
    $region32: #{convnext_vit_forward.3} parent=1 // pred_region
      %s85 = ssub.s32 1536, 1536
      %86 = vsyncadd [#allocation12], %s85
      %s87 = sshll.u32 [#allocation11], 4
      %s88 = int_to_ptr.vmem [resolvable:$true] %s87
      %93 = dma.hbm_to_vmem [thread:$0]  %s7, 1536, %s88, [#allocation12], 768, 768, 48
    $region33: #{convnext_vit_forward.3} parent=1 // pred_fallthru
      _
    // Predicated region
    $region34: #{convnext_vit_forward.3} parent=1 // pred_check
      _
    $region35: #{convnext_vit_forward.3} parent=1 // pred_check_branch
      %95 = sbr.rel (0) target = $region37
    $region36: #{convnext_vit_forward.3} parent=1 // pred_region
      %96 = dma.done [#allocation3], 36864
    $region37: #{convnext_vit_forward.3} parent=1 // pred_fallthru
      _
    // Predicated region
    $region38: #{convnext_vit_forward.3} parent=1 // pred_check
      _
    $region39: #{convnext_vit_forward.3} parent=1 // pred_check_branch
      %98 = sbr.rel (0) target = $region41
    $region40: #{convnext_vit_forward.3} parent=1 // pred_region
      %99 = dma.done [#allocation6], 36864
    $region41: #{convnext_vit_forward.3} parent=1 // pred_fallthru
      _
    // Predicated region
    $region42: #{convnext_vit_forward.3} parent=1 // pred_check
      _
    $region43: #{convnext_vit_forward.3} parent=1 // pred_check_branch
      %101 = sbr.rel (0) target = $region45
    $region44: #{convnext_vit_forward.3} parent=1 // pred_region
      %102 = dma.done [#allocation6], 24576
    $region45: #{convnext_vit_forward.3} parent=1 // pred_fallthru
      _
    // Predicated region
    $region46: #{convnext_vit_forward.3} parent=1 // pred_check
      _
    $region47: #{convnext_vit_forward.3} parent=1 // pred_check_branch
      %104 = sbr.rel (0) target = $region49
    $region48: #{convnext_vit_forward.3} parent=1 // pred_region
      %105 = dma.done [#allocation9], 24576
    $region49: #{convnext_vit_forward.3} parent=1 // pred_fallthru
      _
    // Predicated region
    $region50: #{convnext_vit_forward.3} parent=1 // pred_check
      _
    $region51: #{convnext_vit_forward.3} parent=1 // pred_check_branch
      %107 = sbr.rel (0) target = $region53
    $region52: #{convnext_vit_forward.3} parent=1 // pred_region
      %108 = dma.done [#allocation9], 12288
    $region53: #{convnext_vit_forward.3} parent=1 // pred_fallthru
      _
    // Predicated region
    $region54: #{convnext_vit_forward.3} parent=1 // pred_check
      _
    $region55: #{convnext_vit_forward.3} parent=1 // pred_check_branch
      %110 = sbr.rel (0) target = $region57
    $region56: #{convnext_vit_forward.3} parent=1 // pred_region
      %111 = dma.done [#allocation12], 1536
    $region57: #{convnext_vit_forward.3} parent=1 // pred_fallthru
      _
    %v113 = vld [vmem:[%s0] sm:$0x3f]
    %v114 = vld [vmem:[%s0 + $0x6] sm:$0x3f]
    %v115 = vld [vmem:[#allocation11] sm:$0xff]
    %v116 = vld [vmem:[#allocation11 + $0x8] sm:$0xff]
    %v117 = vld [vmem:[#allocation11 + $0x10] sm:$0xff]
    %v118 = vld [vmem:[#allocation11 + $0x18] sm:$0xff]
    %v119 = vld [vmem:[#allocation11 + $0x20] sm:$0xff]
    %v120 = vld [vmem:[#allocation11 + $0x28] sm:$0xff]
    %v121 = vld [vmem:[#allocation11 + $0x30] sm:$0xf]
    %v122 = vld [vmem:[#allocation11 + $0x38] sm:$0xf]
    %v123 = vld [vmem:[#allocation11 + $0x40] sm:$0xf]
    %v124 = vld [vmem:[#allocation11 + $0x48] sm:$0xf]
    %v125 = vld [vmem:[#allocation11 + $0x50] sm:$0xf]
    %v126 = vld [vmem:[#allocation11 + $0x58] sm:$0xf]
    %v129 = vlaneseq
    %v130 = vshrl.u32 %v129, 7
    %v131 = vsub.s32 0, %v130
    %v132 = vrot.slane %v113, %v131
    %v133 = vlaneseq
    %v134 = vshrl.u32 %v133, 7
    %v135 = vsub.s32 1, %v134
    %v136 = vrot.slane %v113, %v135
    %v137 = vlaneseq
    %v138 = vshrl.u32 %v137, 7
    %v139 = vsub.s32 2, %v138
    %v140 = vrot.slane %v113, %v139
    %v141 = vlaneseq
    %v142 = vshrl.u32 %v141, 7
    %v143 = vsub.s32 3, %v142
    %v144 = vrot.slane %v113, %v143
    %v145 = vlaneseq
    %v146 = vshrl.u32 %v145, 7
    %v147 = vsub.s32 4, %v146
    %v148 = vrot.slane %v113, %v147
    %v149 = vlaneseq
    %v150 = vshrl.u32 %v149, 7
    %v151 = vsub.s32 5, %v150
    %v152 = vrot.slane %v113, %v151
    %v153 = vlaneseq
    %v154 = vshrl.u32 %v153, 7
    %v155 = vsub.s32 0, %v154
    %v156 = vrot.slane %v114, %v155
    %v157 = vlaneseq
    %v158 = vshrl.u32 %v157, 7
    %v159 = vsub.s32 1, %v158
    %v160 = vrot.slane %v114, %v159
    %v161 = vlaneseq
    %v162 = vshrl.u32 %v161, 7
    %v163 = vsub.s32 2, %v162
    %v164 = vrot.slane %v114, %v163
    %v165 = vlaneseq
    %v166 = vshrl.u32 %v165, 7
    %v167 = vsub.s32 3, %v166
    %v168 = vrot.slane %v114, %v167
    %v169 = vlaneseq
    %v170 = vshrl.u32 %v169, 7
    %v171 = vsub.s32 4, %v170
    %v172 = vrot.slane %v114, %v171
    %v173 = vlaneseq
    %v174 = vshrl.u32 %v173, 7
    %v175 = vsub.s32 5, %v174
    %v176 = vrot.slane %v114, %v175
    %v189 = vpack.c.bf16 %v132, %v132
    %v190 = vpack.c.bf16 %v136, %v136
    %v191 = vpack.c.bf16 %v140, %v140
    %v192 = vpack.c.bf16 %v144, %v144
    %v193 = vpack.c.bf16 %v148, %v148
    %v194 = vpack.c.bf16 %v152, %v152
    %v195 = vpack.c.bf16 %v156, %v156
    %v196 = vpack.c.bf16 %v160, %v160
    %v197 = vpack.c.bf16 %v164, %v164
    %v198 = vpack.c.bf16 %v168, %v168
    %v199 = vpack.c.bf16 %v172, %v172
    %v200 = vpack.c.bf16 %v176, %v176
    %v201 = vld [vmem:[#allocation2] sm:$0xff]
    %v202 = vld [vmem:[#allocation2 + $0x8] sm:$0xff]
    %v203 = vld [vmem:[#allocation2 + $0x10] sm:$0xff]
    %v204 = vld [vmem:[#allocation2 + $0x18] sm:$0xff]
    %v205 = vld [vmem:[#allocation2 + $0x20] sm:$0xff]
    %v206 = vld [vmem:[#allocation2 + $0x28] sm:$0xff]
    %v207 = vld [vmem:[#allocation2 + $0x30] sm:$0xff]
    %v208 = vld [vmem:[#allocation2 + $0x38] sm:$0xff]
    %v209 = vld [vmem:[#allocation2 + $0x40] sm:$0xff]
    %v210 = vld [vmem:[#allocation2 + $0x48] sm:$0xff]
    %v211 = vld [vmem:[#allocation2 + $0x50] sm:$0xff]
    %v212 = vld [vmem:[#allocation2 + $0x58] sm:$0xff]
    %v213 = vld [vmem:[#allocation2 + $0x60] sm:$0xff]
    %v214 = vld [vmem:[#allocation2 + $0x68] sm:$0xff]
    %v215 = vld [vmem:[#allocation2 + $0x70] sm:$0xff]
    %v216 = vld [vmem:[#allocation2 + $0x78] sm:$0xff]
    %v217 = vld [vmem:[#allocation2 + $0x80] sm:$0xff]
    %v218 = vld [vmem:[#allocation2 + $0x88] sm:$0xff]
    %v219 = vld [vmem:[#allocation2 + $0x90] sm:$0xff]
    %v220 = vld [vmem:[#allocation2 + $0x98] sm:$0xff]
    %v221 = vld [vmem:[#allocation2 + $0xa0] sm:$0xff]
    %v222 = vld [vmem:[#allocation2 + $0xa8] sm:$0xff]
    %v223 = vld [vmem:[#allocation2 + $0xb0] sm:$0xff]
    %v224 = vld [vmem:[#allocation2 + $0xb8] sm:$0xff]
    %v225 = vld [vmem:[#allocation2 + $0xc0] sm:$0xff]
    %v226 = vld [vmem:[#allocation2 + $0xc8] sm:$0xff]
    %v227 = vld [vmem:[#allocation2 + $0xd0] sm:$0xff]
    %v228 = vld [vmem:[#allocation2 + $0xd8] sm:$0xff]
    %v229 = vld [vmem:[#allocation2 + $0xe0] sm:$0xff]
    %v230 = vld [vmem:[#allocation2 + $0xe8] sm:$0xff]
    %v231 = vld [vmem:[#allocation2 + $0xf0] sm:$0xff]
    %v232 = vld [vmem:[#allocation2 + $0xf8] sm:$0xff]
    %v233 = vld [vmem:[#allocation2 + $0x100] sm:$0xff]
    %v234 = vld [vmem:[#allocation2 + $0x108] sm:$0xff]
    %v235 = vld [vmem:[#allocation2 + $0x110] sm:$0xff]
    %v236 = vld [vmem:[#allocation2 + $0x118] sm:$0xff]
    %v237 = vld [vmem:[#allocation2 + $0x120] sm:$0xff]
    %v238 = vld [vmem:[#allocation2 + $0x128] sm:$0xff]
    %v239 = vld [vmem:[#allocation2 + $0x130] sm:$0xff]
    %v240 = vld [vmem:[#allocation2 + $0x138] sm:$0xff]
    %v241 = vld [vmem:[#allocation2 + $0x140] sm:$0xff]
    %v242 = vld [vmem:[#allocation2 + $0x148] sm:$0xff]
    %v243 = vld [vmem:[#allocation2 + $0x150] sm:$0xff]
    %v244 = vld [vmem:[#allocation2 + $0x158] sm:$0xff]
    %v245 = vld [vmem:[#allocation2 + $0x160] sm:$0xff]
    %v246 = vld [vmem:[#allocation2 + $0x168] sm:$0xff]
    %v247 = vld [vmem:[#allocation2 + $0x170] sm:$0xff]
    %v248 = vld [vmem:[#allocation2 + $0x178] sm:$0xff]
    %v249 = vld [vmem:[#allocation2 + $0x180] sm:$0xff]
    %v250 = vld [vmem:[#allocation2 + $0x188] sm:$0xff]
    %v251 = vld [vmem:[#allocation2 + $0x190] sm:$0xff]
    %v252 = vld [vmem:[#allocation2 + $0x198] sm:$0xff]
    %v253 = vld [vmem:[#allocation2 + $0x1a0] sm:$0xff]
    %v254 = vld [vmem:[#allocation2 + $0x1a8] sm:$0xff]
    %v255 = vld [vmem:[#allocation2 + $0x1b0] sm:$0xff]
    %v256 = vld [vmem:[#allocation2 + $0x1b8] sm:$0xff]
    %v257 = vld [vmem:[#allocation2 + $0x1c0] sm:$0xff]
    %v258 = vld [vmem:[#allocation2 + $0x1c8] sm:$0xff]
    %v259 = vld [vmem:[#allocation2 + $0x1d0] sm:$0xff]
    %v260 = vld [vmem:[#allocation2 + $0x1d8] sm:$0xff]
    %v261 = vld [vmem:[#allocation2 + $0x1e0] sm:$0xff]
    %v262 = vld [vmem:[#allocation2 + $0x1e8] sm:$0xff]
    %v263 = vld [vmem:[#allocation2 + $0x1f0] sm:$0xff]
    %v264 = vld [vmem:[#allocation2 + $0x1f8] sm:$0xff]
    %v265 = vld [vmem:[#allocation2 + $0x200] sm:$0xff]
    %v266 = vld [vmem:[#allocation2 + $0x208] sm:$0xff]
    %v267 = vld [vmem:[#allocation2 + $0x210] sm:$0xff]
    %v268 = vld [vmem:[#allocation2 + $0x218] sm:$0xff]
    %v269 = vld [vmem:[#allocation2 + $0x220] sm:$0xff]
    %v270 = vld [vmem:[#allocation2 + $0x228] sm:$0xff]
    %v271 = vld [vmem:[#allocation2 + $0x230] sm:$0xff]
    %v272 = vld [vmem:[#allocation2 + $0x238] sm:$0xff]
    %v273 = vld [vmem:[#allocation2 + $0x240] sm:$0xff]
    %v274 = vld [vmem:[#allocation2 + $0x248] sm:$0xff]
    %v275 = vld [vmem:[#allocation2 + $0x250] sm:$0xff]
    %v276 = vld [vmem:[#allocation2 + $0x258] sm:$0xff]
    %v277 = vld [vmem:[#allocation2 + $0x260] sm:$0xff]
    %v278 = vld [vmem:[#allocation2 + $0x268] sm:$0xff]
    %v279 = vld [vmem:[#allocation2 + $0x270] sm:$0xff]
    %v280 = vld [vmem:[#allocation2 + $0x278] sm:$0xff]
    %v281 = vld [vmem:[#allocation2 + $0x280] sm:$0xff]
    %v282 = vld [vmem:[#allocation2 + $0x288] sm:$0xff]
    %v283 = vld [vmem:[#allocation2 + $0x290] sm:$0xff]
    %v284 = vld [vmem:[#allocation2 + $0x298] sm:$0xff]
    %v285 = vld [vmem:[#allocation2 + $0x2a0] sm:$0xff]
    %v286 = vld [vmem:[#allocation2 + $0x2a8] sm:$0xff]
    %v287 = vld [vmem:[#allocation2 + $0x2b0] sm:$0xff]
    %v288 = vld [vmem:[#allocation2 + $0x2b8] sm:$0xff]
    %v289 = vld [vmem:[#allocation2 + $0x2c0] sm:$0xff]
    %v290 = vld [vmem:[#allocation2 + $0x2c8] sm:$0xff]
    %v291 = vld [vmem:[#allocation2 + $0x2d0] sm:$0xff]
    %v292 = vld [vmem:[#allocation2 + $0x2d8] sm:$0xff]
    %v293 = vld [vmem:[#allocation2 + $0x2e0] sm:$0xff]
    %v294 = vld [vmem:[#allocation2 + $0x2e8] sm:$0xff]
    %v295 = vld [vmem:[#allocation2 + $0x2f0] sm:$0xff]
    %v296 = vld [vmem:[#allocation2 + $0x2f8] sm:$0xff]
    %v297 = vld [vmem:[#allocation2 + $0x300] sm:$0xff]
    %v298 = vld [vmem:[#allocation2 + $0x308] sm:$0xff]
    %v299 = vld [vmem:[#allocation2 + $0x310] sm:$0xff]
    %v300 = vld [vmem:[#allocation2 + $0x318] sm:$0xff]
    %v301 = vld [vmem:[#allocation2 + $0x320] sm:$0xff]
    %v302 = vld [vmem:[#allocation2 + $0x328] sm:$0xff]
    %v303 = vld [vmem:[#allocation2 + $0x330] sm:$0xff]
    %v304 = vld [vmem:[#allocation2 + $0x338] sm:$0xff]
    %v305 = vld [vmem:[#allocation2 + $0x340] sm:$0xff]
    %v306 = vld [vmem:[#allocation2 + $0x348] sm:$0xff]
    %v307 = vld [vmem:[#allocation2 + $0x350] sm:$0xff]
    %v308 = vld [vmem:[#allocation2 + $0x358] sm:$0xff]
    %v309 = vld [vmem:[#allocation2 + $0x360] sm:$0xff]
    %v310 = vld [vmem:[#allocation2 + $0x368] sm:$0xff]
    %v311 = vld [vmem:[#allocation2 + $0x370] sm:$0xff]
    %v312 = vld [vmem:[#allocation2 + $0x378] sm:$0xff]
    %v313 = vld [vmem:[#allocation2 + $0x380] sm:$0xff]
    %v314 = vld [vmem:[#allocation2 + $0x388] sm:$0xff]
    %v315 = vld [vmem:[#allocation2 + $0x390] sm:$0xff]
    %v316 = vld [vmem:[#allocation2 + $0x398] sm:$0xff]
    %v317 = vld [vmem:[#allocation2 + $0x3a0] sm:$0xff]
    %v318 = vld [vmem:[#allocation2 + $0x3a8] sm:$0xff]
    %v319 = vld [vmem:[#allocation2 + $0x3b0] sm:$0xff]
    %v320 = vld [vmem:[#allocation2 + $0x3b8] sm:$0xff]
    %v321 = vld [vmem:[#allocation2 + $0x3c0] sm:$0xff]
    %v322 = vld [vmem:[#allocation2 + $0x3c8] sm:$0xff]
    %v323 = vld [vmem:[#allocation2 + $0x3d0] sm:$0xff]
    %v324 = vld [vmem:[#allocation2 + $0x3d8] sm:$0xff]
    %v325 = vld [vmem:[#allocation2 + $0x3e0] sm:$0xff]
    %v326 = vld [vmem:[#allocation2 + $0x3e8] sm:$0xff]
    %v327 = vld [vmem:[#allocation2 + $0x3f0] sm:$0xff]
    %v328 = vld [vmem:[#allocation2 + $0x3f8] sm:$0xff]
    %v329 = vld [vmem:[#allocation2 + $0x400] sm:$0xff]
    %v330 = vld [vmem:[#allocation2 + $0x408] sm:$0xff]
    %v331 = vld [vmem:[#allocation2 + $0x410] sm:$0xff]
    %v332 = vld [vmem:[#allocation2 + $0x418] sm:$0xff]
    %v333 = vld [vmem:[#allocation2 + $0x420] sm:$0xff]
    %v334 = vld [vmem:[#allocation2 + $0x428] sm:$0xff]
    %v335 = vld [vmem:[#allocation2 + $0x430] sm:$0xff]
    %v336 = vld [vmem:[#allocation2 + $0x438] sm:$0xff]
    %v337 = vld [vmem:[#allocation2 + $0x440] sm:$0xff]
    %v338 = vld [vmem:[#allocation2 + $0x448] sm:$0xff]
    %v339 = vld [vmem:[#allocation2 + $0x450] sm:$0xff]
    %v340 = vld [vmem:[#allocation2 + $0x458] sm:$0xff]
    %v341 = vld [vmem:[#allocation2 + $0x460] sm:$0xff]
    %v342 = vld [vmem:[#allocation2 + $0x468] sm:$0xff]
    %v343 = vld [vmem:[#allocation2 + $0x470] sm:$0xff]
    %v344 = vld [vmem:[#allocation2 + $0x478] sm:$0xff]
    %v345 = vld [vmem:[#allocation2 + $0x480] sm:$0xff]
    %v346 = vld [vmem:[#allocation2 + $0x488] sm:$0xff]
    %v347 = vld [vmem:[#allocation2 + $0x490] sm:$0xff]
    %v348 = vld [vmem:[#allocation2 + $0x498] sm:$0xff]
    %v349 = vld [vmem:[#allocation2 + $0x4a0] sm:$0xff]
    %v350 = vld [vmem:[#allocation2 + $0x4a8] sm:$0xff]
    %v351 = vld [vmem:[#allocation2 + $0x4b0] sm:$0xff]
    %v352 = vld [vmem:[#allocation2 + $0x4b8] sm:$0xff]
    %v353 = vld [vmem:[#allocation2 + $0x4c0] sm:$0xff]
    %v354 = vld [vmem:[#allocation2 + $0x4c8] sm:$0xff]
    %v355 = vld [vmem:[#allocation2 + $0x4d0] sm:$0xff]
    %v356 = vld [vmem:[#allocation2 + $0x4d8] sm:$0xff]
    %v357 = vld [vmem:[#allocation2 + $0x4e0] sm:$0xff]
    %v358 = vld [vmem:[#allocation2 + $0x4e8] sm:$0xff]
    %v359 = vld [vmem:[#allocation2 + $0x4f0] sm:$0xff]
    %v360 = vld [vmem:[#allocation2 + $0x4f8] sm:$0xff]
    %v361 = vld [vmem:[#allocation2 + $0x500] sm:$0xff]
    %v362 = vld [vmem:[#allocation2 + $0x508] sm:$0xff]
    %v363 = vld [vmem:[#allocation2 + $0x510] sm:$0xff]
    %v364 = vld [vmem:[#allocation2 + $0x518] sm:$0xff]
    %v365 = vld [vmem:[#allocation2 + $0x520] sm:$0xff]
    %v366 = vld [vmem:[#allocation2 + $0x528] sm:$0xff]
    %v367 = vld [vmem:[#allocation2 + $0x530] sm:$0xff]
    %v368 = vld [vmem:[#allocation2 + $0x538] sm:$0xff]
    %v369 = vld [vmem:[#allocation2 + $0x540] sm:$0xff]
    %v370 = vld [vmem:[#allocation2 + $0x548] sm:$0xff]
    %v371 = vld [vmem:[#allocation2 + $0x550] sm:$0xff]
    %v372 = vld [vmem:[#allocation2 + $0x558] sm:$0xff]
    %v373 = vld [vmem:[#allocation2 + $0x560] sm:$0xff]
    %v374 = vld [vmem:[#allocation2 + $0x568] sm:$0xff]
    %v375 = vld [vmem:[#allocation2 + $0x570] sm:$0xff]
    %v376 = vld [vmem:[#allocation2 + $0x578] sm:$0xff]
    %v377 = vld [vmem:[#allocation2 + $0x580] sm:$0xff]
    %v378 = vld [vmem:[#allocation2 + $0x588] sm:$0xff]
    %v379 = vld [vmem:[#allocation2 + $0x590] sm:$0xff]
    %v380 = vld [vmem:[#allocation2 + $0x598] sm:$0xff]
    %v381 = vld [vmem:[#allocation2 + $0x5a0] sm:$0xff]
    %v382 = vld [vmem:[#allocation2 + $0x5a8] sm:$0xff]
    %v383 = vld [vmem:[#allocation2 + $0x5b0] sm:$0xff]
    %v384 = vld [vmem:[#allocation2 + $0x5b8] sm:$0xff]
    %v385 = vld [vmem:[#allocation2 + $0x5c0] sm:$0xff]
    %v386 = vld [vmem:[#allocation2 + $0x5c8] sm:$0xff]
    %v387 = vld [vmem:[#allocation2 + $0x5d0] sm:$0xff]
    %v388 = vld [vmem:[#allocation2 + $0x5d8] sm:$0xff]
    %v389 = vld [vmem:[#allocation2 + $0x5e0] sm:$0xff]
    %v390 = vld [vmem:[#allocation2 + $0x5e8] sm:$0xff]
    %v391 = vld [vmem:[#allocation2 + $0x5f0] sm:$0xff]
    %v392 = vld [vmem:[#allocation2 + $0x5f8] sm:$0xff]
    %v393 = vld [vmem:[#allocation2 + $0x600] sm:$0xff]
    %v394 = vld [vmem:[#allocation2 + $0x608] sm:$0xff]
    %v395 = vld [vmem:[#allocation2 + $0x610] sm:$0xff]
    %v396 = vld [vmem:[#allocation2 + $0x618] sm:$0xff]
    %v397 = vld [vmem:[#allocation2 + $0x620] sm:$0xff]
    %v398 = vld [vmem:[#allocation2 + $0x628] sm:$0xff]
    %v399 = vld [vmem:[#allocation2 + $0x630] sm:$0xff]
    %v400 = vld [vmem:[#allocation2 + $0x638] sm:$0xff]
    %v401 = vld [vmem:[#allocation2 + $0x640] sm:$0xff]
    %v402 = vld [vmem:[#allocation2 + $0x648] sm:$0xff]
    %v403 = vld [vmem:[#allocation2 + $0x650] sm:$0xff]
    %v404 = vld [vmem:[#allocation2 + $0x658] sm:$0xff]
    %v405 = vld [vmem:[#allocation2 + $0x660] sm:$0xff]
    %v406 = vld [vmem:[#allocation2 + $0x668] sm:$0xff]
    %v407 = vld [vmem:[#allocation2 + $0x670] sm:$0xff]
    %v408 = vld [vmem:[#allocation2 + $0x678] sm:$0xff]
    %v409 = vld [vmem:[#allocation2 + $0x680] sm:$0xff]
    %v410 = vld [vmem:[#allocation2 + $0x688] sm:$0xff]
    %v411 = vld [vmem:[#allocation2 + $0x690] sm:$0xff]
    %v412 = vld [vmem:[#allocation2 + $0x698] sm:$0xff]
    %v413 = vld [vmem:[#allocation2 + $0x6a0] sm:$0xff]
    %v414 = vld [vmem:[#allocation2 + $0x6a8] sm:$0xff]
    %v415 = vld [vmem:[#allocation2 + $0x6b0] sm:$0xff]
    %v416 = vld [vmem:[#allocation2 + $0x6b8] sm:$0xff]
    %v417 = vld [vmem:[#allocation2 + $0x6c0] sm:$0xff]
    %v418 = vld [vmem:[#allocation2 + $0x6c8] sm:$0xff]
    %v419 = vld [vmem:[#allocation2 + $0x6d0] sm:$0xff]
    %v420 = vld [vmem:[#allocation2 + $0x6d8] sm:$0xff]
    %v421 = vld [vmem:[#allocation2 + $0x6e0] sm:$0xff]
    %v422 = vld [vmem:[#allocation2 + $0x6e8] sm:$0xff]
    %v423 = vld [vmem:[#allocation2 + $0x6f0] sm:$0xff]
    %v424 = vld [vmem:[#allocation2 + $0x6f8] sm:$0xff]
    %v425 = vld [vmem:[#allocation2 + $0x700] sm:$0xff]
    %v426 = vld [vmem:[#allocation2 + $0x708] sm:$0xff]
    %v427 = vld [vmem:[#allocation2 + $0x710] sm:$0xff]
    %v428 = vld [vmem:[#allocation2 + $0x718] sm:$0xff]
    %v429 = vld [vmem:[#allocation2 + $0x720] sm:$0xff]
    %v430 = vld [vmem:[#allocation2 + $0x728] sm:$0xff]
    %v431 = vld [vmem:[#allocation2 + $0x730] sm:$0xff]
    %v432 = vld [vmem:[#allocation2 + $0x738] sm:$0xff]
    %v433 = vld [vmem:[#allocation2 + $0x740] sm:$0xff]
    %v434 = vld [vmem:[#allocation2 + $0x748] sm:$0xff]
    %v435 = vld [vmem:[#allocation2 + $0x750] sm:$0xff]
    %v436 = vld [vmem:[#allocation2 + $0x758] sm:$0xff]
    %v437 = vld [vmem:[#allocation2 + $0x760] sm:$0xff]
    %v438 = vld [vmem:[#allocation2 + $0x768] sm:$0xff]
    %v439 = vld [vmem:[#allocation2 + $0x770] sm:$0xff]
    %v440 = vld [vmem:[#allocation2 + $0x778] sm:$0xff]
    %v441 = vld [vmem:[#allocation2 + $0x780] sm:$0xff]
    %v442 = vld [vmem:[#allocation2 + $0x788] sm:$0xff]
    %v443 = vld [vmem:[#allocation2 + $0x790] sm:$0xff]
    %v444 = vld [vmem:[#allocation2 + $0x798] sm:$0xff]
    %v445 = vld [vmem:[#allocation2 + $0x7a0] sm:$0xff]
    %v446 = vld [vmem:[#allocation2 + $0x7a8] sm:$0xff]
    %v447 = vld [vmem:[#allocation2 + $0x7b0] sm:$0xff]
    %v448 = vld [vmem:[#allocation2 + $0x7b8] sm:$0xff]
    %v449 = vld [vmem:[#allocation2 + $0x7c0] sm:$0xff]
    %v450 = vld [vmem:[#allocation2 + $0x7c8] sm:$0xff]
    %v451 = vld [vmem:[#allocation2 + $0x7d0] sm:$0xff]
    %v452 = vld [vmem:[#allocation2 + $0x7d8] sm:$0xff]
    %v453 = vld [vmem:[#allocation2 + $0x7e0] sm:$0xff]
    %v454 = vld [vmem:[#allocation2 + $0x7e8] sm:$0xff]
    %v455 = vld [vmem:[#allocation2 + $0x7f0] sm:$0xff]
    %v456 = vld [vmem:[#allocation2 + $0x7f8] sm:$0xff]
    %v457 = vld [vmem:[#allocation2 + $0x800] sm:$0xff]
    %v458 = vld [vmem:[#allocation2 + $0x808] sm:$0xff]
    %v459 = vld [vmem:[#allocation2 + $0x810] sm:$0xff]
    %v460 = vld [vmem:[#allocation2 + $0x818] sm:$0xff]
    %v461 = vld [vmem:[#allocation2 + $0x820] sm:$0xff]
    %v462 = vld [vmem:[#allocation2 + $0x828] sm:$0xff]
    %v463 = vld [vmem:[#allocation2 + $0x830] sm:$0xff]
    %v464 = vld [vmem:[#allocation2 + $0x838] sm:$0xff]
    %v465 = vld [vmem:[#allocation2 + $0x840] sm:$0xff]
    %v466 = vld [vmem:[#allocation2 + $0x848] sm:$0xff]
    %v467 = vld [vmem:[#allocation2 + $0x850] sm:$0xff]
    %v468 = vld [vmem:[#allocation2 + $0x858] sm:$0xff]
    %v469 = vld [vmem:[#allocation2 + $0x860] sm:$0xff]
    %v470 = vld [vmem:[#allocation2 + $0x868] sm:$0xff]
    %v471 = vld [vmem:[#allocation2 + $0x870] sm:$0xff]
    %v472 = vld [vmem:[#allocation2 + $0x878] sm:$0xff]
    %v473 = vld [vmem:[#allocation2 + $0x880] sm:$0xff]
    %v474 = vld [vmem:[#allocation2 + $0x888] sm:$0xff]
    %v475 = vld [vmem:[#allocation2 + $0x890] sm:$0xff]
    %v476 = vld [vmem:[#allocation2 + $0x898] sm:$0xff]
    %v477 = vld [vmem:[#allocation2 + $0x8a0] sm:$0xff]
    %v478 = vld [vmem:[#allocation2 + $0x8a8] sm:$0xff]
    %v479 = vld [vmem:[#allocation2 + $0x8b0] sm:$0xff]
    %v480 = vld [vmem:[#allocation2 + $0x8b8] sm:$0xff]
    %v481 = vld [vmem:[#allocation2 + $0x8c0] sm:$0xff]
    %v482 = vld [vmem:[#allocation2 + $0x8c8] sm:$0xff]
    %v483 = vld [vmem:[#allocation2 + $0x8d0] sm:$0xff]
    %v484 = vld [vmem:[#allocation2 + $0x8d8] sm:$0xff]
    %v485 = vld [vmem:[#allocation2 + $0x8e0] sm:$0xff]
    %v486 = vld [vmem:[#allocation2 + $0x8e8] sm:$0xff]
    %v487 = vld [vmem:[#allocation2 + $0x8f0] sm:$0xff]
    %v488 = vld [vmem:[#allocation2 + $0x8f8] sm:$0xff]
    %v489 = vlaneseq
    %v490 = vshrl.u32 %v489, 7
    %v491 = vsub.s32 0, %v490
    %v492 = vrot.slane %v115, %v491
    %v493 = vlaneseq
    %v494 = vshrl.u32 %v493, 7
    %v495 = vsub.s32 0, %v494
    %v496 = vrot.slane %v116, %v495
    %v497 = vlaneseq
    %v498 = vshrl.u32 %v497, 7
    %v499 = vsub.s32 0, %v498
    %v500 = vrot.slane %v117, %v499
    %v501 = vlaneseq
    %v502 = vshrl.u32 %v501, 7
    %v503 = vsub.s32 0, %v502
    %v504 = vrot.slane %v118, %v503
    %v505 = vlaneseq
    %v506 = vshrl.u32 %v505, 7
    %v507 = vsub.s32 0, %v506
    %v508 = vrot.slane %v119, %v507
    %v509 = vlaneseq
    %v510 = vshrl.u32 %v509, 7
    %v511 = vsub.s32 0, %v510
    %v512 = vrot.slane %v120, %v511
    %v525 = vunpack.c.l.b16 %v189
    %v526 = vunpack.c.l.b16 %v190
    %v527 = vunpack.c.l.b16 %v191
    %v528 = vunpack.c.l.b16 %v192
    %v529 = vunpack.c.l.b16 %v193
    %v530 = vunpack.c.l.b16 %v194
    %v531 = vunpack.c.l.b16 %v195
    %v532 = vunpack.c.l.b16 %v196
    %v533 = vunpack.c.l.b16 %v197
    %v534 = vunpack.c.l.b16 %v198
    %v535 = vunpack.c.l.b16 %v199
    %v536 = vunpack.c.l.b16 %v200
    %v537 = vrot.slane %v531, 7
    %vm538 = vcmask 1041409
    %v539 = vsel %vm538, %v537, %v525
    %v540 = vrot.slane %v532, 7
    %v541 = vsel %vm538, %v540, %v526
    %v542 = vrot.slane %v533, 7
    %v543 = vsel %vm538, %v542, %v527
    %v544 = vrot.slane %v534, 7
    %v545 = vsel %vm538, %v544, %v528
    %v546 = vrot.slane %v535, 7
    %v547 = vsel %vm538, %v546, %v529
    %v548 = vrot.slane %v536, 7
    %v549 = vsel %vm538, %v548, %v530
    %v550 = vpack.c.b16 %v539, %v539
    %v551 = vpack.c.b16 %v541, %v541
    %v552 = vpack.c.b16 %v543, %v543
    %v553 = vpack.c.b16 %v545, %v545
    %v554 = vpack.c.b16 %v547, %v547
    %v555 = vpack.c.b16 %v549, %v549
    %v850 = vunpack.c.l.b16 %v201
    %v851 = vunpack.c.h.b16 %v201
    %v852 = vunpack.c.l.b16 %v202
    %v853 = vunpack.c.h.b16 %v202
    %v854 = vunpack.c.l.b16 %v203
    %v855 = vunpack.c.h.b16 %v203
    %v856 = vunpack.c.l.b16 %v204
    %v857 = vunpack.c.h.b16 %v204
    %v858 = vunpack.c.l.b16 %v205
    %v859 = vunpack.c.h.b16 %v205
    %v860 = vunpack.c.l.b16 %v206
    %v861 = vunpack.c.h.b16 %v206
    %v862 = vunpack.c.l.b16 %v207
    %v863 = vunpack.c.h.b16 %v207
    %v864 = vunpack.c.l.b16 %v208
    %v865 = vunpack.c.h.b16 %v208
    %v866 = vunpack.c.l.b16 %v209
    %v867 = vunpack.c.h.b16 %v209
    %v868 = vunpack.c.l.b16 %v210
    %v869 = vunpack.c.h.b16 %v210
    %v870 = vunpack.c.l.b16 %v211
    %v871 = vunpack.c.h.b16 %v211
    %v872 = vunpack.c.l.b16 %v212
    %v873 = vunpack.c.h.b16 %v212
    %v874 = vunpack.c.l.b16 %v213
    %v875 = vunpack.c.h.b16 %v213
    %v876 = vunpack.c.l.b16 %v214
    %v877 = vunpack.c.h.b16 %v214
    %v878 = vunpack.c.l.b16 %v215
    %v879 = vunpack.c.h.b16 %v215
    %v880 = vunpack.c.l.b16 %v216
    %v881 = vunpack.c.h.b16 %v216
    %v882 = vunpack.c.l.b16 %v217
    %v883 = vunpack.c.h.b16 %v217
    %v884 = vunpack.c.l.b16 %v218
    %v885 = vunpack.c.h.b16 %v218
    %v886 = vunpack.c.l.b16 %v219
    %v887 = vunpack.c.h.b16 %v219
    %v888 = vunpack.c.l.b16 %v220
    %v889 = vunpack.c.h.b16 %v220
    %v890 = vunpack.c.l.b16 %v221
    %v891 = vunpack.c.h.b16 %v221
    %v892 = vunpack.c.l.b16 %v222
    %v893 = vunpack.c.h.b16 %v222
    %v894 = vunpack.c.l.b16 %v223
    %v895 = vunpack.c.h.b16 %v223
    %v896 = vunpack.c.l.b16 %v224
    %v897 = vunpack.c.h.b16 %v224
    %v898 = vunpack.c.l.b16 %v225
    %v899 = vunpack.c.h.b16 %v225
    %v900 = vunpack.c.l.b16 %v226
    %v901 = vunpack.c.h.b16 %v226
    %v902 = vunpack.c.l.b16 %v227
    %v903 = vunpack.c.h.b16 %v227
    %v904 = vunpack.c.l.b16 %v228
    %v905 = vunpack.c.h.b16 %v228
    %v906 = vunpack.c.l.b16 %v229
    %v907 = vunpack.c.h.b16 %v229
    %v908 = vunpack.c.l.b16 %v230
    %v909 = vunpack.c.h.b16 %v230
    %v910 = vunpack.c.l.b16 %v231
    %v911 = vunpack.c.h.b16 %v231
    %v912 = vunpack.c.l.b16 %v232
    %v913 = vunpack.c.h.b16 %v232
    %v914 = vunpack.c.l.b16 %v233
    %v915 = vunpack.c.h.b16 %v233
    %v916 = vunpack.c.l.b16 %v234
    %v917 = vunpack.c.h.b16 %v234
    %v918 = vunpack.c.l.b16 %v235
    %v919 = vunpack.c.h.b16 %v235
    %v920 = vunpack.c.l.b16 %v236
    %v921 = vunpack.c.h.b16 %v236
    %v922 = vunpack.c.l.b16 %v237
    %v923 = vunpack.c.h.b16 %v237
    %v924 = vunpack.c.l.b16 %v238
    %v925 = vunpack.c.h.b16 %v238
    %v926 = vunpack.c.l.b16 %v239
    %v927 = vunpack.c.h.b16 %v239
    %v928 = vunpack.c.l.b16 %v240
    %v929 = vunpack.c.h.b16 %v240
    %v930 = vunpack.c.l.b16 %v241
    %v931 = vunpack.c.h.b16 %v241
    %v932 = vunpack.c.l.b16 %v242
    %v933 = vunpack.c.h.b16 %v242
    %v934 = vunpack.c.l.b16 %v243
    %v935 = vunpack.c.h.b16 %v243
    %v936 = vunpack.c.l.b16 %v244
    %v937 = vunpack.c.h.b16 %v244
    %v938 = vunpack.c.l.b16 %v245
    %v939 = vunpack.c.h.b16 %v245
    %v940 = vunpack.c.l.b16 %v246
    %v941 = vunpack.c.h.b16 %v246
    %v942 = vunpack.c.l.b16 %v247
    %v943 = vunpack.c.h.b16 %v247
    %v944 = vunpack.c.l.b16 %v248
    %v945 = vunpack.c.h.b16 %v248
    %v946 = vunpack.c.l.b16 %v249
    %v947 = vunpack.c.h.b16 %v249
    %v948 = vunpack.c.l.b16 %v250
    %v949 = vunpack.c.h.b16 %v250
    %v950 = vunpack.c.l.b16 %v251
    %v951 = vunpack.c.h.b16 %v251
    %v952 = vunpack.c.l.b16 %v252
    %v953 = vunpack.c.h.b16 %v252
    %v954 = vunpack.c.l.b16 %v253
    %v955 = vunpack.c.h.b16 %v253
    %v956 = vunpack.c.l.b16 %v254
    %v957 = vunpack.c.h.b16 %v254
    %v958 = vunpack.c.l.b16 %v255
    %v959 = vunpack.c.h.b16 %v255
    %v960 = vunpack.c.l.b16 %v256
    %v961 = vunpack.c.h.b16 %v256
    %v962 = vunpack.c.l.b16 %v257
    %v963 = vunpack.c.h.b16 %v257
    %v964 = vunpack.c.l.b16 %v258
    %v965 = vunpack.c.h.b16 %v258
    %v966 = vunpack.c.l.b16 %v259
    %v967 = vunpack.c.h.b16 %v259
    %v968 = vunpack.c.l.b16 %v260
    %v969 = vunpack.c.h.b16 %v260
    %v970 = vunpack.c.l.b16 %v261
    %v971 = vunpack.c.h.b16 %v261
    %v972 = vunpack.c.l.b16 %v262
    %v973 = vunpack.c.h.b16 %v262
    %v974 = vunpack.c.l.b16 %v263
    %v975 = vunpack.c.h.b16 %v263
    %v976 = vunpack.c.l.b16 %v264
    %v977 = vunpack.c.h.b16 %v264
    %v978 = vunpack.c.l.b16 %v265
    %v979 = vunpack.c.h.b16 %v265
    %v980 = vunpack.c.l.b16 %v266
    %v981 = vunpack.c.h.b16 %v266
    %v982 = vunpack.c.l.b16 %v267
    %v983 = vunpack.c.h.b16 %v267
    %v984 = vunpack.c.l.b16 %v268
    %v985 = vunpack.c.h.b16 %v268
    %v986 = vunpack.c.l.b16 %v269
    %v987 = vunpack.c.h.b16 %v269
    %v988 = vunpack.c.l.b16 %v270
    %v989 = vunpack.c.h.b16 %v270
    %v990 = vunpack.c.l.b16 %v271
    %v991 = vunpack.c.h.b16 %v271
    %v992 = vunpack.c.l.b16 %v272
    %v993 = vunpack.c.h.b16 %v272
    %v994 = vunpack.c.l.b16 %v273
    %v995 = vunpack.c.h.b16 %v273
    %v996 = vunpack.c.l.b16 %v274
    %v997 = vunpack.c.h.b16 %v274
    %v998 = vunpack.c.l.b16 %v275
    %v999 = vunpack.c.h.b16 %v275
    %v1000 = vunpack.c.l.b16 %v276
    %v1001 = vunpack.c.h.b16 %v276
    %v1002 = vunpack.c.l.b16 %v277
    %v1003 = vunpack.c.h.b16 %v277
    %v1004 = vunpack.c.l.b16 %v278
    %v1005 = vunpack.c.h.b16 %v278
    %v1006 = vunpack.c.l.b16 %v279
    %v1007 = vunpack.c.h.b16 %v279
    %v1008 = vunpack.c.l.b16 %v280
    %v1009 = vunpack.c.h.b16 %v280
    %v1010 = vunpack.c.l.b16 %v281
    %v1011 = vunpack.c.h.b16 %v281
    %v1012 = vunpack.c.l.b16 %v282
    %v1013 = vunpack.c.h.b16 %v282
    %v1014 = vunpack.c.l.b16 %v283
    %v1015 = vunpack.c.h.b16 %v283
    %v1016 = vunpack.c.l.b16 %v284
    %v1017 = vunpack.c.h.b16 %v284
    %v1018 = vunpack.c.l.b16 %v285
    %v1019 = vunpack.c.h.b16 %v285
    %v1020 = vunpack.c.l.b16 %v286
    %v1021 = vunpack.c.h.b16 %v286
    %v1022 = vunpack.c.l.b16 %v287
    %v1023 = vunpack.c.h.b16 %v287
    %v1024 = vunpack.c.l.b16 %v288
    %v1025 = vunpack.c.h.b16 %v288
    %v1026 = vunpack.c.l.b16 %v289
    %v1027 = vunpack.c.h.b16 %v289
    %v1028 = vunpack.c.l.b16 %v290
    %v1029 = vunpack.c.h.b16 %v290
    %v1030 = vunpack.c.l.b16 %v291
    %v1031 = vunpack.c.h.b16 %v291
    %v1032 = vunpack.c.l.b16 %v292
    %v1033 = vunpack.c.h.b16 %v292
    %v1034 = vunpack.c.l.b16 %v293
    %v1035 = vunpack.c.h.b16 %v293
    %v1036 = vunpack.c.l.b16 %v294
    %v1037 = vunpack.c.h.b16 %v294
    %v1038 = vunpack.c.l.b16 %v295
    %v1039 = vunpack.c.h.b16 %v295
    %v1040 = vunpack.c.l.b16 %v296
    %v1041 = vunpack.c.h.b16 %v296
    %v1042 = vunpack.c.l.b16 %v297
    %v1043 = vunpack.c.h.b16 %v297
    %v1044 = vunpack.c.l.b16 %v298
    %v1045 = vunpack.c.h.b16 %v298
    %v1046 = vunpack.c.l.b16 %v299
    %v1047 = vunpack.c.h.b16 %v299
    %v1048 = vunpack.c.l.b16 %v300
    %v1049 = vunpack.c.h.b16 %v300
    %v1050 = vunpack.c.l.b16 %v301
    %v1051 = vunpack.c.h.b16 %v301
    %v1052 = vunpack.c.l.b16 %v302
    %v1053 = vunpack.c.h.b16 %v302
    %v1054 = vunpack.c.l.b16 %v303
    %v1055 = vunpack.c.h.b16 %v303
    %v1056 = vunpack.c.l.b16 %v304
    %v1057 = vunpack.c.h.b16 %v304
    %v1058 = vunpack.c.l.b16 %v305
    %v1059 = vunpack.c.h.b16 %v305
    %v1060 = vunpack.c.l.b16 %v306
    %v1061 = vunpack.c.h.b16 %v306
    %v1062 = vunpack.c.l.b16 %v307
    %v1063 = vunpack.c.h.b16 %v307
    %v1064 = vunpack.c.l.b16 %v308
    %v1065 = vunpack.c.h.b16 %v308
    %v1066 = vunpack.c.l.b16 %v309
    %v1067 = vunpack.c.h.b16 %v309
    %v1068 = vunpack.c.l.b16 %v310
    %v1069 = vunpack.c.h.b16 %v310
    %v1070 = vunpack.c.l.b16 %v311
    %v1071 = vunpack.c.h.b16 %v311
    %v1072 = vunpack.c.l.b16 %v312
    %v1073 = vunpack.c.h.b16 %v312
    %v1074 = vunpack.c.l.b16 %v313
    %v1075 = vunpack.c.h.b16 %v313
    %v1076 = vunpack.c.l.b16 %v314
    %v1077 = vunpack.c.h.b16 %v314
    %v1078 = vunpack.c.l.b16 %v315
    %v1079 = vunpack.c.h.b16 %v315
    %v1080 = vunpack.c.l.b16 %v316
    %v1081 = vunpack.c.h.b16 %v316
    %v1082 = vunpack.c.l.b16 %v317
    %v1083 = vunpack.c.h.b16 %v317
    %v1084 = vunpack.c.l.b16 %v318
    %v1085 = vunpack.c.h.b16 %v318
    %v1086 = vunpack.c.l.b16 %v319
    %v1087 = vunpack.c.h.b16 %v319
    %v1088 = vunpack.c.l.b16 %v320
    %v1089 = vunpack.c.h.b16 %v320
    %v1090 = vunpack.c.l.b16 %v321
    %v1091 = vunpack.c.h.b16 %v321
    %v1092 = vunpack.c.l.b16 %v322
    %v1093 = vunpack.c.h.b16 %v322
    %v1094 = vunpack.c.l.b16 %v323
    %v1095 = vunpack.c.h.b16 %v323
    %v1096 = vunpack.c.l.b16 %v324
    %v1097 = vunpack.c.h.b16 %v324
    %v1098 = vunpack.c.l.b16 %v325
    %v1099 = vunpack.c.h.b16 %v325
    %v1100 = vunpack.c.l.b16 %v326
    %v1101 = vunpack.c.h.b16 %v326
    %v1102 = vunpack.c.l.b16 %v327
    %v1103 = vunpack.c.h.b16 %v327
    %v1104 = vunpack.c.l.b16 %v328
    %v1105 = vunpack.c.h.b16 %v328
    %v1106 = vunpack.c.l.b16 %v329
    %v1107 = vunpack.c.h.b16 %v329
    %v1108 = vunpack.c.l.b16 %v330
    %v1109 = vunpack.c.h.b16 %v330
    %v1110 = vunpack.c.l.b16 %v331
    %v1111 = vunpack.c.h.b16 %v331
    %v1112 = vunpack.c.l.b16 %v332
    %v1113 = vunpack.c.h.b16 %v332
    %v1114 = vunpack.c.l.b16 %v333
    %v1115 = vunpack.c.h.b16 %v333
    %v1116 = vunpack.c.l.b16 %v334
    %v1117 = vunpack.c.h.b16 %v334
    %v1118 = vunpack.c.l.b16 %v335
    %v1119 = vunpack.c.h.b16 %v335
    %v1120 = vunpack.c.l.b16 %v336
    %v1121 = vunpack.c.h.b16 %v336
    %v1122 = vunpack.c.l.b16 %v337
    %v1123 = vunpack.c.h.b16 %v337
    %v1124 = vunpack.c.l.b16 %v338
    %v1125 = vunpack.c.h.b16 %v338
    %v1126 = vunpack.c.l.b16 %v339
    %v1127 = vunpack.c.h.b16 %v339
    %v1128 = vunpack.c.l.b16 %v340
    %v1129 = vunpack.c.h.b16 %v340
    %v1130 = vunpack.c.l.b16 %v341
    %v1131 = vunpack.c.h.b16 %v341
    %v1132 = vunpack.c.l.b16 %v342
    %v1133 = vunpack.c.h.b16 %v342
    %v1134 = vunpack.c.l.b16 %v343
    %v1135 = vunpack.c.h.b16 %v343
    %v1136 = vunpack.c.l.b16 %v344
    %v1137 = vunpack.c.h.b16 %v344
    %v1138 = vunpack.c.l.b16 %v345
    %v1139 = vunpack.c.h.b16 %v345
    %v1140 = vunpack.c.l.b16 %v346
    %v1141 = vunpack.c.h.b16 %v346
    %v1142 = vunpack.c.l.b16 %v347
    %v1143 = vunpack.c.h.b16 %v347
    %v1144 = vunpack.c.l.b16 %v348
    %v1145 = vunpack.c.h.b16 %v348
    %v1146 = vunpack.c.l.b16 %v349
    %v1147 = vunpack.c.h.b16 %v349
    %v1148 = vunpack.c.l.b16 %v350
    %v1149 = vunpack.c.h.b16 %v350
    %v1150 = vunpack.c.l.b16 %v351
    %v1151 = vunpack.c.h.b16 %v351
    %v1152 = vunpack.c.l.b16 %v352
    %v1153 = vunpack.c.h.b16 %v352
    %v1154 = vunpack.c.l.b16 %v353
    %v1155 = vunpack.c.h.b16 %v353
    %v1156 = vunpack.c.l.b16 %v354
    %v1157 = vunpack.c.h.b16 %v354
    %v1158 = vunpack.c.l.b16 %v355
    %v1159 = vunpack.c.h.b16 %v355
    %v1160 = vunpack.c.l.b16 %v356
    %v1161 = vunpack.c.h.b16 %v356
    %v1162 = vunpack.c.l.b16 %v357
    %v1163 = vunpack.c.h.b16 %v357
    %v1164 = vunpack.c.l.b16 %v358
    %v1165 = vunpack.c.h.b16 %v358
    %v1166 = vunpack.c.l.b16 %v359
    %v1167 = vunpack.c.h.b16 %v359
    %v1168 = vunpack.c.l.b16 %v360
    %v1169 = vunpack.c.h.b16 %v360
    %v1170 = vunpack.c.l.b16 %v361
    %v1171 = vunpack.c.h.b16 %v361
    %v1172 = vunpack.c.l.b16 %v362
    %v1173 = vunpack.c.h.b16 %v362
    %v1174 = vunpack.c.l.b16 %v363
    %v1175 = vunpack.c.h.b16 %v363
    %v1176 = vunpack.c.l.b16 %v364
    %v1177 = vunpack.c.h.b16 %v364
    %v1178 = vunpack.c.l.b16 %v365
    %v1179 = vunpack.c.h.b16 %v365
    %v1180 = vunpack.c.l.b16 %v366
    %v1181 = vunpack.c.h.b16 %v366
    %v1182 = vunpack.c.l.b16 %v367
    %v1183 = vunpack.c.h.b16 %v367
    %v1184 = vunpack.c.l.b16 %v368
    %v1185 = vunpack.c.h.b16 %v368
    %v1186 = vunpack.c.l.b16 %v369
    %v1187 = vunpack.c.h.b16 %v369
    %v1188 = vunpack.c.l.b16 %v370
    %v1189 = vunpack.c.h.b16 %v370
    %v1190 = vunpack.c.l.b16 %v371
    %v1191 = vunpack.c.h.b16 %v371
    %v1192 = vunpack.c.l.b16 %v372
    %v1193 = vunpack.c.h.b16 %v372
    %v1194 = vunpack.c.l.b16 %v373
    %v1195 = vunpack.c.h.b16 %v373
    %v1196 = vunpack.c.l.b16 %v374
    %v1197 = vunpack.c.h.b16 %v374
    %v1198 = vunpack.c.l.b16 %v375
    %v1199 = vunpack.c.h.b16 %v375
    %v1200 = vunpack.c.l.b16 %v376
    %v1201 = vunpack.c.h.b16 %v376
    %v1202 = vunpack.c.l.b16 %v377
    %v1203 = vunpack.c.h.b16 %v377
    %v1204 = vunpack.c.l.b16 %v378
    %v1205 = vunpack.c.h.b16 %v378
    %v1206 = vunpack.c.l.b16 %v379
    %v1207 = vunpack.c.h.b16 %v379
    %v1208 = vunpack.c.l.b16 %v380
    %v1209 = vunpack.c.h.b16 %v380
    %v1210 = vunpack.c.l.b16 %v381
    %v1211 = vunpack.c.h.b16 %v381
    %v1212 = vunpack.c.l.b16 %v382
    %v1213 = vunpack.c.h.b16 %v382
    %v1214 = vunpack.c.l.b16 %v383
    %v1215 = vunpack.c.h.b16 %v383
    %v1216 = vunpack.c.l.b16 %v384
    %v1217 = vunpack.c.h.b16 %v384
    %v1218 = vunpack.c.l.b16 %v385
    %v1219 = vunpack.c.h.b16 %v385
    %v1220 = vunpack.c.l.b16 %v386
    %v1221 = vunpack.c.h.b16 %v386
    %v1222 = vunpack.c.l.b16 %v387
    %v1223 = vunpack.c.h.b16 %v387
    %v1224 = vunpack.c.l.b16 %v388
    %v1225 = vunpack.c.h.b16 %v388
    %v1226 = vunpack.c.l.b16 %v389
    %v1227 = vunpack.c.h.b16 %v389
    %v1228 = vunpack.c.l.b16 %v390
    %v1229 = vunpack.c.h.b16 %v390
    %v1230 = vunpack.c.l.b16 %v391
    %v1231 = vunpack.c.h.b16 %v391
    %v1232 = vunpack.c.l.b16 %v392
    %v1233 = vunpack.c.h.b16 %v392
    %v1234 = vunpack.c.l.b16 %v393
    %v1235 = vunpack.c.h.b16 %v393
    %v1236 = vunpack.c.l.b16 %v394
    %v1237 = vunpack.c.h.b16 %v394
    %v1238 = vunpack.c.l.b16 %v395
    %v1239 = vunpack.c.h.b16 %v395
    %v1240 = vunpack.c.l.b16 %v396
    %v1241 = vunpack.c.h.b16 %v396
    %v1242 = vunpack.c.l.b16 %v397
    %v1243 = vunpack.c.h.b16 %v397
    %v1244 = vunpack.c.l.b16 %v398
    %v1245 = vunpack.c.h.b16 %v398
    %v1246 = vunpack.c.l.b16 %v399
    %v1247 = vunpack.c.h.b16 %v399
    %v1248 = vunpack.c.l.b16 %v400
    %v1249 = vunpack.c.h.b16 %v400
    %v1250 = vunpack.c.l.b16 %v401
    %v1251 = vunpack.c.h.b16 %v401
    %v1252 = vunpack.c.l.b16 %v402
    %v1253 = vunpack.c.h.b16 %v402
    %v1254 = vunpack.c.l.b16 %v403
    %v1255 = vunpack.c.h.b16 %v403
    %v1256 = vunpack.c.l.b16 %v404
    %v1257 = vunpack.c.h.b16 %v404
    %v1258 = vunpack.c.l.b16 %v405
    %v1259 = vunpack.c.h.b16 %v405
    %v1260 = vunpack.c.l.b16 %v406
    %v1261 = vunpack.c.h.b16 %v406
    %v1262 = vunpack.c.l.b16 %v407
    %v1263 = vunpack.c.h.b16 %v407
    %v1264 = vunpack.c.l.b16 %v408
    %v1265 = vunpack.c.h.b16 %v408
    %v1266 = vunpack.c.l.b16 %v409
    %v1267 = vunpack.c.h.b16 %v409
    %v1268 = vunpack.c.l.b16 %v410
    %v1269 = vunpack.c.h.b16 %v410
    %v1270 = vunpack.c.l.b16 %v411
    %v1271 = vunpack.c.h.b16 %v411
    %v1272 = vunpack.c.l.b16 %v412
    %v1273 = vunpack.c.h.b16 %v412
    %v1274 = vunpack.c.l.b16 %v413
    %v1275 = vunpack.c.h.b16 %v413
    %v1276 = vunpack.c.l.b16 %v414
    %v1277 = vunpack.c.h.b16 %v414
    %v1278 = vunpack.c.l.b16 %v415
    %v1279 = vunpack.c.h.b16 %v415
    %v1280 = vunpack.c.l.b16 %v416
    %v1281 = vunpack.c.h.b16 %v416
    %v1282 = vunpack.c.l.b16 %v417
    %v1283 = vunpack.c.h.b16 %v417
    %v1284 = vunpack.c.l.b16 %v418
    %v1285 = vunpack.c.h.b16 %v418
    %v1286 = vunpack.c.l.b16 %v419
    %v1287 = vunpack.c.h.b16 %v419
    %v1288 = vunpack.c.l.b16 %v420
    %v1289 = vunpack.c.h.b16 %v420
    %v1290 = vunpack.c.l.b16 %v421
    %v1291 = vunpack.c.h.b16 %v421
    %v1292 = vunpack.c.l.b16 %v422
    %v1293 = vunpack.c.h.b16 %v422
    %v1294 = vunpack.c.l.b16 %v423
    %v1295 = vunpack.c.h.b16 %v423
    %v1296 = vunpack.c.l.b16 %v424
    %v1297 = vunpack.c.h.b16 %v424
    %v1298 = vunpack.c.l.b16 %v425
    %v1299 = vunpack.c.h.b16 %v425
    %v1300 = vunpack.c.l.b16 %v426
    %v1301 = vunpack.c.h.b16 %v426
    %v1302 = vunpack.c.l.b16 %v427
    %v1303 = vunpack.c.h.b16 %v427
    %v1304 = vunpack.c.l.b16 %v428
    %v1305 = vunpack.c.h.b16 %v428
    %v1306 = vunpack.c.l.b16 %v429
    %v1307 = vunpack.c.h.b16 %v429
    %v1308 = vunpack.c.l.b16 %v430
    %v1309 = vunpack.c.h.b16 %v430
    %v1310 = vunpack.c.l.b16 %v431
    %v1311 = vunpack.c.h.b16 %v431
    %v1312 = vunpack.c.l.b16 %v432
    %v1313 = vunpack.c.h.b16 %v432
    %v1314 = vunpack.c.l.b16 %v433
    %v1315 = vunpack.c.h.b16 %v433
    %v1316 = vunpack.c.l.b16 %v434
    %v1317 = vunpack.c.h.b16 %v434
    %v1318 = vunpack.c.l.b16 %v435
    %v1319 = vunpack.c.h.b16 %v435
    %v1320 = vunpack.c.l.b16 %v436
    %v1321 = vunpack.c.h.b16 %v436
    %v1322 = vunpack.c.l.b16 %v437
    %v1323 = vunpack.c.h.b16 %v437
    %v1324 = vunpack.c.l.b16 %v438
    %v1325 = vunpack.c.h.b16 %v438
    %v1326 = vunpack.c.l.b16 %v439
    %v1327 = vunpack.c.h.b16 %v439
    %v1328 = vunpack.c.l.b16 %v440
    %v1329 = vunpack.c.h.b16 %v440
    %v1330 = vunpack.c.l.b16 %v441
    %v1331 = vunpack.c.h.b16 %v441
    %v1332 = vunpack.c.l.b16 %v442
    %v1333 = vunpack.c.h.b16 %v442
    %v1334 = vunpack.c.l.b16 %v443
    %v1335 = vunpack.c.h.b16 %v443
    %v1336 = vunpack.c.l.b16 %v444
    %v1337 = vunpack.c.h.b16 %v444
    %v1338 = vunpack.c.l.b16 %v445
    %v1339 = vunpack.c.h.b16 %v445
    %v1340 = vunpack.c.l.b16 %v446
    %v1341 = vunpack.c.h.b16 %v446
    %v1342 = vunpack.c.l.b16 %v447
    %v1343 = vunpack.c.h.b16 %v447
    %v1344 = vunpack.c.l.b16 %v448
    %v1345 = vunpack.c.h.b16 %v448
    %v1346 = vunpack.c.l.b16 %v449
    %v1347 = vunpack.c.h.b16 %v449
    %v1348 = vunpack.c.l.b16 %v450
    %v1349 = vunpack.c.h.b16 %v450
    %v1350 = vunpack.c.l.b16 %v451
    %v1351 = vunpack.c.h.b16 %v451
    %v1352 = vunpack.c.l.b16 %v452
    %v1353 = vunpack.c.h.b16 %v452
    %v1354 = vunpack.c.l.b16 %v453
    %v1355 = vunpack.c.h.b16 %v453
    %v1356 = vunpack.c.l.b16 %v454
    %v1357 = vunpack.c.h.b16 %v454
    %v1358 = vunpack.c.l.b16 %v455
    %v1359 = vunpack.c.h.b16 %v455
    %v1360 = vunpack.c.l.b16 %v456
    %v1361 = vunpack.c.h.b16 %v456
    %v1362 = vunpack.c.l.b16 %v457
    %v1363 = vunpack.c.h.b16 %v457
    %v1364 = vunpack.c.l.b16 %v458
    %v1365 = vunpack.c.h.b16 %v458
    %v1366 = vunpack.c.l.b16 %v459
    %v1367 = vunpack.c.h.b16 %v459
    %v1368 = vunpack.c.l.b16 %v460
    %v1369 = vunpack.c.h.b16 %v460
    %v1370 = vunpack.c.l.b16 %v461
    %v1371 = vunpack.c.h.b16 %v461
    %v1372 = vunpack.c.l.b16 %v462
    %v1373 = vunpack.c.h.b16 %v462
    %v1374 = vunpack.c.l.b16 %v463
    %v1375 = vunpack.c.h.b16 %v463
    %v1376 = vunpack.c.l.b16 %v464
    %v1377 = vunpack.c.h.b16 %v464
    %v1378 = vunpack.c.l.b16 %v465
    %v1379 = vunpack.c.h.b16 %v465
    %v1380 = vunpack.c.l.b16 %v466
    %v1381 = vunpack.c.h.b16 %v466
    %v1382 = vunpack.c.l.b16 %v467
    %v1383 = vunpack.c.h.b16 %v467
    %v1384 = vunpack.c.l.b16 %v468
    %v1385 = vunpack.c.h.b16 %v468
    %v1386 = vunpack.c.l.b16 %v469
    %v1387 = vunpack.c.h.b16 %v469
    %v1388 = vunpack.c.l.b16 %v470
    %v1389 = vunpack.c.h.b16 %v470
    %v1390 = vunpack.c.l.b16 %v471
    %v1391 = vunpack.c.h.b16 %v471
    %v1392 = vunpack.c.l.b16 %v472
    %v1393 = vunpack.c.h.b16 %v472
    %v1394 = vunpack.c.l.b16 %v473
    %v1395 = vunpack.c.h.b16 %v473
    %v1396 = vunpack.c.l.b16 %v474
    %v1397 = vunpack.c.h.b16 %v474
    %v1398 = vunpack.c.l.b16 %v475
    %v1399 = vunpack.c.h.b16 %v475
    %v1400 = vunpack.c.l.b16 %v476
    %v1401 = vunpack.c.h.b16 %v476
    %v1402 = vunpack.c.l.b16 %v477
    %v1403 = vunpack.c.h.b16 %v477
    %v1404 = vunpack.c.l.b16 %v478
    %v1405 = vunpack.c.h.b16 %v478
    %v1406 = vunpack.c.l.b16 %v479
    %v1407 = vunpack.c.h.b16 %v479
    %v1408 = vunpack.c.l.b16 %v480
    %v1409 = vunpack.c.h.b16 %v480
    %v1410 = vunpack.c.l.b16 %v481
    %v1411 = vunpack.c.h.b16 %v481
    %v1412 = vunpack.c.l.b16 %v482
    %v1413 = vunpack.c.h.b16 %v482
    %v1414 = vunpack.c.l.b16 %v483
    %v1415 = vunpack.c.h.b16 %v483
    %v1416 = vunpack.c.l.b16 %v484
    %v1417 = vunpack.c.h.b16 %v484
    %v1418 = vunpack.c.l.b16 %v485
    %v1419 = vunpack.c.h.b16 %v485
    %v1420 = vunpack.c.l.b16 %v486
    %v1421 = vunpack.c.h.b16 %v486
    %v1422 = vunpack.c.l.b16 %v487
    %v1423 = vunpack.c.h.b16 %v487
    %v1424 = vunpack.c.l.b16 %v488
    %v1425 = vunpack.c.h.b16 %v488
    %v1426 = vpack.c.b16 %v856, %v850
    %v1427 = vpack.c.b16 %v857, %v851
    %v1428 = vpack.c.b16 %v858, %v852
    %v1429 = vpack.c.b16 %v859, %v853
    %v1430 = vpack.c.b16 %v860, %v854
    %v1431 = vpack.c.b16 %v861, %v855
    %v1432 = vpack.c.b16 %v868, %v862
    %v1433 = vpack.c.b16 %v869, %v863
    %v1434 = vpack.c.b16 %v870, %v864
    %v1435 = vpack.c.b16 %v871, %v865
    %v1436 = vpack.c.b16 %v872, %v866
    %v1437 = vpack.c.b16 %v873, %v867
    %v1438 = vpack.c.b16 %v880, %v874
    %v1439 = vpack.c.b16 %v881, %v875
    %v1440 = vpack.c.b16 %v882, %v876
    %v1441 = vpack.c.b16 %v883, %v877
    %v1442 = vpack.c.b16 %v884, %v878
    %v1443 = vpack.c.b16 %v885, %v879
    %v1444 = vpack.c.b16 %v892, %v886
    %v1445 = vpack.c.b16 %v893, %v887
    %v1446 = vpack.c.b16 %v894, %v888
    %v1447 = vpack.c.b16 %v895, %v889
    %v1448 = vpack.c.b16 %v896, %v890
    %v1449 = vpack.c.b16 %v897, %v891
    %v1450 = vpack.c.b16 %v904, %v898
    %v1451 = vpack.c.b16 %v905, %v899
    %v1452 = vpack.c.b16 %v906, %v900
    %v1453 = vpack.c.b16 %v907, %v901
    %v1454 = vpack.c.b16 %v908, %v902
    %v1455 = vpack.c.b16 %v909, %v903
    %v1456 = vpack.c.b16 %v916, %v910
    %v1457 = vpack.c.b16 %v917, %v911
    %v1458 = vpack.c.b16 %v918, %v912
    %v1459 = vpack.c.b16 %v919, %v913
    %v1460 = vpack.c.b16 %v920, %v914
    %v1461 = vpack.c.b16 %v921, %v915
    %v1462 = vpack.c.b16 %v928, %v922
    %v1463 = vpack.c.b16 %v929, %v923
    %v1464 = vpack.c.b16 %v930, %v924
    %v1465 = vpack.c.b16 %v931, %v925
    %v1466 = vpack.c.b16 %v932, %v926
    %v1467 = vpack.c.b16 %v933, %v927
    %v1468 = vpack.c.b16 %v940, %v934
    %v1469 = vpack.c.b16 %v941, %v935
    %v1470 = vpack.c.b16 %v942, %v936
    %v1471 = vpack.c.b16 %v943, %v937
    %v1472 = vpack.c.b16 %v944, %v938
    %v1473 = vpack.c.b16 %v945, %v939
    %v1474 = vpack.c.b16 %v952, %v946
    %v1475 = vpack.c.b16 %v953, %v947
    %v1476 = vpack.c.b16 %v954, %v948
    %v1477 = vpack.c.b16 %v955, %v949
    %v1478 = vpack.c.b16 %v956, %v950
    %v1479 = vpack.c.b16 %v957, %v951
    %v1480 = vpack.c.b16 %v964, %v958
    %v1481 = vpack.c.b16 %v965, %v959
    %v1482 = vpack.c.b16 %v966, %v960
    %v1483 = vpack.c.b16 %v967, %v961
    %v1484 = vpack.c.b16 %v968, %v962
    %v1485 = vpack.c.b16 %v969, %v963
    %v1486 = vpack.c.b16 %v976, %v970
    %v1487 = vpack.c.b16 %v977, %v971
    %v1488 = vpack.c.b16 %v978, %v972
    %v1489 = vpack.c.b16 %v979, %v973
    %v1490 = vpack.c.b16 %v980, %v974
    %v1491 = vpack.c.b16 %v981, %v975
    %v1492 = vpack.c.b16 %v988, %v982
    %v1493 = vpack.c.b16 %v989, %v983
    %v1494 = vpack.c.b16 %v990, %v984
    %v1495 = vpack.c.b16 %v991, %v985
    %v1496 = vpack.c.b16 %v992, %v986
    %v1497 = vpack.c.b16 %v993, %v987
    %v1498 = vpack.c.b16 %v1000, %v994
    %v1499 = vpack.c.b16 %v1001, %v995
    %v1500 = vpack.c.b16 %v1002, %v996
    %v1501 = vpack.c.b16 %v1003, %v997
    %v1502 = vpack.c.b16 %v1004, %v998
    %v1503 = vpack.c.b16 %v1005, %v999
    %v1504 = vpack.c.b16 %v1012, %v1006
    %v1505 = vpack.c.b16 %v1013, %v1007
    %v1506 = vpack.c.b16 %v1014, %v1008
    %v1507 = vpack.c.b16 %v1015, %v1009
    %v1508 = vpack.c.b16 %v1016, %v1010
    %v1509 = vpack.c.b16 %v1017, %v1011
    %v1510 = vpack.c.b16 %v1024, %v1018
    %v1511 = vpack.c.b16 %v1025, %v1019
    %v1512 = vpack.c.b16 %v1026, %v1020
    %v1513 = vpack.c.b16 %v1027, %v1021
    %v1514 = vpack.c.b16 %v1028, %v1022
    %v1515 = vpack.c.b16 %v1029, %v1023
    %v1516 = vpack.c.b16 %v1036, %v1030
    %v1517 = vpack.c.b16 %v1037, %v1031
    %v1518 = vpack.c.b16 %v1038, %v1032
    %v1519 = vpack.c.b16 %v1039, %v1033
    %v1520 = vpack.c.b16 %v1040, %v1034
    %v1521 = vpack.c.b16 %v1041, %v1035
    %v1522 = vpack.c.b16 %v1048, %v1042
    %v1523 = vpack.c.b16 %v1049, %v1043
    %v1524 = vpack.c.b16 %v1050, %v1044
    %v1525 = vpack.c.b16 %v1051, %v1045
    %v1526 = vpack.c.b16 %v1052, %v1046
    %v1527 = vpack.c.b16 %v1053, %v1047
    %v1528 = vpack.c.b16 %v1060, %v1054
    %v1529 = vpack.c.b16 %v1061, %v1055
    %v1530 = vpack.c.b16 %v1062, %v1056
    %v1531 = vpack.c.b16 %v1063, %v1057
    %v1532 = vpack.c.b16 %v1064, %v1058
    %v1533 = vpack.c.b16 %v1065, %v1059
    %v1534 = vpack.c.b16 %v1072, %v1066
    %v1535 = vpack.c.b16 %v1073, %v1067
    %v1536 = vpack.c.b16 %v1074, %v1068
    %v1537 = vpack.c.b16 %v1075, %v1069
    %v1538 = vpack.c.b16 %v1076, %v1070
    %v1539 = vpack.c.b16 %v1077, %v1071
    %v1540 = vpack.c.b16 %v1084, %v1078
    %v1541 = vpack.c.b16 %v1085, %v1079
    %v1542 = vpack.c.b16 %v1086, %v1080
    %v1543 = vpack.c.b16 %v1087, %v1081
    %v1544 = vpack.c.b16 %v1088, %v1082
    %v1545 = vpack.c.b16 %v1089, %v1083
    %v1546 = vpack.c.b16 %v1096, %v1090
    %v1547 = vpack.c.b16 %v1097, %v1091
    %v1548 = vpack.c.b16 %v1098, %v1092
    %v1549 = vpack.c.b16 %v1099, %v1093
    %v1550 = vpack.c.b16 %v1100, %v1094
    %v1551 = vpack.c.b16 %v1101, %v1095
    %v1552 = vpack.c.b16 %v1108, %v1102
    %v1553 = vpack.c.b16 %v1109, %v1103
    %v1554 = vpack.c.b16 %v1110, %v1104
    %v1555 = vpack.c.b16 %v1111, %v1105
    %v1556 = vpack.c.b16 %v1112, %v1106
    %v1557 = vpack.c.b16 %v1113, %v1107
    %v1558 = vpack.c.b16 %v1120, %v1114
    %v1559 = vpack.c.b16 %v1121, %v1115
    %v1560 = vpack.c.b16 %v1122, %v1116
    %v1561 = vpack.c.b16 %v1123, %v1117
    %v1562 = vpack.c.b16 %v1124, %v1118
    %v1563 = vpack.c.b16 %v1125, %v1119
    %v1564 = vpack.c.b16 %v1132, %v1126
    %v1565 = vpack.c.b16 %v1133, %v1127
    %v1566 = vpack.c.b16 %v1134, %v1128
    %v1567 = vpack.c.b16 %v1135, %v1129
    %v1568 = vpack.c.b16 %v1136, %v1130
    %v1569 = vpack.c.b16 %v1137, %v1131
    %v1570 = vpack.c.b16 %v1144, %v1138
    %v1571 = vpack.c.b16 %v1145, %v1139
    %v1572 = vpack.c.b16 %v1146, %v1140
    %v1573 = vpack.c.b16 %v1147, %v1141
    %v1574 = vpack.c.b16 %v1148, %v1142
    %v1575 = vpack.c.b16 %v1149, %v1143
    %v1576 = vpack.c.b16 %v1156, %v1150
    %v1577 = vpack.c.b16 %v1157, %v1151
    %v1578 = vpack.c.b16 %v1158, %v1152
    %v1579 = vpack.c.b16 %v1159, %v1153
    %v1580 = vpack.c.b16 %v1160, %v1154
    %v1581 = vpack.c.b16 %v1161, %v1155
    %v1582 = vpack.c.b16 %v1168, %v1162
    %v1583 = vpack.c.b16 %v1169, %v1163
    %v1584 = vpack.c.b16 %v1170, %v1164
    %v1585 = vpack.c.b16 %v1171, %v1165
    %v1586 = vpack.c.b16 %v1172, %v1166
    %v1587 = vpack.c.b16 %v1173, %v1167
    %v1588 = vpack.c.b16 %v1180, %v1174
    %v1589 = vpack.c.b16 %v1181, %v1175
    %v1590 = vpack.c.b16 %v1182, %v1176
    %v1591 = vpack.c.b16 %v1183, %v1177
    %v1592 = vpack.c.b16 %v1184, %v1178
    %v1593 = vpack.c.b16 %v1185, %v1179
    %v1594 = vpack.c.b16 %v1192, %v1186
    %v1595 = vpack.c.b16 %v1193, %v1187
    %v1596 = vpack.c.b16 %v1194, %v1188
    %v1597 = vpack.c.b16 %v1195, %v1189
    %v1598 = vpack.c.b16 %v1196, %v1190
    %v1599 = vpack.c.b16 %v1197, %v1191
    %v1600 = vpack.c.b16 %v1204, %v1198
    %v1601 = vpack.c.b16 %v1205, %v1199
    %v1602 = vpack.c.b16 %v1206, %v1200
    %v1603 = vpack.c.b16 %v1207, %v1201
    %v1604 = vpack.c.b16 %v1208, %v1202
    %v1605 = vpack.c.b16 %v1209, %v1203
    %v1606 = vpack.c.b16 %v1216, %v1210
    %v1607 = vpack.c.b16 %v1217, %v1211
    %v1608 = vpack.c.b16 %v1218, %v1212
    %v1609 = vpack.c.b16 %v1219, %v1213
    %v1610 = vpack.c.b16 %v1220, %v1214
    %v1611 = vpack.c.b16 %v1221, %v1215
    %v1612 = vpack.c.b16 %v1228, %v1222
    %v1613 = vpack.c.b16 %v1229, %v1223
    %v1614 = vpack.c.b16 %v1230, %v1224
    %v1615 = vpack.c.b16 %v1231, %v1225
    %v1616 = vpack.c.b16 %v1232, %v1226
    %v1617 = vpack.c.b16 %v1233, %v1227
    %v1618 = vpack.c.b16 %v1240, %v1234
    %v1619 = vpack.c.b16 %v1241, %v1235
    %v1620 = vpack.c.b16 %v1242, %v1236
    %v1621 = vpack.c.b16 %v1243, %v1237
    %v1622 = vpack.c.b16 %v1244, %v1238
    %v1623 = vpack.c.b16 %v1245, %v1239
    %v1624 = vpack.c.b16 %v1252, %v1246
    %v1625 = vpack.c.b16 %v1253, %v1247
    %v1626 = vpack.c.b16 %v1254, %v1248
    %v1627 = vpack.c.b16 %v1255, %v1249
    %v1628 = vpack.c.b16 %v1256, %v1250
    %v1629 = vpack.c.b16 %v1257, %v1251
    %v1630 = vpack.c.b16 %v1264, %v1258
    %v1631 = vpack.c.b16 %v1265, %v1259
    %v1632 = vpack.c.b16 %v1266, %v1260
    %v1633 = vpack.c.b16 %v1267, %v1261
    %v1634 = vpack.c.b16 %v1268, %v1262
    %v1635 = vpack.c.b16 %v1269, %v1263
    %v1636 = vpack.c.b16 %v1276, %v1270
    %v1637 = vpack.c.b16 %v1277, %v1271
    %v1638 = vpack.c.b16 %v1278, %v1272
    %v1639 = vpack.c.b16 %v1279, %v1273
    %v1640 = vpack.c.b16 %v1280, %v1274
    %v1641 = vpack.c.b16 %v1281, %v1275
    %v1642 = vpack.c.b16 %v1288, %v1282
    %v1643 = vpack.c.b16 %v1289, %v1283
    %v1644 = vpack.c.b16 %v1290, %v1284
    %v1645 = vpack.c.b16 %v1291, %v1285
    %v1646 = vpack.c.b16 %v1292, %v1286
    %v1647 = vpack.c.b16 %v1293, %v1287
    %v1648 = vpack.c.b16 %v1300, %v1294
    %v1649 = vpack.c.b16 %v1301, %v1295
    %v1650 = vpack.c.b16 %v1302, %v1296
    %v1651 = vpack.c.b16 %v1303, %v1297
    %v1652 = vpack.c.b16 %v1304, %v1298
    %v1653 = vpack.c.b16 %v1305, %v1299
    %v1654 = vpack.c.b16 %v1312, %v1306
    %v1655 = vpack.c.b16 %v1313, %v1307
    %v1656 = vpack.c.b16 %v1314, %v1308
    %v1657 = vpack.c.b16 %v1315, %v1309
    %v1658 = vpack.c.b16 %v1316, %v1310
    %v1659 = vpack.c.b16 %v1317, %v1311
    %v1660 = vpack.c.b16 %v1324, %v1318
    %v1661 = vpack.c.b16 %v1325, %v1319
    %v1662 = vpack.c.b16 %v1326, %v1320
    %v1663 = vpack.c.b16 %v1327, %v1321
    %v1664 = vpack.c.b16 %v1328, %v1322
    %v1665 = vpack.c.b16 %v1329, %v1323
    %v1666 = vpack.c.b16 %v1336, %v1330
    %v1667 = vpack.c.b16 %v1337, %v1331
    %v1668 = vpack.c.b16 %v1338, %v1332
    %v1669 = vpack.c.b16 %v1339, %v1333
    %v1670 = vpack.c.b16 %v1340, %v1334
    %v1671 = vpack.c.b16 %v1341, %v1335
    %v1672 = vpack.c.b16 %v1348, %v1342
    %v1673 = vpack.c.b16 %v1349, %v1343
    %v1674 = vpack.c.b16 %v1350, %v1344
    %v1675 = vpack.c.b16 %v1351, %v1345
    %v1676 = vpack.c.b16 %v1352, %v1346
    %v1677 = vpack.c.b16 %v1353, %v1347
    %v1678 = vpack.c.b16 %v1360, %v1354
    %v1679 = vpack.c.b16 %v1361, %v1355
    %v1680 = vpack.c.b16 %v1362, %v1356
    %v1681 = vpack.c.b16 %v1363, %v1357
    %v1682 = vpack.c.b16 %v1364, %v1358
    %v1683 = vpack.c.b16 %v1365, %v1359
    %v1684 = vpack.c.b16 %v1372, %v1366
    %v1685 = vpack.c.b16 %v1373, %v1367
    %v1686 = vpack.c.b16 %v1374, %v1368
    %v1687 = vpack.c.b16 %v1375, %v1369
    %v1688 = vpack.c.b16 %v1376, %v1370
    %v1689 = vpack.c.b16 %v1377, %v1371
    %v1690 = vpack.c.b16 %v1384, %v1378
    %v1691 = vpack.c.b16 %v1385, %v1379
    %v1692 = vpack.c.b16 %v1386, %v1380
    %v1693 = vpack.c.b16 %v1387, %v1381
    %v1694 = vpack.c.b16 %v1388, %v1382
    %v1695 = vpack.c.b16 %v1389, %v1383
    %v1696 = vpack.c.b16 %v1396, %v1390
    %v1697 = vpack.c.b16 %v1397, %v1391
    %v1698 = vpack.c.b16 %v1398, %v1392
    %v1699 = vpack.c.b16 %v1399, %v1393
    %v1700 = vpack.c.b16 %v1400, %v1394
    %v1701 = vpack.c.b16 %v1401, %v1395
    %v1702 = vpack.c.b16 %v1408, %v1402
    %v1703 = vpack.c.b16 %v1409, %v1403
    %v1704 = vpack.c.b16 %v1410, %v1404
    %v1705 = vpack.c.b16 %v1411, %v1405
    %v1706 = vpack.c.b16 %v1412, %v1406
    %v1707 = vpack.c.b16 %v1413, %v1407
    %v1708 = vpack.c.b16 %v1420, %v1414
    %v1709 = vpack.c.b16 %v1421, %v1415
    %v1710 = vpack.c.b16 %v1422, %v1416
    %v1711 = vpack.c.b16 %v1423, %v1417
    %v1712 = vpack.c.b16 %v1424, %v1418
    %v1713 = vpack.c.b16 %v1425, %v1419
    %2002 = vmatprep.subr.bf16.mxu0 %v1469
    %2003 = vmatpush1.bf16.msra.mxu0 %v1468
    %2004 = vmatprep.subr.bf16.mxu0 %v1463
    %2005 = vmatpush1.bf16.msra.mxu0 %v1462
    %2006 = vmatprep.subr.bf16.mxu0 %v1457
    %2007 = vmatpush1.bf16.msra.mxu0 %v1456
    %2008 = vmatprep.subr.bf16.mxu0 %v1451
    %2009 = vmatpush1.bf16.msra.mxu0 %v1450
    %2010 = vmatprep.subr.bf16.mxu0 %v1445
    %2011 = vmatpush1.bf16.msra.mxu0 %v1444
    %2012 = vmatprep.subr.bf16.mxu0 %v1439
    %2013 = vmatpush1.bf16.msra.mxu0 %v1438
    %2014 = vmatprep.subr.bf16.mxu0 %v1433
    %2015 = vmatpush1.bf16.msra.mxu0 %v1432
    %2016 = vmatprep.subr.bf16.mxu0 %v1427
    %2017 = vmatpush1.bf16.msra.mxu0 %v1426
    %2018 = vmatprep.subr.bf16.mxu0 %v1517
    %2019 = vmatpush2.bf16.msra.mxu0 %v1516
    %2020 = vmatprep.subr.bf16.mxu0 %v1511
    %2021 = vmatpush2.bf16.msra.mxu0 %v1510
    %2022 = vmatprep.subr.bf16.mxu0 %v1505
    %2023 = vmatpush2.bf16.msra.mxu0 %v1504
    %2024 = vmatprep.subr.bf16.mxu0 %v1499
    %2025 = vmatpush2.bf16.msra.mxu0 %v1498
    %2026 = vmatprep.subr.bf16.mxu0 %v1493
    %2027 = vmatpush2.bf16.msra.mxu0 %v1492
    %2028 = vmatprep.subr.bf16.mxu0 %v1487
    %2029 = vmatpush2.bf16.msra.mxu0 %v1486
    %2030 = vmatprep.subr.bf16.mxu0 %v1481
    %2031 = vmatpush2.bf16.msra.mxu0 %v1480
    %2032 = vmatprep.subr.bf16.mxu0 %v1475
    %2033 = vmatpush2.bf16.msra.mxu0 %v1474
    %2034 = vmatprep.mubr.bf16.mxu0 %v551
    %2035 = vmatmul.mubr.bf16.gmra.mxu0 %v550
    %v2036 = vpop.f32.mrf.mxu0
    %v2037 = vadd.f32 %v492, %v2036
    %v2038 = vpop.f32.mrf.mxu0
    %v2039 = vadd.f32 %v496, %v2038
    %v2040 = vpop.f32.mrf.mxu0
    %v2041 = vpop.f32.mrf.mxu0
    %2042 = vdwg.mxu0
    %2043 = vmatprep.subr.bf16.mxu0 %v1565
    %2044 = vmatpush1.bf16.msra.mxu0 %v1564
    %2045 = vmatprep.subr.bf16.mxu0 %v1559
    %2046 = vmatpush1.bf16.msra.mxu0 %v1558
    %2047 = vmatprep.subr.bf16.mxu0 %v1553
    %2048 = vmatpush1.bf16.msra.mxu0 %v1552
    %2049 = vmatprep.subr.bf16.mxu0 %v1547
    %2050 = vmatpush1.bf16.msra.mxu0 %v1546
    %2051 = vmatprep.subr.bf16.mxu0 %v1541
    %2052 = vmatpush1.bf16.msra.mxu0 %v1540
    %2053 = vmatprep.subr.bf16.mxu0 %v1535
    %2054 = vmatpush1.bf16.msra.mxu0 %v1534
    %2055 = vmatprep.subr.bf16.mxu0 %v1529
    %2056 = vmatpush1.bf16.msra.mxu0 %v1528
    %2057 = vmatprep.subr.bf16.mxu0 %v1523
    %2058 = vmatpush1.bf16.msra.mxu0 %v1522
    %2059 = vmatprep.subr.bf16.mxu0 %v1613
    %2060 = vmatpush2.bf16.msra.mxu0 %v1612
    %2061 = vmatprep.subr.bf16.mxu0 %v1607
    %2062 = vmatpush2.bf16.msra.mxu0 %v1606
    %2063 = vmatprep.subr.bf16.mxu0 %v1601
    %2064 = vmatpush2.bf16.msra.mxu0 %v1600
    %2065 = vmatprep.subr.bf16.mxu0 %v1595
    %2066 = vmatpush2.bf16.msra.mxu0 %v1594
    %2067 = vmatprep.subr.bf16.mxu0 %v1589
    %2068 = vmatpush2.bf16.msra.mxu0 %v1588
    %2069 = vmatprep.subr.bf16.mxu0 %v1583
    %2070 = vmatpush2.bf16.msra.mxu0 %v1582
    %2071 = vmatprep.subr.bf16.mxu0 %v1577
    %2072 = vmatpush2.bf16.msra.mxu0 %v1576
    %2073 = vmatprep.subr.bf16.mxu0 %v1571
    %2074 = vmatpush2.bf16.msra.mxu0 %v1570
    %2075 = vmatprep.mubr.bf16.mxu0 %v553
    %2076 = vmatmul.mubr.bf16.gmra.mxu0 %v552
    %v2077 = vpop.f32.mrf.mxu0
    %v2078 = vadd.f32 %v2037, %v2077
    %v2079 = vpop.f32.mrf.mxu0
    %v2080 = vadd.f32 %v2039, %v2079
    %v2081 = vpop.f32.mrf.mxu0
    %v2082 = vpop.f32.mrf.mxu0
    %2083 = vdwg.mxu0
    %2084 = vmatprep.subr.bf16.mxu0 %v1661
    %2085 = vmatpush1.bf16.msra.mxu0 %v1660
    %2086 = vmatprep.subr.bf16.mxu0 %v1655
    %2087 = vmatpush1.bf16.msra.mxu0 %v1654
    %2088 = vmatprep.subr.bf16.mxu0 %v1649
    %2089 = vmatpush1.bf16.msra.mxu0 %v1648
    %2090 = vmatprep.subr.bf16.mxu0 %v1643
    %2091 = vmatpush1.bf16.msra.mxu0 %v1642
    %2092 = vmatprep.subr.bf16.mxu0 %v1637
    %2093 = vmatpush1.bf16.msra.mxu0 %v1636
    %2094 = vmatprep.subr.bf16.mxu0 %v1631
    %2095 = vmatpush1.bf16.msra.mxu0 %v1630
    %2096 = vmatprep.subr.bf16.mxu0 %v1625
    %2097 = vmatpush1.bf16.msra.mxu0 %v1624
    %2098 = vmatprep.subr.bf16.mxu0 %v1619
    %2099 = vmatpush1.bf16.msra.mxu0 %v1618
    %2100 = vmatprep.subr.bf16.mxu0 %v1709
    %2101 = vmatpush2.bf16.msra.mxu0 %v1708
    %2102 = vmatprep.subr.bf16.mxu0 %v1703
    %2103 = vmatpush2.bf16.msra.mxu0 %v1702
    %2104 = vmatprep.subr.bf16.mxu0 %v1697
    %2105 = vmatpush2.bf16.msra.mxu0 %v1696
    %2106 = vmatprep.subr.bf16.mxu0 %v1691
    %2107 = vmatpush2.bf16.msra.mxu0 %v1690
    %2108 = vmatprep.subr.bf16.mxu0 %v1685
    %2109 = vmatpush2.bf16.msra.mxu0 %v1684
    %2110 = vmatprep.subr.bf16.mxu0 %v1679
    %2111 = vmatpush2.bf16.msra.mxu0 %v1678
    %2112 = vmatprep.subr.bf16.mxu0 %v1673
    %2113 = vmatpush2.bf16.msra.mxu0 %v1672
    %2114 = vmatprep.subr.bf16.mxu0 %v1667
    %2115 = vmatpush2.bf16.msra.mxu0 %v1666
    %2116 = vmatprep.mubr.bf16.mxu0 %v555
    %2117 = vmatmul.mubr.bf16.gmra.mxu0 %v554
    %v2118 = vpop.f32.mrf.mxu0
    %v2119 = vadd.f32 %v2078, %v2118
    %v2120 = vpop.f32.mrf.mxu0
    %v2121 = vadd.f32 %v2080, %v2120
    %v2122 = vpop.f32.mrf.mxu0
    %v2123 = vpop.f32.mrf.mxu0
    %2124 = vdwg.mxu0
    %2125 = vmatprep.subr.bf16.mxu0 %v1471
    %2126 = vmatpush1.bf16.msra.mxu0 %v1470
    %2127 = vmatprep.subr.bf16.mxu0 %v1465
    %2128 = vmatpush1.bf16.msra.mxu0 %v1464
    %2129 = vmatprep.subr.bf16.mxu0 %v1459
    %2130 = vmatpush1.bf16.msra.mxu0 %v1458
    %2131 = vmatprep.subr.bf16.mxu0 %v1453
    %2132 = vmatpush1.bf16.msra.mxu0 %v1452
    %2133 = vmatprep.subr.bf16.mxu0 %v1447
    %2134 = vmatpush1.bf16.msra.mxu0 %v1446
    %2135 = vmatprep.subr.bf16.mxu0 %v1441
    %2136 = vmatpush1.bf16.msra.mxu0 %v1440
    %2137 = vmatprep.subr.bf16.mxu0 %v1435
    %2138 = vmatpush1.bf16.msra.mxu0 %v1434
    %2139 = vmatprep.subr.bf16.mxu0 %v1429
    %2140 = vmatpush1.bf16.msra.mxu0 %v1428
    %2141 = vmatprep.subr.bf16.mxu0 %v1519
    %2142 = vmatpush2.bf16.msra.mxu0 %v1518
    %2143 = vmatprep.subr.bf16.mxu0 %v1513
    %2144 = vmatpush2.bf16.msra.mxu0 %v1512
    %2145 = vmatprep.subr.bf16.mxu0 %v1507
    %2146 = vmatpush2.bf16.msra.mxu0 %v1506
    %2147 = vmatprep.subr.bf16.mxu0 %v1501
    %2148 = vmatpush2.bf16.msra.mxu0 %v1500
    %2149 = vmatprep.subr.bf16.mxu0 %v1495
    %2150 = vmatpush2.bf16.msra.mxu0 %v1494
    %2151 = vmatprep.subr.bf16.mxu0 %v1489
    %2152 = vmatpush2.bf16.msra.mxu0 %v1488
    %2153 = vmatprep.subr.bf16.mxu0 %v1483
    %2154 = vmatpush2.bf16.msra.mxu0 %v1482
    %2155 = vmatprep.subr.bf16.mxu0 %v1477
    %2156 = vmatpush2.bf16.msra.mxu0 %v1476
    %2157 = vmatprep.mubr.bf16.mxu0 %v551
    %2158 = vmatmul.mubr.bf16.gmra.mxu0 %v550
    %v2159 = vpop.f32.mrf.mxu0
    %v2160 = vadd.f32 %v500, %v2159
    %v2161 = vpop.f32.mrf.mxu0
    %v2162 = vadd.f32 %v504, %v2161
    %v2163 = vpop.f32.mrf.mxu0
    %v2164 = vpop.f32.mrf.mxu0
    %2165 = vdwg.mxu0
    %2166 = vmatprep.subr.bf16.mxu0 %v1567
    %2167 = vmatpush1.bf16.msra.mxu0 %v1566
    %2168 = vmatprep.subr.bf16.mxu0 %v1561
    %2169 = vmatpush1.bf16.msra.mxu0 %v1560
    %2170 = vmatprep.subr.bf16.mxu0 %v1555
    %2171 = vmatpush1.bf16.msra.mxu0 %v1554
    %2172 = vmatprep.subr.bf16.mxu0 %v1549
    %2173 = vmatpush1.bf16.msra.mxu0 %v1548
    %2174 = vmatprep.subr.bf16.mxu0 %v1543
    %2175 = vmatpush1.bf16.msra.mxu0 %v1542
    %2176 = vmatprep.subr.bf16.mxu0 %v1537
    %2177 = vmatpush1.bf16.msra.mxu0 %v1536
    %2178 = vmatprep.subr.bf16.mxu0 %v1531
    %2179 = vmatpush1.bf16.msra.mxu0 %v1530
    %2180 = vmatprep.subr.bf16.mxu0 %v1525
    %2181 = vmatpush1.bf16.msra.mxu0 %v1524
    %2182 = vmatprep.subr.bf16.mxu0 %v1615
    %2183 = vmatpush2.bf16.msra.mxu0 %v1614
    %2184 = vmatprep.subr.bf16.mxu0 %v1609
    %2185 = vmatpush2.bf16.msra.mxu0 %v1608
    %2186 = vmatprep.subr.bf16.mxu0 %v1603
    %2187 = vmatpush2.bf16.msra.mxu0 %v1602
    %2188 = vmatprep.subr.bf16.mxu0 %v1597
    %2189 = vmatpush2.bf16.msra.mxu0 %v1596
    %2190 = vmatprep.subr.bf16.mxu0 %v1591
    %2191 = vmatpush2.bf16.msra.mxu0 %v1590
    %2192 = vmatprep.subr.bf16.mxu0 %v1585
    %2193 = vmatpush2.bf16.msra.mxu0 %v1584
    %2194 = vmatprep.subr.bf16.mxu0 %v1579
    %2195 = vmatpush2.bf16.msra.mxu0 %v1578
    %2196 = vmatprep.subr.bf16.mxu0 %v1573
    %2197 = vmatpush2.bf16.msra.mxu0 %v1572
    %2198 = vmatprep.mubr.bf16.mxu0 %v553
    %2199 = vmatmul.mubr.bf16.gmra.mxu0 %v552
    %v2200 = vpop.f32.mrf.mxu0
    %v2201 = vadd.f32 %v2160, %v2200
    %v2202 = vpop.f32.mrf.mxu0
    %v2203 = vadd.f32 %v2162, %v2202
    %v2204 = vpop.f32.mrf.mxu0
    %v2205 = vpop.f32.mrf.mxu0
    %2206 = vdwg.mxu0
    %2207 = vmatprep.subr.bf16.mxu0 %v1663
    %2208 = vmatpush1.bf16.msra.mxu0 %v1662
    %2209 = vmatprep.subr.bf16.mxu0 %v1657
    %2210 = vmatpush1.bf16.msra.mxu0 %v1656
    %2211 = vmatprep.subr.bf16.mxu0 %v1651
    %2212 = vmatpush1.bf16.msra.mxu0 %v1650
    %2213 = vmatprep.subr.bf16.mxu0 %v1645
    %2214 = vmatpush1.bf16.msra.mxu0 %v1644
    %2215 = vmatprep.subr.bf16.mxu0 %v1639
    %2216 = vmatpush1.bf16.msra.mxu0 %v1638
    %2217 = vmatprep.subr.bf16.mxu0 %v1633
    %2218 = vmatpush1.bf16.msra.mxu0 %v1632
    %2219 = vmatprep.subr.bf16.mxu0 %v1627
    %2220 = vmatpush1.bf16.msra.mxu0 %v1626
    %2221 = vmatprep.subr.bf16.mxu0 %v1621
    %2222 = vmatpush1.bf16.msra.mxu0 %v1620
    %2223 = vmatprep.subr.bf16.mxu0 %v1711
    %2224 = vmatpush2.bf16.msra.mxu0 %v1710
    %2225 = vmatprep.subr.bf16.mxu0 %v1705
    %2226 = vmatpush2.bf16.msra.mxu0 %v1704
    %2227 = vmatprep.subr.bf16.mxu0 %v1699
    %2228 = vmatpush2.bf16.msra.mxu0 %v1698
    %2229 = vmatprep.subr.bf16.mxu0 %v1693
    %2230 = vmatpush2.bf16.msra.mxu0 %v1692
    %2231 = vmatprep.subr.bf16.mxu0 %v1687
    %2232 = vmatpush2.bf16.msra.mxu0 %v1686
    %2233 = vmatprep.subr.bf16.mxu0 %v1681
    %2234 = vmatpush2.bf16.msra.mxu0 %v1680
    %2235 = vmatprep.subr.bf16.mxu0 %v1675
    %2236 = vmatpush2.bf16.msra.mxu0 %v1674
    %2237 = vmatprep.subr.bf16.mxu0 %v1669
    %2238 = vmatpush2.bf16.msra.mxu0 %v1668
    %2239 = vmatprep.mubr.bf16.mxu0 %v555
    %2240 = vmatmul.mubr.bf16.gmra.mxu0 %v554
    %v2241 = vpop.f32.mrf.mxu0
    %v2242 = vadd.f32 %v2201, %v2241
    %v2243 = vpop.f32.mrf.mxu0
    %v2244 = vadd.f32 %v2203, %v2243
    %v2245 = vpop.f32.mrf.mxu0
    %v2246 = vpop.f32.mrf.mxu0
    %2247 = vdwg.mxu0
    %2248 = vmatprep.subr.bf16.mxu0 %v1473
    %2249 = vmatpush1.bf16.msra.mxu0 %v1472
    %2250 = vmatprep.subr.bf16.mxu0 %v1467
    %2251 = vmatpush1.bf16.msra.mxu0 %v1466
    %2252 = vmatprep.subr.bf16.mxu0 %v1461
    %2253 = vmatpush1.bf16.msra.mxu0 %v1460
    %2254 = vmatprep.subr.bf16.mxu0 %v1455
    %2255 = vmatpush1.bf16.msra.mxu0 %v1454
    %2256 = vmatprep.subr.bf16.mxu0 %v1449
    %2257 = vmatpush1.bf16.msra.mxu0 %v1448
    %2258 = vmatprep.subr.bf16.mxu0 %v1443
    %2259 = vmatpush1.bf16.msra.mxu0 %v1442
    %2260 = vmatprep.subr.bf16.mxu0 %v1437
    %2261 = vmatpush1.bf16.msra.mxu0 %v1436
    %2262 = vmatprep.subr.bf16.mxu0 %v1431
    %2263 = vmatpush1.bf16.msra.mxu0 %v1430
    %2264 = vmatprep.subr.bf16.mxu0 %v1521
    %2265 = vmatpush2.bf16.msra.mxu0 %v1520
    %2266 = vmatprep.subr.bf16.mxu0 %v1515
    %2267 = vmatpush2.bf16.msra.mxu0 %v1514
    %2268 = vmatprep.subr.bf16.mxu0 %v1509
    %2269 = vmatpush2.bf16.msra.mxu0 %v1508
    %2270 = vmatprep.subr.bf16.mxu0 %v1503
    %2271 = vmatpush2.bf16.msra.mxu0 %v1502
    %2272 = vmatprep.subr.bf16.mxu0 %v1497
    %2273 = vmatpush2.bf16.msra.mxu0 %v1496
    %2274 = vmatprep.subr.bf16.mxu0 %v1491
    %2275 = vmatpush2.bf16.msra.mxu0 %v1490
    %2276 = vmatprep.subr.bf16.mxu0 %v1485
    %2277 = vmatpush2.bf16.msra.mxu0 %v1484
    %2278 = vmatprep.subr.bf16.mxu0 %v1479
    %2279 = vmatpush2.bf16.msra.mxu0 %v1478
    %2280 = vmatprep.mubr.bf16.mxu0 %v551
    %2281 = vmatmul.mubr.bf16.gmra.mxu0 %v550
    %v2282 = vpop.f32.mrf.mxu0
    %v2283 = vadd.f32 %v508, %v2282
    %v2284 = vpop.f32.mrf.mxu0
    %v2285 = vadd.f32 %v512, %v2284
    %v2286 = vpop.f32.mrf.mxu0
    %v2287 = vpop.f32.mrf.mxu0
    %2288 = vdwg.mxu0
    %2289 = vmatprep.subr.bf16.mxu0 %v1569
    %2290 = vmatpush1.bf16.msra.mxu0 %v1568
    %2291 = vmatprep.subr.bf16.mxu0 %v1563
    %2292 = vmatpush1.bf16.msra.mxu0 %v1562
    %2293 = vmatprep.subr.bf16.mxu0 %v1557
    %2294 = vmatpush1.bf16.msra.mxu0 %v1556
    %2295 = vmatprep.subr.bf16.mxu0 %v1551
    %2296 = vmatpush1.bf16.msra.mxu0 %v1550
    %2297 = vmatprep.subr.bf16.mxu0 %v1545
    %2298 = vmatpush1.bf16.msra.mxu0 %v1544
    %2299 = vmatprep.subr.bf16.mxu0 %v1539
    %2300 = vmatpush1.bf16.msra.mxu0 %v1538
    %2301 = vmatprep.subr.bf16.mxu0 %v1533
    %2302 = vmatpush1.bf16.msra.mxu0 %v1532
    %2303 = vmatprep.subr.bf16.mxu0 %v1527
    %2304 = vmatpush1.bf16.msra.mxu0 %v1526
    %2305 = vmatprep.subr.bf16.mxu0 %v1617
    %2306 = vmatpush2.bf16.msra.mxu0 %v1616
    %2307 = vmatprep.subr.bf16.mxu0 %v1611
    %2308 = vmatpush2.bf16.msra.mxu0 %v1610
    %2309 = vmatprep.subr.bf16.mxu0 %v1605
    %2310 = vmatpush2.bf16.msra.mxu0 %v1604
    %2311 = vmatprep.subr.bf16.mxu0 %v1599
    %2312 = vmatpush2.bf16.msra.mxu0 %v1598
    %2313 = vmatprep.subr.bf16.mxu0 %v1593
    %2314 = vmatpush2.bf16.msra.mxu0 %v1592
    %2315 = vmatprep.subr.bf16.mxu0 %v1587
    %2316 = vmatpush2.bf16.msra.mxu0 %v1586
    %2317 = vmatprep.subr.bf16.mxu0 %v1581
    %2318 = vmatpush2.bf16.msra.mxu0 %v1580
    %2319 = vmatprep.subr.bf16.mxu0 %v1575
    %2320 = vmatpush2.bf16.msra.mxu0 %v1574
    %2321 = vmatprep.mubr.bf16.mxu0 %v553
    %2322 = vmatmul.mubr.bf16.gmra.mxu0 %v552
    %v2323 = vpop.f32.mrf.mxu0
    %v2324 = vadd.f32 %v2283, %v2323
    %v2325 = vpop.f32.mrf.mxu0
    %v2326 = vadd.f32 %v2285, %v2325
    %v2327 = vpop.f32.mrf.mxu0
    %v2328 = vpop.f32.mrf.mxu0
    %2329 = vdwg.mxu0
    %2330 = vmatprep.subr.bf16.mxu0 %v1665
    %2331 = vmatpush1.bf16.msra.mxu0 %v1664
    %2332 = vmatprep.subr.bf16.mxu0 %v1659
    %2333 = vmatpush1.bf16.msra.mxu0 %v1658
    %2334 = vmatprep.subr.bf16.mxu0 %v1653
    %2335 = vmatpush1.bf16.msra.mxu0 %v1652
    %2336 = vmatprep.subr.bf16.mxu0 %v1647
    %2337 = vmatpush1.bf16.msra.mxu0 %v1646
    %2338 = vmatprep.subr.bf16.mxu0 %v1641
    %2339 = vmatpush1.bf16.msra.mxu0 %v1640
    %2340 = vmatprep.subr.bf16.mxu0 %v1635
    %2341 = vmatpush1.bf16.msra.mxu0 %v1634
    %2342 = vmatprep.subr.bf16.mxu0 %v1629
    %2343 = vmatpush1.bf16.msra.mxu0 %v1628
    %2344 = vmatprep.subr.bf16.mxu0 %v1623
    %2345 = vmatpush1.bf16.msra.mxu0 %v1622
    %2346 = vmatprep.subr.bf16.mxu0 %v1713
    %2347 = vmatpush2.bf16.msra.mxu0 %v1712
    %2348 = vmatprep.subr.bf16.mxu0 %v1707
    %2349 = vmatpush2.bf16.msra.mxu0 %v1706
    %2350 = vmatprep.subr.bf16.mxu0 %v1701
    %2351 = vmatpush2.bf16.msra.mxu0 %v1700
    %2352 = vmatprep.subr.bf16.mxu0 %v1695
    %2353 = vmatpush2.bf16.msra.mxu0 %v1694
    %2354 = vmatprep.subr.bf16.mxu0 %v1689
    %2355 = vmatpush2.bf16.msra.mxu0 %v1688
    %2356 = vmatprep.subr.bf16.mxu0 %v1683
    %2357 = vmatpush2.bf16.msra.mxu0 %v1682
    %2358 = vmatprep.subr.bf16.mxu0 %v1677
    %2359 = vmatpush2.bf16.msra.mxu0 %v1676
    %2360 = vmatprep.subr.bf16.mxu0 %v1671
    %2361 = vmatpush2.bf16.msra.mxu0 %v1670
    %2362 = vmatprep.mubr.bf16.mxu0 %v555
    %2363 = vmatmul.mubr.bf16.gmra.mxu0 %v554
    %v2364 = vpop.f32.mrf.mxu0
    %v2365 = vadd.f32 %v2324, %v2364
    %v2366 = vpop.f32.mrf.mxu0
    %v2367 = vadd.f32 %v2326, %v2366
    %v2368 = vpop.f32.mrf.mxu0
    %v2369 = vpop.f32.mrf.mxu0
    %2370 = vdwg.mxu0
    %v2371 = vpack.c.bf16 %v2119, %v2119
    %v2372 = vpack.c.bf16 %v2121, %v2121
    %v2373 = vpack.c.bf16 %v2242, %v2242
    %v2374 = vpack.c.bf16 %v2244, %v2244
    %v2375 = vpack.c.bf16 %v2365, %v2365
    %v2376 = vpack.c.bf16 %v2367, %v2367
    %v2377 = vld [vmem:[#allocation5] sm:$0xff]
    %v2378 = vld [vmem:[#allocation5 + $0x8] sm:$0xff]
    %v2379 = vld [vmem:[#allocation5 + $0x10] sm:$0xff]
    %v2380 = vld [vmem:[#allocation5 + $0x18] sm:$0xff]
    %v2381 = vld [vmem:[#allocation5 + $0x20] sm:$0xff]
    %v2382 = vld [vmem:[#allocation5 + $0x28] sm:$0xff]
    %v2383 = vld [vmem:[#allocation5 + $0x30] sm:$0xff]
    %v2384 = vld [vmem:[#allocation5 + $0x38] sm:$0xff]
    %v2385 = vld [vmem:[#allocation5 + $0x40] sm:$0xff]
    %v2386 = vld [vmem:[#allocation5 + $0x48] sm:$0xff]
    %v2387 = vld [vmem:[#allocation5 + $0x50] sm:$0xff]
    %v2388 = vld [vmem:[#allocation5 + $0x58] sm:$0xff]
    %v2389 = vld [vmem:[#allocation5 + $0x60] sm:$0xff]
    %v2390 = vld [vmem:[#allocation5 + $0x68] sm:$0xff]
    %v2391 = vld [vmem:[#allocation5 + $0x70] sm:$0xff]
    %v2392 = vld [vmem:[#allocation5 + $0x78] sm:$0xff]
    %v2393 = vld [vmem:[#allocation5 + $0x80] sm:$0xff]
    %v2394 = vld [vmem:[#allocation5 + $0x88] sm:$0xff]
    %v2395 = vld [vmem:[#allocation5 + $0x90] sm:$0xff]
    %v2396 = vld [vmem:[#allocation5 + $0x98] sm:$0xff]
    %v2397 = vld [vmem:[#allocation5 + $0xa0] sm:$0xff]
    %v2398 = vld [vmem:[#allocation5 + $0xa8] sm:$0xff]
    %v2399 = vld [vmem:[#allocation5 + $0xb0] sm:$0xff]
    %v2400 = vld [vmem:[#allocation5 + $0xb8] sm:$0xff]
    %v2401 = vld [vmem:[#allocation5 + $0xc0] sm:$0xff]
    %v2402 = vld [vmem:[#allocation5 + $0xc8] sm:$0xff]
    %v2403 = vld [vmem:[#allocation5 + $0xd0] sm:$0xff]
    %v2404 = vld [vmem:[#allocation5 + $0xd8] sm:$0xff]
    %v2405 = vld [vmem:[#allocation5 + $0xe0] sm:$0xff]
    %v2406 = vld [vmem:[#allocation5 + $0xe8] sm:$0xff]
    %v2407 = vld [vmem:[#allocation5 + $0xf0] sm:$0xff]
    %v2408 = vld [vmem:[#allocation5 + $0xf8] sm:$0xff]
    %v2409 = vld [vmem:[#allocation5 + $0x100] sm:$0xff]
    %v2410 = vld [vmem:[#allocation5 + $0x108] sm:$0xff]
    %v2411 = vld [vmem:[#allocation5 + $0x110] sm:$0xff]
    %v2412 = vld [vmem:[#allocation5 + $0x118] sm:$0xff]
    %v2413 = vld [vmem:[#allocation5 + $0x120] sm:$0xff]
    %v2414 = vld [vmem:[#allocation5 + $0x128] sm:$0xff]
    %v2415 = vld [vmem:[#allocation5 + $0x130] sm:$0xff]
    %v2416 = vld [vmem:[#allocation5 + $0x138] sm:$0xff]
    %v2417 = vld [vmem:[#allocation5 + $0x140] sm:$0xff]
    %v2418 = vld [vmem:[#allocation5 + $0x148] sm:$0xff]
    %v2419 = vld [vmem:[#allocation5 + $0x150] sm:$0xff]
    %v2420 = vld [vmem:[#allocation5 + $0x158] sm:$0xff]
    %v2421 = vld [vmem:[#allocation5 + $0x160] sm:$0xff]
    %v2422 = vld [vmem:[#allocation5 + $0x168] sm:$0xff]
    %v2423 = vld [vmem:[#allocation5 + $0x170] sm:$0xff]
    %v2424 = vld [vmem:[#allocation5 + $0x178] sm:$0xff]
    %v2425 = vld [vmem:[#allocation5 + $0x180] sm:$0xff]
    %v2426 = vld [vmem:[#allocation5 + $0x188] sm:$0xff]
    %v2427 = vld [vmem:[#allocation5 + $0x190] sm:$0xff]
    %v2428 = vld [vmem:[#allocation5 + $0x198] sm:$0xff]
    %v2429 = vld [vmem:[#allocation5 + $0x1a0] sm:$0xff]
    %v2430 = vld [vmem:[#allocation5 + $0x1a8] sm:$0xff]
    %v2431 = vld [vmem:[#allocation5 + $0x1b0] sm:$0xff]
    %v2432 = vld [vmem:[#allocation5 + $0x1b8] sm:$0xff]
    %v2433 = vld [vmem:[#allocation5 + $0x1c0] sm:$0xff]
    %v2434 = vld [vmem:[#allocation5 + $0x1c8] sm:$0xff]
    %v2435 = vld [vmem:[#allocation5 + $0x1d0] sm:$0xff]
    %v2436 = vld [vmem:[#allocation5 + $0x1d8] sm:$0xff]
    %v2437 = vld [vmem:[#allocation5 + $0x1e0] sm:$0xff]
    %v2438 = vld [vmem:[#allocation5 + $0x1e8] sm:$0xff]
    %v2439 = vld [vmem:[#allocation5 + $0x1f0] sm:$0xff]
    %v2440 = vld [vmem:[#allocation5 + $0x1f8] sm:$0xff]
    %v2441 = vld [vmem:[#allocation5 + $0x200] sm:$0xff]
    %v2442 = vld [vmem:[#allocation5 + $0x208] sm:$0xff]
    %v2443 = vld [vmem:[#allocation5 + $0x210] sm:$0xff]
    %v2444 = vld [vmem:[#allocation5 + $0x218] sm:$0xff]
    %v2445 = vld [vmem:[#allocation5 + $0x220] sm:$0xff]
    %v2446 = vld [vmem:[#allocation5 + $0x228] sm:$0xff]
    %v2447 = vld [vmem:[#allocation5 + $0x230] sm:$0xff]
    %v2448 = vld [vmem:[#allocation5 + $0x238] sm:$0xff]
    %v2449 = vld [vmem:[#allocation5 + $0x240] sm:$0xff]
    %v2450 = vld [vmem:[#allocation5 + $0x248] sm:$0xff]
    %v2451 = vld [vmem:[#allocation5 + $0x250] sm:$0xff]
    %v2452 = vld [vmem:[#allocation5 + $0x258] sm:$0xff]
    %v2453 = vld [vmem:[#allocation5 + $0x260] sm:$0xff]
    %v2454 = vld [vmem:[#allocation5 + $0x268] sm:$0xff]
    %v2455 = vld [vmem:[#allocation5 + $0x270] sm:$0xff]
    %v2456 = vld [vmem:[#allocation5 + $0x278] sm:$0xff]
    %v2457 = vld [vmem:[#allocation5 + $0x280] sm:$0xff]
    %v2458 = vld [vmem:[#allocation5 + $0x288] sm:$0xff]
    %v2459 = vld [vmem:[#allocation5 + $0x290] sm:$0xff]
    %v2460 = vld [vmem:[#allocation5 + $0x298] sm:$0xff]
    %v2461 = vld [vmem:[#allocation5 + $0x2a0] sm:$0xff]
    %v2462 = vld [vmem:[#allocation5 + $0x2a8] sm:$0xff]
    %v2463 = vld [vmem:[#allocation5 + $0x2b0] sm:$0xff]
    %v2464 = vld [vmem:[#allocation5 + $0x2b8] sm:$0xff]
    %v2465 = vld [vmem:[#allocation5 + $0x2c0] sm:$0xff]
    %v2466 = vld [vmem:[#allocation5 + $0x2c8] sm:$0xff]
    %v2467 = vld [vmem:[#allocation5 + $0x2d0] sm:$0xff]
    %v2468 = vld [vmem:[#allocation5 + $0x2d8] sm:$0xff]
    %v2469 = vld [vmem:[#allocation5 + $0x2e0] sm:$0xff]
    %v2470 = vld [vmem:[#allocation5 + $0x2e8] sm:$0xff]
    %v2471 = vld [vmem:[#allocation5 + $0x2f0] sm:$0xff]
    %v2472 = vld [vmem:[#allocation5 + $0x2f8] sm:$0xff]
    %v2473 = vld [vmem:[#allocation5 + $0x300] sm:$0xff]
    %v2474 = vld [vmem:[#allocation5 + $0x308] sm:$0xff]
    %v2475 = vld [vmem:[#allocation5 + $0x310] sm:$0xff]
    %v2476 = vld [vmem:[#allocation5 + $0x318] sm:$0xff]
    %v2477 = vld [vmem:[#allocation5 + $0x320] sm:$0xff]
    %v2478 = vld [vmem:[#allocation5 + $0x328] sm:$0xff]
    %v2479 = vld [vmem:[#allocation5 + $0x330] sm:$0xff]
    %v2480 = vld [vmem:[#allocation5 + $0x338] sm:$0xff]
    %v2481 = vld [vmem:[#allocation5 + $0x340] sm:$0xff]
    %v2482 = vld [vmem:[#allocation5 + $0x348] sm:$0xff]
    %v2483 = vld [vmem:[#allocation5 + $0x350] sm:$0xff]
    %v2484 = vld [vmem:[#allocation5 + $0x358] sm:$0xff]
    %v2485 = vld [vmem:[#allocation5 + $0x360] sm:$0xff]
    %v2486 = vld [vmem:[#allocation5 + $0x368] sm:$0xff]
    %v2487 = vld [vmem:[#allocation5 + $0x370] sm:$0xff]
    %v2488 = vld [vmem:[#allocation5 + $0x378] sm:$0xff]
    %v2489 = vld [vmem:[#allocation5 + $0x380] sm:$0xff]
    %v2490 = vld [vmem:[#allocation5 + $0x388] sm:$0xff]
    %v2491 = vld [vmem:[#allocation5 + $0x390] sm:$0xff]
    %v2492 = vld [vmem:[#allocation5 + $0x398] sm:$0xff]
    %v2493 = vld [vmem:[#allocation5 + $0x3a0] sm:$0xff]
    %v2494 = vld [vmem:[#allocation5 + $0x3a8] sm:$0xff]
    %v2495 = vld [vmem:[#allocation5 + $0x3b0] sm:$0xff]
    %v2496 = vld [vmem:[#allocation5 + $0x3b8] sm:$0xff]
    %v2497 = vld [vmem:[#allocation5 + $0x3c0] sm:$0xff]
    %v2498 = vld [vmem:[#allocation5 + $0x3c8] sm:$0xff]
    %v2499 = vld [vmem:[#allocation5 + $0x3d0] sm:$0xff]
    %v2500 = vld [vmem:[#allocation5 + $0x3d8] sm:$0xff]
    %v2501 = vld [vmem:[#allocation5 + $0x3e0] sm:$0xff]
    %v2502 = vld [vmem:[#allocation5 + $0x3e8] sm:$0xff]
    %v2503 = vld [vmem:[#allocation5 + $0x3f0] sm:$0xff]
    %v2504 = vld [vmem:[#allocation5 + $0x3f8] sm:$0xff]
    %v2505 = vld [vmem:[#allocation5 + $0x400] sm:$0xff]
    %v2506 = vld [vmem:[#allocation5 + $0x408] sm:$0xff]
    %v2507 = vld [vmem:[#allocation5 + $0x410] sm:$0xff]
    %v2508 = vld [vmem:[#allocation5 + $0x418] sm:$0xff]
    %v2509 = vld [vmem:[#allocation5 + $0x420] sm:$0xff]
    %v2510 = vld [vmem:[#allocation5 + $0x428] sm:$0xff]
    %v2511 = vld [vmem:[#allocation5 + $0x430] sm:$0xff]
    %v2512 = vld [vmem:[#allocation5 + $0x438] sm:$0xff]
    %v2513 = vld [vmem:[#allocation5 + $0x440] sm:$0xff]
    %v2514 = vld [vmem:[#allocation5 + $0x448] sm:$0xff]
    %v2515 = vld [vmem:[#allocation5 + $0x450] sm:$0xff]
    %v2516 = vld [vmem:[#allocation5 + $0x458] sm:$0xff]
    %v2517 = vld [vmem:[#allocation5 + $0x460] sm:$0xff]
    %v2518 = vld [vmem:[#allocation5 + $0x468] sm:$0xff]
    %v2519 = vld [vmem:[#allocation5 + $0x470] sm:$0xff]
    %v2520 = vld [vmem:[#allocation5 + $0x478] sm:$0xff]
    %v2521 = vld [vmem:[#allocation5 + $0x480] sm:$0xff]
    %v2522 = vld [vmem:[#allocation5 + $0x488] sm:$0xff]
    %v2523 = vld [vmem:[#allocation5 + $0x490] sm:$0xff]
    %v2524 = vld [vmem:[#allocation5 + $0x498] sm:$0xff]
    %v2525 = vld [vmem:[#allocation5 + $0x4a0] sm:$0xff]
    %v2526 = vld [vmem:[#allocation5 + $0x4a8] sm:$0xff]
    %v2527 = vld [vmem:[#allocation5 + $0x4b0] sm:$0xff]
    %v2528 = vld [vmem:[#allocation5 + $0x4b8] sm:$0xff]
    %v2529 = vld [vmem:[#allocation5 + $0x4c0] sm:$0xff]
    %v2530 = vld [vmem:[#allocation5 + $0x4c8] sm:$0xff]
    %v2531 = vld [vmem:[#allocation5 + $0x4d0] sm:$0xff]
    %v2532 = vld [vmem:[#allocation5 + $0x4d8] sm:$0xff]
    %v2533 = vld [vmem:[#allocation5 + $0x4e0] sm:$0xff]
    %v2534 = vld [vmem:[#allocation5 + $0x4e8] sm:$0xff]
    %v2535 = vld [vmem:[#allocation5 + $0x4f0] sm:$0xff]
    %v2536 = vld [vmem:[#allocation5 + $0x4f8] sm:$0xff]
    %v2537 = vld [vmem:[#allocation5 + $0x500] sm:$0xff]
    %v2538 = vld [vmem:[#allocation5 + $0x508] sm:$0xff]
    %v2539 = vld [vmem:[#allocation5 + $0x510] sm:$0xff]
    %v2540 = vld [vmem:[#allocation5 + $0x518] sm:$0xff]
    %v2541 = vld [vmem:[#allocation5 + $0x520] sm:$0xff]
    %v2542 = vld [vmem:[#allocation5 + $0x528] sm:$0xff]
    %v2543 = vld [vmem:[#allocation5 + $0x530] sm:$0xff]
    %v2544 = vld [vmem:[#allocation5 + $0x538] sm:$0xff]
    %v2545 = vld [vmem:[#allocation5 + $0x540] sm:$0xff]
    %v2546 = vld [vmem:[#allocation5 + $0x548] sm:$0xff]
    %v2547 = vld [vmem:[#allocation5 + $0x550] sm:$0xff]
    %v2548 = vld [vmem:[#allocation5 + $0x558] sm:$0xff]
    %v2549 = vld [vmem:[#allocation5 + $0x560] sm:$0xff]
    %v2550 = vld [vmem:[#allocation5 + $0x568] sm:$0xff]
    %v2551 = vld [vmem:[#allocation5 + $0x570] sm:$0xff]
    %v2552 = vld [vmem:[#allocation5 + $0x578] sm:$0xff]
    %v2553 = vld [vmem:[#allocation5 + $0x580] sm:$0xff]
    %v2554 = vld [vmem:[#allocation5 + $0x588] sm:$0xff]
    %v2555 = vld [vmem:[#allocation5 + $0x590] sm:$0xff]
    %v2556 = vld [vmem:[#allocation5 + $0x598] sm:$0xff]
    %v2557 = vld [vmem:[#allocation5 + $0x5a0] sm:$0xff]
    %v2558 = vld [vmem:[#allocation5 + $0x5a8] sm:$0xff]
    %v2559 = vld [vmem:[#allocation5 + $0x5b0] sm:$0xff]
    %v2560 = vld [vmem:[#allocation5 + $0x5b8] sm:$0xff]
    %v2561 = vld [vmem:[#allocation5 + $0x5c0] sm:$0xff]
    %v2562 = vld [vmem:[#allocation5 + $0x5c8] sm:$0xff]
    %v2563 = vld [vmem:[#allocation5 + $0x5d0] sm:$0xff]
    %v2564 = vld [vmem:[#allocation5 + $0x5d8] sm:$0xff]
    %v2565 = vld [vmem:[#allocation5 + $0x5e0] sm:$0xff]
    %v2566 = vld [vmem:[#allocation5 + $0x5e8] sm:$0xff]
    %v2567 = vld [vmem:[#allocation5 + $0x5f0] sm:$0xff]
    %v2568 = vld [vmem:[#allocation5 + $0x5f8] sm:$0xff]
    %v2569 = vld [vmem:[#allocation5 + $0x600] sm:$0xff]
    %v2570 = vld [vmem:[#allocation5 + $0x608] sm:$0xff]
    %v2571 = vld [vmem:[#allocation5 + $0x610] sm:$0xff]
    %v2572 = vld [vmem:[#allocation5 + $0x618] sm:$0xff]
    %v2573 = vld [vmem:[#allocation5 + $0x620] sm:$0xff]
    %v2574 = vld [vmem:[#allocation5 + $0x628] sm:$0xff]
    %v2575 = vld [vmem:[#allocation5 + $0x630] sm:$0xff]
    %v2576 = vld [vmem:[#allocation5 + $0x638] sm:$0xff]
    %v2577 = vld [vmem:[#allocation5 + $0x640] sm:$0xff]
    %v2578 = vld [vmem:[#allocation5 + $0x648] sm:$0xff]
    %v2579 = vld [vmem:[#allocation5 + $0x650] sm:$0xff]
    %v2580 = vld [vmem:[#allocation5 + $0x658] sm:$0xff]
    %v2581 = vld [vmem:[#allocation5 + $0x660] sm:$0xff]
    %v2582 = vld [vmem:[#allocation5 + $0x668] sm:$0xff]
    %v2583 = vld [vmem:[#allocation5 + $0x670] sm:$0xff]
    %v2584 = vld [vmem:[#allocation5 + $0x678] sm:$0xff]
    %v2585 = vld [vmem:[#allocation5 + $0x680] sm:$0xff]
    %v2586 = vld [vmem:[#allocation5 + $0x688] sm:$0xff]
    %v2587 = vld [vmem:[#allocation5 + $0x690] sm:$0xff]
    %v2588 = vld [vmem:[#allocation5 + $0x698] sm:$0xff]
    %v2589 = vld [vmem:[#allocation5 + $0x6a0] sm:$0xff]
    %v2590 = vld [vmem:[#allocation5 + $0x6a8] sm:$0xff]
    %v2591 = vld [vmem:[#allocation5 + $0x6b0] sm:$0xff]
    %v2592 = vld [vmem:[#allocation5 + $0x6b8] sm:$0xff]
    %v2593 = vld [vmem:[#allocation5 + $0x6c0] sm:$0xff]
    %v2594 = vld [vmem:[#allocation5 + $0x6c8] sm:$0xff]
    %v2595 = vld [vmem:[#allocation5 + $0x6d0] sm:$0xff]
    %v2596 = vld [vmem:[#allocation5 + $0x6d8] sm:$0xff]
    %v2597 = vld [vmem:[#allocation5 + $0x6e0] sm:$0xff]
    %v2598 = vld [vmem:[#allocation5 + $0x6e8] sm:$0xff]
    %v2599 = vld [vmem:[#allocation5 + $0x6f0] sm:$0xff]
    %v2600 = vld [vmem:[#allocation5 + $0x6f8] sm:$0xff]
    %v2601 = vld [vmem:[#allocation5 + $0x700] sm:$0xff]
    %v2602 = vld [vmem:[#allocation5 + $0x708] sm:$0xff]
    %v2603 = vld [vmem:[#allocation5 + $0x710] sm:$0xff]
    %v2604 = vld [vmem:[#allocation5 + $0x718] sm:$0xff]
    %v2605 = vld [vmem:[#allocation5 + $0x720] sm:$0xff]
    %v2606 = vld [vmem:[#allocation5 + $0x728] sm:$0xff]
    %v2607 = vld [vmem:[#allocation5 + $0x730] sm:$0xff]
    %v2608 = vld [vmem:[#allocation5 + $0x738] sm:$0xff]
    %v2609 = vld [vmem:[#allocation5 + $0x740] sm:$0xff]
    %v2610 = vld [vmem:[#allocation5 + $0x748] sm:$0xff]
    %v2611 = vld [vmem:[#allocation5 + $0x750] sm:$0xff]
    %v2612 = vld [vmem:[#allocation5 + $0x758] sm:$0xff]
    %v2613 = vld [vmem:[#allocation5 + $0x760] sm:$0xff]
    %v2614 = vld [vmem:[#allocation5 + $0x768] sm:$0xff]
    %v2615 = vld [vmem:[#allocation5 + $0x770] sm:$0xff]
    %v2616 = vld [vmem:[#allocation5 + $0x778] sm:$0xff]
    %v2617 = vld [vmem:[#allocation5 + $0x780] sm:$0xff]
    %v2618 = vld [vmem:[#allocation5 + $0x788] sm:$0xff]
    %v2619 = vld [vmem:[#allocation5 + $0x790] sm:$0xff]
    %v2620 = vld [vmem:[#allocation5 + $0x798] sm:$0xff]
    %v2621 = vld [vmem:[#allocation5 + $0x7a0] sm:$0xff]
    %v2622 = vld [vmem:[#allocation5 + $0x7a8] sm:$0xff]
    %v2623 = vld [vmem:[#allocation5 + $0x7b0] sm:$0xff]
    %v2624 = vld [vmem:[#allocation5 + $0x7b8] sm:$0xff]
    %v2625 = vld [vmem:[#allocation5 + $0x7c0] sm:$0xff]
    %v2626 = vld [vmem:[#allocation5 + $0x7c8] sm:$0xff]
    %v2627 = vld [vmem:[#allocation5 + $0x7d0] sm:$0xff]
    %v2628 = vld [vmem:[#allocation5 + $0x7d8] sm:$0xff]
    %v2629 = vld [vmem:[#allocation5 + $0x7e0] sm:$0xff]
    %v2630 = vld [vmem:[#allocation5 + $0x7e8] sm:$0xff]
    %v2631 = vld [vmem:[#allocation5 + $0x7f0] sm:$0xff]
    %v2632 = vld [vmem:[#allocation5 + $0x7f8] sm:$0xff]
    %v2633 = vld [vmem:[#allocation5 + $0x800] sm:$0xff]
    %v2634 = vld [vmem:[#allocation5 + $0x808] sm:$0xff]
    %v2635 = vld [vmem:[#allocation5 + $0x810] sm:$0xff]
    %v2636 = vld [vmem:[#allocation5 + $0x818] sm:$0xff]
    %v2637 = vld [vmem:[#allocation5 + $0x820] sm:$0xff]
    %v2638 = vld [vmem:[#allocation5 + $0x828] sm:$0xff]
    %v2639 = vld [vmem:[#allocation5 + $0x830] sm:$0xff]
    %v2640 = vld [vmem:[#allocation5 + $0x838] sm:$0xff]
    %v2641 = vld [vmem:[#allocation5 + $0x840] sm:$0xff]
    %v2642 = vld [vmem:[#allocation5 + $0x848] sm:$0xff]
    %v2643 = vld [vmem:[#allocation5 + $0x850] sm:$0xff]
    %v2644 = vld [vmem:[#allocation5 + $0x858] sm:$0xff]
    %v2645 = vld [vmem:[#allocation5 + $0x860] sm:$0xff]
    %v2646 = vld [vmem:[#allocation5 + $0x868] sm:$0xff]
    %v2647 = vld [vmem:[#allocation5 + $0x870] sm:$0xff]
    %v2648 = vld [vmem:[#allocation5 + $0x878] sm:$0xff]
    %v2649 = vld [vmem:[#allocation5 + $0x880] sm:$0xff]
    %v2650 = vld [vmem:[#allocation5 + $0x888] sm:$0xff]
    %v2651 = vld [vmem:[#allocation5 + $0x890] sm:$0xff]
    %v2652 = vld [vmem:[#allocation5 + $0x898] sm:$0xff]
    %v2653 = vld [vmem:[#allocation5 + $0x8a0] sm:$0xff]
    %v2654 = vld [vmem:[#allocation5 + $0x8a8] sm:$0xff]
    %v2655 = vld [vmem:[#allocation5 + $0x8b0] sm:$0xff]
    %v2656 = vld [vmem:[#allocation5 + $0x8b8] sm:$0xff]
    %v2657 = vld [vmem:[#allocation5 + $0x8c0] sm:$0xff]
    %v2658 = vld [vmem:[#allocation5 + $0x8c8] sm:$0xff]
    %v2659 = vld [vmem:[#allocation5 + $0x8d0] sm:$0xff]
    %v2660 = vld [vmem:[#allocation5 + $0x8d8] sm:$0xff]
    %v2661 = vld [vmem:[#allocation5 + $0x8e0] sm:$0xff]
    %v2662 = vld [vmem:[#allocation5 + $0x8e8] sm:$0xff]
    %v2663 = vld [vmem:[#allocation5 + $0x8f0] sm:$0xff]
    %v2664 = vld [vmem:[#allocation5 + $0x8f8] sm:$0xff]
    %v2665 = vlaneseq
    %v2666 = vshrl.u32 %v2665, 7
    %v2667 = vsub.s32 1, %v2666
    %v2668 = vrot.slane %v115, %v2667
    %v2669 = vlaneseq
    %v2670 = vshrl.u32 %v2669, 7
    %v2671 = vsub.s32 1, %v2670
    %v2672 = vrot.slane %v116, %v2671
    %v2673 = vlaneseq
    %v2674 = vshrl.u32 %v2673, 7
    %v2675 = vsub.s32 1, %v2674
    %v2676 = vrot.slane %v117, %v2675
    %v2677 = vlaneseq
    %v2678 = vshrl.u32 %v2677, 7
    %v2679 = vsub.s32 1, %v2678
    %v2680 = vrot.slane %v118, %v2679
    %v2681 = vlaneseq
    %v2682 = vshrl.u32 %v2681, 7
    %v2683 = vsub.s32 1, %v2682
    %v2684 = vrot.slane %v119, %v2683
    %v2685 = vlaneseq
    %v2686 = vshrl.u32 %v2685, 7
    %v2687 = vsub.s32 1, %v2686
    %v2688 = vrot.slane %v120, %v2687
    %v2977 = vunpack.c.l.b16 %v2377
    %v2978 = vunpack.c.h.b16 %v2377
    %v2979 = vunpack.c.l.b16 %v2378
    %v2980 = vunpack.c.h.b16 %v2378
    %v2981 = vunpack.c.l.b16 %v2379
    %v2982 = vunpack.c.h.b16 %v2379
    %v2983 = vunpack.c.l.b16 %v2380
    %v2984 = vunpack.c.h.b16 %v2380
    %v2985 = vunpack.c.l.b16 %v2381
    %v2986 = vunpack.c.h.b16 %v2381
    %v2987 = vunpack.c.l.b16 %v2382
    %v2988 = vunpack.c.h.b16 %v2382
    %v2989 = vunpack.c.l.b16 %v2383
    %v2990 = vunpack.c.h.b16 %v2383
    %v2991 = vunpack.c.l.b16 %v2384
    %v2992 = vunpack.c.h.b16 %v2384
    %v2993 = vunpack.c.l.b16 %v2385
    %v2994 = vunpack.c.h.b16 %v2385
    %v2995 = vunpack.c.l.b16 %v2386
    %v2996 = vunpack.c.h.b16 %v2386
    %v2997 = vunpack.c.l.b16 %v2387
    %v2998 = vunpack.c.h.b16 %v2387
    %v2999 = vunpack.c.l.b16 %v2388
    %v3000 = vunpack.c.h.b16 %v2388
    %v3001 = vunpack.c.l.b16 %v2389
    %v3002 = vunpack.c.h.b16 %v2389
    %v3003 = vunpack.c.l.b16 %v2390
    %v3004 = vunpack.c.h.b16 %v2390
    %v3005 = vunpack.c.l.b16 %v2391
    %v3006 = vunpack.c.h.b16 %v2391
    %v3007 = vunpack.c.l.b16 %v2392
    %v3008 = vunpack.c.h.b16 %v2392
    %v3009 = vunpack.c.l.b16 %v2393
    %v3010 = vunpack.c.h.b16 %v2393
    %v3011 = vunpack.c.l.b16 %v2394
    %v3012 = vunpack.c.h.b16 %v2394
    %v3013 = vunpack.c.l.b16 %v2395
    %v3014 = vunpack.c.h.b16 %v2395
    %v3015 = vunpack.c.l.b16 %v2396
    %v3016 = vunpack.c.h.b16 %v2396
    %v3017 = vunpack.c.l.b16 %v2397
    %v3018 = vunpack.c.h.b16 %v2397
    %v3019 = vunpack.c.l.b16 %v2398
    %v3020 = vunpack.c.h.b16 %v2398
    %v3021 = vunpack.c.l.b16 %v2399
    %v3022 = vunpack.c.h.b16 %v2399
    %v3023 = vunpack.c.l.b16 %v2400
    %v3024 = vunpack.c.h.b16 %v2400
    %v3025 = vunpack.c.l.b16 %v2401
    %v3026 = vunpack.c.h.b16 %v2401
    %v3027 = vunpack.c.l.b16 %v2402
    %v3028 = vunpack.c.h.b16 %v2402
    %v3029 = vunpack.c.l.b16 %v2403
    %v3030 = vunpack.c.h.b16 %v2403
    %v3031 = vunpack.c.l.b16 %v2404
    %v3032 = vunpack.c.h.b16 %v2404
    %v3033 = vunpack.c.l.b16 %v2405
    %v3034 = vunpack.c.h.b16 %v2405
    %v3035 = vunpack.c.l.b16 %v2406
    %v3036 = vunpack.c.h.b16 %v2406
    %v3037 = vunpack.c.l.b16 %v2407
    %v3038 = vunpack.c.h.b16 %v2407
    %v3039 = vunpack.c.l.b16 %v2408
    %v3040 = vunpack.c.h.b16 %v2408
    %v3041 = vunpack.c.l.b16 %v2409
    %v3042 = vunpack.c.h.b16 %v2409
    %v3043 = vunpack.c.l.b16 %v2410
    %v3044 = vunpack.c.h.b16 %v2410
    %v3045 = vunpack.c.l.b16 %v2411
    %v3046 = vunpack.c.h.b16 %v2411
    %v3047 = vunpack.c.l.b16 %v2412
    %v3048 = vunpack.c.h.b16 %v2412
    %v3049 = vunpack.c.l.b16 %v2413
    %v3050 = vunpack.c.h.b16 %v2413
    %v3051 = vunpack.c.l.b16 %v2414
    %v3052 = vunpack.c.h.b16 %v2414
    %v3053 = vunpack.c.l.b16 %v2415
    %v3054 = vunpack.c.h.b16 %v2415
    %v3055 = vunpack.c.l.b16 %v2416
    %v3056 = vunpack.c.h.b16 %v2416
    %v3057 = vunpack.c.l.b16 %v2417
    %v3058 = vunpack.c.h.b16 %v2417
    %v3059 = vunpack.c.l.b16 %v2418
    %v3060 = vunpack.c.h.b16 %v2418
    %v3061 = vunpack.c.l.b16 %v2419
    %v3062 = vunpack.c.h.b16 %v2419
    %v3063 = vunpack.c.l.b16 %v2420
    %v3064 = vunpack.c.h.b16 %v2420
    %v3065 = vunpack.c.l.b16 %v2421
    %v3066 = vunpack.c.h.b16 %v2421
    %v3067 = vunpack.c.l.b16 %v2422
    %v3068 = vunpack.c.h.b16 %v2422
    %v3069 = vunpack.c.l.b16 %v2423
    %v3070 = vunpack.c.h.b16 %v2423
    %v3071 = vunpack.c.l.b16 %v2424
    %v3072 = vunpack.c.h.b16 %v2424
    %v3073 = vunpack.c.l.b16 %v2425
    %v3074 = vunpack.c.h.b16 %v2425
    %v3075 = vunpack.c.l.b16 %v2426
    %v3076 = vunpack.c.h.b16 %v2426
    %v3077 = vunpack.c.l.b16 %v2427
    %v3078 = vunpack.c.h.b16 %v2427
    %v3079 = vunpack.c.l.b16 %v2428
    %v3080 = vunpack.c.h.b16 %v2428
    %v3081 = vunpack.c.l.b16 %v2429
    %v3082 = vunpack.c.h.b16 %v2429
    %v3083 = vunpack.c.l.b16 %v2430
    %v3084 = vunpack.c.h.b16 %v2430
    %v3085 = vunpack.c.l.b16 %v2431
    %v3086 = vunpack.c.h.b16 %v2431
    %v3087 = vunpack.c.l.b16 %v2432
    %v3088 = vunpack.c.h.b16 %v2432
    %v3089 = vunpack.c.l.b16 %v2433
    %v3090 = vunpack.c.h.b16 %v2433
    %v3091 = vunpack.c.l.b16 %v2434
    %v3092 = vunpack.c.h.b16 %v2434
    %v3093 = vunpack.c.l.b16 %v2435
    %v3094 = vunpack.c.h.b16 %v2435
    %v3095 = vunpack.c.l.b16 %v2436
    %v3096 = vunpack.c.h.b16 %v2436
    %v3097 = vunpack.c.l.b16 %v2437
    %v3098 = vunpack.c.h.b16 %v2437
    %v3099 = vunpack.c.l.b16 %v2438
    %v3100 = vunpack.c.h.b16 %v2438
    %v3101 = vunpack.c.l.b16 %v2439
    %v3102 = vunpack.c.h.b16 %v2439
    %v3103 = vunpack.c.l.b16 %v2440
    %v3104 = vunpack.c.h.b16 %v2440
    %v3105 = vunpack.c.l.b16 %v2441
    %v3106 = vunpack.c.h.b16 %v2441
    %v3107 = vunpack.c.l.b16 %v2442
    %v3108 = vunpack.c.h.b16 %v2442
    %v3109 = vunpack.c.l.b16 %v2443
    %v3110 = vunpack.c.h.b16 %v2443
    %v3111 = vunpack.c.l.b16 %v2444
    %v3112 = vunpack.c.h.b16 %v2444
    %v3113 = vunpack.c.l.b16 %v2445
    %v3114 = vunpack.c.h.b16 %v2445
    %v3115 = vunpack.c.l.b16 %v2446
    %v3116 = vunpack.c.h.b16 %v2446
    %v3117 = vunpack.c.l.b16 %v2447
    %v3118 = vunpack.c.h.b16 %v2447
    %v3119 = vunpack.c.l.b16 %v2448
    %v3120 = vunpack.c.h.b16 %v2448
    %v3121 = vunpack.c.l.b16 %v2449
    %v3122 = vunpack.c.h.b16 %v2449
    %v3123 = vunpack.c.l.b16 %v2450
    %v3124 = vunpack.c.h.b16 %v2450
    %v3125 = vunpack.c.l.b16 %v2451
    %v3126 = vunpack.c.h.b16 %v2451
    %v3127 = vunpack.c.l.b16 %v2452
    %v3128 = vunpack.c.h.b16 %v2452
    %v3129 = vunpack.c.l.b16 %v2453
    %v3130 = vunpack.c.h.b16 %v2453
    %v3131 = vunpack.c.l.b16 %v2454
    %v3132 = vunpack.c.h.b16 %v2454
    %v3133 = vunpack.c.l.b16 %v2455
    %v3134 = vunpack.c.h.b16 %v2455
    %v3135 = vunpack.c.l.b16 %v2456
    %v3136 = vunpack.c.h.b16 %v2456
    %v3137 = vunpack.c.l.b16 %v2457
    %v3138 = vunpack.c.h.b16 %v2457
    %v3139 = vunpack.c.l.b16 %v2458
    %v3140 = vunpack.c.h.b16 %v2458
    %v3141 = vunpack.c.l.b16 %v2459
    %v3142 = vunpack.c.h.b16 %v2459
    %v3143 = vunpack.c.l.b16 %v2460
    %v3144 = vunpack.c.h.b16 %v2460
    %v3145 = vunpack.c.l.b16 %v2461
    %v3146 = vunpack.c.h.b16 %v2461
    %v3147 = vunpack.c.l.b16 %v2462
    %v3148 = vunpack.c.h.b16 %v2462
    %v3149 = vunpack.c.l.b16 %v2463
    %v3150 = vunpack.c.h.b16 %v2463
    %v3151 = vunpack.c.l.b16 %v2464
    %v3152 = vunpack.c.h.b16 %v2464
    %v3153 = vunpack.c.l.b16 %v2465
    %v3154 = vunpack.c.h.b16 %v2465
    %v3155 = vunpack.c.l.b16 %v2466
    %v3156 = vunpack.c.h.b16 %v2466
    %v3157 = vunpack.c.l.b16 %v2467
    %v3158 = vunpack.c.h.b16 %v2467
    %v3159 = vunpack.c.l.b16 %v2468
    %v3160 = vunpack.c.h.b16 %v2468
    %v3161 = vunpack.c.l.b16 %v2469
    %v3162 = vunpack.c.h.b16 %v2469
    %v3163 = vunpack.c.l.b16 %v2470
    %v3164 = vunpack.c.h.b16 %v2470
    %v3165 = vunpack.c.l.b16 %v2471
    %v3166 = vunpack.c.h.b16 %v2471
    %v3167 = vunpack.c.l.b16 %v2472
    %v3168 = vunpack.c.h.b16 %v2472
    %v3169 = vunpack.c.l.b16 %v2473
    %v3170 = vunpack.c.h.b16 %v2473
    %v3171 = vunpack.c.l.b16 %v2474
    %v3172 = vunpack.c.h.b16 %v2474
    %v3173 = vunpack.c.l.b16 %v2475
    %v3174 = vunpack.c.h.b16 %v2475
    %v3175 = vunpack.c.l.b16 %v2476
    %v3176 = vunpack.c.h.b16 %v2476
    %v3177 = vunpack.c.l.b16 %v2477
    %v3178 = vunpack.c.h.b16 %v2477
    %v3179 = vunpack.c.l.b16 %v2478
    %v3180 = vunpack.c.h.b16 %v2478
    %v3181 = vunpack.c.l.b16 %v2479
    %v3182 = vunpack.c.h.b16 %v2479
    %v3183 = vunpack.c.l.b16 %v2480
    %v3184 = vunpack.c.h.b16 %v2480
    %v3185 = vunpack.c.l.b16 %v2481
    %v3186 = vunpack.c.h.b16 %v2481
    %v3187 = vunpack.c.l.b16 %v2482
    %v3188 = vunpack.c.h.b16 %v2482
    %v3189 = vunpack.c.l.b16 %v2483
    %v3190 = vunpack.c.h.b16 %v2483
    %v3191 = vunpack.c.l.b16 %v2484
    %v3192 = vunpack.c.h.b16 %v2484
    %v3193 = vunpack.c.l.b16 %v2485
    %v3194 = vunpack.c.h.b16 %v2485
    %v3195 = vunpack.c.l.b16 %v2486
    %v3196 = vunpack.c.h.b16 %v2486
    %v3197 = vunpack.c.l.b16 %v2487
    %v3198 = vunpack.c.h.b16 %v2487
    %v3199 = vunpack.c.l.b16 %v2488
    %v3200 = vunpack.c.h.b16 %v2488
    %v3201 = vunpack.c.l.b16 %v2489
    %v3202 = vunpack.c.h.b16 %v2489
    %v3203 = vunpack.c.l.b16 %v2490
    %v3204 = vunpack.c.h.b16 %v2490
    %v3205 = vunpack.c.l.b16 %v2491
    %v3206 = vunpack.c.h.b16 %v2491
    %v3207 = vunpack.c.l.b16 %v2492
    %v3208 = vunpack.c.h.b16 %v2492
    %v3209 = vunpack.c.l.b16 %v2493
    %v3210 = vunpack.c.h.b16 %v2493
    %v3211 = vunpack.c.l.b16 %v2494
    %v3212 = vunpack.c.h.b16 %v2494
    %v3213 = vunpack.c.l.b16 %v2495
    %v3214 = vunpack.c.h.b16 %v2495
    %v3215 = vunpack.c.l.b16 %v2496
    %v3216 = vunpack.c.h.b16 %v2496
    %v3217 = vunpack.c.l.b16 %v2497
    %v3218 = vunpack.c.h.b16 %v2497
    %v3219 = vunpack.c.l.b16 %v2498
    %v3220 = vunpack.c.h.b16 %v2498
    %v3221 = vunpack.c.l.b16 %v2499
    %v3222 = vunpack.c.h.b16 %v2499
    %v3223 = vunpack.c.l.b16 %v2500
    %v3224 = vunpack.c.h.b16 %v2500
    %v3225 = vunpack.c.l.b16 %v2501
    %v3226 = vunpack.c.h.b16 %v2501
    %v3227 = vunpack.c.l.b16 %v2502
    %v3228 = vunpack.c.h.b16 %v2502
    %v3229 = vunpack.c.l.b16 %v2503
    %v3230 = vunpack.c.h.b16 %v2503
    %v3231 = vunpack.c.l.b16 %v2504
    %v3232 = vunpack.c.h.b16 %v2504
    %v3233 = vunpack.c.l.b16 %v2505
    %v3234 = vunpack.c.h.b16 %v2505
    %v3235 = vunpack.c.l.b16 %v2506
    %v3236 = vunpack.c.h.b16 %v2506
    %v3237 = vunpack.c.l.b16 %v2507
    %v3238 = vunpack.c.h.b16 %v2507
    %v3239 = vunpack.c.l.b16 %v2508
    %v3240 = vunpack.c.h.b16 %v2508
    %v3241 = vunpack.c.l.b16 %v2509
    %v3242 = vunpack.c.h.b16 %v2509
    %v3243 = vunpack.c.l.b16 %v2510
    %v3244 = vunpack.c.h.b16 %v2510
    %v3245 = vunpack.c.l.b16 %v2511
    %v3246 = vunpack.c.h.b16 %v2511
    %v3247 = vunpack.c.l.b16 %v2512
    %v3248 = vunpack.c.h.b16 %v2512
    %v3249 = vunpack.c.l.b16 %v2513
    %v3250 = vunpack.c.h.b16 %v2513
    %v3251 = vunpack.c.l.b16 %v2514
    %v3252 = vunpack.c.h.b16 %v2514
    %v3253 = vunpack.c.l.b16 %v2515
    %v3254 = vunpack.c.h.b16 %v2515
    %v3255 = vunpack.c.l.b16 %v2516
    %v3256 = vunpack.c.h.b16 %v2516
    %v3257 = vunpack.c.l.b16 %v2517
    %v3258 = vunpack.c.h.b16 %v2517
    %v3259 = vunpack.c.l.b16 %v2518
    %v3260 = vunpack.c.h.b16 %v2518
    %v3261 = vunpack.c.l.b16 %v2519
    %v3262 = vunpack.c.h.b16 %v2519
    %v3263 = vunpack.c.l.b16 %v2520
    %v3264 = vunpack.c.h.b16 %v2520
    %v3265 = vunpack.c.l.b16 %v2521
    %v3266 = vunpack.c.h.b16 %v2521
    %v3267 = vunpack.c.l.b16 %v2522
    %v3268 = vunpack.c.h.b16 %v2522
    %v3269 = vunpack.c.l.b16 %v2523
    %v3270 = vunpack.c.h.b16 %v2523
    %v3271 = vunpack.c.l.b16 %v2524
    %v3272 = vunpack.c.h.b16 %v2524
    %v3273 = vunpack.c.l.b16 %v2525
    %v3274 = vunpack.c.h.b16 %v2525
    %v3275 = vunpack.c.l.b16 %v2526
    %v3276 = vunpack.c.h.b16 %v2526
    %v3277 = vunpack.c.l.b16 %v2527
    %v3278 = vunpack.c.h.b16 %v2527
    %v3279 = vunpack.c.l.b16 %v2528
    %v3280 = vunpack.c.h.b16 %v2528
    %v3281 = vunpack.c.l.b16 %v2529
    %v3282 = vunpack.c.h.b16 %v2529
    %v3283 = vunpack.c.l.b16 %v2530
    %v3284 = vunpack.c.h.b16 %v2530
    %v3285 = vunpack.c.l.b16 %v2531
    %v3286 = vunpack.c.h.b16 %v2531
    %v3287 = vunpack.c.l.b16 %v2532
    %v3288 = vunpack.c.h.b16 %v2532
    %v3289 = vunpack.c.l.b16 %v2533
    %v3290 = vunpack.c.h.b16 %v2533
    %v3291 = vunpack.c.l.b16 %v2534
    %v3292 = vunpack.c.h.b16 %v2534
    %v3293 = vunpack.c.l.b16 %v2535
    %v3294 = vunpack.c.h.b16 %v2535
    %v3295 = vunpack.c.l.b16 %v2536
    %v3296 = vunpack.c.h.b16 %v2536
    %v3297 = vunpack.c.l.b16 %v2537
    %v3298 = vunpack.c.h.b16 %v2537
    %v3299 = vunpack.c.l.b16 %v2538
    %v3300 = vunpack.c.h.b16 %v2538
    %v3301 = vunpack.c.l.b16 %v2539
    %v3302 = vunpack.c.h.b16 %v2539
    %v3303 = vunpack.c.l.b16 %v2540
    %v3304 = vunpack.c.h.b16 %v2540
    %v3305 = vunpack.c.l.b16 %v2541
    %v3306 = vunpack.c.h.b16 %v2541
    %v3307 = vunpack.c.l.b16 %v2542
    %v3308 = vunpack.c.h.b16 %v2542
    %v3309 = vunpack.c.l.b16 %v2543
    %v3310 = vunpack.c.h.b16 %v2543
    %v3311 = vunpack.c.l.b16 %v2544
    %v3312 = vunpack.c.h.b16 %v2544
    %v3313 = vunpack.c.l.b16 %v2545
    %v3314 = vunpack.c.h.b16 %v2545
    %v3315 = vunpack.c.l.b16 %v2546
    %v3316 = vunpack.c.h.b16 %v2546
    %v3317 = vunpack.c.l.b16 %v2547
    %v3318 = vunpack.c.h.b16 %v2547
    %v3319 = vunpack.c.l.b16 %v2548
    %v3320 = vunpack.c.h.b16 %v2548
    %v3321 = vunpack.c.l.b16 %v2549
    %v3322 = vunpack.c.h.b16 %v2549
    %v3323 = vunpack.c.l.b16 %v2550
    %v3324 = vunpack.c.h.b16 %v2550
    %v3325 = vunpack.c.l.b16 %v2551
    %v3326 = vunpack.c.h.b16 %v2551
    %v3327 = vunpack.c.l.b16 %v2552
    %v3328 = vunpack.c.h.b16 %v2552
    %v3329 = vunpack.c.l.b16 %v2553
    %v3330 = vunpack.c.h.b16 %v2553
    %v3331 = vunpack.c.l.b16 %v2554
    %v3332 = vunpack.c.h.b16 %v2554
    %v3333 = vunpack.c.l.b16 %v2555
    %v3334 = vunpack.c.h.b16 %v2555
    %v3335 = vunpack.c.l.b16 %v2556
    %v3336 = vunpack.c.h.b16 %v2556
    %v3337 = vunpack.c.l.b16 %v2557
    %v3338 = vunpack.c.h.b16 %v2557
    %v3339 = vunpack.c.l.b16 %v2558
    %v3340 = vunpack.c.h.b16 %v2558
    %v3341 = vunpack.c.l.b16 %v2559
    %v3342 = vunpack.c.h.b16 %v2559
    %v3343 = vunpack.c.l.b16 %v2560
    %v3344 = vunpack.c.h.b16 %v2560
    %v3345 = vunpack.c.l.b16 %v2561
    %v3346 = vunpack.c.h.b16 %v2561
    %v3347 = vunpack.c.l.b16 %v2562
    %v3348 = vunpack.c.h.b16 %v2562
    %v3349 = vunpack.c.l.b16 %v2563
    %v3350 = vunpack.c.h.b16 %v2563
    %v3351 = vunpack.c.l.b16 %v2564
    %v3352 = vunpack.c.h.b16 %v2564
    %v3353 = vunpack.c.l.b16 %v2565
    %v3354 = vunpack.c.h.b16 %v2565
    %v3355 = vunpack.c.l.b16 %v2566
    %v3356 = vunpack.c.h.b16 %v2566
    %v3357 = vunpack.c.l.b16 %v2567
    %v3358 = vunpack.c.h.b16 %v2567
    %v3359 = vunpack.c.l.b16 %v2568
    %v3360 = vunpack.c.h.b16 %v2568
    %v3361 = vunpack.c.l.b16 %v2569
    %v3362 = vunpack.c.h.b16 %v2569
    %v3363 = vunpack.c.l.b16 %v2570
    %v3364 = vunpack.c.h.b16 %v2570
    %v3365 = vunpack.c.l.b16 %v2571
    %v3366 = vunpack.c.h.b16 %v2571
    %v3367 = vunpack.c.l.b16 %v2572
    %v3368 = vunpack.c.h.b16 %v2572
    %v3369 = vunpack.c.l.b16 %v2573
    %v3370 = vunpack.c.h.b16 %v2573
    %v3371 = vunpack.c.l.b16 %v2574
    %v3372 = vunpack.c.h.b16 %v2574
    %v3373 = vunpack.c.l.b16 %v2575
    %v3374 = vunpack.c.h.b16 %v2575
    %v3375 = vunpack.c.l.b16 %v2576
    %v3376 = vunpack.c.h.b16 %v2576
    %v3377 = vunpack.c.l.b16 %v2577
    %v3378 = vunpack.c.h.b16 %v2577
    %v3379 = vunpack.c.l.b16 %v2578
    %v3380 = vunpack.c.h.b16 %v2578
    %v3381 = vunpack.c.l.b16 %v2579
    %v3382 = vunpack.c.h.b16 %v2579
    %v3383 = vunpack.c.l.b16 %v2580
    %v3384 = vunpack.c.h.b16 %v2580
    %v3385 = vunpack.c.l.b16 %v2581
    %v3386 = vunpack.c.h.b16 %v2581
    %v3387 = vunpack.c.l.b16 %v2582
    %v3388 = vunpack.c.h.b16 %v2582
    %v3389 = vunpack.c.l.b16 %v2583
    %v3390 = vunpack.c.h.b16 %v2583
    %v3391 = vunpack.c.l.b16 %v2584
    %v3392 = vunpack.c.h.b16 %v2584
    %v3393 = vunpack.c.l.b16 %v2585
    %v3394 = vunpack.c.h.b16 %v2585
    %v3395 = vunpack.c.l.b16 %v2586
    %v3396 = vunpack.c.h.b16 %v2586
    %v3397 = vunpack.c.l.b16 %v2587
    %v3398 = vunpack.c.h.b16 %v2587
    %v3399 = vunpack.c.l.b16 %v2588
    %v3400 = vunpack.c.h.b16 %v2588
    %v3401 = vunpack.c.l.b16 %v2589
    %v3402 = vunpack.c.h.b16 %v2589
    %v3403 = vunpack.c.l.b16 %v2590
    %v3404 = vunpack.c.h.b16 %v2590
    %v3405 = vunpack.c.l.b16 %v2591
    %v3406 = vunpack.c.h.b16 %v2591
    %v3407 = vunpack.c.l.b16 %v2592
    %v3408 = vunpack.c.h.b16 %v2592
    %v3409 = vunpack.c.l.b16 %v2593
    %v3410 = vunpack.c.h.b16 %v2593
    %v3411 = vunpack.c.l.b16 %v2594
    %v3412 = vunpack.c.h.b16 %v2594
    %v3413 = vunpack.c.l.b16 %v2595
    %v3414 = vunpack.c.h.b16 %v2595
    %v3415 = vunpack.c.l.b16 %v2596
    %v3416 = vunpack.c.h.b16 %v2596
    %v3417 = vunpack.c.l.b16 %v2597
    %v3418 = vunpack.c.h.b16 %v2597
    %v3419 = vunpack.c.l.b16 %v2598
    %v3420 = vunpack.c.h.b16 %v2598
    %v3421 = vunpack.c.l.b16 %v2599
    %v3422 = vunpack.c.h.b16 %v2599
    %v3423 = vunpack.c.l.b16 %v2600
    %v3424 = vunpack.c.h.b16 %v2600
    %v3425 = vunpack.c.l.b16 %v2601
    %v3426 = vunpack.c.h.b16 %v2601
    %v3427 = vunpack.c.l.b16 %v2602
    %v3428 = vunpack.c.h.b16 %v2602
    %v3429 = vunpack.c.l.b16 %v2603
    %v3430 = vunpack.c.h.b16 %v2603
    %v3431 = vunpack.c.l.b16 %v2604
    %v3432 = vunpack.c.h.b16 %v2604
    %v3433 = vunpack.c.l.b16 %v2605
    %v3434 = vunpack.c.h.b16 %v2605
    %v3435 = vunpack.c.l.b16 %v2606
    %v3436 = vunpack.c.h.b16 %v2606
    %v3437 = vunpack.c.l.b16 %v2607
    %v3438 = vunpack.c.h.b16 %v2607
    %v3439 = vunpack.c.l.b16 %v2608
    %v3440 = vunpack.c.h.b16 %v2608
    %v3441 = vunpack.c.l.b16 %v2609
    %v3442 = vunpack.c.h.b16 %v2609
    %v3443 = vunpack.c.l.b16 %v2610
    %v3444 = vunpack.c.h.b16 %v2610
    %v3445 = vunpack.c.l.b16 %v2611
    %v3446 = vunpack.c.h.b16 %v2611
    %v3447 = vunpack.c.l.b16 %v2612
    %v3448 = vunpack.c.h.b16 %v2612
    %v3449 = vunpack.c.l.b16 %v2613
    %v3450 = vunpack.c.h.b16 %v2613
    %v3451 = vunpack.c.l.b16 %v2614
    %v3452 = vunpack.c.h.b16 %v2614
    %v3453 = vunpack.c.l.b16 %v2615
    %v3454 = vunpack.c.h.b16 %v2615
    %v3455 = vunpack.c.l.b16 %v2616
    %v3456 = vunpack.c.h.b16 %v2616
    %v3457 = vunpack.c.l.b16 %v2617
    %v3458 = vunpack.c.h.b16 %v2617
    %v3459 = vunpack.c.l.b16 %v2618
    %v3460 = vunpack.c.h.b16 %v2618
    %v3461 = vunpack.c.l.b16 %v2619
    %v3462 = vunpack.c.h.b16 %v2619
    %v3463 = vunpack.c.l.b16 %v2620
    %v3464 = vunpack.c.h.b16 %v2620
    %v3465 = vunpack.c.l.b16 %v2621
    %v3466 = vunpack.c.h.b16 %v2621
    %v3467 = vunpack.c.l.b16 %v2622
    %v3468 = vunpack.c.h.b16 %v2622
    %v3469 = vunpack.c.l.b16 %v2623
    %v3470 = vunpack.c.h.b16 %v2623
    %v3471 = vunpack.c.l.b16 %v2624
    %v3472 = vunpack.c.h.b16 %v2624
    %v3473 = vunpack.c.l.b16 %v2625
    %v3474 = vunpack.c.h.b16 %v2625
    %v3475 = vunpack.c.l.b16 %v2626
    %v3476 = vunpack.c.h.b16 %v2626
    %v3477 = vunpack.c.l.b16 %v2627
    %v3478 = vunpack.c.h.b16 %v2627
    %v3479 = vunpack.c.l.b16 %v2628
    %v3480 = vunpack.c.h.b16 %v2628
    %v3481 = vunpack.c.l.b16 %v2629
    %v3482 = vunpack.c.h.b16 %v2629
    %v3483 = vunpack.c.l.b16 %v2630
    %v3484 = vunpack.c.h.b16 %v2630
    %v3485 = vunpack.c.l.b16 %v2631
    %v3486 = vunpack.c.h.b16 %v2631
    %v3487 = vunpack.c.l.b16 %v2632
    %v3488 = vunpack.c.h.b16 %v2632
    %v3489 = vunpack.c.l.b16 %v2633
    %v3490 = vunpack.c.h.b16 %v2633
    %v3491 = vunpack.c.l.b16 %v2634
    %v3492 = vunpack.c.h.b16 %v2634
    %v3493 = vunpack.c.l.b16 %v2635
    %v3494 = vunpack.c.h.b16 %v2635
    %v3495 = vunpack.c.l.b16 %v2636
    %v3496 = vunpack.c.h.b16 %v2636
    %v3497 = vunpack.c.l.b16 %v2637
    %v3498 = vunpack.c.h.b16 %v2637
    %v3499 = vunpack.c.l.b16 %v2638
    %v3500 = vunpack.c.h.b16 %v2638
    %v3501 = vunpack.c.l.b16 %v2639
    %v3502 = vunpack.c.h.b16 %v2639
    %v3503 = vunpack.c.l.b16 %v2640
    %v3504 = vunpack.c.h.b16 %v2640
    %v3505 = vunpack.c.l.b16 %v2641
    %v3506 = vunpack.c.h.b16 %v2641
    %v3507 = vunpack.c.l.b16 %v2642
    %v3508 = vunpack.c.h.b16 %v2642
    %v3509 = vunpack.c.l.b16 %v2643
    %v3510 = vunpack.c.h.b16 %v2643
    %v3511 = vunpack.c.l.b16 %v2644
    %v3512 = vunpack.c.h.b16 %v2644
    %v3513 = vunpack.c.l.b16 %v2645
    %v3514 = vunpack.c.h.b16 %v2645
    %v3515 = vunpack.c.l.b16 %v2646
    %v3516 = vunpack.c.h.b16 %v2646
    %v3517 = vunpack.c.l.b16 %v2647
    %v3518 = vunpack.c.h.b16 %v2647
    %v3519 = vunpack.c.l.b16 %v2648
    %v3520 = vunpack.c.h.b16 %v2648
    %v3521 = vunpack.c.l.b16 %v2649
    %v3522 = vunpack.c.h.b16 %v2649
    %v3523 = vunpack.c.l.b16 %v2650
    %v3524 = vunpack.c.h.b16 %v2650
    %v3525 = vunpack.c.l.b16 %v2651
    %v3526 = vunpack.c.h.b16 %v2651
    %v3527 = vunpack.c.l.b16 %v2652
    %v3528 = vunpack.c.h.b16 %v2652
    %v3529 = vunpack.c.l.b16 %v2653
    %v3530 = vunpack.c.h.b16 %v2653
    %v3531 = vunpack.c.l.b16 %v2654
    %v3532 = vunpack.c.h.b16 %v2654
    %v3533 = vunpack.c.l.b16 %v2655
    %v3534 = vunpack.c.h.b16 %v2655
    %v3535 = vunpack.c.l.b16 %v2656
    %v3536 = vunpack.c.h.b16 %v2656
    %v3537 = vunpack.c.l.b16 %v2657
    %v3538 = vunpack.c.h.b16 %v2657
    %v3539 = vunpack.c.l.b16 %v2658
    %v3540 = vunpack.c.h.b16 %v2658
    %v3541 = vunpack.c.l.b16 %v2659
    %v3542 = vunpack.c.h.b16 %v2659
    %v3543 = vunpack.c.l.b16 %v2660
    %v3544 = vunpack.c.h.b16 %v2660
    %v3545 = vunpack.c.l.b16 %v2661
    %v3546 = vunpack.c.h.b16 %v2661
    %v3547 = vunpack.c.l.b16 %v2662
    %v3548 = vunpack.c.h.b16 %v2662
    %v3549 = vunpack.c.l.b16 %v2663
    %v3550 = vunpack.c.h.b16 %v2663
    %v3551 = vunpack.c.l.b16 %v2664
    %v3552 = vunpack.c.h.b16 %v2664
    %v3553 = vpack.c.b16 %v2983, %v2977
    %v3554 = vpack.c.b16 %v2984, %v2978
    %v3555 = vpack.c.b16 %v2985, %v2979
    %v3556 = vpack.c.b16 %v2986, %v2980
    %v3557 = vpack.c.b16 %v2987, %v2981
    %v3558 = vpack.c.b16 %v2988, %v2982
    %v3559 = vpack.c.b16 %v2995, %v2989
    %v3560 = vpack.c.b16 %v2996, %v2990
    %v3561 = vpack.c.b16 %v2997, %v2991
    %v3562 = vpack.c.b16 %v2998, %v2992
    %v3563 = vpack.c.b16 %v2999, %v2993
    %v3564 = vpack.c.b16 %v3000, %v2994
    %v3565 = vpack.c.b16 %v3007, %v3001
    %v3566 = vpack.c.b16 %v3008, %v3002
    %v3567 = vpack.c.b16 %v3009, %v3003
    %v3568 = vpack.c.b16 %v3010, %v3004
    %v3569 = vpack.c.b16 %v3011, %v3005
    %v3570 = vpack.c.b16 %v3012, %v3006
    %v3571 = vpack.c.b16 %v3019, %v3013
    %v3572 = vpack.c.b16 %v3020, %v3014
    %v3573 = vpack.c.b16 %v3021, %v3015
    %v3574 = vpack.c.b16 %v3022, %v3016
    %v3575 = vpack.c.b16 %v3023, %v3017
    %v3576 = vpack.c.b16 %v3024, %v3018
    %v3577 = vpack.c.b16 %v3031, %v3025
    %v3578 = vpack.c.b16 %v3032, %v3026
    %v3579 = vpack.c.b16 %v3033, %v3027
    %v3580 = vpack.c.b16 %v3034, %v3028
    %v3581 = vpack.c.b16 %v3035, %v3029
    %v3582 = vpack.c.b16 %v3036, %v3030
    %v3583 = vpack.c.b16 %v3043, %v3037
    %v3584 = vpack.c.b16 %v3044, %v3038
    %v3585 = vpack.c.b16 %v3045, %v3039
    %v3586 = vpack.c.b16 %v3046, %v3040
    %v3587 = vpack.c.b16 %v3047, %v3041
    %v3588 = vpack.c.b16 %v3048, %v3042
    %v3589 = vpack.c.b16 %v3055, %v3049
    %v3590 = vpack.c.b16 %v3056, %v3050
    %v3591 = vpack.c.b16 %v3057, %v3051
    %v3592 = vpack.c.b16 %v3058, %v3052
    %v3593 = vpack.c.b16 %v3059, %v3053
    %v3594 = vpack.c.b16 %v3060, %v3054
    %v3595 = vpack.c.b16 %v3067, %v3061
    %v3596 = vpack.c.b16 %v3068, %v3062
    %v3597 = vpack.c.b16 %v3069, %v3063
    %v3598 = vpack.c.b16 %v3070, %v3064
    %v3599 = vpack.c.b16 %v3071, %v3065
    %v3600 = vpack.c.b16 %v3072, %v3066
    %v3601 = vpack.c.b16 %v3079, %v3073
    %v3602 = vpack.c.b16 %v3080, %v3074
    %v3603 = vpack.c.b16 %v3081, %v3075
    %v3604 = vpack.c.b16 %v3082, %v3076
    %v3605 = vpack.c.b16 %v3083, %v3077
    %v3606 = vpack.c.b16 %v3084, %v3078
    %v3607 = vpack.c.b16 %v3091, %v3085
    %v3608 = vpack.c.b16 %v3092, %v3086
    %v3609 = vpack.c.b16 %v3093, %v3087
    %v3610 = vpack.c.b16 %v3094, %v3088
    %v3611 = vpack.c.b16 %v3095, %v3089
    %v3612 = vpack.c.b16 %v3096, %v3090
    %v3613 = vpack.c.b16 %v3103, %v3097
    %v3614 = vpack.c.b16 %v3104, %v3098
    %v3615 = vpack.c.b16 %v3105, %v3099
    %v3616 = vpack.c.b16 %v3106, %v3100
    %v3617 = vpack.c.b16 %v3107, %v3101
    %v3618 = vpack.c.b16 %v3108, %v3102
    %v3619 = vpack.c.b16 %v3115, %v3109
    %v3620 = vpack.c.b16 %v3116, %v3110
    %v3621 = vpack.c.b16 %v3117, %v3111
    %v3622 = vpack.c.b16 %v3118, %v3112
    %v3623 = vpack.c.b16 %v3119, %v3113
    %v3624 = vpack.c.b16 %v3120, %v3114
    %v3625 = vpack.c.b16 %v3127, %v3121
    %v3626 = vpack.c.b16 %v3128, %v3122
    %v3627 = vpack.c.b16 %v3129, %v3123
    %v3628 = vpack.c.b16 %v3130, %v3124
    %v3629 = vpack.c.b16 %v3131, %v3125
    %v3630 = vpack.c.b16 %v3132, %v3126
    %v3631 = vpack.c.b16 %v3139, %v3133
    %v3632 = vpack.c.b16 %v3140, %v3134
    %v3633 = vpack.c.b16 %v3141, %v3135
    %v3634 = vpack.c.b16 %v3142, %v3136
    %v3635 = vpack.c.b16 %v3143, %v3137
    %v3636 = vpack.c.b16 %v3144, %v3138
    %v3637 = vpack.c.b16 %v3151, %v3145
    %v3638 = vpack.c.b16 %v3152, %v3146
    %v3639 = vpack.c.b16 %v3153, %v3147
    %v3640 = vpack.c.b16 %v3154, %v3148
    %v3641 = vpack.c.b16 %v3155, %v3149
    %v3642 = vpack.c.b16 %v3156, %v3150
    %v3643 = vpack.c.b16 %v3163, %v3157
    %v3644 = vpack.c.b16 %v3164, %v3158
    %v3645 = vpack.c.b16 %v3165, %v3159
    %v3646 = vpack.c.b16 %v3166, %v3160
    %v3647 = vpack.c.b16 %v3167, %v3161
    %v3648 = vpack.c.b16 %v3168, %v3162
    %v3649 = vpack.c.b16 %v3175, %v3169
    %v3650 = vpack.c.b16 %v3176, %v3170
    %v3651 = vpack.c.b16 %v3177, %v3171
    %v3652 = vpack.c.b16 %v3178, %v3172
    %v3653 = vpack.c.b16 %v3179, %v3173
    %v3654 = vpack.c.b16 %v3180, %v3174
    %v3655 = vpack.c.b16 %v3187, %v3181
    %v3656 = vpack.c.b16 %v3188, %v3182
    %v3657 = vpack.c.b16 %v3189, %v3183
    %v3658 = vpack.c.b16 %v3190, %v3184
    %v3659 = vpack.c.b16 %v3191, %v3185
    %v3660 = vpack.c.b16 %v3192, %v3186
    %v3661 = vpack.c.b16 %v3199, %v3193
    %v3662 = vpack.c.b16 %v3200, %v3194
    %v3663 = vpack.c.b16 %v3201, %v3195
    %v3664 = vpack.c.b16 %v3202, %v3196
    %v3665 = vpack.c.b16 %v3203, %v3197
    %v3666 = vpack.c.b16 %v3204, %v3198
    %v3667 = vpack.c.b16 %v3211, %v3205
    %v3668 = vpack.c.b16 %v3212, %v3206
    %v3669 = vpack.c.b16 %v3213, %v3207
    %v3670 = vpack.c.b16 %v3214, %v3208
    %v3671 = vpack.c.b16 %v3215, %v3209
    %v3672 = vpack.c.b16 %v3216, %v3210
    %v3673 = vpack.c.b16 %v3223, %v3217
    %v3674 = vpack.c.b16 %v3224, %v3218
    %v3675 = vpack.c.b16 %v3225, %v3219
    %v3676 = vpack.c.b16 %v3226, %v3220
    %v3677 = vpack.c.b16 %v3227, %v3221
    %v3678 = vpack.c.b16 %v3228, %v3222
    %v3679 = vpack.c.b16 %v3235, %v3229
    %v3680 = vpack.c.b16 %v3236, %v3230
    %v3681 = vpack.c.b16 %v3237, %v3231
    %v3682 = vpack.c.b16 %v3238, %v3232
    %v3683 = vpack.c.b16 %v3239, %v3233
    %v3684 = vpack.c.b16 %v3240, %v3234
    %v3685 = vpack.c.b16 %v3247, %v3241
    %v3686 = vpack.c.b16 %v3248, %v3242
    %v3687 = vpack.c.b16 %v3249, %v3243
    %v3688 = vpack.c.b16 %v3250, %v3244
    %v3689 = vpack.c.b16 %v3251, %v3245
    %v3690 = vpack.c.b16 %v3252, %v3246
    %v3691 = vpack.c.b16 %v3259, %v3253
    %v3692 = vpack.c.b16 %v3260, %v3254
    %v3693 = vpack.c.b16 %v3261, %v3255
    %v3694 = vpack.c.b16 %v3262, %v3256
    %v3695 = vpack.c.b16 %v3263, %v3257
    %v3696 = vpack.c.b16 %v3264, %v3258
    %v3697 = vpack.c.b16 %v3271, %v3265
    %v3698 = vpack.c.b16 %v3272, %v3266
    %v3699 = vpack.c.b16 %v3273, %v3267
    %v3700 = vpack.c.b16 %v3274, %v3268
    %v3701 = vpack.c.b16 %v3275, %v3269
    %v3702 = vpack.c.b16 %v3276, %v3270
    %v3703 = vpack.c.b16 %v3283, %v3277
    %v3704 = vpack.c.b16 %v3284, %v3278
    %v3705 = vpack.c.b16 %v3285, %v3279
    %v3706 = vpack.c.b16 %v3286, %v3280
    %v3707 = vpack.c.b16 %v3287, %v3281
    %v3708 = vpack.c.b16 %v3288, %v3282
    %v3709 = vpack.c.b16 %v3295, %v3289
    %v3710 = vpack.c.b16 %v3296, %v3290
    %v3711 = vpack.c.b16 %v3297, %v3291
    %v3712 = vpack.c.b16 %v3298, %v3292
    %v3713 = vpack.c.b16 %v3299, %v3293
    %v3714 = vpack.c.b16 %v3300, %v3294
    %v3715 = vpack.c.b16 %v3307, %v3301
    %v3716 = vpack.c.b16 %v3308, %v3302
    %v3717 = vpack.c.b16 %v3309, %v3303
    %v3718 = vpack.c.b16 %v3310, %v3304
    %v3719 = vpack.c.b16 %v3311, %v3305
    %v3720 = vpack.c.b16 %v3312, %v3306
    %v3721 = vpack.c.b16 %v3319, %v3313
    %v3722 = vpack.c.b16 %v3320, %v3314
    %v3723 = vpack.c.b16 %v3321, %v3315
    %v3724 = vpack.c.b16 %v3322, %v3316
    %v3725 = vpack.c.b16 %v3323, %v3317
    %v3726 = vpack.c.b16 %v3324, %v3318
    %v3727 = vpack.c.b16 %v3331, %v3325
    %v3728 = vpack.c.b16 %v3332, %v3326
    %v3729 = vpack.c.b16 %v3333, %v3327
    %v3730 = vpack.c.b16 %v3334, %v3328
    %v3731 = vpack.c.b16 %v3335, %v3329
    %v3732 = vpack.c.b16 %v3336, %v3330
    %v3733 = vpack.c.b16 %v3343, %v3337
    %v3734 = vpack.c.b16 %v3344, %v3338
    %v3735 = vpack.c.b16 %v3345, %v3339
    %v3736 = vpack.c.b16 %v3346, %v3340
    %v3737 = vpack.c.b16 %v3347, %v3341
    %v3738 = vpack.c.b16 %v3348, %v3342
    %v3739 = vpack.c.b16 %v3355, %v3349
    %v3740 = vpack.c.b16 %v3356, %v3350
    %v3741 = vpack.c.b16 %v3357, %v3351
    %v3742 = vpack.c.b16 %v3358, %v3352
    %v3743 = vpack.c.b16 %v3359, %v3353
    %v3744 = vpack.c.b16 %v3360, %v3354
    %v3745 = vpack.c.b16 %v3367, %v3361
    %v3746 = vpack.c.b16 %v3368, %v3362
    %v3747 = vpack.c.b16 %v3369, %v3363
    %v3748 = vpack.c.b16 %v3370, %v3364
    %v3749 = vpack.c.b16 %v3371, %v3365
    %v3750 = vpack.c.b16 %v3372, %v3366
    %v3751 = vpack.c.b16 %v3379, %v3373
    %v3752 = vpack.c.b16 %v3380, %v3374
    %v3753 = vpack.c.b16 %v3381, %v3375
    %v3754 = vpack.c.b16 %v3382, %v3376
    %v3755 = vpack.c.b16 %v3383, %v3377
    %v3756 = vpack.c.b16 %v3384, %v3378
    %v3757 = vpack.c.b16 %v3391, %v3385
    %v3758 = vpack.c.b16 %v3392, %v3386
    %v3759 = vpack.c.b16 %v3393, %v3387
    %v3760 = vpack.c.b16 %v3394, %v3388
    %v3761 = vpack.c.b16 %v3395, %v3389
    %v3762 = vpack.c.b16 %v3396, %v3390
    %v3763 = vpack.c.b16 %v3403, %v3397
    %v3764 = vpack.c.b16 %v3404, %v3398
    %v3765 = vpack.c.b16 %v3405, %v3399
    %v3766 = vpack.c.b16 %v3406, %v3400
    %v3767 = vpack.c.b16 %v3407, %v3401
    %v3768 = vpack.c.b16 %v3408, %v3402
    %v3769 = vpack.c.b16 %v3415, %v3409
    %v3770 = vpack.c.b16 %v3416, %v3410
    %v3771 = vpack.c.b16 %v3417, %v3411
    %v3772 = vpack.c.b16 %v3418, %v3412
    %v3773 = vpack.c.b16 %v3419, %v3413
    %v3774 = vpack.c.b16 %v3420, %v3414
    %v3775 = vpack.c.b16 %v3427, %v3421
    %v3776 = vpack.c.b16 %v3428, %v3422
    %v3777 = vpack.c.b16 %v3429, %v3423
    %v3778 = vpack.c.b16 %v3430, %v3424
    %v3779 = vpack.c.b16 %v3431, %v3425
    %v3780 = vpack.c.b16 %v3432, %v3426
    %v3781 = vpack.c.b16 %v3439, %v3433
    %v3782 = vpack.c.b16 %v3440, %v3434
    %v3783 = vpack.c.b16 %v3441, %v3435
    %v3784 = vpack.c.b16 %v3442, %v3436
    %v3785 = vpack.c.b16 %v3443, %v3437
    %v3786 = vpack.c.b16 %v3444, %v3438
    %v3787 = vpack.c.b16 %v3451, %v3445
    %v3788 = vpack.c.b16 %v3452, %v3446
    %v3789 = vpack.c.b16 %v3453, %v3447
    %v3790 = vpack.c.b16 %v3454, %v3448
    %v3791 = vpack.c.b16 %v3455, %v3449
    %v3792 = vpack.c.b16 %v3456, %v3450
    %v3793 = vpack.c.b16 %v3463, %v3457
    %v3794 = vpack.c.b16 %v3464, %v3458
    %v3795 = vpack.c.b16 %v3465, %v3459
    %v3796 = vpack.c.b16 %v3466, %v3460
    %v3797 = vpack.c.b16 %v3467, %v3461
    %v3798 = vpack.c.b16 %v3468, %v3462
    %v3799 = vpack.c.b16 %v3475, %v3469
    %v3800 = vpack.c.b16 %v3476, %v3470
    %v3801 = vpack.c.b16 %v3477, %v3471
    %v3802 = vpack.c.b16 %v3478, %v3472
    %v3803 = vpack.c.b16 %v3479, %v3473
    %v3804 = vpack.c.b16 %v3480, %v3474
    %v3805 = vpack.c.b16 %v3487, %v3481
    %v3806 = vpack.c.b16 %v3488, %v3482
    %v3807 = vpack.c.b16 %v3489, %v3483
    %v3808 = vpack.c.b16 %v3490, %v3484
    %v3809 = vpack.c.b16 %v3491, %v3485
    %v3810 = vpack.c.b16 %v3492, %v3486
    %v3811 = vpack.c.b16 %v3499, %v3493
    %v3812 = vpack.c.b16 %v3500, %v3494
    %v3813 = vpack.c.b16 %v3501, %v3495
    %v3814 = vpack.c.b16 %v3502, %v3496
    %v3815 = vpack.c.b16 %v3503, %v3497
    %v3816 = vpack.c.b16 %v3504, %v3498
    %v3817 = vpack.c.b16 %v3511, %v3505
    %v3818 = vpack.c.b16 %v3512, %v3506
    %v3819 = vpack.c.b16 %v3513, %v3507
    %v3820 = vpack.c.b16 %v3514, %v3508
    %v3821 = vpack.c.b16 %v3515, %v3509
    %v3822 = vpack.c.b16 %v3516, %v3510
    %v3823 = vpack.c.b16 %v3523, %v3517
    %v3824 = vpack.c.b16 %v3524, %v3518
    %v3825 = vpack.c.b16 %v3525, %v3519
    %v3826 = vpack.c.b16 %v3526, %v3520
    %v3827 = vpack.c.b16 %v3527, %v3521
    %v3828 = vpack.c.b16 %v3528, %v3522
    %v3829 = vpack.c.b16 %v3535, %v3529
    %v3830 = vpack.c.b16 %v3536, %v3530
    %v3831 = vpack.c.b16 %v3537, %v3531
    %v3832 = vpack.c.b16 %v3538, %v3532
    %v3833 = vpack.c.b16 %v3539, %v3533
    %v3834 = vpack.c.b16 %v3540, %v3534
    %v3835 = vpack.c.b16 %v3547, %v3541
    %v3836 = vpack.c.b16 %v3548, %v3542
    %v3837 = vpack.c.b16 %v3549, %v3543
    %v3838 = vpack.c.b16 %v3550, %v3544
    %v3839 = vpack.c.b16 %v3551, %v3545
    %v3840 = vpack.c.b16 %v3552, %v3546
    %4129 = vmatprep.subr.bf16.mxu0 %v3596
    %4130 = vmatpush1.bf16.msra.mxu0 %v3595
    %4131 = vmatprep.subr.bf16.mxu0 %v3590
    %4132 = vmatpush1.bf16.msra.mxu0 %v3589
    %4133 = vmatprep.subr.bf16.mxu0 %v3584
    %4134 = vmatpush1.bf16.msra.mxu0 %v3583
    %4135 = vmatprep.subr.bf16.mxu0 %v3578
    %4136 = vmatpush1.bf16.msra.mxu0 %v3577
    %4137 = vmatprep.subr.bf16.mxu0 %v3572
    %4138 = vmatpush1.bf16.msra.mxu0 %v3571
    %4139 = vmatprep.subr.bf16.mxu0 %v3566
    %4140 = vmatpush1.bf16.msra.mxu0 %v3565
    %4141 = vmatprep.subr.bf16.mxu0 %v3560
    %4142 = vmatpush1.bf16.msra.mxu0 %v3559
    %4143 = vmatprep.subr.bf16.mxu0 %v3554
    %4144 = vmatpush1.bf16.msra.mxu0 %v3553
    %4145 = vmatprep.subr.bf16.mxu0 %v3644
    %4146 = vmatpush2.bf16.msra.mxu0 %v3643
    %4147 = vmatprep.subr.bf16.mxu0 %v3638
    %4148 = vmatpush2.bf16.msra.mxu0 %v3637
    %4149 = vmatprep.subr.bf16.mxu0 %v3632
    %4150 = vmatpush2.bf16.msra.mxu0 %v3631
    %4151 = vmatprep.subr.bf16.mxu0 %v3626
    %4152 = vmatpush2.bf16.msra.mxu0 %v3625
    %4153 = vmatprep.subr.bf16.mxu0 %v3620
    %4154 = vmatpush2.bf16.msra.mxu0 %v3619
    %4155 = vmatprep.subr.bf16.mxu0 %v3614
    %4156 = vmatpush2.bf16.msra.mxu0 %v3613
    %4157 = vmatprep.subr.bf16.mxu0 %v3608
    %4158 = vmatpush2.bf16.msra.mxu0 %v3607
    %4159 = vmatprep.subr.bf16.mxu0 %v3602
    %4160 = vmatpush2.bf16.msra.mxu0 %v3601
    %4161 = vmatprep.mubr.bf16.mxu0 %v2372
    %4162 = vmatmul.mubr.bf16.gmra.mxu0 %v2371
    %v4163 = vpop.f32.mrf.mxu0
    %v4164 = vadd.f32 %v2668, %v4163
    %v4165 = vpop.f32.mrf.mxu0
    %v4166 = vadd.f32 %v2672, %v4165
    %v4167 = vpop.f32.mrf.mxu0
    %v4168 = vpop.f32.mrf.mxu0
    %4169 = vdwg.mxu0
    %4170 = vmatprep.subr.bf16.mxu0 %v3692
    %4171 = vmatpush1.bf16.msra.mxu0 %v3691
    %4172 = vmatprep.subr.bf16.mxu0 %v3686
    %4173 = vmatpush1.bf16.msra.mxu0 %v3685
    %4174 = vmatprep.subr.bf16.mxu0 %v3680
    %4175 = vmatpush1.bf16.msra.mxu0 %v3679
    %4176 = vmatprep.subr.bf16.mxu0 %v3674
    %4177 = vmatpush1.bf16.msra.mxu0 %v3673
    %4178 = vmatprep.subr.bf16.mxu0 %v3668
    %4179 = vmatpush1.bf16.msra.mxu0 %v3667
    %4180 = vmatprep.subr.bf16.mxu0 %v3662
    %4181 = vmatpush1.bf16.msra.mxu0 %v3661
    %4182 = vmatprep.subr.bf16.mxu0 %v3656
    %4183 = vmatpush1.bf16.msra.mxu0 %v3655
    %4184 = vmatprep.subr.bf16.mxu0 %v3650
    %4185 = vmatpush1.bf16.msra.mxu0 %v3649
    %4186 = vmatprep.subr.bf16.mxu0 %v3740
    %4187 = vmatpush2.bf16.msra.mxu0 %v3739
    %4188 = vmatprep.subr.bf16.mxu0 %v3734
    %4189 = vmatpush2.bf16.msra.mxu0 %v3733
    %4190 = vmatprep.subr.bf16.mxu0 %v3728
    %4191 = vmatpush2.bf16.msra.mxu0 %v3727
    %4192 = vmatprep.subr.bf16.mxu0 %v3722
    %4193 = vmatpush2.bf16.msra.mxu0 %v3721
    %4194 = vmatprep.subr.bf16.mxu0 %v3716
    %4195 = vmatpush2.bf16.msra.mxu0 %v3715
    %4196 = vmatprep.subr.bf16.mxu0 %v3710
    %4197 = vmatpush2.bf16.msra.mxu0 %v3709
    %4198 = vmatprep.subr.bf16.mxu0 %v3704
    %4199 = vmatpush2.bf16.msra.mxu0 %v3703
    %4200 = vmatprep.subr.bf16.mxu0 %v3698
    %4201 = vmatpush2.bf16.msra.mxu0 %v3697
    %4202 = vmatprep.mubr.bf16.mxu0 %v2374
    %4203 = vmatmul.mubr.bf16.gmra.mxu0 %v2373
    %v4204 = vpop.f32.mrf.mxu0
    %v4205 = vadd.f32 %v4164, %v4204
    %v4206 = vpop.f32.mrf.mxu0
    %v4207 = vadd.f32 %v4166, %v4206
    %v4208 = vpop.f32.mrf.mxu0
    %v4209 = vpop.f32.mrf.mxu0
    %4210 = vdwg.mxu0
    %4211 = vmatprep.subr.bf16.mxu0 %v3788
    %4212 = vmatpush1.bf16.msra.mxu0 %v3787
    %4213 = vmatprep.subr.bf16.mxu0 %v3782
    %4214 = vmatpush1.bf16.msra.mxu0 %v3781
    %4215 = vmatprep.subr.bf16.mxu0 %v3776
    %4216 = vmatpush1.bf16.msra.mxu0 %v3775
    %4217 = vmatprep.subr.bf16.mxu0 %v3770
    %4218 = vmatpush1.bf16.msra.mxu0 %v3769
    %4219 = vmatprep.subr.bf16.mxu0 %v3764
    %4220 = vmatpush1.bf16.msra.mxu0 %v3763
    %4221 = vmatprep.subr.bf16.mxu0 %v3758
    %4222 = vmatpush1.bf16.msra.mxu0 %v3757
    %4223 = vmatprep.subr.bf16.mxu0 %v3752
    %4224 = vmatpush1.bf16.msra.mxu0 %v3751
    %4225 = vmatprep.subr.bf16.mxu0 %v3746
    %4226 = vmatpush1.bf16.msra.mxu0 %v3745
    %4227 = vmatprep.subr.bf16.mxu0 %v3836
    %4228 = vmatpush2.bf16.msra.mxu0 %v3835
    %4229 = vmatprep.subr.bf16.mxu0 %v3830
    %4230 = vmatpush2.bf16.msra.mxu0 %v3829
    %4231 = vmatprep.subr.bf16.mxu0 %v3824
    %4232 = vmatpush2.bf16.msra.mxu0 %v3823
    %4233 = vmatprep.subr.bf16.mxu0 %v3818
    %4234 = vmatpush2.bf16.msra.mxu0 %v3817
    %4235 = vmatprep.subr.bf16.mxu0 %v3812
    %4236 = vmatpush2.bf16.msra.mxu0 %v3811
    %4237 = vmatprep.subr.bf16.mxu0 %v3806
    %4238 = vmatpush2.bf16.msra.mxu0 %v3805
    %4239 = vmatprep.subr.bf16.mxu0 %v3800
    %4240 = vmatpush2.bf16.msra.mxu0 %v3799
    %4241 = vmatprep.subr.bf16.mxu0 %v3794
    %4242 = vmatpush2.bf16.msra.mxu0 %v3793
    %4243 = vmatprep.mubr.bf16.mxu0 %v2376
    %4244 = vmatmul.mubr.bf16.gmra.mxu0 %v2375
    %v4245 = vpop.f32.mrf.mxu0
    %v4246 = vadd.f32 %v4205, %v4245
    %v4247 = vpop.f32.mrf.mxu0
    %v4248 = vadd.f32 %v4207, %v4247
    %v4249 = vpop.f32.mrf.mxu0
    %v4250 = vpop.f32.mrf.mxu0
    %4251 = vdwg.mxu0
    %4252 = vmatprep.subr.bf16.mxu0 %v3598
    %4253 = vmatpush1.bf16.msra.mxu0 %v3597
    %4254 = vmatprep.subr.bf16.mxu0 %v3592
    %4255 = vmatpush1.bf16.msra.mxu0 %v3591
    %4256 = vmatprep.subr.bf16.mxu0 %v3586
    %4257 = vmatpush1.bf16.msra.mxu0 %v3585
    %4258 = vmatprep.subr.bf16.mxu0 %v3580
    %4259 = vmatpush1.bf16.msra.mxu0 %v3579
    %4260 = vmatprep.subr.bf16.mxu0 %v3574
    %4261 = vmatpush1.bf16.msra.mxu0 %v3573
    %4262 = vmatprep.subr.bf16.mxu0 %v3568
    %4263 = vmatpush1.bf16.msra.mxu0 %v3567
    %4264 = vmatprep.subr.bf16.mxu0 %v3562
    %4265 = vmatpush1.bf16.msra.mxu0 %v3561
    %4266 = vmatprep.subr.bf16.mxu0 %v3556
    %4267 = vmatpush1.bf16.msra.mxu0 %v3555
    %4268 = vmatprep.subr.bf16.mxu0 %v3646
    %4269 = vmatpush2.bf16.msra.mxu0 %v3645
    %4270 = vmatprep.subr.bf16.mxu0 %v3640
    %4271 = vmatpush2.bf16.msra.mxu0 %v3639
    %4272 = vmatprep.subr.bf16.mxu0 %v3634
    %4273 = vmatpush2.bf16.msra.mxu0 %v3633
    %4274 = vmatprep.subr.bf16.mxu0 %v3628
    %4275 = vmatpush2.bf16.msra.mxu0 %v3627
    %4276 = vmatprep.subr.bf16.mxu0 %v3622
    %4277 = vmatpush2.bf16.msra.mxu0 %v3621
    %4278 = vmatprep.subr.bf16.mxu0 %v3616
    %4279 = vmatpush2.bf16.msra.mxu0 %v3615
    %4280 = vmatprep.subr.bf16.mxu0 %v3610
    %4281 = vmatpush2.bf16.msra.mxu0 %v3609
    %4282 = vmatprep.subr.bf16.mxu0 %v3604
    %4283 = vmatpush2.bf16.msra.mxu0 %v3603
    %4284 = vmatprep.mubr.bf16.mxu0 %v2372
    %4285 = vmatmul.mubr.bf16.gmra.mxu0 %v2371
    %v4286 = vpop.f32.mrf.mxu0
    %v4287 = vadd.f32 %v2676, %v4286
    %v4288 = vpop.f32.mrf.mxu0
    %v4289 = vadd.f32 %v2680, %v4288
    %v4290 = vpop.f32.mrf.mxu0
    %v4291 = vpop.f32.mrf.mxu0
    %4292 = vdwg.mxu0
    %4293 = vmatprep.subr.bf16.mxu0 %v3694
    %4294 = vmatpush1.bf16.msra.mxu0 %v3693
    %4295 = vmatprep.subr.bf16.mxu0 %v3688
    %4296 = vmatpush1.bf16.msra.mxu0 %v3687
    %4297 = vmatprep.subr.bf16.mxu0 %v3682
    %4298 = vmatpush1.bf16.msra.mxu0 %v3681
    %4299 = vmatprep.subr.bf16.mxu0 %v3676
    %4300 = vmatpush1.bf16.msra.mxu0 %v3675
    %4301 = vmatprep.subr.bf16.mxu0 %v3670
    %4302 = vmatpush1.bf16.msra.mxu0 %v3669
    %4303 = vmatprep.subr.bf16.mxu0 %v3664
    %4304 = vmatpush1.bf16.msra.mxu0 %v3663
    %4305 = vmatprep.subr.bf16.mxu0 %v3658
    %4306 = vmatpush1.bf16.msra.mxu0 %v3657
    %4307 = vmatprep.subr.bf16.mxu0 %v3652
    %4308 = vmatpush1.bf16.msra.mxu0 %v3651
    %4309 = vmatprep.subr.bf16.mxu0 %v3742
    %4310 = vmatpush2.bf16.msra.mxu0 %v3741
    %4311 = vmatprep.subr.bf16.mxu0 %v3736
    %4312 = vmatpush2.bf16.msra.mxu0 %v3735
    %4313 = vmatprep.subr.bf16.mxu0 %v3730
    %4314 = vmatpush2.bf16.msra.mxu0 %v3729
    %4315 = vmatprep.subr.bf16.mxu0 %v3724
    %4316 = vmatpush2.bf16.msra.mxu0 %v3723
    %4317 = vmatprep.subr.bf16.mxu0 %v3718
    %4318 = vmatpush2.bf16.msra.mxu0 %v3717
    %4319 = vmatprep.subr.bf16.mxu0 %v3712
    %4320 = vmatpush2.bf16.msra.mxu0 %v3711
    %4321 = vmatprep.subr.bf16.mxu0 %v3706
    %4322 = vmatpush2.bf16.msra.mxu0 %v3705
    %4323 = vmatprep.subr.bf16.mxu0 %v3700
    %4324 = vmatpush2.bf16.msra.mxu0 %v3699
    %4325 = vmatprep.mubr.bf16.mxu0 %v2374
    %4326 = vmatmul.mubr.bf16.gmra.mxu0 %v2373
    %v4327 = vpop.f32.mrf.mxu0
    %v4328 = vadd.f32 %v4287, %v4327
    %v4329 = vpop.f32.mrf.mxu0
    %v4330 = vadd.f32 %v4289, %v4329
    %v4331 = vpop.f32.mrf.mxu0
    %v4332 = vpop.f32.mrf.mxu0
    %4333 = vdwg.mxu0
    %4334 = vmatprep.subr.bf16.mxu0 %v3790
    %4335 = vmatpush1.bf16.msra.mxu0 %v3789
    %4336 = vmatprep.subr.bf16.mxu0 %v3784
    %4337 = vmatpush1.bf16.msra.mxu0 %v3783
    %4338 = vmatprep.subr.bf16.mxu0 %v3778
    %4339 = vmatpush1.bf16.msra.mxu0 %v3777
    %4340 = vmatprep.subr.bf16.mxu0 %v3772
    %4341 = vmatpush1.bf16.msra.mxu0 %v3771
    %4342 = vmatprep.subr.bf16.mxu0 %v3766
    %4343 = vmatpush1.bf16.msra.mxu0 %v3765
    %4344 = vmatprep.subr.bf16.mxu0 %v3760
    %4345 = vmatpush1.bf16.msra.mxu0 %v3759
    %4346 = vmatprep.subr.bf16.mxu0 %v3754
    %4347 = vmatpush1.bf16.msra.mxu0 %v3753
    %4348 = vmatprep.subr.bf16.mxu0 %v3748
    %4349 = vmatpush1.bf16.msra.mxu0 %v3747
    %4350 = vmatprep.subr.bf16.mxu0 %v3838
    %4351 = vmatpush2.bf16.msra.mxu0 %v3837
    %4352 = vmatprep.subr.bf16.mxu0 %v3832
    %4353 = vmatpush2.bf16.msra.mxu0 %v3831
    %4354 = vmatprep.subr.bf16.mxu0 %v3826
    %4355 = vmatpush2.bf16.msra.mxu0 %v3825
    %4356 = vmatprep.subr.bf16.mxu0 %v3820
    %4357 = vmatpush2.bf16.msra.mxu0 %v3819
    %4358 = vmatprep.subr.bf16.mxu0 %v3814
    %4359 = vmatpush2.bf16.msra.mxu0 %v3813
    %4360 = vmatprep.subr.bf16.mxu0 %v3808
    %4361 = vmatpush2.bf16.msra.mxu0 %v3807
    %4362 = vmatprep.subr.bf16.mxu0 %v3802
    %4363 = vmatpush2.bf16.msra.mxu0 %v3801
    %4364 = vmatprep.subr.bf16.mxu0 %v3796
    %4365 = vmatpush2.bf16.msra.mxu0 %v3795
    %4366 = vmatprep.mubr.bf16.mxu0 %v2376
    %4367 = vmatmul.mubr.bf16.gmra.mxu0 %v2375
    %v4368 = vpop.f32.mrf.mxu0
    %v4369 = vadd.f32 %v4328, %v4368
    %v4370 = vpop.f32.mrf.mxu0
    %v4371 = vadd.f32 %v4330, %v4370
    %v4372 = vpop.f32.mrf.mxu0
    %v4373 = vpop.f32.mrf.mxu0
    %4374 = vdwg.mxu0
    %4375 = vmatprep.subr.bf16.mxu0 %v3600
    %4376 = vmatpush1.bf16.msra.mxu0 %v3599
    %4377 = vmatprep.subr.bf16.mxu0 %v3594
    %4378 = vmatpush1.bf16.msra.mxu0 %v3593
    %4379 = vmatprep.subr.bf16.mxu0 %v3588
    %4380 = vmatpush1.bf16.msra.mxu0 %v3587
    %4381 = vmatprep.subr.bf16.mxu0 %v3582
    %4382 = vmatpush1.bf16.msra.mxu0 %v3581
    %4383 = vmatprep.subr.bf16.mxu0 %v3576
    %4384 = vmatpush1.bf16.msra.mxu0 %v3575
    %4385 = vmatprep.subr.bf16.mxu0 %v3570
    %4386 = vmatpush1.bf16.msra.mxu0 %v3569
    %4387 = vmatprep.subr.bf16.mxu0 %v3564
    %4388 = vmatpush1.bf16.msra.mxu0 %v3563
    %4389 = vmatprep.subr.bf16.mxu0 %v3558
    %4390 = vmatpush1.bf16.msra.mxu0 %v3557
    %4391 = vmatprep.subr.bf16.mxu0 %v3648
    %4392 = vmatpush2.bf16.msra.mxu0 %v3647
    %4393 = vmatprep.subr.bf16.mxu0 %v3642
    %4394 = vmatpush2.bf16.msra.mxu0 %v3641
    %4395 = vmatprep.subr.bf16.mxu0 %v3636
    %4396 = vmatpush2.bf16.msra.mxu0 %v3635
    %4397 = vmatprep.subr.bf16.mxu0 %v3630
    %4398 = vmatpush2.bf16.msra.mxu0 %v3629
    %4399 = vmatprep.subr.bf16.mxu0 %v3624
    %4400 = vmatpush2.bf16.msra.mxu0 %v3623
    %4401 = vmatprep.subr.bf16.mxu0 %v3618
    %4402 = vmatpush2.bf16.msra.mxu0 %v3617
    %4403 = vmatprep.subr.bf16.mxu0 %v3612
    %4404 = vmatpush2.bf16.msra.mxu0 %v3611
    %4405 = vmatprep.subr.bf16.mxu0 %v3606
    %4406 = vmatpush2.bf16.msra.mxu0 %v3605
    %4407 = vmatprep.mubr.bf16.mxu0 %v2372
    %4408 = vmatmul.mubr.bf16.gmra.mxu0 %v2371
    %v4409 = vpop.f32.mrf.mxu0
    %v4410 = vadd.f32 %v2684, %v4409
    %v4411 = vpop.f32.mrf.mxu0
    %v4412 = vadd.f32 %v2688, %v4411
    %v4413 = vpop.f32.mrf.mxu0
    %v4414 = vpop.f32.mrf.mxu0
    %4415 = vdwg.mxu0
    %4416 = vmatprep.subr.bf16.mxu0 %v3696
    %4417 = vmatpush1.bf16.msra.mxu0 %v3695
    %4418 = vmatprep.subr.bf16.mxu0 %v3690
    %4419 = vmatpush1.bf16.msra.mxu0 %v3689
    %4420 = vmatprep.subr.bf16.mxu0 %v3684
    %4421 = vmatpush1.bf16.msra.mxu0 %v3683
    %4422 = vmatprep.subr.bf16.mxu0 %v3678
    %4423 = vmatpush1.bf16.msra.mxu0 %v3677
    %4424 = vmatprep.subr.bf16.mxu0 %v3672
    %4425 = vmatpush1.bf16.msra.mxu0 %v3671
    %4426 = vmatprep.subr.bf16.mxu0 %v3666
    %4427 = vmatpush1.bf16.msra.mxu0 %v3665
    %4428 = vmatprep.subr.bf16.mxu0 %v3660
    %4429 = vmatpush1.bf16.msra.mxu0 %v3659
    %4430 = vmatprep.subr.bf16.mxu0 %v3654
    %4431 = vmatpush1.bf16.msra.mxu0 %v3653
    %4432 = vmatprep.subr.bf16.mxu0 %v3744
    %4433 = vmatpush2.bf16.msra.mxu0 %v3743
    %4434 = vmatprep.subr.bf16.mxu0 %v3738
    %4435 = vmatpush2.bf16.msra.mxu0 %v3737
    %4436 = vmatprep.subr.bf16.mxu0 %v3732
    %4437 = vmatpush2.bf16.msra.mxu0 %v3731
    %4438 = vmatprep.subr.bf16.mxu0 %v3726
    %4439 = vmatpush2.bf16.msra.mxu0 %v3725
    %4440 = vmatprep.subr.bf16.mxu0 %v3720
    %4441 = vmatpush2.bf16.msra.mxu0 %v3719
    %4442 = vmatprep.subr.bf16.mxu0 %v3714
    %4443 = vmatpush2.bf16.msra.mxu0 %v3713
    %4444 = vmatprep.subr.bf16.mxu0 %v3708
    %4445 = vmatpush2.bf16.msra.mxu0 %v3707
    %4446 = vmatprep.subr.bf16.mxu0 %v3702
    %4447 = vmatpush2.bf16.msra.mxu0 %v3701
    %4448 = vmatprep.mubr.bf16.mxu0 %v2374
    %4449 = vmatmul.mubr.bf16.gmra.mxu0 %v2373
    %v4450 = vpop.f32.mrf.mxu0
    %v4451 = vadd.f32 %v4410, %v4450
    %v4452 = vpop.f32.mrf.mxu0
    %v4453 = vadd.f32 %v4412, %v4452
    %v4454 = vpop.f32.mrf.mxu0
    %v4455 = vpop.f32.mrf.mxu0
    %4456 = vdwg.mxu0
    %4457 = vmatprep.subr.bf16.mxu0 %v3792
    %4458 = vmatpush1.bf16.msra.mxu0 %v3791
    %4459 = vmatprep.subr.bf16.mxu0 %v3786
    %4460 = vmatpush1.bf16.msra.mxu0 %v3785
    %4461 = vmatprep.subr.bf16.mxu0 %v3780
    %4462 = vmatpush1.bf16.msra.mxu0 %v3779
    %4463 = vmatprep.subr.bf16.mxu0 %v3774
    %4464 = vmatpush1.bf16.msra.mxu0 %v3773
    %4465 = vmatprep.subr.bf16.mxu0 %v3768
    %4466 = vmatpush1.bf16.msra.mxu0 %v3767
    %4467 = vmatprep.subr.bf16.mxu0 %v3762
    %4468 = vmatpush1.bf16.msra.mxu0 %v3761
    %4469 = vmatprep.subr.bf16.mxu0 %v3756
    %4470 = vmatpush1.bf16.msra.mxu0 %v3755
    %4471 = vmatprep.subr.bf16.mxu0 %v3750
    %4472 = vmatpush1.bf16.msra.mxu0 %v3749
    %4473 = vmatprep.subr.bf16.mxu0 %v3840
    %4474 = vmatpush2.bf16.msra.mxu0 %v3839
    %4475 = vmatprep.subr.bf16.mxu0 %v3834
    %4476 = vmatpush2.bf16.msra.mxu0 %v3833
    %4477 = vmatprep.subr.bf16.mxu0 %v3828
    %4478 = vmatpush2.bf16.msra.mxu0 %v3827
    %4479 = vmatprep.subr.bf16.mxu0 %v3822
    %4480 = vmatpush2.bf16.msra.mxu0 %v3821
    %4481 = vmatprep.subr.bf16.mxu0 %v3816
    %4482 = vmatpush2.bf16.msra.mxu0 %v3815
    %4483 = vmatprep.subr.bf16.mxu0 %v3810
    %4484 = vmatpush2.bf16.msra.mxu0 %v3809
    %4485 = vmatprep.subr.bf16.mxu0 %v3804
    %4486 = vmatpush2.bf16.msra.mxu0 %v3803
    %4487 = vmatprep.subr.bf16.mxu0 %v3798
    %4488 = vmatpush2.bf16.msra.mxu0 %v3797
    %4489 = vmatprep.mubr.bf16.mxu0 %v2376
    %4490 = vmatmul.mubr.bf16.gmra.mxu0 %v2375
    %v4491 = vpop.f32.mrf.mxu0
    %v4492 = vadd.f32 %v4451, %v4491
    %v4493 = vpop.f32.mrf.mxu0
    %v4494 = vadd.f32 %v4453, %v4493
    %v4495 = vpop.f32.mrf.mxu0
    %v4496 = vpop.f32.mrf.mxu0
    %4497 = vdwg.mxu0
    %v4504 = vcombine.low %v4246, %v4248
    %v4505 = vcombine.low %v4369, %v4371
    %v4506 = vcombine.low %v4492, %v4494
    %v4508 = vunpack.c.l.s4 1966171168
    %v4509 = vunpack.c.0.s8 %v4508
    %v4510 = vlaneseq
    %v4511 = vshrl.u32 %v4510, 7
    %v4512 = vsub.s32 %v4509, %v4511
    %v4513 = vrot.slane %v4504, %v4512
    %v4515 = vunpack.c.l.s4 1966171168
    %v4516 = vunpack.c.0.s8 %v4515
    %v4517 = vlaneseq
    %v4518 = vshrl.u32 %v4517, 7
    %v4519 = vsub.s32 %v4516, %v4518
    %v4520 = vrot.slane %v4505, %v4519
    %v4522 = vunpack.c.l.s4 1966171168
    %v4523 = vunpack.c.0.s8 %v4522
    %v4524 = vlaneseq
    %v4525 = vshrl.u32 %v4524, 7
    %v4526 = vsub.s32 %v4523, %v4525
    %v4527 = vrot.slane %v4506, %v4526
    %v4528 = vcombine.low %v4513, %v4520
    %v4529 = vcombine.high %v4513, %v4520
    %v4530 = vcombine.high %v4527, %v4527
    %v4532 = vunpack.c.l.s4 1966171168
    %v4533 = vunpack.c.0.s8 %v4532
    %v4534 = vlaneseq
    %v4535 = vshrl.u32 %v4534, 7
    %v4536 = vsub.s32 %v4533, %v4535
    %v4537 = vrot.slane %v4528, %v4536
    %v4539 = vunpack.c.l.s4 1966171168
    %v4540 = vunpack.c.0.s8 %v4539
    %v4541 = vlaneseq
    %v4542 = vshrl.u32 %v4541, 7
    %v4543 = vsub.s32 %v4540, %v4542
    %v4544 = vrot.slane %v4529, %v4543
    %v4546 = vunpack.c.l.s4 1966171168
    %v4547 = vunpack.c.0.s8 %v4546
    %v4548 = vlaneseq
    %v4549 = vshrl.u32 %v4548, 7
    %v4550 = vsub.s32 %v4547, %v4549
    %v4551 = vrot.slane %v4527, %v4550
    %v4553 = vunpack.c.l.s4 1966171168
    %v4554 = vunpack.c.0.s8 %v4553
    %v4555 = vlaneseq
    %v4556 = vshrl.u32 %v4555, 7
    %v4557 = vsub.s32 %v4554, %v4556
    %v4558 = vrot.slane %v4530, %v4557
    %v4559 = vcombine.low %v4537, %v4551
    %v4560 = vcombine.low %v4544, %v4558
    %v4563 = vadd.f32 %v113, %v4559
    %v4564 = vadd.f32 %v114, %v4560
    %v4567 = vcombine.low %v4563, %v4564
    %v4568 = vcombine.high %v4563, %v4564
    %v4570 = vunpack.c.l.s4 1966171168
    %v4571 = vunpack.c.0.s8 %v4570
    %v4572 = vlaneseq
    %v4573 = vshrl.u32 %v4572, 7
    %v4574 = vsub.s32 %v4571, %v4573
    %v4575 = vrot.slane %v4567, %v4574
    %v4577 = vunpack.c.l.s4 1966171168
    %v4578 = vunpack.c.0.s8 %v4577
    %v4579 = vlaneseq
    %v4580 = vshrl.u32 %v4579, 7
    %v4581 = vsub.s32 %v4578, %v4580
    %v4582 = vrot.slane %v4568, %v4581
    %v4583 = vcombine.high %v4575, %v4575
    %v4584 = vcombine.high %v4582, %v4582
    %v4586 = vunpack.c.l.s4 1966171168
    %v4587 = vunpack.c.0.s8 %v4586
    %v4588 = vlaneseq
    %v4589 = vshrl.u32 %v4588, 7
    %v4590 = vsub.s32 %v4587, %v4589
    %v4591 = vrot.slane %v4575, %v4590
    %v4593 = vunpack.c.l.s4 1966171168
    %v4594 = vunpack.c.0.s8 %v4593
    %v4595 = vlaneseq
    %v4596 = vshrl.u32 %v4595, 7
    %v4597 = vsub.s32 %v4594, %v4596
    %v4598 = vrot.slane %v4582, %v4597
    %v4600 = vunpack.c.l.s4 1966171168
    %v4601 = vunpack.c.0.s8 %v4600
    %v4602 = vlaneseq
    %v4603 = vshrl.u32 %v4602, 7
    %v4604 = vsub.s32 %v4601, %v4603
    %v4605 = vrot.slane %v4583, %v4604
    %v4607 = vunpack.c.l.s4 1966171168
    %v4608 = vunpack.c.0.s8 %v4607
    %v4609 = vlaneseq
    %v4610 = vshrl.u32 %v4609, 7
    %v4611 = vsub.s32 %v4608, %v4610
    %v4612 = vrot.slane %v4584, %v4611
    %v4613 = vcombine.high %v4591, %v4591
    %v4614 = vcombine.high %v4605, %v4605
    %vm4621 = vcmask 1041408
    %v4622 = vsel %vm4621, %v4591, 0.0
    %v4623 = vsel %vm4621, %v4605, 0.0
    %v4624 = vadd.f32 %v4622, %v4623
    %v4625 = vsel %vm4621, %v4613, 0.0
    %v4626 = vadd.f32 %v4624, %v4625
    %v4627 = vsel %vm4621, %v4614, 0.0
    %v4628 = vadd.f32 %v4626, %v4627
    %v4629 = vsel %vm4621, %v4598, 0.0
    %v4630 = vadd.f32 %v4628, %v4629
    %v4631 = vsel %vm4621, %v4612, 0.0
    %v4632 = vadd.f32 %v4630, %v4631
    %4633 = vadd.xlane.f32.xlu0 %v4632
    %v4634 = vpop.xlane.xlu0 %4633
    %v4635 = vrcp.pop 768.0
    %v4636 = vmul.f32 %v4634, %v4635
    %v4638 = vlaneseq
    %v4639 = vshrl.u32 %v4638, 7
    %v4640 = vsub.s32 0, %v4639
    %v4641 = vrot.slane %v4636, %v4640
    %v4642 = vlaneseq
    %v4643 = vshrl.u32 %v4642, 7
    %v4644 = vsub.s32 1, %v4643
    %v4645 = vrot.slane %v4636, %v4644
    %v4648 = vsub.f32 %v4563, %v4641
    %v4649 = vsub.f32 %v4564, %v4645
    %v4650 = vmul.f32 %v4648, %v4648
    %v4651 = vmul.f32 %v4649, %v4649
    %v4654 = vcombine.low %v4650, %v4651
    %v4655 = vcombine.high %v4650, %v4651
    %v4657 = vunpack.c.l.s4 1966171168
    %v4658 = vunpack.c.0.s8 %v4657
    %v4659 = vlaneseq
    %v4660 = vshrl.u32 %v4659, 7
    %v4661 = vsub.s32 %v4658, %v4660
    %v4662 = vrot.slane %v4654, %v4661
    %v4664 = vunpack.c.l.s4 1966171168
    %v4665 = vunpack.c.0.s8 %v4664
    %v4666 = vlaneseq
    %v4667 = vshrl.u32 %v4666, 7
    %v4668 = vsub.s32 %v4665, %v4667
    %v4669 = vrot.slane %v4655, %v4668
    %v4670 = vcombine.high %v4662, %v4662
    %v4671 = vcombine.high %v4669, %v4669
    %v4673 = vunpack.c.l.s4 1966171168
    %v4674 = vunpack.c.0.s8 %v4673
    %v4675 = vlaneseq
    %v4676 = vshrl.u32 %v4675, 7
    %v4677 = vsub.s32 %v4674, %v4676
    %v4678 = vrot.slane %v4662, %v4677
    %v4680 = vunpack.c.l.s4 1966171168
    %v4681 = vunpack.c.0.s8 %v4680
    %v4682 = vlaneseq
    %v4683 = vshrl.u32 %v4682, 7
    %v4684 = vsub.s32 %v4681, %v4683
    %v4685 = vrot.slane %v4669, %v4684
    %v4687 = vunpack.c.l.s4 1966171168
    %v4688 = vunpack.c.0.s8 %v4687
    %v4689 = vlaneseq
    %v4690 = vshrl.u32 %v4689, 7
    %v4691 = vsub.s32 %v4688, %v4690
    %v4692 = vrot.slane %v4670, %v4691
    %v4694 = vunpack.c.l.s4 1966171168
    %v4695 = vunpack.c.0.s8 %v4694
    %v4696 = vlaneseq
    %v4697 = vshrl.u32 %v4696, 7
    %v4698 = vsub.s32 %v4695, %v4697
    %v4699 = vrot.slane %v4671, %v4698
    %v4700 = vcombine.high %v4678, %v4678
    %v4701 = vcombine.high %v4692, %v4692
    %v4708 = vsel %vm4621, %v4678, 0.0
    %v4709 = vsel %vm4621, %v4692, 0.0
    %v4710 = vadd.f32 %v4708, %v4709
    %v4711 = vsel %vm4621, %v4700, 0.0
    %v4712 = vadd.f32 %v4710, %v4711
    %v4713 = vsel %vm4621, %v4701, 0.0
    %v4714 = vadd.f32 %v4712, %v4713
    %v4715 = vsel %vm4621, %v4685, 0.0
    %v4716 = vadd.f32 %v4714, %v4715
    %v4717 = vsel %vm4621, %v4699, 0.0
    %v4718 = vadd.f32 %v4716, %v4717
    %4719 = vadd.xlane.f32.xlu0 %v4718
    %v4720 = vpop.xlane.xlu0 %4719
    %v4721 = vmul.f32 %v4720, %v4635
    %v4722 = vadd.f32 %v4721, 1e-05
    %v4723 = vrsqrt.pop %v4722
    %v4725 = vlaneseq
    %v4726 = vshrl.u32 %v4725, 7
    %v4727 = vsub.s32 0, %v4726
    %v4728 = vrot.slane %v4723, %v4727
    %v4729 = vlaneseq
    %v4730 = vshrl.u32 %v4729, 7
    %v4731 = vsub.s32 1, %v4730
    %v4732 = vrot.slane %v4723, %v4731
    %v4735 = vmul.f32 %v4648, %v4728
    %v4736 = vmul.f32 %v4649, %v4732
    %v4737 = vlaneseq
    %v4738 = vshrl.u32 %v4737, 7
    %v4739 = vsub.s32 2, %v4738
    %v4740 = vrot.slane %v115, %v4739
    %v4741 = vlaneseq
    %v4742 = vshrl.u32 %v4741, 7
    %v4743 = vsub.s32 2, %v4742
    %v4744 = vrot.slane %v116, %v4743
    %v4745 = vlaneseq
    %v4746 = vshrl.u32 %v4745, 7
    %v4747 = vsub.s32 2, %v4746
    %v4748 = vrot.slane %v117, %v4747
    %v4749 = vlaneseq
    %v4750 = vshrl.u32 %v4749, 7
    %v4751 = vsub.s32 2, %v4750
    %v4752 = vrot.slane %v118, %v4751
    %v4753 = vlaneseq
    %v4754 = vshrl.u32 %v4753, 7
    %v4755 = vsub.s32 2, %v4754
    %v4756 = vrot.slane %v119, %v4755
    %v4757 = vlaneseq
    %v4758 = vshrl.u32 %v4757, 7
    %v4759 = vsub.s32 2, %v4758
    %v4760 = vrot.slane %v120, %v4759
    %v4767 = vcombine.low %v4740, %v4744
    %v4768 = vcombine.low %v4748, %v4752
    %v4769 = vcombine.low %v4756, %v4760
    %v4771 = vunpack.c.l.s4 1966171168
    %v4772 = vunpack.c.0.s8 %v4771
    %v4773 = vlaneseq
    %v4774 = vshrl.u32 %v4773, 7
    %v4775 = vsub.s32 %v4772, %v4774
    %v4776 = vrot.slane %v4767, %v4775
    %v4778 = vunpack.c.l.s4 1966171168
    %v4779 = vunpack.c.0.s8 %v4778
    %v4780 = vlaneseq
    %v4781 = vshrl.u32 %v4780, 7
    %v4782 = vsub.s32 %v4779, %v4781
    %v4783 = vrot.slane %v4768, %v4782
    %v4785 = vunpack.c.l.s4 1966171168
    %v4786 = vunpack.c.0.s8 %v4785
    %v4787 = vlaneseq
    %v4788 = vshrl.u32 %v4787, 7
    %v4789 = vsub.s32 %v4786, %v4788
    %v4790 = vrot.slane %v4769, %v4789
    %v4791 = vcombine.low %v4776, %v4783
    %v4792 = vcombine.high %v4776, %v4783
    %v4793 = vcombine.high %v4790, %v4790
    %v4795 = vunpack.c.l.s4 1966171168
    %v4796 = vunpack.c.0.s8 %v4795
    %v4797 = vlaneseq
    %v4798 = vshrl.u32 %v4797, 7
    %v4799 = vsub.s32 %v4796, %v4798
    %v4800 = vrot.slane %v4791, %v4799
    %v4802 = vunpack.c.l.s4 1966171168
    %v4803 = vunpack.c.0.s8 %v4802
    %v4804 = vlaneseq
    %v4805 = vshrl.u32 %v4804, 7
    %v4806 = vsub.s32 %v4803, %v4805
    %v4807 = vrot.slane %v4792, %v4806
    %v4809 = vunpack.c.l.s4 1966171168
    %v4810 = vunpack.c.0.s8 %v4809
    %v4811 = vlaneseq
    %v4812 = vshrl.u32 %v4811, 7
    %v4813 = vsub.s32 %v4810, %v4812
    %v4814 = vrot.slane %v4790, %v4813
    %v4816 = vunpack.c.l.s4 1966171168
    %v4817 = vunpack.c.0.s8 %v4816
    %v4818 = vlaneseq
    %v4819 = vshrl.u32 %v4818, 7
    %v4820 = vsub.s32 %v4817, %v4819
    %v4821 = vrot.slane %v4793, %v4820
    %v4822 = vcombine.low %v4800, %v4814
    %v4823 = vcombine.low %v4807, %v4821
    %v4826 = vmul.f32 %v4735, %v4822
    %v4827 = vmul.f32 %v4736, %v4823
    %v4828 = vlaneseq
    %v4829 = vshrl.u32 %v4828, 7
    %v4830 = vsub.s32 3, %v4829
    %v4831 = vrot.slane %v115, %v4830
    %v4832 = vlaneseq
    %v4833 = vshrl.u32 %v4832, 7
    %v4834 = vsub.s32 3, %v4833
    %v4835 = vrot.slane %v116, %v4834
    %v4836 = vlaneseq
    %v4837 = vshrl.u32 %v4836, 7
    %v4838 = vsub.s32 3, %v4837
    %v4839 = vrot.slane %v117, %v4838
    %v4840 = vlaneseq
    %v4841 = vshrl.u32 %v4840, 7
    %v4842 = vsub.s32 3, %v4841
    %v4843 = vrot.slane %v118, %v4842
    %v4844 = vlaneseq
    %v4845 = vshrl.u32 %v4844, 7
    %v4846 = vsub.s32 3, %v4845
    %v4847 = vrot.slane %v119, %v4846
    %v4848 = vlaneseq
    %v4849 = vshrl.u32 %v4848, 7
    %v4850 = vsub.s32 3, %v4849
    %v4851 = vrot.slane %v120, %v4850
    %v4858 = vcombine.low %v4831, %v4835
    %v4859 = vcombine.low %v4839, %v4843
    %v4860 = vcombine.low %v4847, %v4851
    %v4862 = vunpack.c.l.s4 1966171168
    %v4863 = vunpack.c.0.s8 %v4862
    %v4864 = vlaneseq
    %v4865 = vshrl.u32 %v4864, 7
    %v4866 = vsub.s32 %v4863, %v4865
    %v4867 = vrot.slane %v4858, %v4866
    %v4869 = vunpack.c.l.s4 1966171168
    %v4870 = vunpack.c.0.s8 %v4869
    %v4871 = vlaneseq
    %v4872 = vshrl.u32 %v4871, 7
    %v4873 = vsub.s32 %v4870, %v4872
    %v4874 = vrot.slane %v4859, %v4873
    %v4876 = vunpack.c.l.s4 1966171168
    %v4877 = vunpack.c.0.s8 %v4876
    %v4878 = vlaneseq
    %v4879 = vshrl.u32 %v4878, 7
    %v4880 = vsub.s32 %v4877, %v4879
    %v4881 = vrot.slane %v4860, %v4880
    %v4882 = vcombine.low %v4867, %v4874
    %v4883 = vcombine.high %v4867, %v4874
    %v4884 = vcombine.high %v4881, %v4881
    %v4886 = vunpack.c.l.s4 1966171168
    %v4887 = vunpack.c.0.s8 %v4886
    %v4888 = vlaneseq
    %v4889 = vshrl.u32 %v4888, 7
    %v4890 = vsub.s32 %v4887, %v4889
    %v4891 = vrot.slane %v4882, %v4890
    %v4893 = vunpack.c.l.s4 1966171168
    %v4894 = vunpack.c.0.s8 %v4893
    %v4895 = vlaneseq
    %v4896 = vshrl.u32 %v4895, 7
    %v4897 = vsub.s32 %v4894, %v4896
    %v4898 = vrot.slane %v4883, %v4897
    %v4900 = vunpack.c.l.s4 1966171168
    %v4901 = vunpack.c.0.s8 %v4900
    %v4902 = vlaneseq
    %v4903 = vshrl.u32 %v4902, 7
    %v4904 = vsub.s32 %v4901, %v4903
    %v4905 = vrot.slane %v4881, %v4904
    %v4907 = vunpack.c.l.s4 1966171168
    %v4908 = vunpack.c.0.s8 %v4907
    %v4909 = vlaneseq
    %v4910 = vshrl.u32 %v4909, 7
    %v4911 = vsub.s32 %v4908, %v4910
    %v4912 = vrot.slane %v4884, %v4911
    %v4913 = vcombine.low %v4891, %v4905
    %v4914 = vcombine.low %v4898, %v4912
    %v4917 = vadd.f32 %v4826, %v4913
    %v4918 = vadd.f32 %v4827, %v4914
    %v4921 = vlaneseq
    %v4922 = vshrl.u32 %v4921, 7
    %v4923 = vsub.s32 0, %v4922
    %v4924 = vrot.slane %v4917, %v4923
    %v4925 = vlaneseq
    %v4926 = vshrl.u32 %v4925, 7
    %v4927 = vsub.s32 1, %v4926
    %v4928 = vrot.slane %v4917, %v4927
    %v4929 = vlaneseq
    %v4930 = vshrl.u32 %v4929, 7
    %v4931 = vsub.s32 2, %v4930
    %v4932 = vrot.slane %v4917, %v4931
    %v4933 = vlaneseq
    %v4934 = vshrl.u32 %v4933, 7
    %v4935 = vsub.s32 3, %v4934
    %v4936 = vrot.slane %v4917, %v4935
    %v4937 = vlaneseq
    %v4938 = vshrl.u32 %v4937, 7
    %v4939 = vsub.s32 4, %v4938
    %v4940 = vrot.slane %v4917, %v4939
    %v4941 = vlaneseq
    %v4942 = vshrl.u32 %v4941, 7
    %v4943 = vsub.s32 5, %v4942
    %v4944 = vrot.slane %v4917, %v4943
    %v4945 = vlaneseq
    %v4946 = vshrl.u32 %v4945, 7
    %v4947 = vsub.s32 0, %v4946
    %v4948 = vrot.slane %v4918, %v4947
    %v4949 = vlaneseq
    %v4950 = vshrl.u32 %v4949, 7
    %v4951 = vsub.s32 1, %v4950
    %v4952 = vrot.slane %v4918, %v4951
    %v4953 = vlaneseq
    %v4954 = vshrl.u32 %v4953, 7
    %v4955 = vsub.s32 2, %v4954
    %v4956 = vrot.slane %v4918, %v4955
    %v4957 = vlaneseq
    %v4958 = vshrl.u32 %v4957, 7
    %v4959 = vsub.s32 3, %v4958
    %v4960 = vrot.slane %v4918, %v4959
    %v4961 = vlaneseq
    %v4962 = vshrl.u32 %v4961, 7
    %v4963 = vsub.s32 4, %v4962
    %v4964 = vrot.slane %v4918, %v4963
    %v4965 = vlaneseq
    %v4966 = vshrl.u32 %v4965, 7
    %v4967 = vsub.s32 5, %v4966
    %v4968 = vrot.slane %v4918, %v4967
    %v4981 = vpack.c.bf16 %v4924, %v4924
    %v4982 = vpack.c.bf16 %v4928, %v4928
    %v4983 = vpack.c.bf16 %v4932, %v4932
    %v4984 = vpack.c.bf16 %v4936, %v4936
    %v4985 = vpack.c.bf16 %v4940, %v4940
    %v4986 = vpack.c.bf16 %v4944, %v4944
    %v4987 = vpack.c.bf16 %v4948, %v4948
    %v4988 = vpack.c.bf16 %v4952, %v4952
    %v4989 = vpack.c.bf16 %v4956, %v4956
    %v4990 = vpack.c.bf16 %v4960, %v4960
    %v4991 = vpack.c.bf16 %v4964, %v4964
    %v4992 = vpack.c.bf16 %v4968, %v4968
    %v4993 = vld [vmem:[#allocation7] sm:$0xff]
    %v4994 = vld [vmem:[#allocation7 + $0x8] sm:$0xff]
    %v4995 = vld [vmem:[#allocation7 + $0x10] sm:$0xff]
    %v4996 = vld [vmem:[#allocation7 + $0x18] sm:$0xff]
    %v4997 = vld [vmem:[#allocation7 + $0x20] sm:$0xff]
    %v4998 = vld [vmem:[#allocation7 + $0x28] sm:$0xff]
    %v4999 = vld [vmem:[#allocation7 + $0x30] sm:$0xff]
    %v5000 = vld [vmem:[#allocation7 + $0x38] sm:$0xff]
    %v5001 = vld [vmem:[#allocation7 + $0x40] sm:$0xff]
    %v5002 = vld [vmem:[#allocation7 + $0x48] sm:$0xff]
    %v5003 = vld [vmem:[#allocation7 + $0x50] sm:$0xff]
    %v5004 = vld [vmem:[#allocation7 + $0x58] sm:$0xff]
    %v5005 = vld [vmem:[#allocation7 + $0x60] sm:$0xff]
    %v5006 = vld [vmem:[#allocation7 + $0x68] sm:$0xff]
    %v5007 = vld [vmem:[#allocation7 + $0x70] sm:$0xff]
    %v5008 = vld [vmem:[#allocation7 + $0x78] sm:$0xff]
    %v5009 = vld [vmem:[#allocation7 + $0x80] sm:$0xff]
    %v5010 = vld [vmem:[#allocation7 + $0x88] sm:$0xff]
    %v5011 = vld [vmem:[#allocation7 + $0x90] sm:$0xff]
    %v5012 = vld [vmem:[#allocation7 + $0x98] sm:$0xff]
    %v5013 = vld [vmem:[#allocation7 + $0xa0] sm:$0xff]
    %v5014 = vld [vmem:[#allocation7 + $0xa8] sm:$0xff]
    %v5015 = vld [vmem:[#allocation7 + $0xb0] sm:$0xff]
    %v5016 = vld [vmem:[#allocation7 + $0xb8] sm:$0xff]
    %v5017 = vld [vmem:[#allocation7 + $0xc0] sm:$0xff]
    %v5018 = vld [vmem:[#allocation7 + $0xc8] sm:$0xff]
    %v5019 = vld [vmem:[#allocation7 + $0xd0] sm:$0xff]
    %v5020 = vld [vmem:[#allocation7 + $0xd8] sm:$0xff]
    %v5021 = vld [vmem:[#allocation7 + $0xe0] sm:$0xff]
    %v5022 = vld [vmem:[#allocation7 + $0xe8] sm:$0xff]
    %v5023 = vld [vmem:[#allocation7 + $0xf0] sm:$0xff]
    %v5024 = vld [vmem:[#allocation7 + $0xf8] sm:$0xff]
    %v5025 = vld [vmem:[#allocation7 + $0x100] sm:$0xff]
    %v5026 = vld [vmem:[#allocation7 + $0x108] sm:$0xff]
    %v5027 = vld [vmem:[#allocation7 + $0x110] sm:$0xff]
    %v5028 = vld [vmem:[#allocation7 + $0x118] sm:$0xff]
    %v5029 = vld [vmem:[#allocation7 + $0x120] sm:$0xff]
    %v5030 = vld [vmem:[#allocation7 + $0x128] sm:$0xff]
    %v5031 = vld [vmem:[#allocation7 + $0x130] sm:$0xff]
    %v5032 = vld [vmem:[#allocation7 + $0x138] sm:$0xff]
    %v5033 = vld [vmem:[#allocation7 + $0x140] sm:$0xff]
    %v5034 = vld [vmem:[#allocation7 + $0x148] sm:$0xff]
    %v5035 = vld [vmem:[#allocation7 + $0x150] sm:$0xff]
    %v5036 = vld [vmem:[#allocation7 + $0x158] sm:$0xff]
    %v5037 = vld [vmem:[#allocation7 + $0x160] sm:$0xff]
    %v5038 = vld [vmem:[#allocation7 + $0x168] sm:$0xff]
    %v5039 = vld [vmem:[#allocation7 + $0x170] sm:$0xff]
    %v5040 = vld [vmem:[#allocation7 + $0x178] sm:$0xff]
    %v5041 = vld [vmem:[#allocation7 + $0x180] sm:$0xff]
    %v5042 = vld [vmem:[#allocation7 + $0x188] sm:$0xff]
    %v5043 = vld [vmem:[#allocation7 + $0x190] sm:$0xff]
    %v5044 = vld [vmem:[#allocation7 + $0x198] sm:$0xff]
    %v5045 = vld [vmem:[#allocation7 + $0x1a0] sm:$0xff]
    %v5046 = vld [vmem:[#allocation7 + $0x1a8] sm:$0xff]
    %v5047 = vld [vmem:[#allocation7 + $0x1b0] sm:$0xff]
    %v5048 = vld [vmem:[#allocation7 + $0x1b8] sm:$0xff]
    %v5049 = vld [vmem:[#allocation7 + $0x1c0] sm:$0xff]
    %v5050 = vld [vmem:[#allocation7 + $0x1c8] sm:$0xff]
    %v5051 = vld [vmem:[#allocation7 + $0x1d0] sm:$0xff]
    %v5052 = vld [vmem:[#allocation7 + $0x1d8] sm:$0xff]
    %v5053 = vld [vmem:[#allocation7 + $0x1e0] sm:$0xff]
    %v5054 = vld [vmem:[#allocation7 + $0x1e8] sm:$0xff]
    %v5055 = vld [vmem:[#allocation7 + $0x1f0] sm:$0xff]
    %v5056 = vld [vmem:[#allocation7 + $0x1f8] sm:$0xff]
    %v5057 = vld [vmem:[#allocation7 + $0x200] sm:$0xff]
    %v5058 = vld [vmem:[#allocation7 + $0x208] sm:$0xff]
    %v5059 = vld [vmem:[#allocation7 + $0x210] sm:$0xff]
    %v5060 = vld [vmem:[#allocation7 + $0x218] sm:$0xff]
    %v5061 = vld [vmem:[#allocation7 + $0x220] sm:$0xff]
    %v5062 = vld [vmem:[#allocation7 + $0x228] sm:$0xff]
    %v5063 = vld [vmem:[#allocation7 + $0x230] sm:$0xff]
    %v5064 = vld [vmem:[#allocation7 + $0x238] sm:$0xff]
    %v5065 = vld [vmem:[#allocation7 + $0x240] sm:$0xff]
    %v5066 = vld [vmem:[#allocation7 + $0x248] sm:$0xff]
    %v5067 = vld [vmem:[#allocation7 + $0x250] sm:$0xff]
    %v5068 = vld [vmem:[#allocation7 + $0x258] sm:$0xff]
    %v5069 = vld [vmem:[#allocation7 + $0x260] sm:$0xff]
    %v5070 = vld [vmem:[#allocation7 + $0x268] sm:$0xff]
    %v5071 = vld [vmem:[#allocation7 + $0x270] sm:$0xff]
    %v5072 = vld [vmem:[#allocation7 + $0x278] sm:$0xff]
    %v5073 = vld [vmem:[#allocation7 + $0x280] sm:$0xff]
    %v5074 = vld [vmem:[#allocation7 + $0x288] sm:$0xff]
    %v5075 = vld [vmem:[#allocation7 + $0x290] sm:$0xff]
    %v5076 = vld [vmem:[#allocation7 + $0x298] sm:$0xff]
    %v5077 = vld [vmem:[#allocation7 + $0x2a0] sm:$0xff]
    %v5078 = vld [vmem:[#allocation7 + $0x2a8] sm:$0xff]
    %v5079 = vld [vmem:[#allocation7 + $0x2b0] sm:$0xff]
    %v5080 = vld [vmem:[#allocation7 + $0x2b8] sm:$0xff]
    %v5081 = vld [vmem:[#allocation7 + $0x2c0] sm:$0xff]
    %v5082 = vld [vmem:[#allocation7 + $0x2c8] sm:$0xff]
    %v5083 = vld [vmem:[#allocation7 + $0x2d0] sm:$0xff]
    %v5084 = vld [vmem:[#allocation7 + $0x2d8] sm:$0xff]
    %v5085 = vld [vmem:[#allocation7 + $0x2e0] sm:$0xff]
    %v5086 = vld [vmem:[#allocation7 + $0x2e8] sm:$0xff]
    %v5087 = vld [vmem:[#allocation7 + $0x2f0] sm:$0xff]
    %v5088 = vld [vmem:[#allocation7 + $0x2f8] sm:$0xff]
    %v5089 = vld [vmem:[#allocation7 + $0x300] sm:$0xff]
    %v5090 = vld [vmem:[#allocation7 + $0x308] sm:$0xff]
    %v5091 = vld [vmem:[#allocation7 + $0x310] sm:$0xff]
    %v5092 = vld [vmem:[#allocation7 + $0x318] sm:$0xff]
    %v5093 = vld [vmem:[#allocation7 + $0x320] sm:$0xff]
    %v5094 = vld [vmem:[#allocation7 + $0x328] sm:$0xff]
    %v5095 = vld [vmem:[#allocation7 + $0x330] sm:$0xff]
    %v5096 = vld [vmem:[#allocation7 + $0x338] sm:$0xff]
    %v5097 = vld [vmem:[#allocation7 + $0x340] sm:$0xff]
    %v5098 = vld [vmem:[#allocation7 + $0x348] sm:$0xff]
    %v5099 = vld [vmem:[#allocation7 + $0x350] sm:$0xff]
    %v5100 = vld [vmem:[#allocation7 + $0x358] sm:$0xff]
    %v5101 = vld [vmem:[#allocation7 + $0x360] sm:$0xff]
    %v5102 = vld [vmem:[#allocation7 + $0x368] sm:$0xff]
    %v5103 = vld [vmem:[#allocation7 + $0x370] sm:$0xff]
    %v5104 = vld [vmem:[#allocation7 + $0x378] sm:$0xff]
    %v5105 = vld [vmem:[#allocation7 + $0x380] sm:$0xff]
    %v5106 = vld [vmem:[#allocation7 + $0x388] sm:$0xff]
    %v5107 = vld [vmem:[#allocation7 + $0x390] sm:$0xff]
    %v5108 = vld [vmem:[#allocation7 + $0x398] sm:$0xff]
    %v5109 = vld [vmem:[#allocation7 + $0x3a0] sm:$0xff]
    %v5110 = vld [vmem:[#allocation7 + $0x3a8] sm:$0xff]
    %v5111 = vld [vmem:[#allocation7 + $0x3b0] sm:$0xff]
    %v5112 = vld [vmem:[#allocation7 + $0x3b8] sm:$0xff]
    %v5113 = vld [vmem:[#allocation7 + $0x3c0] sm:$0xff]
    %v5114 = vld [vmem:[#allocation7 + $0x3c8] sm:$0xff]
    %v5115 = vld [vmem:[#allocation7 + $0x3d0] sm:$0xff]
    %v5116 = vld [vmem:[#allocation7 + $0x3d8] sm:$0xff]
    %v5117 = vld [vmem:[#allocation7 + $0x3e0] sm:$0xff]
    %v5118 = vld [vmem:[#allocation7 + $0x3e8] sm:$0xff]
    %v5119 = vld [vmem:[#allocation7 + $0x3f0] sm:$0xff]
    %v5120 = vld [vmem:[#allocation7 + $0x3f8] sm:$0xff]
    %v5121 = vld [vmem:[#allocation7 + $0x400] sm:$0xff]
    %v5122 = vld [vmem:[#allocation7 + $0x408] sm:$0xff]
    %v5123 = vld [vmem:[#allocation7 + $0x410] sm:$0xff]
    %v5124 = vld [vmem:[#allocation7 + $0x418] sm:$0xff]
    %v5125 = vld [vmem:[#allocation7 + $0x420] sm:$0xff]
    %v5126 = vld [vmem:[#allocation7 + $0x428] sm:$0xff]
    %v5127 = vld [vmem:[#allocation7 + $0x430] sm:$0xff]
    %v5128 = vld [vmem:[#allocation7 + $0x438] sm:$0xff]
    %v5129 = vld [vmem:[#allocation7 + $0x440] sm:$0xff]
    %v5130 = vld [vmem:[#allocation7 + $0x448] sm:$0xff]
    %v5131 = vld [vmem:[#allocation7 + $0x450] sm:$0xff]
    %v5132 = vld [vmem:[#allocation7 + $0x458] sm:$0xff]
    %v5133 = vld [vmem:[#allocation7 + $0x460] sm:$0xff]
    %v5134 = vld [vmem:[#allocation7 + $0x468] sm:$0xff]
    %v5135 = vld [vmem:[#allocation7 + $0x470] sm:$0xff]
    %v5136 = vld [vmem:[#allocation7 + $0x478] sm:$0xff]
    %v5137 = vld [vmem:[#allocation7 + $0x480] sm:$0xff]
    %v5138 = vld [vmem:[#allocation7 + $0x488] sm:$0xff]
    %v5139 = vld [vmem:[#allocation7 + $0x490] sm:$0xff]
    %v5140 = vld [vmem:[#allocation7 + $0x498] sm:$0xff]
    %v5141 = vld [vmem:[#allocation7 + $0x4a0] sm:$0xff]
    %v5142 = vld [vmem:[#allocation7 + $0x4a8] sm:$0xff]
    %v5143 = vld [vmem:[#allocation7 + $0x4b0] sm:$0xff]
    %v5144 = vld [vmem:[#allocation7 + $0x4b8] sm:$0xff]
    %v5145 = vld [vmem:[#allocation7 + $0x4c0] sm:$0xff]
    %v5146 = vld [vmem:[#allocation7 + $0x4c8] sm:$0xff]
    %v5147 = vld [vmem:[#allocation7 + $0x4d0] sm:$0xff]
    %v5148 = vld [vmem:[#allocation7 + $0x4d8] sm:$0xff]
    %v5149 = vld [vmem:[#allocation7 + $0x4e0] sm:$0xff]
    %v5150 = vld [vmem:[#allocation7 + $0x4e8] sm:$0xff]
    %v5151 = vld [vmem:[#allocation7 + $0x4f0] sm:$0xff]
    %v5152 = vld [vmem:[#allocation7 + $0x4f8] sm:$0xff]
    %v5153 = vld [vmem:[#allocation7 + $0x500] sm:$0xff]
    %v5154 = vld [vmem:[#allocation7 + $0x508] sm:$0xff]
    %v5155 = vld [vmem:[#allocation7 + $0x510] sm:$0xff]
    %v5156 = vld [vmem:[#allocation7 + $0x518] sm:$0xff]
    %v5157 = vld [vmem:[#allocation7 + $0x520] sm:$0xff]
    %v5158 = vld [vmem:[#allocation7 + $0x528] sm:$0xff]
    %v5159 = vld [vmem:[#allocation7 + $0x530] sm:$0xff]
    %v5160 = vld [vmem:[#allocation7 + $0x538] sm:$0xff]
    %v5161 = vld [vmem:[#allocation7 + $0x540] sm:$0xff]
    %v5162 = vld [vmem:[#allocation7 + $0x548] sm:$0xff]
    %v5163 = vld [vmem:[#allocation7 + $0x550] sm:$0xff]
    %v5164 = vld [vmem:[#allocation7 + $0x558] sm:$0xff]
    %v5165 = vld [vmem:[#allocation7 + $0x560] sm:$0xff]
    %v5166 = vld [vmem:[#allocation7 + $0x568] sm:$0xff]
    %v5167 = vld [vmem:[#allocation7 + $0x570] sm:$0xff]
    %v5168 = vld [vmem:[#allocation7 + $0x578] sm:$0xff]
    %v5169 = vld [vmem:[#allocation7 + $0x580] sm:$0xff]
    %v5170 = vld [vmem:[#allocation7 + $0x588] sm:$0xff]
    %v5171 = vld [vmem:[#allocation7 + $0x590] sm:$0xff]
    %v5172 = vld [vmem:[#allocation7 + $0x598] sm:$0xff]
    %v5173 = vld [vmem:[#allocation7 + $0x5a0] sm:$0xff]
    %v5174 = vld [vmem:[#allocation7 + $0x5a8] sm:$0xff]
    %v5175 = vld [vmem:[#allocation7 + $0x5b0] sm:$0xff]
    %v5176 = vld [vmem:[#allocation7 + $0x5b8] sm:$0xff]
    %v5177 = vld [vmem:[#allocation7 + $0x5c0] sm:$0xff]
    %v5178 = vld [vmem:[#allocation7 + $0x5c8] sm:$0xff]
    %v5179 = vld [vmem:[#allocation7 + $0x5d0] sm:$0xff]
    %v5180 = vld [vmem:[#allocation7 + $0x5d8] sm:$0xff]
    %v5181 = vld [vmem:[#allocation7 + $0x5e0] sm:$0xff]
    %v5182 = vld [vmem:[#allocation7 + $0x5e8] sm:$0xff]
    %v5183 = vld [vmem:[#allocation7 + $0x5f0] sm:$0xff]
    %v5184 = vld [vmem:[#allocation7 + $0x5f8] sm:$0xff]
    %v5185 = vlaneseq
    %v5186 = vshrl.u32 %v5185, 7
    %v5187 = vsub.s32 4, %v5186
    %v5188 = vrot.slane %v115, %v5187
    %v5189 = vlaneseq
    %v5190 = vshrl.u32 %v5189, 7
    %v5191 = vsub.s32 4, %v5190
    %v5192 = vrot.slane %v116, %v5191
    %v5193 = vlaneseq
    %v5194 = vshrl.u32 %v5193, 7
    %v5195 = vsub.s32 4, %v5194
    %v5196 = vrot.slane %v117, %v5195
    %v5197 = vlaneseq
    %v5198 = vshrl.u32 %v5197, 7
    %v5199 = vsub.s32 4, %v5198
    %v5200 = vrot.slane %v118, %v5199
    %v5213 = vunpack.c.l.b16 %v4981
    %v5214 = vunpack.c.l.b16 %v4982
    %v5215 = vunpack.c.l.b16 %v4983
    %v5216 = vunpack.c.l.b16 %v4984
    %v5217 = vunpack.c.l.b16 %v4985
    %v5218 = vunpack.c.l.b16 %v4986
    %v5219 = vunpack.c.l.b16 %v4987
    %v5220 = vunpack.c.l.b16 %v4988
    %v5221 = vunpack.c.l.b16 %v4989
    %v5222 = vunpack.c.l.b16 %v4990
    %v5223 = vunpack.c.l.b16 %v4991
    %v5224 = vunpack.c.l.b16 %v4992
    %v5225 = vrot.slane %v5219, 7
    %v5226 = vsel %vm538, %v5225, %v5213
    %v5227 = vrot.slane %v5220, 7
    %v5228 = vsel %vm538, %v5227, %v5214
    %v5229 = vrot.slane %v5221, 7
    %v5230 = vsel %vm538, %v5229, %v5215
    %v5231 = vrot.slane %v5222, 7
    %v5232 = vsel %vm538, %v5231, %v5216
    %v5233 = vrot.slane %v5223, 7
    %v5234 = vsel %vm538, %v5233, %v5217
    %v5235 = vrot.slane %v5224, 7
    %v5236 = vsel %vm538, %v5235, %v5218
    %v5237 = vpack.c.b16 %v5226, %v5226
    %v5238 = vpack.c.b16 %v5228, %v5228
    %v5239 = vpack.c.b16 %v5230, %v5230
    %v5240 = vpack.c.b16 %v5232, %v5232
    %v5241 = vpack.c.b16 %v5234, %v5234
    %v5242 = vpack.c.b16 %v5236, %v5236
    %v5441 = vunpack.c.l.b16 %v4993
    %v5442 = vunpack.c.h.b16 %v4993
    %v5443 = vunpack.c.l.b16 %v4994
    %v5444 = vunpack.c.h.b16 %v4994
    %v5445 = vunpack.c.l.b16 %v4995
    %v5446 = vunpack.c.h.b16 %v4995
    %v5447 = vunpack.c.l.b16 %v4996
    %v5448 = vunpack.c.h.b16 %v4996
    %v5449 = vunpack.c.l.b16 %v4997
    %v5450 = vunpack.c.h.b16 %v4997
    %v5451 = vunpack.c.l.b16 %v4998
    %v5452 = vunpack.c.h.b16 %v4998
    %v5453 = vunpack.c.l.b16 %v4999
    %v5454 = vunpack.c.h.b16 %v4999
    %v5455 = vunpack.c.l.b16 %v5000
    %v5456 = vunpack.c.h.b16 %v5000
    %v5457 = vunpack.c.l.b16 %v5001
    %v5458 = vunpack.c.h.b16 %v5001
    %v5459 = vunpack.c.l.b16 %v5002
    %v5460 = vunpack.c.h.b16 %v5002
    %v5461 = vunpack.c.l.b16 %v5003
    %v5462 = vunpack.c.h.b16 %v5003
    %v5463 = vunpack.c.l.b16 %v5004
    %v5464 = vunpack.c.h.b16 %v5004
    %v5465 = vunpack.c.l.b16 %v5005
    %v5466 = vunpack.c.h.b16 %v5005
    %v5467 = vunpack.c.l.b16 %v5006
    %v5468 = vunpack.c.h.b16 %v5006
    %v5469 = vunpack.c.l.b16 %v5007
    %v5470 = vunpack.c.h.b16 %v5007
    %v5471 = vunpack.c.l.b16 %v5008
    %v5472 = vunpack.c.h.b16 %v5008
    %v5473 = vunpack.c.l.b16 %v5009
    %v5474 = vunpack.c.h.b16 %v5009
    %v5475 = vunpack.c.l.b16 %v5010
    %v5476 = vunpack.c.h.b16 %v5010
    %v5477 = vunpack.c.l.b16 %v5011
    %v5478 = vunpack.c.h.b16 %v5011
    %v5479 = vunpack.c.l.b16 %v5012
    %v5480 = vunpack.c.h.b16 %v5012
    %v5481 = vunpack.c.l.b16 %v5013
    %v5482 = vunpack.c.h.b16 %v5013
    %v5483 = vunpack.c.l.b16 %v5014
    %v5484 = vunpack.c.h.b16 %v5014
    %v5485 = vunpack.c.l.b16 %v5015
    %v5486 = vunpack.c.h.b16 %v5015
    %v5487 = vunpack.c.l.b16 %v5016
    %v5488 = vunpack.c.h.b16 %v5016
    %v5489 = vunpack.c.l.b16 %v5017
    %v5490 = vunpack.c.h.b16 %v5017
    %v5491 = vunpack.c.l.b16 %v5018
    %v5492 = vunpack.c.h.b16 %v5018
    %v5493 = vunpack.c.l.b16 %v5019
    %v5494 = vunpack.c.h.b16 %v5019
    %v5495 = vunpack.c.l.b16 %v5020
    %v5496 = vunpack.c.h.b16 %v5020
    %v5497 = vunpack.c.l.b16 %v5021
    %v5498 = vunpack.c.h.b16 %v5021
    %v5499 = vunpack.c.l.b16 %v5022
    %v5500 = vunpack.c.h.b16 %v5022
    %v5501 = vunpack.c.l.b16 %v5023
    %v5502 = vunpack.c.h.b16 %v5023
    %v5503 = vunpack.c.l.b16 %v5024
    %v5504 = vunpack.c.h.b16 %v5024
    %v5505 = vunpack.c.l.b16 %v5025
    %v5506 = vunpack.c.h.b16 %v5025
    %v5507 = vunpack.c.l.b16 %v5026
    %v5508 = vunpack.c.h.b16 %v5026
    %v5509 = vunpack.c.l.b16 %v5027
    %v5510 = vunpack.c.h.b16 %v5027
    %v5511 = vunpack.c.l.b16 %v5028
    %v5512 = vunpack.c.h.b16 %v5028
    %v5513 = vunpack.c.l.b16 %v5029
    %v5514 = vunpack.c.h.b16 %v5029
    %v5515 = vunpack.c.l.b16 %v5030
    %v5516 = vunpack.c.h.b16 %v5030
    %v5517 = vunpack.c.l.b16 %v5031
    %v5518 = vunpack.c.h.b16 %v5031
    %v5519 = vunpack.c.l.b16 %v5032
    %v5520 = vunpack.c.h.b16 %v5032
    %v5521 = vunpack.c.l.b16 %v5033
    %v5522 = vunpack.c.h.b16 %v5033
    %v5523 = vunpack.c.l.b16 %v5034
    %v5524 = vunpack.c.h.b16 %v5034
    %v5525 = vunpack.c.l.b16 %v5035
    %v5526 = vunpack.c.h.b16 %v5035
    %v5527 = vunpack.c.l.b16 %v5036
    %v5528 = vunpack.c.h.b16 %v5036
    %v5529 = vunpack.c.l.b16 %v5037
    %v5530 = vunpack.c.h.b16 %v5037
    %v5531 = vunpack.c.l.b16 %v5038
    %v5532 = vunpack.c.h.b16 %v5038
    %v5533 = vunpack.c.l.b16 %v5039
    %v5534 = vunpack.c.h.b16 %v5039
    %v5535 = vunpack.c.l.b16 %v5040
    %v5536 = vunpack.c.h.b16 %v5040
    %v5537 = vunpack.c.l.b16 %v5041
    %v5538 = vunpack.c.h.b16 %v5041
    %v5539 = vunpack.c.l.b16 %v5042
    %v5540 = vunpack.c.h.b16 %v5042
    %v5541 = vunpack.c.l.b16 %v5043
    %v5542 = vunpack.c.h.b16 %v5043
    %v5543 = vunpack.c.l.b16 %v5044
    %v5544 = vunpack.c.h.b16 %v5044
    %v5545 = vunpack.c.l.b16 %v5045
    %v5546 = vunpack.c.h.b16 %v5045
    %v5547 = vunpack.c.l.b16 %v5046
    %v5548 = vunpack.c.h.b16 %v5046
    %v5549 = vunpack.c.l.b16 %v5047
    %v5550 = vunpack.c.h.b16 %v5047
    %v5551 = vunpack.c.l.b16 %v5048
    %v5552 = vunpack.c.h.b16 %v5048
    %v5553 = vunpack.c.l.b16 %v5049
    %v5554 = vunpack.c.h.b16 %v5049
    %v5555 = vunpack.c.l.b16 %v5050
    %v5556 = vunpack.c.h.b16 %v5050
    %v5557 = vunpack.c.l.b16 %v5051
    %v5558 = vunpack.c.h.b16 %v5051
    %v5559 = vunpack.c.l.b16 %v5052
    %v5560 = vunpack.c.h.b16 %v5052
    %v5561 = vunpack.c.l.b16 %v5053
    %v5562 = vunpack.c.h.b16 %v5053
    %v5563 = vunpack.c.l.b16 %v5054
    %v5564 = vunpack.c.h.b16 %v5054
    %v5565 = vunpack.c.l.b16 %v5055
    %v5566 = vunpack.c.h.b16 %v5055
    %v5567 = vunpack.c.l.b16 %v5056
    %v5568 = vunpack.c.h.b16 %v5056
    %v5569 = vunpack.c.l.b16 %v5057
    %v5570 = vunpack.c.h.b16 %v5057
    %v5571 = vunpack.c.l.b16 %v5058
    %v5572 = vunpack.c.h.b16 %v5058
    %v5573 = vunpack.c.l.b16 %v5059
    %v5574 = vunpack.c.h.b16 %v5059
    %v5575 = vunpack.c.l.b16 %v5060
    %v5576 = vunpack.c.h.b16 %v5060
    %v5577 = vunpack.c.l.b16 %v5061
    %v5578 = vunpack.c.h.b16 %v5061
    %v5579 = vunpack.c.l.b16 %v5062
    %v5580 = vunpack.c.h.b16 %v5062
    %v5581 = vunpack.c.l.b16 %v5063
    %v5582 = vunpack.c.h.b16 %v5063
    %v5583 = vunpack.c.l.b16 %v5064
    %v5584 = vunpack.c.h.b16 %v5064
    %v5585 = vunpack.c.l.b16 %v5065
    %v5586 = vunpack.c.h.b16 %v5065
    %v5587 = vunpack.c.l.b16 %v5066
    %v5588 = vunpack.c.h.b16 %v5066
    %v5589 = vunpack.c.l.b16 %v5067
    %v5590 = vunpack.c.h.b16 %v5067
    %v5591 = vunpack.c.l.b16 %v5068
    %v5592 = vunpack.c.h.b16 %v5068
    %v5593 = vunpack.c.l.b16 %v5069
    %v5594 = vunpack.c.h.b16 %v5069
    %v5595 = vunpack.c.l.b16 %v5070
    %v5596 = vunpack.c.h.b16 %v5070
    %v5597 = vunpack.c.l.b16 %v5071
    %v5598 = vunpack.c.h.b16 %v5071
    %v5599 = vunpack.c.l.b16 %v5072
    %v5600 = vunpack.c.h.b16 %v5072
    %v5601 = vunpack.c.l.b16 %v5073
    %v5602 = vunpack.c.h.b16 %v5073
    %v5603 = vunpack.c.l.b16 %v5074
    %v5604 = vunpack.c.h.b16 %v5074
    %v5605 = vunpack.c.l.b16 %v5075
    %v5606 = vunpack.c.h.b16 %v5075
    %v5607 = vunpack.c.l.b16 %v5076
    %v5608 = vunpack.c.h.b16 %v5076
    %v5609 = vunpack.c.l.b16 %v5077
    %v5610 = vunpack.c.h.b16 %v5077
    %v5611 = vunpack.c.l.b16 %v5078
    %v5612 = vunpack.c.h.b16 %v5078
    %v5613 = vunpack.c.l.b16 %v5079
    %v5614 = vunpack.c.h.b16 %v5079
    %v5615 = vunpack.c.l.b16 %v5080
    %v5616 = vunpack.c.h.b16 %v5080
    %v5617 = vunpack.c.l.b16 %v5081
    %v5618 = vunpack.c.h.b16 %v5081
    %v5619 = vunpack.c.l.b16 %v5082
    %v5620 = vunpack.c.h.b16 %v5082
    %v5621 = vunpack.c.l.b16 %v5083
    %v5622 = vunpack.c.h.b16 %v5083
    %v5623 = vunpack.c.l.b16 %v5084
    %v5624 = vunpack.c.h.b16 %v5084
    %v5625 = vunpack.c.l.b16 %v5085
    %v5626 = vunpack.c.h.b16 %v5085
    %v5627 = vunpack.c.l.b16 %v5086
    %v5628 = vunpack.c.h.b16 %v5086
    %v5629 = vunpack.c.l.b16 %v5087
    %v5630 = vunpack.c.h.b16 %v5087
    %v5631 = vunpack.c.l.b16 %v5088
    %v5632 = vunpack.c.h.b16 %v5088
    %v5633 = vunpack.c.l.b16 %v5089
    %v5634 = vunpack.c.h.b16 %v5089
    %v5635 = vunpack.c.l.b16 %v5090
    %v5636 = vunpack.c.h.b16 %v5090
    %v5637 = vunpack.c.l.b16 %v5091
    %v5638 = vunpack.c.h.b16 %v5091
    %v5639 = vunpack.c.l.b16 %v5092
    %v5640 = vunpack.c.h.b16 %v5092
    %v5641 = vunpack.c.l.b16 %v5093
    %v5642 = vunpack.c.h.b16 %v5093
    %v5643 = vunpack.c.l.b16 %v5094
    %v5644 = vunpack.c.h.b16 %v5094
    %v5645 = vunpack.c.l.b16 %v5095
    %v5646 = vunpack.c.h.b16 %v5095
    %v5647 = vunpack.c.l.b16 %v5096
    %v5648 = vunpack.c.h.b16 %v5096
    %v5649 = vunpack.c.l.b16 %v5097
    %v5650 = vunpack.c.h.b16 %v5097
    %v5651 = vunpack.c.l.b16 %v5098
    %v5652 = vunpack.c.h.b16 %v5098
    %v5653 = vunpack.c.l.b16 %v5099
    %v5654 = vunpack.c.h.b16 %v5099
    %v5655 = vunpack.c.l.b16 %v5100
    %v5656 = vunpack.c.h.b16 %v5100
    %v5657 = vunpack.c.l.b16 %v5101
    %v5658 = vunpack.c.h.b16 %v5101
    %v5659 = vunpack.c.l.b16 %v5102
    %v5660 = vunpack.c.h.b16 %v5102
    %v5661 = vunpack.c.l.b16 %v5103
    %v5662 = vunpack.c.h.b16 %v5103
    %v5663 = vunpack.c.l.b16 %v5104
    %v5664 = vunpack.c.h.b16 %v5104
    %v5665 = vunpack.c.l.b16 %v5105
    %v5666 = vunpack.c.h.b16 %v5105
    %v5667 = vunpack.c.l.b16 %v5106
    %v5668 = vunpack.c.h.b16 %v5106
    %v5669 = vunpack.c.l.b16 %v5107
    %v5670 = vunpack.c.h.b16 %v5107
    %v5671 = vunpack.c.l.b16 %v5108
    %v5672 = vunpack.c.h.b16 %v5108
    %v5673 = vunpack.c.l.b16 %v5109
    %v5674 = vunpack.c.h.b16 %v5109
    %v5675 = vunpack.c.l.b16 %v5110
    %v5676 = vunpack.c.h.b16 %v5110
    %v5677 = vunpack.c.l.b16 %v5111
    %v5678 = vunpack.c.h.b16 %v5111
    %v5679 = vunpack.c.l.b16 %v5112
    %v5680 = vunpack.c.h.b16 %v5112
    %v5681 = vunpack.c.l.b16 %v5113
    %v5682 = vunpack.c.h.b16 %v5113
    %v5683 = vunpack.c.l.b16 %v5114
    %v5684 = vunpack.c.h.b16 %v5114
    %v5685 = vunpack.c.l.b16 %v5115
    %v5686 = vunpack.c.h.b16 %v5115
    %v5687 = vunpack.c.l.b16 %v5116
    %v5688 = vunpack.c.h.b16 %v5116
    %v5689 = vunpack.c.l.b16 %v5117
    %v5690 = vunpack.c.h.b16 %v5117
    %v5691 = vunpack.c.l.b16 %v5118
    %v5692 = vunpack.c.h.b16 %v5118
    %v5693 = vunpack.c.l.b16 %v5119
    %v5694 = vunpack.c.h.b16 %v5119
    %v5695 = vunpack.c.l.b16 %v5120
    %v5696 = vunpack.c.h.b16 %v5120
    %v5697 = vunpack.c.l.b16 %v5121
    %v5698 = vunpack.c.h.b16 %v5121
    %v5699 = vunpack.c.l.b16 %v5122
    %v5700 = vunpack.c.h.b16 %v5122
    %v5701 = vunpack.c.l.b16 %v5123
    %v5702 = vunpack.c.h.b16 %v5123
    %v5703 = vunpack.c.l.b16 %v5124
    %v5704 = vunpack.c.h.b16 %v5124
    %v5705 = vunpack.c.l.b16 %v5125
    %v5706 = vunpack.c.h.b16 %v5125
    %v5707 = vunpack.c.l.b16 %v5126
    %v5708 = vunpack.c.h.b16 %v5126
    %v5709 = vunpack.c.l.b16 %v5127
    %v5710 = vunpack.c.h.b16 %v5127
    %v5711 = vunpack.c.l.b16 %v5128
    %v5712 = vunpack.c.h.b16 %v5128
    %v5713 = vunpack.c.l.b16 %v5129
    %v5714 = vunpack.c.h.b16 %v5129
    %v5715 = vunpack.c.l.b16 %v5130
    %v5716 = vunpack.c.h.b16 %v5130
    %v5717 = vunpack.c.l.b16 %v5131
    %v5718 = vunpack.c.h.b16 %v5131
    %v5719 = vunpack.c.l.b16 %v5132
    %v5720 = vunpack.c.h.b16 %v5132
    %v5721 = vunpack.c.l.b16 %v5133
    %v5722 = vunpack.c.h.b16 %v5133
    %v5723 = vunpack.c.l.b16 %v5134
    %v5724 = vunpack.c.h.b16 %v5134
    %v5725 = vunpack.c.l.b16 %v5135
    %v5726 = vunpack.c.h.b16 %v5135
    %v5727 = vunpack.c.l.b16 %v5136
    %v5728 = vunpack.c.h.b16 %v5136
    %v5729 = vunpack.c.l.b16 %v5137
    %v5730 = vunpack.c.h.b16 %v5137
    %v5731 = vunpack.c.l.b16 %v5138
    %v5732 = vunpack.c.h.b16 %v5138
    %v5733 = vunpack.c.l.b16 %v5139
    %v5734 = vunpack.c.h.b16 %v5139
    %v5735 = vunpack.c.l.b16 %v5140
    %v5736 = vunpack.c.h.b16 %v5140
    %v5737 = vunpack.c.l.b16 %v5141
    %v5738 = vunpack.c.h.b16 %v5141
    %v5739 = vunpack.c.l.b16 %v5142
    %v5740 = vunpack.c.h.b16 %v5142
    %v5741 = vunpack.c.l.b16 %v5143
    %v5742 = vunpack.c.h.b16 %v5143
    %v5743 = vunpack.c.l.b16 %v5144
    %v5744 = vunpack.c.h.b16 %v5144
    %v5745 = vunpack.c.l.b16 %v5145
    %v5746 = vunpack.c.h.b16 %v5145
    %v5747 = vunpack.c.l.b16 %v5146
    %v5748 = vunpack.c.h.b16 %v5146
    %v5749 = vunpack.c.l.b16 %v5147
    %v5750 = vunpack.c.h.b16 %v5147
    %v5751 = vunpack.c.l.b16 %v5148
    %v5752 = vunpack.c.h.b16 %v5148
    %v5753 = vunpack.c.l.b16 %v5149
    %v5754 = vunpack.c.h.b16 %v5149
    %v5755 = vunpack.c.l.b16 %v5150
    %v5756 = vunpack.c.h.b16 %v5150
    %v5757 = vunpack.c.l.b16 %v5151
    %v5758 = vunpack.c.h.b16 %v5151
    %v5759 = vunpack.c.l.b16 %v5152
    %v5760 = vunpack.c.h.b16 %v5152
    %v5761 = vunpack.c.l.b16 %v5153
    %v5762 = vunpack.c.h.b16 %v5153
    %v5763 = vunpack.c.l.b16 %v5154
    %v5764 = vunpack.c.h.b16 %v5154
    %v5765 = vunpack.c.l.b16 %v5155
    %v5766 = vunpack.c.h.b16 %v5155
    %v5767 = vunpack.c.l.b16 %v5156
    %v5768 = vunpack.c.h.b16 %v5156
    %v5769 = vunpack.c.l.b16 %v5157
    %v5770 = vunpack.c.h.b16 %v5157
    %v5771 = vunpack.c.l.b16 %v5158
    %v5772 = vunpack.c.h.b16 %v5158
    %v5773 = vunpack.c.l.b16 %v5159
    %v5774 = vunpack.c.h.b16 %v5159
    %v5775 = vunpack.c.l.b16 %v5160
    %v5776 = vunpack.c.h.b16 %v5160
    %v5777 = vunpack.c.l.b16 %v5161
    %v5778 = vunpack.c.h.b16 %v5161
    %v5779 = vunpack.c.l.b16 %v5162
    %v5780 = vunpack.c.h.b16 %v5162
    %v5781 = vunpack.c.l.b16 %v5163
    %v5782 = vunpack.c.h.b16 %v5163
    %v5783 = vunpack.c.l.b16 %v5164
    %v5784 = vunpack.c.h.b16 %v5164
    %v5785 = vunpack.c.l.b16 %v5165
    %v5786 = vunpack.c.h.b16 %v5165
    %v5787 = vunpack.c.l.b16 %v5166
    %v5788 = vunpack.c.h.b16 %v5166
    %v5789 = vunpack.c.l.b16 %v5167
    %v5790 = vunpack.c.h.b16 %v5167
    %v5791 = vunpack.c.l.b16 %v5168
    %v5792 = vunpack.c.h.b16 %v5168
    %v5793 = vunpack.c.l.b16 %v5169
    %v5794 = vunpack.c.h.b16 %v5169
    %v5795 = vunpack.c.l.b16 %v5170
    %v5796 = vunpack.c.h.b16 %v5170
    %v5797 = vunpack.c.l.b16 %v5171
    %v5798 = vunpack.c.h.b16 %v5171
    %v5799 = vunpack.c.l.b16 %v5172
    %v5800 = vunpack.c.h.b16 %v5172
    %v5801 = vunpack.c.l.b16 %v5173
    %v5802 = vunpack.c.h.b16 %v5173
    %v5803 = vunpack.c.l.b16 %v5174
    %v5804 = vunpack.c.h.b16 %v5174
    %v5805 = vunpack.c.l.b16 %v5175
    %v5806 = vunpack.c.h.b16 %v5175
    %v5807 = vunpack.c.l.b16 %v5176
    %v5808 = vunpack.c.h.b16 %v5176
    %v5809 = vunpack.c.l.b16 %v5177
    %v5810 = vunpack.c.h.b16 %v5177
    %v5811 = vunpack.c.l.b16 %v5178
    %v5812 = vunpack.c.h.b16 %v5178
    %v5813 = vunpack.c.l.b16 %v5179
    %v5814 = vunpack.c.h.b16 %v5179
    %v5815 = vunpack.c.l.b16 %v5180
    %v5816 = vunpack.c.h.b16 %v5180
    %v5817 = vunpack.c.l.b16 %v5181
    %v5818 = vunpack.c.h.b16 %v5181
    %v5819 = vunpack.c.l.b16 %v5182
    %v5820 = vunpack.c.h.b16 %v5182
    %v5821 = vunpack.c.l.b16 %v5183
    %v5822 = vunpack.c.h.b16 %v5183
    %v5823 = vunpack.c.l.b16 %v5184
    %v5824 = vunpack.c.h.b16 %v5184
    %v5825 = vpack.c.b16 %v5445, %v5441
    %v5826 = vpack.c.b16 %v5446, %v5442
    %v5827 = vpack.c.b16 %v5447, %v5443
    %v5828 = vpack.c.b16 %v5448, %v5444
    %v5829 = vpack.c.b16 %v5453, %v5449
    %v5830 = vpack.c.b16 %v5454, %v5450
    %v5831 = vpack.c.b16 %v5455, %v5451
    %v5832 = vpack.c.b16 %v5456, %v5452
    %v5833 = vpack.c.b16 %v5461, %v5457
    %v5834 = vpack.c.b16 %v5462, %v5458
    %v5835 = vpack.c.b16 %v5463, %v5459
    %v5836 = vpack.c.b16 %v5464, %v5460
    %v5837 = vpack.c.b16 %v5469, %v5465
    %v5838 = vpack.c.b16 %v5470, %v5466
    %v5839 = vpack.c.b16 %v5471, %v5467
    %v5840 = vpack.c.b16 %v5472, %v5468
    %v5841 = vpack.c.b16 %v5477, %v5473
    %v5842 = vpack.c.b16 %v5478, %v5474
    %v5843 = vpack.c.b16 %v5479, %v5475
    %v5844 = vpack.c.b16 %v5480, %v5476
    %v5845 = vpack.c.b16 %v5485, %v5481
    %v5846 = vpack.c.b16 %v5486, %v5482
    %v5847 = vpack.c.b16 %v5487, %v5483
    %v5848 = vpack.c.b16 %v5488, %v5484
    %v5849 = vpack.c.b16 %v5493, %v5489
    %v5850 = vpack.c.b16 %v5494, %v5490
    %v5851 = vpack.c.b16 %v5495, %v5491
    %v5852 = vpack.c.b16 %v5496, %v5492
    %v5853 = vpack.c.b16 %v5501, %v5497
    %v5854 = vpack.c.b16 %v5502, %v5498
    %v5855 = vpack.c.b16 %v5503, %v5499
    %v5856 = vpack.c.b16 %v5504, %v5500
    %v5857 = vpack.c.b16 %v5509, %v5505
    %v5858 = vpack.c.b16 %v5510, %v5506
    %v5859 = vpack.c.b16 %v5511, %v5507
    %v5860 = vpack.c.b16 %v5512, %v5508
    %v5861 = vpack.c.b16 %v5517, %v5513
    %v5862 = vpack.c.b16 %v5518, %v5514
    %v5863 = vpack.c.b16 %v5519, %v5515
    %v5864 = vpack.c.b16 %v5520, %v5516
    %v5865 = vpack.c.b16 %v5525, %v5521
    %v5866 = vpack.c.b16 %v5526, %v5522
    %v5867 = vpack.c.b16 %v5527, %v5523
    %v5868 = vpack.c.b16 %v5528, %v5524
    %v5869 = vpack.c.b16 %v5533, %v5529
    %v5870 = vpack.c.b16 %v5534, %v5530
    %v5871 = vpack.c.b16 %v5535, %v5531
    %v5872 = vpack.c.b16 %v5536, %v5532
    %v5873 = vpack.c.b16 %v5541, %v5537
    %v5874 = vpack.c.b16 %v5542, %v5538
    %v5875 = vpack.c.b16 %v5543, %v5539
    %v5876 = vpack.c.b16 %v5544, %v5540
    %v5877 = vpack.c.b16 %v5549, %v5545
    %v5878 = vpack.c.b16 %v5550, %v5546
    %v5879 = vpack.c.b16 %v5551, %v5547
    %v5880 = vpack.c.b16 %v5552, %v5548
    %v5881 = vpack.c.b16 %v5557, %v5553
    %v5882 = vpack.c.b16 %v5558, %v5554
    %v5883 = vpack.c.b16 %v5559, %v5555
    %v5884 = vpack.c.b16 %v5560, %v5556
    %v5885 = vpack.c.b16 %v5565, %v5561
    %v5886 = vpack.c.b16 %v5566, %v5562
    %v5887 = vpack.c.b16 %v5567, %v5563
    %v5888 = vpack.c.b16 %v5568, %v5564
    %v5889 = vpack.c.b16 %v5573, %v5569
    %v5890 = vpack.c.b16 %v5574, %v5570
    %v5891 = vpack.c.b16 %v5575, %v5571
    %v5892 = vpack.c.b16 %v5576, %v5572
    %v5893 = vpack.c.b16 %v5581, %v5577
    %v5894 = vpack.c.b16 %v5582, %v5578
    %v5895 = vpack.c.b16 %v5583, %v5579
    %v5896 = vpack.c.b16 %v5584, %v5580
    %v5897 = vpack.c.b16 %v5589, %v5585
    %v5898 = vpack.c.b16 %v5590, %v5586
    %v5899 = vpack.c.b16 %v5591, %v5587
    %v5900 = vpack.c.b16 %v5592, %v5588
    %v5901 = vpack.c.b16 %v5597, %v5593
    %v5902 = vpack.c.b16 %v5598, %v5594
    %v5903 = vpack.c.b16 %v5599, %v5595
    %v5904 = vpack.c.b16 %v5600, %v5596
    %v5905 = vpack.c.b16 %v5605, %v5601
    %v5906 = vpack.c.b16 %v5606, %v5602
    %v5907 = vpack.c.b16 %v5607, %v5603
    %v5908 = vpack.c.b16 %v5608, %v5604
    %v5909 = vpack.c.b16 %v5613, %v5609
    %v5910 = vpack.c.b16 %v5614, %v5610
    %v5911 = vpack.c.b16 %v5615, %v5611
    %v5912 = vpack.c.b16 %v5616, %v5612
    %v5913 = vpack.c.b16 %v5621, %v5617
    %v5914 = vpack.c.b16 %v5622, %v5618
    %v5915 = vpack.c.b16 %v5623, %v5619
    %v5916 = vpack.c.b16 %v5624, %v5620
    %v5917 = vpack.c.b16 %v5629, %v5625
    %v5918 = vpack.c.b16 %v5630, %v5626
    %v5919 = vpack.c.b16 %v5631, %v5627
    %v5920 = vpack.c.b16 %v5632, %v5628
    %v5921 = vpack.c.b16 %v5637, %v5633
    %v5922 = vpack.c.b16 %v5638, %v5634
    %v5923 = vpack.c.b16 %v5639, %v5635
    %v5924 = vpack.c.b16 %v5640, %v5636
    %v5925 = vpack.c.b16 %v5645, %v5641
    %v5926 = vpack.c.b16 %v5646, %v5642
    %v5927 = vpack.c.b16 %v5647, %v5643
    %v5928 = vpack.c.b16 %v5648, %v5644
    %v5929 = vpack.c.b16 %v5653, %v5649
    %v5930 = vpack.c.b16 %v5654, %v5650
    %v5931 = vpack.c.b16 %v5655, %v5651
    %v5932 = vpack.c.b16 %v5656, %v5652
    %v5933 = vpack.c.b16 %v5661, %v5657
    %v5934 = vpack.c.b16 %v5662, %v5658
    %v5935 = vpack.c.b16 %v5663, %v5659
    %v5936 = vpack.c.b16 %v5664, %v5660
    %v5937 = vpack.c.b16 %v5669, %v5665
    %v5938 = vpack.c.b16 %v5670, %v5666
    %v5939 = vpack.c.b16 %v5671, %v5667
    %v5940 = vpack.c.b16 %v5672, %v5668
    %v5941 = vpack.c.b16 %v5677, %v5673
    %v5942 = vpack.c.b16 %v5678, %v5674
    %v5943 = vpack.c.b16 %v5679, %v5675
    %v5944 = vpack.c.b16 %v5680, %v5676
    %v5945 = vpack.c.b16 %v5685, %v5681
    %v5946 = vpack.c.b16 %v5686, %v5682
    %v5947 = vpack.c.b16 %v5687, %v5683
    %v5948 = vpack.c.b16 %v5688, %v5684
    %v5949 = vpack.c.b16 %v5693, %v5689
    %v5950 = vpack.c.b16 %v5694, %v5690
    %v5951 = vpack.c.b16 %v5695, %v5691
    %v5952 = vpack.c.b16 %v5696, %v5692
    %v5953 = vpack.c.b16 %v5701, %v5697
    %v5954 = vpack.c.b16 %v5702, %v5698
    %v5955 = vpack.c.b16 %v5703, %v5699
    %v5956 = vpack.c.b16 %v5704, %v5700
    %v5957 = vpack.c.b16 %v5709, %v5705
    %v5958 = vpack.c.b16 %v5710, %v5706
    %v5959 = vpack.c.b16 %v5711, %v5707
    %v5960 = vpack.c.b16 %v5712, %v5708
    %v5961 = vpack.c.b16 %v5717, %v5713
    %v5962 = vpack.c.b16 %v5718, %v5714
    %v5963 = vpack.c.b16 %v5719, %v5715
    %v5964 = vpack.c.b16 %v5720, %v5716
    %v5965 = vpack.c.b16 %v5725, %v5721
    %v5966 = vpack.c.b16 %v5726, %v5722
    %v5967 = vpack.c.b16 %v5727, %v5723
    %v5968 = vpack.c.b16 %v5728, %v5724
    %v5969 = vpack.c.b16 %v5733, %v5729
    %v5970 = vpack.c.b16 %v5734, %v5730
    %v5971 = vpack.c.b16 %v5735, %v5731
    %v5972 = vpack.c.b16 %v5736, %v5732
    %v5973 = vpack.c.b16 %v5741, %v5737
    %v5974 = vpack.c.b16 %v5742, %v5738
    %v5975 = vpack.c.b16 %v5743, %v5739
    %v5976 = vpack.c.b16 %v5744, %v5740
    %v5977 = vpack.c.b16 %v5749, %v5745
    %v5978 = vpack.c.b16 %v5750, %v5746
    %v5979 = vpack.c.b16 %v5751, %v5747
    %v5980 = vpack.c.b16 %v5752, %v5748
    %v5981 = vpack.c.b16 %v5757, %v5753
    %v5982 = vpack.c.b16 %v5758, %v5754
    %v5983 = vpack.c.b16 %v5759, %v5755
    %v5984 = vpack.c.b16 %v5760, %v5756
    %v5985 = vpack.c.b16 %v5765, %v5761
    %v5986 = vpack.c.b16 %v5766, %v5762
    %v5987 = vpack.c.b16 %v5767, %v5763
    %v5988 = vpack.c.b16 %v5768, %v5764
    %v5989 = vpack.c.b16 %v5773, %v5769
    %v5990 = vpack.c.b16 %v5774, %v5770
    %v5991 = vpack.c.b16 %v5775, %v5771
    %v5992 = vpack.c.b16 %v5776, %v5772
    %v5993 = vpack.c.b16 %v5781, %v5777
    %v5994 = vpack.c.b16 %v5782, %v5778
    %v5995 = vpack.c.b16 %v5783, %v5779
    %v5996 = vpack.c.b16 %v5784, %v5780
    %v5997 = vpack.c.b16 %v5789, %v5785
    %v5998 = vpack.c.b16 %v5790, %v5786
    %v5999 = vpack.c.b16 %v5791, %v5787
    %v6000 = vpack.c.b16 %v5792, %v5788
    %v6001 = vpack.c.b16 %v5797, %v5793
    %v6002 = vpack.c.b16 %v5798, %v5794
    %v6003 = vpack.c.b16 %v5799, %v5795
    %v6004 = vpack.c.b16 %v5800, %v5796
    %v6005 = vpack.c.b16 %v5805, %v5801
    %v6006 = vpack.c.b16 %v5806, %v5802
    %v6007 = vpack.c.b16 %v5807, %v5803
    %v6008 = vpack.c.b16 %v5808, %v5804
    %v6009 = vpack.c.b16 %v5813, %v5809
    %v6010 = vpack.c.b16 %v5814, %v5810
    %v6011 = vpack.c.b16 %v5815, %v5811
    %v6012 = vpack.c.b16 %v5816, %v5812
    %v6013 = vpack.c.b16 %v5821, %v5817
    %v6014 = vpack.c.b16 %v5822, %v5818
    %v6015 = vpack.c.b16 %v5823, %v5819
    %v6016 = vpack.c.b16 %v5824, %v5820
    %6209 = vmatprep.subr.bf16.mxu0 %v5854
    %6210 = vmatpush1.bf16.msra.mxu0 %v5853
    %6211 = vmatprep.subr.bf16.mxu0 %v5850
    %6212 = vmatpush1.bf16.msra.mxu0 %v5849
    %6213 = vmatprep.subr.bf16.mxu0 %v5846
    %6214 = vmatpush1.bf16.msra.mxu0 %v5845
    %6215 = vmatprep.subr.bf16.mxu0 %v5842
    %6216 = vmatpush1.bf16.msra.mxu0 %v5841
    %6217 = vmatprep.subr.bf16.mxu0 %v5838
    %6218 = vmatpush1.bf16.msra.mxu0 %v5837
    %6219 = vmatprep.subr.bf16.mxu0 %v5834
    %6220 = vmatpush1.bf16.msra.mxu0 %v5833
    %6221 = vmatprep.subr.bf16.mxu0 %v5830
    %6222 = vmatpush1.bf16.msra.mxu0 %v5829
    %6223 = vmatprep.subr.bf16.mxu0 %v5826
    %6224 = vmatpush1.bf16.msra.mxu0 %v5825
    %6225 = vmatprep.subr.bf16.mxu0 %v5886
    %6226 = vmatpush2.bf16.msra.mxu0 %v5885
    %6227 = vmatprep.subr.bf16.mxu0 %v5882
    %6228 = vmatpush2.bf16.msra.mxu0 %v5881
    %6229 = vmatprep.subr.bf16.mxu0 %v5878
    %6230 = vmatpush2.bf16.msra.mxu0 %v5877
    %6231 = vmatprep.subr.bf16.mxu0 %v5874
    %6232 = vmatpush2.bf16.msra.mxu0 %v5873
    %6233 = vmatprep.subr.bf16.mxu0 %v5870
    %6234 = vmatpush2.bf16.msra.mxu0 %v5869
    %6235 = vmatprep.subr.bf16.mxu0 %v5866
    %6236 = vmatpush2.bf16.msra.mxu0 %v5865
    %6237 = vmatprep.subr.bf16.mxu0 %v5862
    %6238 = vmatpush2.bf16.msra.mxu0 %v5861
    %6239 = vmatprep.subr.bf16.mxu0 %v5858
    %6240 = vmatpush2.bf16.msra.mxu0 %v5857
    %6241 = vmatprep.mubr.bf16.mxu0 %v5238
    %6242 = vmatmul.mubr.bf16.gmra.mxu0 %v5237
    %v6243 = vpop.f32.mrf.mxu0
    %v6244 = vadd.f32 %v5188, %v6243
    %v6245 = vpop.f32.mrf.mxu0
    %v6246 = vadd.f32 %v5192, %v6245
    %v6247 = vpop.f32.mrf.mxu0
    %v6248 = vpop.f32.mrf.mxu0
    %6249 = vdwg.mxu0
    %6250 = vmatprep.subr.bf16.mxu0 %v5918
    %6251 = vmatpush1.bf16.msra.mxu0 %v5917
    %6252 = vmatprep.subr.bf16.mxu0 %v5914
    %6253 = vmatpush1.bf16.msra.mxu0 %v5913
    %6254 = vmatprep.subr.bf16.mxu0 %v5910
    %6255 = vmatpush1.bf16.msra.mxu0 %v5909
    %6256 = vmatprep.subr.bf16.mxu0 %v5906
    %6257 = vmatpush1.bf16.msra.mxu0 %v5905
    %6258 = vmatprep.subr.bf16.mxu0 %v5902
    %6259 = vmatpush1.bf16.msra.mxu0 %v5901
    %6260 = vmatprep.subr.bf16.mxu0 %v5898
    %6261 = vmatpush1.bf16.msra.mxu0 %v5897
    %6262 = vmatprep.subr.bf16.mxu0 %v5894
    %6263 = vmatpush1.bf16.msra.mxu0 %v5893
    %6264 = vmatprep.subr.bf16.mxu0 %v5890
    %6265 = vmatpush1.bf16.msra.mxu0 %v5889
    %6266 = vmatprep.subr.bf16.mxu0 %v5950
    %6267 = vmatpush2.bf16.msra.mxu0 %v5949
    %6268 = vmatprep.subr.bf16.mxu0 %v5946
    %6269 = vmatpush2.bf16.msra.mxu0 %v5945
    %6270 = vmatprep.subr.bf16.mxu0 %v5942
    %6271 = vmatpush2.bf16.msra.mxu0 %v5941
    %6272 = vmatprep.subr.bf16.mxu0 %v5938
    %6273 = vmatpush2.bf16.msra.mxu0 %v5937
    %6274 = vmatprep.subr.bf16.mxu0 %v5934
    %6275 = vmatpush2.bf16.msra.mxu0 %v5933
    %6276 = vmatprep.subr.bf16.mxu0 %v5930
    %6277 = vmatpush2.bf16.msra.mxu0 %v5929
    %6278 = vmatprep.subr.bf16.mxu0 %v5926
    %6279 = vmatpush2.bf16.msra.mxu0 %v5925
    %6280 = vmatprep.subr.bf16.mxu0 %v5922
    %6281 = vmatpush2.bf16.msra.mxu0 %v5921
    %6282 = vmatprep.mubr.bf16.mxu0 %v5240
    %6283 = vmatmul.mubr.bf16.gmra.mxu0 %v5239
    %v6284 = vpop.f32.mrf.mxu0
    %v6285 = vadd.f32 %v6244, %v6284
    %v6286 = vpop.f32.mrf.mxu0
    %v6287 = vadd.f32 %v6246, %v6286
    %v6288 = vpop.f32.mrf.mxu0
    %v6289 = vpop.f32.mrf.mxu0
    %6290 = vdwg.mxu0
    %6291 = vmatprep.subr.bf16.mxu0 %v5982
    %6292 = vmatpush1.bf16.msra.mxu0 %v5981
    %6293 = vmatprep.subr.bf16.mxu0 %v5978
    %6294 = vmatpush1.bf16.msra.mxu0 %v5977
    %6295 = vmatprep.subr.bf16.mxu0 %v5974
    %6296 = vmatpush1.bf16.msra.mxu0 %v5973
    %6297 = vmatprep.subr.bf16.mxu0 %v5970
    %6298 = vmatpush1.bf16.msra.mxu0 %v5969
    %6299 = vmatprep.subr.bf16.mxu0 %v5966
    %6300 = vmatpush1.bf16.msra.mxu0 %v5965
    %6301 = vmatprep.subr.bf16.mxu0 %v5962
    %6302 = vmatpush1.bf16.msra.mxu0 %v5961
    %6303 = vmatprep.subr.bf16.mxu0 %v5958
    %6304 = vmatpush1.bf16.msra.mxu0 %v5957
    %6305 = vmatprep.subr.bf16.mxu0 %v5954
    %6306 = vmatpush1.bf16.msra.mxu0 %v5953
    %6307 = vmatprep.subr.bf16.mxu0 %v6014
    %6308 = vmatpush2.bf16.msra.mxu0 %v6013
    %6309 = vmatprep.subr.bf16.mxu0 %v6010
    %6310 = vmatpush2.bf16.msra.mxu0 %v6009
    %6311 = vmatprep.subr.bf16.mxu0 %v6006
    %6312 = vmatpush2.bf16.msra.mxu0 %v6005
    %6313 = vmatprep.subr.bf16.mxu0 %v6002
    %6314 = vmatpush2.bf16.msra.mxu0 %v6001
    %6315 = vmatprep.subr.bf16.mxu0 %v5998
    %6316 = vmatpush2.bf16.msra.mxu0 %v5997
    %6317 = vmatprep.subr.bf16.mxu0 %v5994
    %6318 = vmatpush2.bf16.msra.mxu0 %v5993
    %6319 = vmatprep.subr.bf16.mxu0 %v5990
    %6320 = vmatpush2.bf16.msra.mxu0 %v5989
    %6321 = vmatprep.subr.bf16.mxu0 %v5986
    %6322 = vmatpush2.bf16.msra.mxu0 %v5985
    %6323 = vmatprep.mubr.bf16.mxu0 %v5242
    %6324 = vmatmul.mubr.bf16.gmra.mxu0 %v5241
    %v6325 = vpop.f32.mrf.mxu0
    %v6326 = vadd.f32 %v6285, %v6325
    %v6327 = vpop.f32.mrf.mxu0
    %v6328 = vadd.f32 %v6287, %v6327
    %v6329 = vpop.f32.mrf.mxu0
    %v6330 = vpop.f32.mrf.mxu0
    %6331 = vdwg.mxu0
    %6332 = vmatprep.subr.bf16.mxu0 %v5856
    %6333 = vmatpush1.bf16.msra.mxu0 %v5855
    %6334 = vmatprep.subr.bf16.mxu0 %v5852
    %6335 = vmatpush1.bf16.msra.mxu0 %v5851
    %6336 = vmatprep.subr.bf16.mxu0 %v5848
    %6337 = vmatpush1.bf16.msra.mxu0 %v5847
    %6338 = vmatprep.subr.bf16.mxu0 %v5844
    %6339 = vmatpush1.bf16.msra.mxu0 %v5843
    %6340 = vmatprep.subr.bf16.mxu0 %v5840
    %6341 = vmatpush1.bf16.msra.mxu0 %v5839
    %6342 = vmatprep.subr.bf16.mxu0 %v5836
    %6343 = vmatpush1.bf16.msra.mxu0 %v5835
    %6344 = vmatprep.subr.bf16.mxu0 %v5832
    %6345 = vmatpush1.bf16.msra.mxu0 %v5831
    %6346 = vmatprep.subr.bf16.mxu0 %v5828
    %6347 = vmatpush1.bf16.msra.mxu0 %v5827
    %6348 = vmatprep.subr.bf16.mxu0 %v5888
    %6349 = vmatpush2.bf16.msra.mxu0 %v5887
    %6350 = vmatprep.subr.bf16.mxu0 %v5884
    %6351 = vmatpush2.bf16.msra.mxu0 %v5883
    %6352 = vmatprep.subr.bf16.mxu0 %v5880
    %6353 = vmatpush2.bf16.msra.mxu0 %v5879
    %6354 = vmatprep.subr.bf16.mxu0 %v5876
    %6355 = vmatpush2.bf16.msra.mxu0 %v5875
    %6356 = vmatprep.subr.bf16.mxu0 %v5872
    %6357 = vmatpush2.bf16.msra.mxu0 %v5871
    %6358 = vmatprep.subr.bf16.mxu0 %v5868
    %6359 = vmatpush2.bf16.msra.mxu0 %v5867
    %6360 = vmatprep.subr.bf16.mxu0 %v5864
    %6361 = vmatpush2.bf16.msra.mxu0 %v5863
    %6362 = vmatprep.subr.bf16.mxu0 %v5860
    %6363 = vmatpush2.bf16.msra.mxu0 %v5859
    %6364 = vmatprep.mubr.bf16.mxu0 %v5238
    %6365 = vmatmul.mubr.bf16.gmra.mxu0 %v5237
    %v6366 = vpop.f32.mrf.mxu0
    %v6367 = vadd.f32 %v5196, %v6366
    %v6368 = vpop.f32.mrf.mxu0
    %v6369 = vadd.f32 %v5200, %v6368
    %v6370 = vpop.f32.mrf.mxu0
    %v6371 = vpop.f32.mrf.mxu0
    %6372 = vdwg.mxu0
    %6373 = vmatprep.subr.bf16.mxu0 %v5920
    %6374 = vmatpush1.bf16.msra.mxu0 %v5919
    %6375 = vmatprep.subr.bf16.mxu0 %v5916
    %6376 = vmatpush1.bf16.msra.mxu0 %v5915
    %6377 = vmatprep.subr.bf16.mxu0 %v5912
    %6378 = vmatpush1.bf16.msra.mxu0 %v5911
    %6379 = vmatprep.subr.bf16.mxu0 %v5908
    %6380 = vmatpush1.bf16.msra.mxu0 %v5907
    %6381 = vmatprep.subr.bf16.mxu0 %v5904
    %6382 = vmatpush1.bf16.msra.mxu0 %v5903
    %6383 = vmatprep.subr.bf16.mxu0 %v5900
    %6384 = vmatpush1.bf16.msra.mxu0 %v5899
    %6385 = vmatprep.subr.bf16.mxu0 %v5896
    %6386 = vmatpush1.bf16.msra.mxu0 %v5895
    %6387 = vmatprep.subr.bf16.mxu0 %v5892
    %6388 = vmatpush1.bf16.msra.mxu0 %v5891
    %6389 = vmatprep.subr.bf16.mxu0 %v5952
    %6390 = vmatpush2.bf16.msra.mxu0 %v5951
    %6391 = vmatprep.subr.bf16.mxu0 %v5948
    %6392 = vmatpush2.bf16.msra.mxu0 %v5947
    %6393 = vmatprep.subr.bf16.mxu0 %v5944
    %6394 = vmatpush2.bf16.msra.mxu0 %v5943
    %6395 = vmatprep.subr.bf16.mxu0 %v5940
    %6396 = vmatpush2.bf16.msra.mxu0 %v5939
    %6397 = vmatprep.subr.bf16.mxu0 %v5936
    %6398 = vmatpush2.bf16.msra.mxu0 %v5935
    %6399 = vmatprep.subr.bf16.mxu0 %v5932
    %6400 = vmatpush2.bf16.msra.mxu0 %v5931
    %6401 = vmatprep.subr.bf16.mxu0 %v5928
    %6402 = vmatpush2.bf16.msra.mxu0 %v5927
    %6403 = vmatprep.subr.bf16.mxu0 %v5924
    %6404 = vmatpush2.bf16.msra.mxu0 %v5923
    %6405 = vmatprep.mubr.bf16.mxu0 %v5240
    %6406 = vmatmul.mubr.bf16.gmra.mxu0 %v5239
    %v6407 = vpop.f32.mrf.mxu0
    %v6408 = vadd.f32 %v6367, %v6407
    %v6409 = vpop.f32.mrf.mxu0
    %v6410 = vadd.f32 %v6369, %v6409
    %v6411 = vpop.f32.mrf.mxu0
    %v6412 = vpop.f32.mrf.mxu0
    %6413 = vdwg.mxu0
    %6414 = vmatprep.subr.bf16.mxu0 %v5984
    %6415 = vmatpush1.bf16.msra.mxu0 %v5983
    %6416 = vmatprep.subr.bf16.mxu0 %v5980
    %6417 = vmatpush1.bf16.msra.mxu0 %v5979
    %6418 = vmatprep.subr.bf16.mxu0 %v5976
    %6419 = vmatpush1.bf16.msra.mxu0 %v5975
    %6420 = vmatprep.subr.bf16.mxu0 %v5972
    %6421 = vmatpush1.bf16.msra.mxu0 %v5971
    %6422 = vmatprep.subr.bf16.mxu0 %v5968
    %6423 = vmatpush1.bf16.msra.mxu0 %v5967
    %6424 = vmatprep.subr.bf16.mxu0 %v5964
    %6425 = vmatpush1.bf16.msra.mxu0 %v5963
    %6426 = vmatprep.subr.bf16.mxu0 %v5960
    %6427 = vmatpush1.bf16.msra.mxu0 %v5959
    %6428 = vmatprep.subr.bf16.mxu0 %v5956
    %6429 = vmatpush1.bf16.msra.mxu0 %v5955
    %6430 = vmatprep.subr.bf16.mxu0 %v6016
    %6431 = vmatpush2.bf16.msra.mxu0 %v6015
    %6432 = vmatprep.subr.bf16.mxu0 %v6012
    %6433 = vmatpush2.bf16.msra.mxu0 %v6011
    %6434 = vmatprep.subr.bf16.mxu0 %v6008
    %6435 = vmatpush2.bf16.msra.mxu0 %v6007
    %6436 = vmatprep.subr.bf16.mxu0 %v6004
    %6437 = vmatpush2.bf16.msra.mxu0 %v6003
    %6438 = vmatprep.subr.bf16.mxu0 %v6000
    %6439 = vmatpush2.bf16.msra.mxu0 %v5999
    %6440 = vmatprep.subr.bf16.mxu0 %v5996
    %6441 = vmatpush2.bf16.msra.mxu0 %v5995
    %6442 = vmatprep.subr.bf16.mxu0 %v5992
    %6443 = vmatpush2.bf16.msra.mxu0 %v5991
    %6444 = vmatprep.subr.bf16.mxu0 %v5988
    %6445 = vmatpush2.bf16.msra.mxu0 %v5987
    %6446 = vmatprep.mubr.bf16.mxu0 %v5242
    %6447 = vmatmul.mubr.bf16.gmra.mxu0 %v5241
    %v6448 = vpop.f32.mrf.mxu0
    %v6449 = vadd.f32 %v6408, %v6448
    %v6450 = vpop.f32.mrf.mxu0
    %v6451 = vadd.f32 %v6410, %v6450
    %v6452 = vpop.f32.mrf.mxu0
    %v6453 = vpop.f32.mrf.mxu0
    %6454 = vdwg.mxu0
    %v6455 = vmul.f32 %v6326, 0.5
    %v6456 = vmul.f32 %v6328, 0.5
    %v6457 = vmul.f32 %v6449, 0.5
    %v6458 = vmul.f32 %v6451, 0.5
    %v6459 = vmul.f32 %v6326, 0.70710677
    %v6460 = vmul.f32 %v6328, 0.70710677
    %v6461 = vmul.f32 %v6449, 0.70710677
    %v6462 = vmul.f32 %v6451, 0.70710677
    %v6463 = vand.u32 2147483647, %v6459
    %v6464 = vand.u32 2147483647, %v6460
    %v6465 = vand.u32 2147483647, %v6461
    %v6466 = vand.u32 2147483647, %v6462
    %v6467 = vmul.f32 %v6463, 0.3275911
    %v6468 = vmul.f32 %v6464, 0.3275911
    %v6469 = vmul.f32 %v6465, 0.3275911
    %v6470 = vmul.f32 %v6466, 0.3275911
    %v6471 = vadd.f32 %v6467, 1.0
    %v6472 = vadd.f32 %v6468, 1.0
    %v6473 = vadd.f32 %v6469, 1.0
    %v6474 = vadd.f32 %v6470, 1.0
    %v6475 = vrcp.pop %v6471
    %v6476 = vmul.f32 1.0, %v6475
    %v6477 = vrcp.pop %v6472
    %v6478 = vmul.f32 1.0, %v6477
    %v6479 = vrcp.pop %v6473
    %v6480 = vmul.f32 1.0, %v6479
    %v6481 = vrcp.pop %v6474
    %v6482 = vmul.f32 1.0, %v6481
    %v6483 = vmul.f32 %v6476, 1.0614054
    %v6484 = vmul.f32 %v6478, 1.0614054
    %v6485 = vmul.f32 %v6480, 1.0614054
    %v6486 = vmul.f32 %v6482, 1.0614054
    %v6487 = vadd.f32 %v6483, -1.4531521
    %v6488 = vadd.f32 %v6484, -1.4531521
    %v6489 = vadd.f32 %v6485, -1.4531521
    %v6490 = vadd.f32 %v6486, -1.4531521
    %v6491 = vmul.f32 %v6487, %v6476
    %v6492 = vmul.f32 %v6488, %v6478
    %v6493 = vmul.f32 %v6489, %v6480
    %v6494 = vmul.f32 %v6490, %v6482
    %v6495 = vadd.f32 %v6491, 1.4214138
    %v6496 = vadd.f32 %v6492, 1.4214138
    %v6497 = vadd.f32 %v6493, 1.4214138
    %v6498 = vadd.f32 %v6494, 1.4214138
    %v6499 = vmul.f32 %v6495, %v6476
    %v6500 = vmul.f32 %v6496, %v6478
    %v6501 = vmul.f32 %v6497, %v6480
    %v6502 = vmul.f32 %v6498, %v6482
    %v6503 = vadd.f32 %v6499, -0.28449672
    %v6504 = vadd.f32 %v6500, -0.28449672
    %v6505 = vadd.f32 %v6501, -0.28449672
    %v6506 = vadd.f32 %v6502, -0.28449672
    %v6507 = vmul.f32 %v6503, %v6476
    %v6508 = vmul.f32 %v6504, %v6478
    %v6509 = vmul.f32 %v6505, %v6480
    %v6510 = vmul.f32 %v6506, %v6482
    %v6511 = vadd.f32 %v6507, 0.2548296
    %v6512 = vadd.f32 %v6508, 0.2548296
    %v6513 = vadd.f32 %v6509, 0.2548296
    %v6514 = vadd.f32 %v6510, 0.2548296
    %v6515 = vmul.f32 %v6511, %v6476
    %v6516 = vmul.f32 %v6512, %v6478
    %v6517 = vmul.f32 %v6513, %v6480
    %v6518 = vmul.f32 %v6514, %v6482
    %v6519 = vsub.f32 0.0, %v6463
    %v6520 = vsub.f32 0.0, %v6464
    %v6521 = vsub.f32 0.0, %v6465
    %v6522 = vsub.f32 0.0, %v6466
    %v6523 = vmul.f32 %v6519, %v6463
    %v6524 = vmul.f32 %v6520, %v6464
    %v6525 = vmul.f32 %v6521, %v6465
    %v6526 = vmul.f32 %v6522, %v6466
    %v6527 = vmul.f32 %v6523, 1.442695
    %v6528 = vpow.pop %v6527
    %v6529 = vmul.f32 %v6524, 1.442695
    %v6530 = vpow.pop %v6529
    %v6531 = vmul.f32 %v6525, 1.442695
    %v6532 = vpow.pop %v6531
    %v6533 = vmul.f32 %v6526, 1.442695
    %v6534 = vpow.pop %v6533
    %v6535 = vmul.f32 %v6515, %v6528
    %v6536 = vmul.f32 %v6516, %v6530
    %v6537 = vmul.f32 %v6517, %v6532
    %v6538 = vmul.f32 %v6518, %v6534
    %v6539 = vsub.f32 1.0, %v6535
    %v6540 = vsub.f32 1.0, %v6536
    %v6541 = vsub.f32 1.0, %v6537
    %v6542 = vsub.f32 1.0, %v6538
    %vm6543 = vcmp.ge.f32.partialorder %v6459, 0.0
    %vm6544 = vcmp.ge.f32.partialorder %v6460, 0.0
    %vm6545 = vcmp.ge.f32.partialorder %v6461, 0.0
    %vm6546 = vcmp.ge.f32.partialorder %v6462, 0.0
    %v6547 = vsub.f32 0.0, %v6539
    %v6548 = vsub.f32 0.0, %v6540
    %v6549 = vsub.f32 0.0, %v6541
    %v6550 = vsub.f32 0.0, %v6542
    %v6551 = vsel %vm6543, %v6539, %v6547
    %v6552 = vsel %vm6544, %v6540, %v6548
    %v6553 = vsel %vm6545, %v6541, %v6549
    %v6554 = vsel %vm6546, %v6542, %v6550
    %v6555 = vadd.f32 %v6551, 1.0
    %v6556 = vadd.f32 %v6552, 1.0
    %v6557 = vadd.f32 %v6553, 1.0
    %v6558 = vadd.f32 %v6554, 1.0
    %v6559 = vmul.f32 %v6455, %v6555
    %v6560 = vmul.f32 %v6456, %v6556
    %v6561 = vmul.f32 %v6457, %v6557
    %v6562 = vmul.f32 %v6458, %v6558
    %v6563 = vpack.c.bf16 %v6559, %v6559
    %v6564 = vpack.c.bf16 %v6560, %v6560
    %v6565 = vpack.c.bf16 %v6561, %v6561
    %v6566 = vpack.c.bf16 %v6562, %v6562
    %v6567 = vld [vmem:[#allocation8] sm:$0xff]
    %v6568 = vld [vmem:[#allocation8 + $0x8] sm:$0xff]
    %v6569 = vld [vmem:[#allocation8 + $0x10] sm:$0xff]
    %v6570 = vld [vmem:[#allocation8 + $0x18] sm:$0xff]
    %v6571 = vld [vmem:[#allocation8 + $0x20] sm:$0xff]
    %v6572 = vld [vmem:[#allocation8 + $0x28] sm:$0xff]
    %v6573 = vld [vmem:[#allocation8 + $0x30] sm:$0xff]
    %v6574 = vld [vmem:[#allocation8 + $0x38] sm:$0xff]
    %v6575 = vld [vmem:[#allocation8 + $0x40] sm:$0xff]
    %v6576 = vld [vmem:[#allocation8 + $0x48] sm:$0xff]
    %v6577 = vld [vmem:[#allocation8 + $0x50] sm:$0xff]
    %v6578 = vld [vmem:[#allocation8 + $0x58] sm:$0xff]
    %v6579 = vld [vmem:[#allocation8 + $0x60] sm:$0xff]
    %v6580 = vld [vmem:[#allocation8 + $0x68] sm:$0xff]
    %v6581 = vld [vmem:[#allocation8 + $0x70] sm:$0xff]
    %v6582 = vld [vmem:[#allocation8 + $0x78] sm:$0xff]
    %v6583 = vld [vmem:[#allocation8 + $0x80] sm:$0xff]
    %v6584 = vld [vmem:[#allocation8 + $0x88] sm:$0xff]
    %v6585 = vld [vmem:[#allocation8 + $0x90] sm:$0xff]
    %v6586 = vld [vmem:[#allocation8 + $0x98] sm:$0xff]
    %v6587 = vld [vmem:[#allocation8 + $0xa0] sm:$0xff]
    %v6588 = vld [vmem:[#allocation8 + $0xa8] sm:$0xff]
    %v6589 = vld [vmem:[#allocation8 + $0xb0] sm:$0xff]
    %v6590 = vld [vmem:[#allocation8 + $0xb8] sm:$0xff]
    %v6591 = vld [vmem:[#allocation8 + $0xc0] sm:$0xff]
    %v6592 = vld [vmem:[#allocation8 + $0xc8] sm:$0xff]
    %v6593 = vld [vmem:[#allocation8 + $0xd0] sm:$0xff]
    %v6594 = vld [vmem:[#allocation8 + $0xd8] sm:$0xff]
    %v6595 = vld [vmem:[#allocation8 + $0xe0] sm:$0xff]
    %v6596 = vld [vmem:[#allocation8 + $0xe8] sm:$0xff]
    %v6597 = vld [vmem:[#allocation8 + $0xf0] sm:$0xff]
    %v6598 = vld [vmem:[#allocation8 + $0xf8] sm:$0xff]
    %v6599 = vld [vmem:[#allocation8 + $0x100] sm:$0xff]
    %v6600 = vld [vmem:[#allocation8 + $0x108] sm:$0xff]
    %v6601 = vld [vmem:[#allocation8 + $0x110] sm:$0xff]
    %v6602 = vld [vmem:[#allocation8 + $0x118] sm:$0xff]
    %v6603 = vld [vmem:[#allocation8 + $0x120] sm:$0xff]
    %v6604 = vld [vmem:[#allocation8 + $0x128] sm:$0xff]
    %v6605 = vld [vmem:[#allocation8 + $0x130] sm:$0xff]
    %v6606 = vld [vmem:[#allocation8 + $0x138] sm:$0xff]
    %v6607 = vld [vmem:[#allocation8 + $0x140] sm:$0xff]
    %v6608 = vld [vmem:[#allocation8 + $0x148] sm:$0xff]
    %v6609 = vld [vmem:[#allocation8 + $0x150] sm:$0xff]
    %v6610 = vld [vmem:[#allocation8 + $0x158] sm:$0xff]
    %v6611 = vld [vmem:[#allocation8 + $0x160] sm:$0xff]
    %v6612 = vld [vmem:[#allocation8 + $0x168] sm:$0xff]
    %v6613 = vld [vmem:[#allocation8 + $0x170] sm:$0xff]
    %v6614 = vld [vmem:[#allocation8 + $0x178] sm:$0xff]
    %v6615 = vld [vmem:[#allocation8 + $0x180] sm:$0xff]
    %v6616 = vld [vmem:[#allocation8 + $0x188] sm:$0xff]
    %v6617 = vld [vmem:[#allocation8 + $0x190] sm:$0xff]
    %v6618 = vld [vmem:[#allocation8 + $0x198] sm:$0xff]
    %v6619 = vld [vmem:[#allocation8 + $0x1a0] sm:$0xff]
    %v6620 = vld [vmem:[#allocation8 + $0x1a8] sm:$0xff]
    %v6621 = vld [vmem:[#allocation8 + $0x1b0] sm:$0xff]
    %v6622 = vld [vmem:[#allocation8 + $0x1b8] sm:$0xff]
    %v6623 = vld [vmem:[#allocation8 + $0x1c0] sm:$0xff]
    %v6624 = vld [vmem:[#allocation8 + $0x1c8] sm:$0xff]
    %v6625 = vld [vmem:[#allocation8 + $0x1d0] sm:$0xff]
    %v6626 = vld [vmem:[#allocation8 + $0x1d8] sm:$0xff]
    %v6627 = vld [vmem:[#allocation8 + $0x1e0] sm:$0xff]
    %v6628 = vld [vmem:[#allocation8 + $0x1e8] sm:$0xff]
    %v6629 = vld [vmem:[#allocation8 + $0x1f0] sm:$0xff]
    %v6630 = vld [vmem:[#allocation8 + $0x1f8] sm:$0xff]
    %v6631 = vld [vmem:[#allocation8 + $0x200] sm:$0xff]
    %v6632 = vld [vmem:[#allocation8 + $0x208] sm:$0xff]
    %v6633 = vld [vmem:[#allocation8 + $0x210] sm:$0xff]
    %v6634 = vld [vmem:[#allocation8 + $0x218] sm:$0xff]
    %v6635 = vld [vmem:[#allocation8 + $0x220] sm:$0xff]
    %v6636 = vld [vmem:[#allocation8 + $0x228] sm:$0xff]
    %v6637 = vld [vmem:[#allocation8 + $0x230] sm:$0xff]
    %v6638 = vld [vmem:[#allocation8 + $0x238] sm:$0xff]
    %v6639 = vld [vmem:[#allocation8 + $0x240] sm:$0xff]
    %v6640 = vld [vmem:[#allocation8 + $0x248] sm:$0xff]
    %v6641 = vld [vmem:[#allocation8 + $0x250] sm:$0xff]
    %v6642 = vld [vmem:[#allocation8 + $0x258] sm:$0xff]
    %v6643 = vld [vmem:[#allocation8 + $0x260] sm:$0xff]
    %v6644 = vld [vmem:[#allocation8 + $0x268] sm:$0xff]
    %v6645 = vld [vmem:[#allocation8 + $0x270] sm:$0xff]
    %v6646 = vld [vmem:[#allocation8 + $0x278] sm:$0xff]
    %v6647 = vld [vmem:[#allocation8 + $0x280] sm:$0xff]
    %v6648 = vld [vmem:[#allocation8 + $0x288] sm:$0xff]
    %v6649 = vld [vmem:[#allocation8 + $0x290] sm:$0xff]
    %v6650 = vld [vmem:[#allocation8 + $0x298] sm:$0xff]
    %v6651 = vld [vmem:[#allocation8 + $0x2a0] sm:$0xff]
    %v6652 = vld [vmem:[#allocation8 + $0x2a8] sm:$0xff]
    %v6653 = vld [vmem:[#allocation8 + $0x2b0] sm:$0xff]
    %v6654 = vld [vmem:[#allocation8 + $0x2b8] sm:$0xff]
    %v6655 = vld [vmem:[#allocation8 + $0x2c0] sm:$0xff]
    %v6656 = vld [vmem:[#allocation8 + $0x2c8] sm:$0xff]
    %v6657 = vld [vmem:[#allocation8 + $0x2d0] sm:$0xff]
    %v6658 = vld [vmem:[#allocation8 + $0x2d8] sm:$0xff]
    %v6659 = vld [vmem:[#allocation8 + $0x2e0] sm:$0xff]
    %v6660 = vld [vmem:[#allocation8 + $0x2e8] sm:$0xff]
    %v6661 = vld [vmem:[#allocation8 + $0x2f0] sm:$0xff]
    %v6662 = vld [vmem:[#allocation8 + $0x2f8] sm:$0xff]
    %v6663 = vld [vmem:[#allocation8 + $0x300] sm:$0xff]
    %v6664 = vld [vmem:[#allocation8 + $0x308] sm:$0xff]
    %v6665 = vld [vmem:[#allocation8 + $0x310] sm:$0xff]
    %v6666 = vld [vmem:[#allocation8 + $0x318] sm:$0xff]
    %v6667 = vld [vmem:[#allocation8 + $0x320] sm:$0xff]
    %v6668 = vld [vmem:[#allocation8 + $0x328] sm:$0xff]
    %v6669 = vld [vmem:[#allocation8 + $0x330] sm:$0xff]
    %v6670 = vld [vmem:[#allocation8 + $0x338] sm:$0xff]
    %v6671 = vld [vmem:[#allocation8 + $0x340] sm:$0xff]
    %v6672 = vld [vmem:[#allocation8 + $0x348] sm:$0xff]
    %v6673 = vld [vmem:[#allocation8 + $0x350] sm:$0xff]
    %v6674 = vld [vmem:[#allocation8 + $0x358] sm:$0xff]
    %v6675 = vld [vmem:[#allocation8 + $0x360] sm:$0xff]
    %v6676 = vld [vmem:[#allocation8 + $0x368] sm:$0xff]
    %v6677 = vld [vmem:[#allocation8 + $0x370] sm:$0xff]
    %v6678 = vld [vmem:[#allocation8 + $0x378] sm:$0xff]
    %v6679 = vld [vmem:[#allocation8 + $0x380] sm:$0xff]
    %v6680 = vld [vmem:[#allocation8 + $0x388] sm:$0xff]
    %v6681 = vld [vmem:[#allocation8 + $0x390] sm:$0xff]
    %v6682 = vld [vmem:[#allocation8 + $0x398] sm:$0xff]
    %v6683 = vld [vmem:[#allocation8 + $0x3a0] sm:$0xff]
    %v6684 = vld [vmem:[#allocation8 + $0x3a8] sm:$0xff]
    %v6685 = vld [vmem:[#allocation8 + $0x3b0] sm:$0xff]
    %v6686 = vld [vmem:[#allocation8 + $0x3b8] sm:$0xff]
    %v6687 = vld [vmem:[#allocation8 + $0x3c0] sm:$0xff]
    %v6688 = vld [vmem:[#allocation8 + $0x3c8] sm:$0xff]
    %v6689 = vld [vmem:[#allocation8 + $0x3d0] sm:$0xff]
    %v6690 = vld [vmem:[#allocation8 + $0x3d8] sm:$0xff]
    %v6691 = vld [vmem:[#allocation8 + $0x3e0] sm:$0xff]
    %v6692 = vld [vmem:[#allocation8 + $0x3e8] sm:$0xff]
    %v6693 = vld [vmem:[#allocation8 + $0x3f0] sm:$0xff]
    %v6694 = vld [vmem:[#allocation8 + $0x3f8] sm:$0xff]
    %v6695 = vld [vmem:[#allocation8 + $0x400] sm:$0xff]
    %v6696 = vld [vmem:[#allocation8 + $0x408] sm:$0xff]
    %v6697 = vld [vmem:[#allocation8 + $0x410] sm:$0xff]
    %v6698 = vld [vmem:[#allocation8 + $0x418] sm:$0xff]
    %v6699 = vld [vmem:[#allocation8 + $0x420] sm:$0xff]
    %v6700 = vld [vmem:[#allocation8 + $0x428] sm:$0xff]
    %v6701 = vld [vmem:[#allocation8 + $0x430] sm:$0xff]
    %v6702 = vld [vmem:[#allocation8 + $0x438] sm:$0xff]
    %v6703 = vld [vmem:[#allocation8 + $0x440] sm:$0xff]
    %v6704 = vld [vmem:[#allocation8 + $0x448] sm:$0xff]
    %v6705 = vld [vmem:[#allocation8 + $0x450] sm:$0xff]
    %v6706 = vld [vmem:[#allocation8 + $0x458] sm:$0xff]
    %v6707 = vld [vmem:[#allocation8 + $0x460] sm:$0xff]
    %v6708 = vld [vmem:[#allocation8 + $0x468] sm:$0xff]
    %v6709 = vld [vmem:[#allocation8 + $0x470] sm:$0xff]
    %v6710 = vld [vmem:[#allocation8 + $0x478] sm:$0xff]
    %v6711 = vld [vmem:[#allocation8 + $0x480] sm:$0xff]
    %v6712 = vld [vmem:[#allocation8 + $0x488] sm:$0xff]
    %v6713 = vld [vmem:[#allocation8 + $0x490] sm:$0xff]
    %v6714 = vld [vmem:[#allocation8 + $0x498] sm:$0xff]
    %v6715 = vld [vmem:[#allocation8 + $0x4a0] sm:$0xff]
    %v6716 = vld [vmem:[#allocation8 + $0x4a8] sm:$0xff]
    %v6717 = vld [vmem:[#allocation8 + $0x4b0] sm:$0xff]
    %v6718 = vld [vmem:[#allocation8 + $0x4b8] sm:$0xff]
    %v6719 = vld [vmem:[#allocation8 + $0x4c0] sm:$0xff]
    %v6720 = vld [vmem:[#allocation8 + $0x4c8] sm:$0xff]
    %v6721 = vld [vmem:[#allocation8 + $0x4d0] sm:$0xff]
    %v6722 = vld [vmem:[#allocation8 + $0x4d8] sm:$0xff]
    %v6723 = vld [vmem:[#allocation8 + $0x4e0] sm:$0xff]
    %v6724 = vld [vmem:[#allocation8 + $0x4e8] sm:$0xff]
    %v6725 = vld [vmem:[#allocation8 + $0x4f0] sm:$0xff]
    %v6726 = vld [vmem:[#allocation8 + $0x4f8] sm:$0xff]
    %v6727 = vld [vmem:[#allocation8 + $0x500] sm:$0xff]
    %v6728 = vld [vmem:[#allocation8 + $0x508] sm:$0xff]
    %v6729 = vld [vmem:[#allocation8 + $0x510] sm:$0xff]
    %v6730 = vld [vmem:[#allocation8 + $0x518] sm:$0xff]
    %v6731 = vld [vmem:[#allocation8 + $0x520] sm:$0xff]
    %v6732 = vld [vmem:[#allocation8 + $0x528] sm:$0xff]
    %v6733 = vld [vmem:[#allocation8 + $0x530] sm:$0xff]
    %v6734 = vld [vmem:[#allocation8 + $0x538] sm:$0xff]
    %v6735 = vld [vmem:[#allocation8 + $0x540] sm:$0xff]
    %v6736 = vld [vmem:[#allocation8 + $0x548] sm:$0xff]
    %v6737 = vld [vmem:[#allocation8 + $0x550] sm:$0xff]
    %v6738 = vld [vmem:[#allocation8 + $0x558] sm:$0xff]
    %v6739 = vld [vmem:[#allocation8 + $0x560] sm:$0xff]
    %v6740 = vld [vmem:[#allocation8 + $0x568] sm:$0xff]
    %v6741 = vld [vmem:[#allocation8 + $0x570] sm:$0xff]
    %v6742 = vld [vmem:[#allocation8 + $0x578] sm:$0xff]
    %v6743 = vld [vmem:[#allocation8 + $0x580] sm:$0xff]
    %v6744 = vld [vmem:[#allocation8 + $0x588] sm:$0xff]
    %v6745 = vld [vmem:[#allocation8 + $0x590] sm:$0xff]
    %v6746 = vld [vmem:[#allocation8 + $0x598] sm:$0xff]
    %v6747 = vld [vmem:[#allocation8 + $0x5a0] sm:$0xff]
    %v6748 = vld [vmem:[#allocation8 + $0x5a8] sm:$0xff]
    %v6749 = vld [vmem:[#allocation8 + $0x5b0] sm:$0xff]
    %v6750 = vld [vmem:[#allocation8 + $0x5b8] sm:$0xff]
    %v6751 = vld [vmem:[#allocation8 + $0x5c0] sm:$0xff]
    %v6752 = vld [vmem:[#allocation8 + $0x5c8] sm:$0xff]
    %v6753 = vld [vmem:[#allocation8 + $0x5d0] sm:$0xff]
    %v6754 = vld [vmem:[#allocation8 + $0x5d8] sm:$0xff]
    %v6755 = vld [vmem:[#allocation8 + $0x5e0] sm:$0xff]
    %v6756 = vld [vmem:[#allocation8 + $0x5e8] sm:$0xff]
    %v6757 = vld [vmem:[#allocation8 + $0x5f0] sm:$0xff]
    %v6758 = vld [vmem:[#allocation8 + $0x5f8] sm:$0xff]
    %v6759 = vlaneseq
    %v6760 = vshrl.u32 %v6759, 7
    %v6761 = vsub.s32 5, %v6760
    %v6762 = vrot.slane %v115, %v6761
    %v6763 = vlaneseq
    %v6764 = vshrl.u32 %v6763, 7
    %v6765 = vsub.s32 5, %v6764
    %v6766 = vrot.slane %v116, %v6765
    %v6767 = vlaneseq
    %v6768 = vshrl.u32 %v6767, 7
    %v6769 = vsub.s32 5, %v6768
    %v6770 = vrot.slane %v117, %v6769
    %v6771 = vlaneseq
    %v6772 = vshrl.u32 %v6771, 7
    %v6773 = vsub.s32 5, %v6772
    %v6774 = vrot.slane %v118, %v6773
    %v6775 = vlaneseq
    %v6776 = vshrl.u32 %v6775, 7
    %v6777 = vsub.s32 5, %v6776
    %v6778 = vrot.slane %v119, %v6777
    %v6779 = vlaneseq
    %v6780 = vshrl.u32 %v6779, 7
    %v6781 = vsub.s32 5, %v6780
    %v6782 = vrot.slane %v120, %v6781
    %v6975 = vunpack.c.l.b16 %v6567
    %v6976 = vunpack.c.h.b16 %v6567
    %v6977 = vunpack.c.l.b16 %v6568
    %v6978 = vunpack.c.h.b16 %v6568
    %v6979 = vunpack.c.l.b16 %v6569
    %v6980 = vunpack.c.h.b16 %v6569
    %v6981 = vunpack.c.l.b16 %v6570
    %v6982 = vunpack.c.h.b16 %v6570
    %v6983 = vunpack.c.l.b16 %v6571
    %v6984 = vunpack.c.h.b16 %v6571
    %v6985 = vunpack.c.l.b16 %v6572
    %v6986 = vunpack.c.h.b16 %v6572
    %v6987 = vunpack.c.l.b16 %v6573
    %v6988 = vunpack.c.h.b16 %v6573
    %v6989 = vunpack.c.l.b16 %v6574
    %v6990 = vunpack.c.h.b16 %v6574
    %v6991 = vunpack.c.l.b16 %v6575
    %v6992 = vunpack.c.h.b16 %v6575
    %v6993 = vunpack.c.l.b16 %v6576
    %v6994 = vunpack.c.h.b16 %v6576
    %v6995 = vunpack.c.l.b16 %v6577
    %v6996 = vunpack.c.h.b16 %v6577
    %v6997 = vunpack.c.l.b16 %v6578
    %v6998 = vunpack.c.h.b16 %v6578
    %v6999 = vunpack.c.l.b16 %v6579
    %v7000 = vunpack.c.h.b16 %v6579
    %v7001 = vunpack.c.l.b16 %v6580
    %v7002 = vunpack.c.h.b16 %v6580
    %v7003 = vunpack.c.l.b16 %v6581
    %v7004 = vunpack.c.h.b16 %v6581
    %v7005 = vunpack.c.l.b16 %v6582
    %v7006 = vunpack.c.h.b16 %v6582
    %v7007 = vunpack.c.l.b16 %v6583
    %v7008 = vunpack.c.h.b16 %v6583
    %v7009 = vunpack.c.l.b16 %v6584
    %v7010 = vunpack.c.h.b16 %v6584
    %v7011 = vunpack.c.l.b16 %v6585
    %v7012 = vunpack.c.h.b16 %v6585
    %v7013 = vunpack.c.l.b16 %v6586
    %v7014 = vunpack.c.h.b16 %v6586
    %v7015 = vunpack.c.l.b16 %v6587
    %v7016 = vunpack.c.h.b16 %v6587
    %v7017 = vunpack.c.l.b16 %v6588
    %v7018 = vunpack.c.h.b16 %v6588
    %v7019 = vunpack.c.l.b16 %v6589
    %v7020 = vunpack.c.h.b16 %v6589
    %v7021 = vunpack.c.l.b16 %v6590
    %v7022 = vunpack.c.h.b16 %v6590
    %v7023 = vunpack.c.l.b16 %v6591
    %v7024 = vunpack.c.h.b16 %v6591
    %v7025 = vunpack.c.l.b16 %v6592
    %v7026 = vunpack.c.h.b16 %v6592
    %v7027 = vunpack.c.l.b16 %v6593
    %v7028 = vunpack.c.h.b16 %v6593
    %v7029 = vunpack.c.l.b16 %v6594
    %v7030 = vunpack.c.h.b16 %v6594
    %v7031 = vunpack.c.l.b16 %v6595
    %v7032 = vunpack.c.h.b16 %v6595
    %v7033 = vunpack.c.l.b16 %v6596
    %v7034 = vunpack.c.h.b16 %v6596
    %v7035 = vunpack.c.l.b16 %v6597
    %v7036 = vunpack.c.h.b16 %v6597
    %v7037 = vunpack.c.l.b16 %v6598
    %v7038 = vunpack.c.h.b16 %v6598
    %v7039 = vunpack.c.l.b16 %v6599
    %v7040 = vunpack.c.h.b16 %v6599
    %v7041 = vunpack.c.l.b16 %v6600
    %v7042 = vunpack.c.h.b16 %v6600
    %v7043 = vunpack.c.l.b16 %v6601
    %v7044 = vunpack.c.h.b16 %v6601
    %v7045 = vunpack.c.l.b16 %v6602
    %v7046 = vunpack.c.h.b16 %v6602
    %v7047 = vunpack.c.l.b16 %v6603
    %v7048 = vunpack.c.h.b16 %v6603
    %v7049 = vunpack.c.l.b16 %v6604
    %v7050 = vunpack.c.h.b16 %v6604
    %v7051 = vunpack.c.l.b16 %v6605
    %v7052 = vunpack.c.h.b16 %v6605
    %v7053 = vunpack.c.l.b16 %v6606
    %v7054 = vunpack.c.h.b16 %v6606
    %v7055 = vunpack.c.l.b16 %v6607
    %v7056 = vunpack.c.h.b16 %v6607
    %v7057 = vunpack.c.l.b16 %v6608
    %v7058 = vunpack.c.h.b16 %v6608
    %v7059 = vunpack.c.l.b16 %v6609
    %v7060 = vunpack.c.h.b16 %v6609
    %v7061 = vunpack.c.l.b16 %v6610
    %v7062 = vunpack.c.h.b16 %v6610
    %v7063 = vunpack.c.l.b16 %v6611
    %v7064 = vunpack.c.h.b16 %v6611
    %v7065 = vunpack.c.l.b16 %v6612
    %v7066 = vunpack.c.h.b16 %v6612
    %v7067 = vunpack.c.l.b16 %v6613
    %v7068 = vunpack.c.h.b16 %v6613
    %v7069 = vunpack.c.l.b16 %v6614
    %v7070 = vunpack.c.h.b16 %v6614
    %v7071 = vunpack.c.l.b16 %v6615
    %v7072 = vunpack.c.h.b16 %v6615
    %v7073 = vunpack.c.l.b16 %v6616
    %v7074 = vunpack.c.h.b16 %v6616
    %v7075 = vunpack.c.l.b16 %v6617
    %v7076 = vunpack.c.h.b16 %v6617
    %v7077 = vunpack.c.l.b16 %v6618
    %v7078 = vunpack.c.h.b16 %v6618
    %v7079 = vunpack.c.l.b16 %v6619
    %v7080 = vunpack.c.h.b16 %v6619
    %v7081 = vunpack.c.l.b16 %v6620
    %v7082 = vunpack.c.h.b16 %v6620
    %v7083 = vunpack.c.l.b16 %v6621
    %v7084 = vunpack.c.h.b16 %v6621
    %v7085 = vunpack.c.l.b16 %v6622
    %v7086 = vunpack.c.h.b16 %v6622
    %v7087 = vunpack.c.l.b16 %v6623
    %v7088 = vunpack.c.h.b16 %v6623
    %v7089 = vunpack.c.l.b16 %v6624
    %v7090 = vunpack.c.h.b16 %v6624
    %v7091 = vunpack.c.l.b16 %v6625
    %v7092 = vunpack.c.h.b16 %v6625
    %v7093 = vunpack.c.l.b16 %v6626
    %v7094 = vunpack.c.h.b16 %v6626
    %v7095 = vunpack.c.l.b16 %v6627
    %v7096 = vunpack.c.h.b16 %v6627
    %v7097 = vunpack.c.l.b16 %v6628
    %v7098 = vunpack.c.h.b16 %v6628
    %v7099 = vunpack.c.l.b16 %v6629
    %v7100 = vunpack.c.h.b16 %v6629
    %v7101 = vunpack.c.l.b16 %v6630
    %v7102 = vunpack.c.h.b16 %v6630
    %v7103 = vunpack.c.l.b16 %v6631
    %v7104 = vunpack.c.h.b16 %v6631
    %v7105 = vunpack.c.l.b16 %v6632
    %v7106 = vunpack.c.h.b16 %v6632
    %v7107 = vunpack.c.l.b16 %v6633
    %v7108 = vunpack.c.h.b16 %v6633
    %v7109 = vunpack.c.l.b16 %v6634
    %v7110 = vunpack.c.h.b16 %v6634
    %v7111 = vunpack.c.l.b16 %v6635
    %v7112 = vunpack.c.h.b16 %v6635
    %v7113 = vunpack.c.l.b16 %v6636
    %v7114 = vunpack.c.h.b16 %v6636
    %v7115 = vunpack.c.l.b16 %v6637
    %v7116 = vunpack.c.h.b16 %v6637
    %v7117 = vunpack.c.l.b16 %v6638
    %v7118 = vunpack.c.h.b16 %v6638
    %v7119 = vunpack.c.l.b16 %v6639
    %v7120 = vunpack.c.h.b16 %v6639
    %v7121 = vunpack.c.l.b16 %v6640
    %v7122 = vunpack.c.h.b16 %v6640
    %v7123 = vunpack.c.l.b16 %v6641
    %v7124 = vunpack.c.h.b16 %v6641
    %v7125 = vunpack.c.l.b16 %v6642
    %v7126 = vunpack.c.h.b16 %v6642
    %v7127 = vunpack.c.l.b16 %v6643
    %v7128 = vunpack.c.h.b16 %v6643
    %v7129 = vunpack.c.l.b16 %v6644
    %v7130 = vunpack.c.h.b16 %v6644
    %v7131 = vunpack.c.l.b16 %v6645
    %v7132 = vunpack.c.h.b16 %v6645
    %v7133 = vunpack.c.l.b16 %v6646
    %v7134 = vunpack.c.h.b16 %v6646
    %v7135 = vunpack.c.l.b16 %v6647
    %v7136 = vunpack.c.h.b16 %v6647
    %v7137 = vunpack.c.l.b16 %v6648
    %v7138 = vunpack.c.h.b16 %v6648
    %v7139 = vunpack.c.l.b16 %v6649
    %v7140 = vunpack.c.h.b16 %v6649
    %v7141 = vunpack.c.l.b16 %v6650
    %v7142 = vunpack.c.h.b16 %v6650
    %v7143 = vunpack.c.l.b16 %v6651
    %v7144 = vunpack.c.h.b16 %v6651
    %v7145 = vunpack.c.l.b16 %v6652
    %v7146 = vunpack.c.h.b16 %v6652
    %v7147 = vunpack.c.l.b16 %v6653
    %v7148 = vunpack.c.h.b16 %v6653
    %v7149 = vunpack.c.l.b16 %v6654
    %v7150 = vunpack.c.h.b16 %v6654
    %v7151 = vunpack.c.l.b16 %v6655
    %v7152 = vunpack.c.h.b16 %v6655
    %v7153 = vunpack.c.l.b16 %v6656
    %v7154 = vunpack.c.h.b16 %v6656
    %v7155 = vunpack.c.l.b16 %v6657
    %v7156 = vunpack.c.h.b16 %v6657
    %v7157 = vunpack.c.l.b16 %v6658
    %v7158 = vunpack.c.h.b16 %v6658
    %v7159 = vunpack.c.l.b16 %v6659
    %v7160 = vunpack.c.h.b16 %v6659
    %v7161 = vunpack.c.l.b16 %v6660
    %v7162 = vunpack.c.h.b16 %v6660
    %v7163 = vunpack.c.l.b16 %v6661
    %v7164 = vunpack.c.h.b16 %v6661
    %v7165 = vunpack.c.l.b16 %v6662
    %v7166 = vunpack.c.h.b16 %v6662
    %v7167 = vunpack.c.l.b16 %v6663
    %v7168 = vunpack.c.h.b16 %v6663
    %v7169 = vunpack.c.l.b16 %v6664
    %v7170 = vunpack.c.h.b16 %v6664
    %v7171 = vunpack.c.l.b16 %v6665
    %v7172 = vunpack.c.h.b16 %v6665
    %v7173 = vunpack.c.l.b16 %v6666
    %v7174 = vunpack.c.h.b16 %v6666
    %v7175 = vunpack.c.l.b16 %v6667
    %v7176 = vunpack.c.h.b16 %v6667
    %v7177 = vunpack.c.l.b16 %v6668
    %v7178 = vunpack.c.h.b16 %v6668
    %v7179 = vunpack.c.l.b16 %v6669
    %v7180 = vunpack.c.h.b16 %v6669
    %v7181 = vunpack.c.l.b16 %v6670
    %v7182 = vunpack.c.h.b16 %v6670
    %v7183 = vunpack.c.l.b16 %v6671
    %v7184 = vunpack.c.h.b16 %v6671
    %v7185 = vunpack.c.l.b16 %v6672
    %v7186 = vunpack.c.h.b16 %v6672
    %v7187 = vunpack.c.l.b16 %v6673
    %v7188 = vunpack.c.h.b16 %v6673
    %v7189 = vunpack.c.l.b16 %v6674
    %v7190 = vunpack.c.h.b16 %v6674
    %v7191 = vunpack.c.l.b16 %v6675
    %v7192 = vunpack.c.h.b16 %v6675
    %v7193 = vunpack.c.l.b16 %v6676
    %v7194 = vunpack.c.h.b16 %v6676
    %v7195 = vunpack.c.l.b16 %v6677
    %v7196 = vunpack.c.h.b16 %v6677
    %v7197 = vunpack.c.l.b16 %v6678
    %v7198 = vunpack.c.h.b16 %v6678
    %v7199 = vunpack.c.l.b16 %v6679
    %v7200 = vunpack.c.h.b16 %v6679
    %v7201 = vunpack.c.l.b16 %v6680
    %v7202 = vunpack.c.h.b16 %v6680
    %v7203 = vunpack.c.l.b16 %v6681
    %v7204 = vunpack.c.h.b16 %v6681
    %v7205 = vunpack.c.l.b16 %v6682
    %v7206 = vunpack.c.h.b16 %v6682
    %v7207 = vunpack.c.l.b16 %v6683
    %v7208 = vunpack.c.h.b16 %v6683
    %v7209 = vunpack.c.l.b16 %v6684
    %v7210 = vunpack.c.h.b16 %v6684
    %v7211 = vunpack.c.l.b16 %v6685
    %v7212 = vunpack.c.h.b16 %v6685
    %v7213 = vunpack.c.l.b16 %v6686
    %v7214 = vunpack.c.h.b16 %v6686
    %v7215 = vunpack.c.l.b16 %v6687
    %v7216 = vunpack.c.h.b16 %v6687
    %v7217 = vunpack.c.l.b16 %v6688
    %v7218 = vunpack.c.h.b16 %v6688
    %v7219 = vunpack.c.l.b16 %v6689
    %v7220 = vunpack.c.h.b16 %v6689
    %v7221 = vunpack.c.l.b16 %v6690
    %v7222 = vunpack.c.h.b16 %v6690
    %v7223 = vunpack.c.l.b16 %v6691
    %v7224 = vunpack.c.h.b16 %v6691
    %v7225 = vunpack.c.l.b16 %v6692
    %v7226 = vunpack.c.h.b16 %v6692
    %v7227 = vunpack.c.l.b16 %v6693
    %v7228 = vunpack.c.h.b16 %v6693
    %v7229 = vunpack.c.l.b16 %v6694
    %v7230 = vunpack.c.h.b16 %v6694
    %v7231 = vunpack.c.l.b16 %v6695
    %v7232 = vunpack.c.h.b16 %v6695
    %v7233 = vunpack.c.l.b16 %v6696
    %v7234 = vunpack.c.h.b16 %v6696
    %v7235 = vunpack.c.l.b16 %v6697
    %v7236 = vunpack.c.h.b16 %v6697
    %v7237 = vunpack.c.l.b16 %v6698
    %v7238 = vunpack.c.h.b16 %v6698
    %v7239 = vunpack.c.l.b16 %v6699
    %v7240 = vunpack.c.h.b16 %v6699
    %v7241 = vunpack.c.l.b16 %v6700
    %v7242 = vunpack.c.h.b16 %v6700
    %v7243 = vunpack.c.l.b16 %v6701
    %v7244 = vunpack.c.h.b16 %v6701
    %v7245 = vunpack.c.l.b16 %v6702
    %v7246 = vunpack.c.h.b16 %v6702
    %v7247 = vunpack.c.l.b16 %v6703
    %v7248 = vunpack.c.h.b16 %v6703
    %v7249 = vunpack.c.l.b16 %v6704
    %v7250 = vunpack.c.h.b16 %v6704
    %v7251 = vunpack.c.l.b16 %v6705
    %v7252 = vunpack.c.h.b16 %v6705
    %v7253 = vunpack.c.l.b16 %v6706
    %v7254 = vunpack.c.h.b16 %v6706
    %v7255 = vunpack.c.l.b16 %v6707
    %v7256 = vunpack.c.h.b16 %v6707
    %v7257 = vunpack.c.l.b16 %v6708
    %v7258 = vunpack.c.h.b16 %v6708
    %v7259 = vunpack.c.l.b16 %v6709
    %v7260 = vunpack.c.h.b16 %v6709
    %v7261 = vunpack.c.l.b16 %v6710
    %v7262 = vunpack.c.h.b16 %v6710
    %v7263 = vunpack.c.l.b16 %v6711
    %v7264 = vunpack.c.h.b16 %v6711
    %v7265 = vunpack.c.l.b16 %v6712
    %v7266 = vunpack.c.h.b16 %v6712
    %v7267 = vunpack.c.l.b16 %v6713
    %v7268 = vunpack.c.h.b16 %v6713
    %v7269 = vunpack.c.l.b16 %v6714
    %v7270 = vunpack.c.h.b16 %v6714
    %v7271 = vunpack.c.l.b16 %v6715
    %v7272 = vunpack.c.h.b16 %v6715
    %v7273 = vunpack.c.l.b16 %v6716
    %v7274 = vunpack.c.h.b16 %v6716
    %v7275 = vunpack.c.l.b16 %v6717
    %v7276 = vunpack.c.h.b16 %v6717
    %v7277 = vunpack.c.l.b16 %v6718
    %v7278 = vunpack.c.h.b16 %v6718
    %v7279 = vunpack.c.l.b16 %v6719
    %v7280 = vunpack.c.h.b16 %v6719
    %v7281 = vunpack.c.l.b16 %v6720
    %v7282 = vunpack.c.h.b16 %v6720
    %v7283 = vunpack.c.l.b16 %v6721
    %v7284 = vunpack.c.h.b16 %v6721
    %v7285 = vunpack.c.l.b16 %v6722
    %v7286 = vunpack.c.h.b16 %v6722
    %v7287 = vunpack.c.l.b16 %v6723
    %v7288 = vunpack.c.h.b16 %v6723
    %v7289 = vunpack.c.l.b16 %v6724
    %v7290 = vunpack.c.h.b16 %v6724
    %v7291 = vunpack.c.l.b16 %v6725
    %v7292 = vunpack.c.h.b16 %v6725
    %v7293 = vunpack.c.l.b16 %v6726
    %v7294 = vunpack.c.h.b16 %v6726
    %v7295 = vunpack.c.l.b16 %v6727
    %v7296 = vunpack.c.h.b16 %v6727
    %v7297 = vunpack.c.l.b16 %v6728
    %v7298 = vunpack.c.h.b16 %v6728
    %v7299 = vunpack.c.l.b16 %v6729
    %v7300 = vunpack.c.h.b16 %v6729
    %v7301 = vunpack.c.l.b16 %v6730
    %v7302 = vunpack.c.h.b16 %v6730
    %v7303 = vunpack.c.l.b16 %v6731
    %v7304 = vunpack.c.h.b16 %v6731
    %v7305 = vunpack.c.l.b16 %v6732
    %v7306 = vunpack.c.h.b16 %v6732
    %v7307 = vunpack.c.l.b16 %v6733
    %v7308 = vunpack.c.h.b16 %v6733
    %v7309 = vunpack.c.l.b16 %v6734
    %v7310 = vunpack.c.h.b16 %v6734
    %v7311 = vunpack.c.l.b16 %v6735
    %v7312 = vunpack.c.h.b16 %v6735
    %v7313 = vunpack.c.l.b16 %v6736
    %v7314 = vunpack.c.h.b16 %v6736
    %v7315 = vunpack.c.l.b16 %v6737
    %v7316 = vunpack.c.h.b16 %v6737
    %v7317 = vunpack.c.l.b16 %v6738
    %v7318 = vunpack.c.h.b16 %v6738
    %v7319 = vunpack.c.l.b16 %v6739
    %v7320 = vunpack.c.h.b16 %v6739
    %v7321 = vunpack.c.l.b16 %v6740
    %v7322 = vunpack.c.h.b16 %v6740
    %v7323 = vunpack.c.l.b16 %v6741
    %v7324 = vunpack.c.h.b16 %v6741
    %v7325 = vunpack.c.l.b16 %v6742
    %v7326 = vunpack.c.h.b16 %v6742
    %v7327 = vunpack.c.l.b16 %v6743
    %v7328 = vunpack.c.h.b16 %v6743
    %v7329 = vunpack.c.l.b16 %v6744
    %v7330 = vunpack.c.h.b16 %v6744
    %v7331 = vunpack.c.l.b16 %v6745
    %v7332 = vunpack.c.h.b16 %v6745
    %v7333 = vunpack.c.l.b16 %v6746
    %v7334 = vunpack.c.h.b16 %v6746
    %v7335 = vunpack.c.l.b16 %v6747
    %v7336 = vunpack.c.h.b16 %v6747
    %v7337 = vunpack.c.l.b16 %v6748
    %v7338 = vunpack.c.h.b16 %v6748
    %v7339 = vunpack.c.l.b16 %v6749
    %v7340 = vunpack.c.h.b16 %v6749
    %v7341 = vunpack.c.l.b16 %v6750
    %v7342 = vunpack.c.h.b16 %v6750
    %v7343 = vunpack.c.l.b16 %v6751
    %v7344 = vunpack.c.h.b16 %v6751
    %v7345 = vunpack.c.l.b16 %v6752
    %v7346 = vunpack.c.h.b16 %v6752
    %v7347 = vunpack.c.l.b16 %v6753
    %v7348 = vunpack.c.h.b16 %v6753
    %v7349 = vunpack.c.l.b16 %v6754
    %v7350 = vunpack.c.h.b16 %v6754
    %v7351 = vunpack.c.l.b16 %v6755
    %v7352 = vunpack.c.h.b16 %v6755
    %v7353 = vunpack.c.l.b16 %v6756
    %v7354 = vunpack.c.h.b16 %v6756
    %v7355 = vunpack.c.l.b16 %v6757
    %v7356 = vunpack.c.h.b16 %v6757
    %v7357 = vunpack.c.l.b16 %v6758
    %v7358 = vunpack.c.h.b16 %v6758
    %v7359 = vpack.c.b16 %v6981, %v6975
    %v7360 = vpack.c.b16 %v6982, %v6976
    %v7361 = vpack.c.b16 %v6983, %v6977
    %v7362 = vpack.c.b16 %v6984, %v6978
    %v7363 = vpack.c.b16 %v6985, %v6979
    %v7364 = vpack.c.b16 %v6986, %v6980
    %v7365 = vpack.c.b16 %v6993, %v6987
    %v7366 = vpack.c.b16 %v6994, %v6988
    %v7367 = vpack.c.b16 %v6995, %v6989
    %v7368 = vpack.c.b16 %v6996, %v6990
    %v7369 = vpack.c.b16 %v6997, %v6991
    %v7370 = vpack.c.b16 %v6998, %v6992
    %v7371 = vpack.c.b16 %v7005, %v6999
    %v7372 = vpack.c.b16 %v7006, %v7000
    %v7373 = vpack.c.b16 %v7007, %v7001
    %v7374 = vpack.c.b16 %v7008, %v7002
    %v7375 = vpack.c.b16 %v7009, %v7003
    %v7376 = vpack.c.b16 %v7010, %v7004
    %v7377 = vpack.c.b16 %v7017, %v7011
    %v7378 = vpack.c.b16 %v7018, %v7012
    %v7379 = vpack.c.b16 %v7019, %v7013
    %v7380 = vpack.c.b16 %v7020, %v7014
    %v7381 = vpack.c.b16 %v7021, %v7015
    %v7382 = vpack.c.b16 %v7022, %v7016
    %v7383 = vpack.c.b16 %v7029, %v7023
    %v7384 = vpack.c.b16 %v7030, %v7024
    %v7385 = vpack.c.b16 %v7031, %v7025
    %v7386 = vpack.c.b16 %v7032, %v7026
    %v7387 = vpack.c.b16 %v7033, %v7027
    %v7388 = vpack.c.b16 %v7034, %v7028
    %v7389 = vpack.c.b16 %v7041, %v7035
    %v7390 = vpack.c.b16 %v7042, %v7036
    %v7391 = vpack.c.b16 %v7043, %v7037
    %v7392 = vpack.c.b16 %v7044, %v7038
    %v7393 = vpack.c.b16 %v7045, %v7039
    %v7394 = vpack.c.b16 %v7046, %v7040
    %v7395 = vpack.c.b16 %v7053, %v7047
    %v7396 = vpack.c.b16 %v7054, %v7048
    %v7397 = vpack.c.b16 %v7055, %v7049
    %v7398 = vpack.c.b16 %v7056, %v7050
    %v7399 = vpack.c.b16 %v7057, %v7051
    %v7400 = vpack.c.b16 %v7058, %v7052
    %v7401 = vpack.c.b16 %v7065, %v7059
    %v7402 = vpack.c.b16 %v7066, %v7060
    %v7403 = vpack.c.b16 %v7067, %v7061
    %v7404 = vpack.c.b16 %v7068, %v7062
    %v7405 = vpack.c.b16 %v7069, %v7063
    %v7406 = vpack.c.b16 %v7070, %v7064
    %v7407 = vpack.c.b16 %v7077, %v7071
    %v7408 = vpack.c.b16 %v7078, %v7072
    %v7409 = vpack.c.b16 %v7079, %v7073
    %v7410 = vpack.c.b16 %v7080, %v7074
    %v7411 = vpack.c.b16 %v7081, %v7075
    %v7412 = vpack.c.b16 %v7082, %v7076
    %v7413 = vpack.c.b16 %v7089, %v7083
    %v7414 = vpack.c.b16 %v7090, %v7084
    %v7415 = vpack.c.b16 %v7091, %v7085
    %v7416 = vpack.c.b16 %v7092, %v7086
    %v7417 = vpack.c.b16 %v7093, %v7087
    %v7418 = vpack.c.b16 %v7094, %v7088
    %v7419 = vpack.c.b16 %v7101, %v7095
    %v7420 = vpack.c.b16 %v7102, %v7096
    %v7421 = vpack.c.b16 %v7103, %v7097
    %v7422 = vpack.c.b16 %v7104, %v7098
    %v7423 = vpack.c.b16 %v7105, %v7099
    %v7424 = vpack.c.b16 %v7106, %v7100
    %v7425 = vpack.c.b16 %v7113, %v7107
    %v7426 = vpack.c.b16 %v7114, %v7108
    %v7427 = vpack.c.b16 %v7115, %v7109
    %v7428 = vpack.c.b16 %v7116, %v7110
    %v7429 = vpack.c.b16 %v7117, %v7111
    %v7430 = vpack.c.b16 %v7118, %v7112
    %v7431 = vpack.c.b16 %v7125, %v7119
    %v7432 = vpack.c.b16 %v7126, %v7120
    %v7433 = vpack.c.b16 %v7127, %v7121
    %v7434 = vpack.c.b16 %v7128, %v7122
    %v7435 = vpack.c.b16 %v7129, %v7123
    %v7436 = vpack.c.b16 %v7130, %v7124
    %v7437 = vpack.c.b16 %v7137, %v7131
    %v7438 = vpack.c.b16 %v7138, %v7132
    %v7439 = vpack.c.b16 %v7139, %v7133
    %v7440 = vpack.c.b16 %v7140, %v7134
    %v7441 = vpack.c.b16 %v7141, %v7135
    %v7442 = vpack.c.b16 %v7142, %v7136
    %v7443 = vpack.c.b16 %v7149, %v7143
    %v7444 = vpack.c.b16 %v7150, %v7144
    %v7445 = vpack.c.b16 %v7151, %v7145
    %v7446 = vpack.c.b16 %v7152, %v7146
    %v7447 = vpack.c.b16 %v7153, %v7147
    %v7448 = vpack.c.b16 %v7154, %v7148
    %v7449 = vpack.c.b16 %v7161, %v7155
    %v7450 = vpack.c.b16 %v7162, %v7156
    %v7451 = vpack.c.b16 %v7163, %v7157
    %v7452 = vpack.c.b16 %v7164, %v7158
    %v7453 = vpack.c.b16 %v7165, %v7159
    %v7454 = vpack.c.b16 %v7166, %v7160
    %v7455 = vpack.c.b16 %v7173, %v7167
    %v7456 = vpack.c.b16 %v7174, %v7168
    %v7457 = vpack.c.b16 %v7175, %v7169
    %v7458 = vpack.c.b16 %v7176, %v7170
    %v7459 = vpack.c.b16 %v7177, %v7171
    %v7460 = vpack.c.b16 %v7178, %v7172
    %v7461 = vpack.c.b16 %v7185, %v7179
    %v7462 = vpack.c.b16 %v7186, %v7180
    %v7463 = vpack.c.b16 %v7187, %v7181
    %v7464 = vpack.c.b16 %v7188, %v7182
    %v7465 = vpack.c.b16 %v7189, %v7183
    %v7466 = vpack.c.b16 %v7190, %v7184
    %v7467 = vpack.c.b16 %v7197, %v7191
    %v7468 = vpack.c.b16 %v7198, %v7192
    %v7469 = vpack.c.b16 %v7199, %v7193
    %v7470 = vpack.c.b16 %v7200, %v7194
    %v7471 = vpack.c.b16 %v7201, %v7195
    %v7472 = vpack.c.b16 %v7202, %v7196
    %v7473 = vpack.c.b16 %v7209, %v7203
    %v7474 = vpack.c.b16 %v7210, %v7204
    %v7475 = vpack.c.b16 %v7211, %v7205
    %v7476 = vpack.c.b16 %v7212, %v7206
    %v7477 = vpack.c.b16 %v7213, %v7207
    %v7478 = vpack.c.b16 %v7214, %v7208
    %v7479 = vpack.c.b16 %v7221, %v7215
    %v7480 = vpack.c.b16 %v7222, %v7216
    %v7481 = vpack.c.b16 %v7223, %v7217
    %v7482 = vpack.c.b16 %v7224, %v7218
    %v7483 = vpack.c.b16 %v7225, %v7219
    %v7484 = vpack.c.b16 %v7226, %v7220
    %v7485 = vpack.c.b16 %v7233, %v7227
    %v7486 = vpack.c.b16 %v7234, %v7228
    %v7487 = vpack.c.b16 %v7235, %v7229
    %v7488 = vpack.c.b16 %v7236, %v7230
    %v7489 = vpack.c.b16 %v7237, %v7231
    %v7490 = vpack.c.b16 %v7238, %v7232
    %v7491 = vpack.c.b16 %v7245, %v7239
    %v7492 = vpack.c.b16 %v7246, %v7240
    %v7493 = vpack.c.b16 %v7247, %v7241
    %v7494 = vpack.c.b16 %v7248, %v7242
    %v7495 = vpack.c.b16 %v7249, %v7243
    %v7496 = vpack.c.b16 %v7250, %v7244
    %v7497 = vpack.c.b16 %v7257, %v7251
    %v7498 = vpack.c.b16 %v7258, %v7252
    %v7499 = vpack.c.b16 %v7259, %v7253
    %v7500 = vpack.c.b16 %v7260, %v7254
    %v7501 = vpack.c.b16 %v7261, %v7255
    %v7502 = vpack.c.b16 %v7262, %v7256
    %v7503 = vpack.c.b16 %v7269, %v7263
    %v7504 = vpack.c.b16 %v7270, %v7264
    %v7505 = vpack.c.b16 %v7271, %v7265
    %v7506 = vpack.c.b16 %v7272, %v7266
    %v7507 = vpack.c.b16 %v7273, %v7267
    %v7508 = vpack.c.b16 %v7274, %v7268
    %v7509 = vpack.c.b16 %v7281, %v7275
    %v7510 = vpack.c.b16 %v7282, %v7276
    %v7511 = vpack.c.b16 %v7283, %v7277
    %v7512 = vpack.c.b16 %v7284, %v7278
    %v7513 = vpack.c.b16 %v7285, %v7279
    %v7514 = vpack.c.b16 %v7286, %v7280
    %v7515 = vpack.c.b16 %v7293, %v7287
    %v7516 = vpack.c.b16 %v7294, %v7288
    %v7517 = vpack.c.b16 %v7295, %v7289
    %v7518 = vpack.c.b16 %v7296, %v7290
    %v7519 = vpack.c.b16 %v7297, %v7291
    %v7520 = vpack.c.b16 %v7298, %v7292
    %v7521 = vpack.c.b16 %v7305, %v7299
    %v7522 = vpack.c.b16 %v7306, %v7300
    %v7523 = vpack.c.b16 %v7307, %v7301
    %v7524 = vpack.c.b16 %v7308, %v7302
    %v7525 = vpack.c.b16 %v7309, %v7303
    %v7526 = vpack.c.b16 %v7310, %v7304
    %v7527 = vpack.c.b16 %v7317, %v7311
    %v7528 = vpack.c.b16 %v7318, %v7312
    %v7529 = vpack.c.b16 %v7319, %v7313
    %v7530 = vpack.c.b16 %v7320, %v7314
    %v7531 = vpack.c.b16 %v7321, %v7315
    %v7532 = vpack.c.b16 %v7322, %v7316
    %v7533 = vpack.c.b16 %v7329, %v7323
    %v7534 = vpack.c.b16 %v7330, %v7324
    %v7535 = vpack.c.b16 %v7331, %v7325
    %v7536 = vpack.c.b16 %v7332, %v7326
    %v7537 = vpack.c.b16 %v7333, %v7327
    %v7538 = vpack.c.b16 %v7334, %v7328
    %v7539 = vpack.c.b16 %v7341, %v7335
    %v7540 = vpack.c.b16 %v7342, %v7336
    %v7541 = vpack.c.b16 %v7343, %v7337
    %v7542 = vpack.c.b16 %v7344, %v7338
    %v7543 = vpack.c.b16 %v7345, %v7339
    %v7544 = vpack.c.b16 %v7346, %v7340
    %v7545 = vpack.c.b16 %v7353, %v7347
    %v7546 = vpack.c.b16 %v7354, %v7348
    %v7547 = vpack.c.b16 %v7355, %v7349
    %v7548 = vpack.c.b16 %v7356, %v7350
    %v7549 = vpack.c.b16 %v7357, %v7351
    %v7550 = vpack.c.b16 %v7358, %v7352
    %7743 = vmatprep.subr.bf16.mxu0 %v7402
    %7744 = vmatpush1.bf16.msra.mxu0 %v7401
    %7745 = vmatprep.subr.bf16.mxu0 %v7396
    %7746 = vmatpush1.bf16.msra.mxu0 %v7395
    %7747 = vmatprep.subr.bf16.mxu0 %v7390
    %7748 = vmatpush1.bf16.msra.mxu0 %v7389
    %7749 = vmatprep.subr.bf16.mxu0 %v7384
    %7750 = vmatpush1.bf16.msra.mxu0 %v7383
    %7751 = vmatprep.subr.bf16.mxu0 %v7378
    %7752 = vmatpush1.bf16.msra.mxu0 %v7377
    %7753 = vmatprep.subr.bf16.mxu0 %v7372
    %7754 = vmatpush1.bf16.msra.mxu0 %v7371
    %7755 = vmatprep.subr.bf16.mxu0 %v7366
    %7756 = vmatpush1.bf16.msra.mxu0 %v7365
    %7757 = vmatprep.subr.bf16.mxu0 %v7360
    %7758 = vmatpush1.bf16.msra.mxu0 %v7359
    %7759 = vmatprep.subr.bf16.mxu0 %v7450
    %7760 = vmatpush2.bf16.msra.mxu0 %v7449
    %7761 = vmatprep.subr.bf16.mxu0 %v7444
    %7762 = vmatpush2.bf16.msra.mxu0 %v7443
    %7763 = vmatprep.subr.bf16.mxu0 %v7438
    %7764 = vmatpush2.bf16.msra.mxu0 %v7437
    %7765 = vmatprep.subr.bf16.mxu0 %v7432
    %7766 = vmatpush2.bf16.msra.mxu0 %v7431
    %7767 = vmatprep.subr.bf16.mxu0 %v7426
    %7768 = vmatpush2.bf16.msra.mxu0 %v7425
    %7769 = vmatprep.subr.bf16.mxu0 %v7420
    %7770 = vmatpush2.bf16.msra.mxu0 %v7419
    %7771 = vmatprep.subr.bf16.mxu0 %v7414
    %7772 = vmatpush2.bf16.msra.mxu0 %v7413
    %7773 = vmatprep.subr.bf16.mxu0 %v7408
    %7774 = vmatpush2.bf16.msra.mxu0 %v7407
    %7775 = vmatprep.mubr.bf16.mxu0 %v6564
    %7776 = vmatmul.mubr.bf16.gmra.mxu0 %v6563
    %v7777 = vpop.f32.mrf.mxu0
    %v7778 = vadd.f32 %v6762, %v7777
    %v7779 = vpop.f32.mrf.mxu0
    %v7780 = vadd.f32 %v6766, %v7779
    %v7781 = vpop.f32.mrf.mxu0
    %v7782 = vpop.f32.mrf.mxu0
    %7783 = vdwg.mxu0
    %7784 = vmatprep.subr.bf16.mxu0 %v7498
    %7785 = vmatpush1.bf16.msra.mxu0 %v7497
    %7786 = vmatprep.subr.bf16.mxu0 %v7492
    %7787 = vmatpush1.bf16.msra.mxu0 %v7491
    %7788 = vmatprep.subr.bf16.mxu0 %v7486
    %7789 = vmatpush1.bf16.msra.mxu0 %v7485
    %7790 = vmatprep.subr.bf16.mxu0 %v7480
    %7791 = vmatpush1.bf16.msra.mxu0 %v7479
    %7792 = vmatprep.subr.bf16.mxu0 %v7474
    %7793 = vmatpush1.bf16.msra.mxu0 %v7473
    %7794 = vmatprep.subr.bf16.mxu0 %v7468
    %7795 = vmatpush1.bf16.msra.mxu0 %v7467
    %7796 = vmatprep.subr.bf16.mxu0 %v7462
    %7797 = vmatpush1.bf16.msra.mxu0 %v7461
    %7798 = vmatprep.subr.bf16.mxu0 %v7456
    %7799 = vmatpush1.bf16.msra.mxu0 %v7455
    %7800 = vmatprep.subr.bf16.mxu0 %v7546
    %7801 = vmatpush2.bf16.msra.mxu0 %v7545
    %7802 = vmatprep.subr.bf16.mxu0 %v7540
    %7803 = vmatpush2.bf16.msra.mxu0 %v7539
    %7804 = vmatprep.subr.bf16.mxu0 %v7534
    %7805 = vmatpush2.bf16.msra.mxu0 %v7533
    %7806 = vmatprep.subr.bf16.mxu0 %v7528
    %7807 = vmatpush2.bf16.msra.mxu0 %v7527
    %7808 = vmatprep.subr.bf16.mxu0 %v7522
    %7809 = vmatpush2.bf16.msra.mxu0 %v7521
    %7810 = vmatprep.subr.bf16.mxu0 %v7516
    %7811 = vmatpush2.bf16.msra.mxu0 %v7515
    %7812 = vmatprep.subr.bf16.mxu0 %v7510
    %7813 = vmatpush2.bf16.msra.mxu0 %v7509
    %7814 = vmatprep.subr.bf16.mxu0 %v7504
    %7815 = vmatpush2.bf16.msra.mxu0 %v7503
    %7816 = vmatprep.mubr.bf16.mxu0 %v6566
    %7817 = vmatmul.mubr.bf16.gmra.mxu0 %v6565
    %v7818 = vpop.f32.mrf.mxu0
    %v7819 = vadd.f32 %v7778, %v7818
    %v7820 = vpop.f32.mrf.mxu0
    %v7821 = vadd.f32 %v7780, %v7820
    %v7822 = vpop.f32.mrf.mxu0
    %v7823 = vpop.f32.mrf.mxu0
    %7824 = vdwg.mxu0
    %7825 = vmatprep.subr.bf16.mxu0 %v7404
    %7826 = vmatpush1.bf16.msra.mxu0 %v7403
    %7827 = vmatprep.subr.bf16.mxu0 %v7398
    %7828 = vmatpush1.bf16.msra.mxu0 %v7397
    %7829 = vmatprep.subr.bf16.mxu0 %v7392
    %7830 = vmatpush1.bf16.msra.mxu0 %v7391
    %7831 = vmatprep.subr.bf16.mxu0 %v7386
    %7832 = vmatpush1.bf16.msra.mxu0 %v7385
    %7833 = vmatprep.subr.bf16.mxu0 %v7380
    %7834 = vmatpush1.bf16.msra.mxu0 %v7379
    %7835 = vmatprep.subr.bf16.mxu0 %v7374
    %7836 = vmatpush1.bf16.msra.mxu0 %v7373
    %7837 = vmatprep.subr.bf16.mxu0 %v7368
    %7838 = vmatpush1.bf16.msra.mxu0 %v7367
    %7839 = vmatprep.subr.bf16.mxu0 %v7362
    %7840 = vmatpush1.bf16.msra.mxu0 %v7361
    %7841 = vmatprep.subr.bf16.mxu0 %v7452
    %7842 = vmatpush2.bf16.msra.mxu0 %v7451
    %7843 = vmatprep.subr.bf16.mxu0 %v7446
    %7844 = vmatpush2.bf16.msra.mxu0 %v7445
    %7845 = vmatprep.subr.bf16.mxu0 %v7440
    %7846 = vmatpush2.bf16.msra.mxu0 %v7439
    %7847 = vmatprep.subr.bf16.mxu0 %v7434
    %7848 = vmatpush2.bf16.msra.mxu0 %v7433
    %7849 = vmatprep.subr.bf16.mxu0 %v7428
    %7850 = vmatpush2.bf16.msra.mxu0 %v7427
    %7851 = vmatprep.subr.bf16.mxu0 %v7422
    %7852 = vmatpush2.bf16.msra.mxu0 %v7421
    %7853 = vmatprep.subr.bf16.mxu0 %v7416
    %7854 = vmatpush2.bf16.msra.mxu0 %v7415
    %7855 = vmatprep.subr.bf16.mxu0 %v7410
    %7856 = vmatpush2.bf16.msra.mxu0 %v7409
    %7857 = vmatprep.mubr.bf16.mxu0 %v6564
    %7858 = vmatmul.mubr.bf16.gmra.mxu0 %v6563
    %v7859 = vpop.f32.mrf.mxu0
    %v7860 = vadd.f32 %v6770, %v7859
    %v7861 = vpop.f32.mrf.mxu0
    %v7862 = vadd.f32 %v6774, %v7861
    %v7863 = vpop.f32.mrf.mxu0
    %v7864 = vpop.f32.mrf.mxu0
    %7865 = vdwg.mxu0
    %7866 = vmatprep.subr.bf16.mxu0 %v7500
    %7867 = vmatpush1.bf16.msra.mxu0 %v7499
    %7868 = vmatprep.subr.bf16.mxu0 %v7494
    %7869 = vmatpush1.bf16.msra.mxu0 %v7493
    %7870 = vmatprep.subr.bf16.mxu0 %v7488
    %7871 = vmatpush1.bf16.msra.mxu0 %v7487
    %7872 = vmatprep.subr.bf16.mxu0 %v7482
    %7873 = vmatpush1.bf16.msra.mxu0 %v7481
    %7874 = vmatprep.subr.bf16.mxu0 %v7476
    %7875 = vmatpush1.bf16.msra.mxu0 %v7475
    %7876 = vmatprep.subr.bf16.mxu0 %v7470
    %7877 = vmatpush1.bf16.msra.mxu0 %v7469
    %7878 = vmatprep.subr.bf16.mxu0 %v7464
    %7879 = vmatpush1.bf16.msra.mxu0 %v7463
    %7880 = vmatprep.subr.bf16.mxu0 %v7458
    %7881 = vmatpush1.bf16.msra.mxu0 %v7457
    %7882 = vmatprep.subr.bf16.mxu0 %v7548
    %7883 = vmatpush2.bf16.msra.mxu0 %v7547
    %7884 = vmatprep.subr.bf16.mxu0 %v7542
    %7885 = vmatpush2.bf16.msra.mxu0 %v7541
    %7886 = vmatprep.subr.bf16.mxu0 %v7536
    %7887 = vmatpush2.bf16.msra.mxu0 %v7535
    %7888 = vmatprep.subr.bf16.mxu0 %v7530
    %7889 = vmatpush2.bf16.msra.mxu0 %v7529
    %7890 = vmatprep.subr.bf16.mxu0 %v7524
    %7891 = vmatpush2.bf16.msra.mxu0 %v7523
    %7892 = vmatprep.subr.bf16.mxu0 %v7518
    %7893 = vmatpush2.bf16.msra.mxu0 %v7517
    %7894 = vmatprep.subr.bf16.mxu0 %v7512
    %7895 = vmatpush2.bf16.msra.mxu0 %v7511
    %7896 = vmatprep.subr.bf16.mxu0 %v7506
    %7897 = vmatpush2.bf16.msra.mxu0 %v7505
    %7898 = vmatprep.mubr.bf16.mxu0 %v6566
    %7899 = vmatmul.mubr.bf16.gmra.mxu0 %v6565
    %v7900 = vpop.f32.mrf.mxu0
    %v7901 = vadd.f32 %v7860, %v7900
    %v7902 = vpop.f32.mrf.mxu0
    %v7903 = vadd.f32 %v7862, %v7902
    %v7904 = vpop.f32.mrf.mxu0
    %v7905 = vpop.f32.mrf.mxu0
    %7906 = vdwg.mxu0
    %7907 = vmatprep.subr.bf16.mxu0 %v7406
    %7908 = vmatpush1.bf16.msra.mxu0 %v7405
    %7909 = vmatprep.subr.bf16.mxu0 %v7400
    %7910 = vmatpush1.bf16.msra.mxu0 %v7399
    %7911 = vmatprep.subr.bf16.mxu0 %v7394
    %7912 = vmatpush1.bf16.msra.mxu0 %v7393
    %7913 = vmatprep.subr.bf16.mxu0 %v7388
    %7914 = vmatpush1.bf16.msra.mxu0 %v7387
    %7915 = vmatprep.subr.bf16.mxu0 %v7382
    %7916 = vmatpush1.bf16.msra.mxu0 %v7381
    %7917 = vmatprep.subr.bf16.mxu0 %v7376
    %7918 = vmatpush1.bf16.msra.mxu0 %v7375
    %7919 = vmatprep.subr.bf16.mxu0 %v7370
    %7920 = vmatpush1.bf16.msra.mxu0 %v7369
    %7921 = vmatprep.subr.bf16.mxu0 %v7364
    %7922 = vmatpush1.bf16.msra.mxu0 %v7363
    %7923 = vmatprep.subr.bf16.mxu0 %v7454
    %7924 = vmatpush2.bf16.msra.mxu0 %v7453
    %7925 = vmatprep.subr.bf16.mxu0 %v7448
    %7926 = vmatpush2.bf16.msra.mxu0 %v7447
    %7927 = vmatprep.subr.bf16.mxu0 %v7442
    %7928 = vmatpush2.bf16.msra.mxu0 %v7441
    %7929 = vmatprep.subr.bf16.mxu0 %v7436
    %7930 = vmatpush2.bf16.msra.mxu0 %v7435
    %7931 = vmatprep.subr.bf16.mxu0 %v7430
    %7932 = vmatpush2.bf16.msra.mxu0 %v7429
    %7933 = vmatprep.subr.bf16.mxu0 %v7424
    %7934 = vmatpush2.bf16.msra.mxu0 %v7423
    %7935 = vmatprep.subr.bf16.mxu0 %v7418
    %7936 = vmatpush2.bf16.msra.mxu0 %v7417
    %7937 = vmatprep.subr.bf16.mxu0 %v7412
    %7938 = vmatpush2.bf16.msra.mxu0 %v7411
    %7939 = vmatprep.mubr.bf16.mxu0 %v6564
    %7940 = vmatmul.mubr.bf16.gmra.mxu0 %v6563
    %v7941 = vpop.f32.mrf.mxu0
    %v7942 = vadd.f32 %v6778, %v7941
    %v7943 = vpop.f32.mrf.mxu0
    %v7944 = vadd.f32 %v6782, %v7943
    %v7945 = vpop.f32.mrf.mxu0
    %v7946 = vpop.f32.mrf.mxu0
    %7947 = vdwg.mxu0
    %7948 = vmatprep.subr.bf16.mxu0 %v7502
    %7949 = vmatpush1.bf16.msra.mxu0 %v7501
    %7950 = vmatprep.subr.bf16.mxu0 %v7496
    %7951 = vmatpush1.bf16.msra.mxu0 %v7495
    %7952 = vmatprep.subr.bf16.mxu0 %v7490
    %7953 = vmatpush1.bf16.msra.mxu0 %v7489
    %7954 = vmatprep.subr.bf16.mxu0 %v7484
    %7955 = vmatpush1.bf16.msra.mxu0 %v7483
    %7956 = vmatprep.subr.bf16.mxu0 %v7478
    %7957 = vmatpush1.bf16.msra.mxu0 %v7477
    %7958 = vmatprep.subr.bf16.mxu0 %v7472
    %7959 = vmatpush1.bf16.msra.mxu0 %v7471
    %7960 = vmatprep.subr.bf16.mxu0 %v7466
    %7961 = vmatpush1.bf16.msra.mxu0 %v7465
    %7962 = vmatprep.subr.bf16.mxu0 %v7460
    %7963 = vmatpush1.bf16.msra.mxu0 %v7459
    %7964 = vmatprep.subr.bf16.mxu0 %v7550
    %7965 = vmatpush2.bf16.msra.mxu0 %v7549
    %7966 = vmatprep.subr.bf16.mxu0 %v7544
    %7967 = vmatpush2.bf16.msra.mxu0 %v7543
    %7968 = vmatprep.subr.bf16.mxu0 %v7538
    %7969 = vmatpush2.bf16.msra.mxu0 %v7537
    %7970 = vmatprep.subr.bf16.mxu0 %v7532
    %7971 = vmatpush2.bf16.msra.mxu0 %v7531
    %7972 = vmatprep.subr.bf16.mxu0 %v7526
    %7973 = vmatpush2.bf16.msra.mxu0 %v7525
    %7974 = vmatprep.subr.bf16.mxu0 %v7520
    %7975 = vmatpush2.bf16.msra.mxu0 %v7519
    %7976 = vmatprep.subr.bf16.mxu0 %v7514
    %7977 = vmatpush2.bf16.msra.mxu0 %v7513
    %7978 = vmatprep.subr.bf16.mxu0 %v7508
    %7979 = vmatpush2.bf16.msra.mxu0 %v7507
    %7980 = vmatprep.mubr.bf16.mxu0 %v6566
    %7981 = vmatmul.mubr.bf16.gmra.mxu0 %v6565
    %v7982 = vpop.f32.mrf.mxu0
    %v7983 = vadd.f32 %v7942, %v7982
    %v7984 = vpop.f32.mrf.mxu0
    %v7985 = vadd.f32 %v7944, %v7984
    %v7986 = vpop.f32.mrf.mxu0
    %v7987 = vpop.f32.mrf.mxu0
    %7988 = vdwg.mxu0
    %v7995 = vcombine.low %v7819, %v7821
    %v7996 = vcombine.low %v7901, %v7903
    %v7997 = vcombine.low %v7983, %v7985
    %v7999 = vunpack.c.l.s4 1966171168
    %v8000 = vunpack.c.0.s8 %v7999
    %v8001 = vlaneseq
    %v8002 = vshrl.u32 %v8001, 7
    %v8003 = vsub.s32 %v8000, %v8002
    %v8004 = vrot.slane %v7995, %v8003
    %v8006 = vunpack.c.l.s4 1966171168
    %v8007 = vunpack.c.0.s8 %v8006
    %v8008 = vlaneseq
    %v8009 = vshrl.u32 %v8008, 7
    %v8010 = vsub.s32 %v8007, %v8009
    %v8011 = vrot.slane %v7996, %v8010
    %v8013 = vunpack.c.l.s4 1966171168
    %v8014 = vunpack.c.0.s8 %v8013
    %v8015 = vlaneseq
    %v8016 = vshrl.u32 %v8015, 7
    %v8017 = vsub.s32 %v8014, %v8016
    %v8018 = vrot.slane %v7997, %v8017
    %v8019 = vcombine.low %v8004, %v8011
    %v8020 = vcombine.high %v8004, %v8011
    %v8021 = vcombine.high %v8018, %v8018
    %v8023 = vunpack.c.l.s4 1966171168
    %v8024 = vunpack.c.0.s8 %v8023
    %v8025 = vlaneseq
    %v8026 = vshrl.u32 %v8025, 7
    %v8027 = vsub.s32 %v8024, %v8026
    %v8028 = vrot.slane %v8019, %v8027
    %v8030 = vunpack.c.l.s4 1966171168
    %v8031 = vunpack.c.0.s8 %v8030
    %v8032 = vlaneseq
    %v8033 = vshrl.u32 %v8032, 7
    %v8034 = vsub.s32 %v8031, %v8033
    %v8035 = vrot.slane %v8020, %v8034
    %v8037 = vunpack.c.l.s4 1966171168
    %v8038 = vunpack.c.0.s8 %v8037
    %v8039 = vlaneseq
    %v8040 = vshrl.u32 %v8039, 7
    %v8041 = vsub.s32 %v8038, %v8040
    %v8042 = vrot.slane %v8018, %v8041
    %v8044 = vunpack.c.l.s4 1966171168
    %v8045 = vunpack.c.0.s8 %v8044
    %v8046 = vlaneseq
    %v8047 = vshrl.u32 %v8046, 7
    %v8048 = vsub.s32 %v8045, %v8047
    %v8049 = vrot.slane %v8021, %v8048
    %v8050 = vcombine.low %v8028, %v8042
    %v8051 = vcombine.low %v8035, %v8049
    %v8054 = vadd.f32 %v4917, %v8050
    %v8055 = vadd.f32 %v4918, %v8051
    %v8058 = vcombine.low %v8054, %v8055
    %v8059 = vcombine.high %v8054, %v8055
    %v8061 = vunpack.c.l.s4 1966171168
    %v8062 = vunpack.c.0.s8 %v8061
    %v8063 = vlaneseq
    %v8064 = vshrl.u32 %v8063, 7
    %v8065 = vsub.s32 %v8062, %v8064
    %v8066 = vrot.slane %v8058, %v8065
    %v8068 = vunpack.c.l.s4 1966171168
    %v8069 = vunpack.c.0.s8 %v8068
    %v8070 = vlaneseq
    %v8071 = vshrl.u32 %v8070, 7
    %v8072 = vsub.s32 %v8069, %v8071
    %v8073 = vrot.slane %v8059, %v8072
    %v8074 = vcombine.high %v8066, %v8066
    %v8075 = vcombine.high %v8073, %v8073
    %v8077 = vunpack.c.l.s4 1966171168
    %v8078 = vunpack.c.0.s8 %v8077
    %v8079 = vlaneseq
    %v8080 = vshrl.u32 %v8079, 7
    %v8081 = vsub.s32 %v8078, %v8080
    %v8082 = vrot.slane %v8066, %v8081
    %v8084 = vunpack.c.l.s4 1966171168
    %v8085 = vunpack.c.0.s8 %v8084
    %v8086 = vlaneseq
    %v8087 = vshrl.u32 %v8086, 7
    %v8088 = vsub.s32 %v8085, %v8087
    %v8089 = vrot.slane %v8073, %v8088
    %v8091 = vunpack.c.l.s4 1966171168
    %v8092 = vunpack.c.0.s8 %v8091
    %v8093 = vlaneseq
    %v8094 = vshrl.u32 %v8093, 7
    %v8095 = vsub.s32 %v8092, %v8094
    %v8096 = vrot.slane %v8074, %v8095
    %v8098 = vunpack.c.l.s4 1966171168
    %v8099 = vunpack.c.0.s8 %v8098
    %v8100 = vlaneseq
    %v8101 = vshrl.u32 %v8100, 7
    %v8102 = vsub.s32 %v8099, %v8101
    %v8103 = vrot.slane %v8075, %v8102
    %v8104 = vcombine.high %v8082, %v8082
    %v8105 = vcombine.high %v8096, %v8096
    %v8112 = vsel %vm4621, %v8082, 0.0
    %v8113 = vsel %vm4621, %v8096, 0.0
    %v8114 = vadd.f32 %v8112, %v8113
    %v8115 = vsel %vm4621, %v8104, 0.0
    %v8116 = vadd.f32 %v8114, %v8115
    %v8117 = vsel %vm4621, %v8105, 0.0
    %v8118 = vadd.f32 %v8116, %v8117
    %v8119 = vsel %vm4621, %v8089, 0.0
    %v8120 = vadd.f32 %v8118, %v8119
    %v8121 = vsel %vm4621, %v8103, 0.0
    %v8122 = vadd.f32 %v8120, %v8121
    %8123 = vadd.xlane.f32.xlu0 %v8122
    %v8124 = vpop.xlane.xlu0 %8123
    %v8125 = vmul.f32 %v8124, %v4635
    %v8127 = vlaneseq
    %v8128 = vshrl.u32 %v8127, 7
    %v8129 = vsub.s32 0, %v8128
    %v8130 = vrot.slane %v8125, %v8129
    %v8131 = vlaneseq
    %v8132 = vshrl.u32 %v8131, 7
    %v8133 = vsub.s32 1, %v8132
    %v8134 = vrot.slane %v8125, %v8133
    %v8137 = vsub.f32 %v8054, %v8130
    %v8138 = vsub.f32 %v8055, %v8134
    %v8139 = vmul.f32 %v8137, %v8137
    %v8140 = vmul.f32 %v8138, %v8138
    %v8143 = vcombine.low %v8139, %v8140
    %v8144 = vcombine.high %v8139, %v8140
    %v8146 = vunpack.c.l.s4 1966171168
    %v8147 = vunpack.c.0.s8 %v8146
    %v8148 = vlaneseq
    %v8149 = vshrl.u32 %v8148, 7
    %v8150 = vsub.s32 %v8147, %v8149
    %v8151 = vrot.slane %v8143, %v8150
    %v8153 = vunpack.c.l.s4 1966171168
    %v8154 = vunpack.c.0.s8 %v8153
    %v8155 = vlaneseq
    %v8156 = vshrl.u32 %v8155, 7
    %v8157 = vsub.s32 %v8154, %v8156
    %v8158 = vrot.slane %v8144, %v8157
    %v8159 = vcombine.high %v8151, %v8151
    %v8160 = vcombine.high %v8158, %v8158
    %v8162 = vunpack.c.l.s4 1966171168
    %v8163 = vunpack.c.0.s8 %v8162
    %v8164 = vlaneseq
    %v8165 = vshrl.u32 %v8164, 7
    %v8166 = vsub.s32 %v8163, %v8165
    %v8167 = vrot.slane %v8151, %v8166
    %v8169 = vunpack.c.l.s4 1966171168
    %v8170 = vunpack.c.0.s8 %v8169
    %v8171 = vlaneseq
    %v8172 = vshrl.u32 %v8171, 7
    %v8173 = vsub.s32 %v8170, %v8172
    %v8174 = vrot.slane %v8158, %v8173
    %v8176 = vunpack.c.l.s4 1966171168
    %v8177 = vunpack.c.0.s8 %v8176
    %v8178 = vlaneseq
    %v8179 = vshrl.u32 %v8178, 7
    %v8180 = vsub.s32 %v8177, %v8179
    %v8181 = vrot.slane %v8159, %v8180
    %v8183 = vunpack.c.l.s4 1966171168
    %v8184 = vunpack.c.0.s8 %v8183
    %v8185 = vlaneseq
    %v8186 = vshrl.u32 %v8185, 7
    %v8187 = vsub.s32 %v8184, %v8186
    %v8188 = vrot.slane %v8160, %v8187
    %v8189 = vcombine.high %v8167, %v8167
    %v8190 = vcombine.high %v8181, %v8181
    %v8197 = vsel %vm4621, %v8167, 0.0
    %v8198 = vsel %vm4621, %v8181, 0.0
    %v8199 = vadd.f32 %v8197, %v8198
    %v8200 = vsel %vm4621, %v8189, 0.0
    %v8201 = vadd.f32 %v8199, %v8200
    %v8202 = vsel %vm4621, %v8190, 0.0
    %v8203 = vadd.f32 %v8201, %v8202
    %v8204 = vsel %vm4621, %v8174, 0.0
    %v8205 = vadd.f32 %v8203, %v8204
    %v8206 = vsel %vm4621, %v8188, 0.0
    %v8207 = vadd.f32 %v8205, %v8206
    %8208 = vadd.xlane.f32.xlu0 %v8207
    %v8209 = vpop.xlane.xlu0 %8208
    %v8210 = vmul.f32 %v8209, %v4635
    %v8211 = vadd.f32 %v8210, 1e-05
    %v8212 = vrsqrt.pop %v8211
    %v8214 = vlaneseq
    %v8215 = vshrl.u32 %v8214, 7
    %v8216 = vsub.s32 0, %v8215
    %v8217 = vrot.slane %v8212, %v8216
    %v8218 = vlaneseq
    %v8219 = vshrl.u32 %v8218, 7
    %v8220 = vsub.s32 1, %v8219
    %v8221 = vrot.slane %v8212, %v8220
    %v8224 = vmul.f32 %v8137, %v8217
    %v8225 = vmul.f32 %v8138, %v8221
    %v8226 = vlaneseq
    %v8227 = vshrl.u32 %v8226, 7
    %v8228 = vsub.s32 6, %v8227
    %v8229 = vrot.slane %v115, %v8228
    %v8230 = vlaneseq
    %v8231 = vshrl.u32 %v8230, 7
    %v8232 = vsub.s32 6, %v8231
    %v8233 = vrot.slane %v116, %v8232
    %v8234 = vlaneseq
    %v8235 = vshrl.u32 %v8234, 7
    %v8236 = vsub.s32 6, %v8235
    %v8237 = vrot.slane %v117, %v8236
    %v8238 = vlaneseq
    %v8239 = vshrl.u32 %v8238, 7
    %v8240 = vsub.s32 6, %v8239
    %v8241 = vrot.slane %v118, %v8240
    %v8242 = vlaneseq
    %v8243 = vshrl.u32 %v8242, 7
    %v8244 = vsub.s32 6, %v8243
    %v8245 = vrot.slane %v119, %v8244
    %v8246 = vlaneseq
    %v8247 = vshrl.u32 %v8246, 7
    %v8248 = vsub.s32 6, %v8247
    %v8249 = vrot.slane %v120, %v8248
    %v8256 = vcombine.low %v8229, %v8233
    %v8257 = vcombine.low %v8237, %v8241
    %v8258 = vcombine.low %v8245, %v8249
    %v8260 = vunpack.c.l.s4 1966171168
    %v8261 = vunpack.c.0.s8 %v8260
    %v8262 = vlaneseq
    %v8263 = vshrl.u32 %v8262, 7
    %v8264 = vsub.s32 %v8261, %v8263
    %v8265 = vrot.slane %v8256, %v8264
    %v8267 = vunpack.c.l.s4 1966171168
    %v8268 = vunpack.c.0.s8 %v8267
    %v8269 = vlaneseq
    %v8270 = vshrl.u32 %v8269, 7
    %v8271 = vsub.s32 %v8268, %v8270
    %v8272 = vrot.slane %v8257, %v8271
    %v8274 = vunpack.c.l.s4 1966171168
    %v8275 = vunpack.c.0.s8 %v8274
    %v8276 = vlaneseq
    %v8277 = vshrl.u32 %v8276, 7
    %v8278 = vsub.s32 %v8275, %v8277
    %v8279 = vrot.slane %v8258, %v8278
    %v8280 = vcombine.low %v8265, %v8272
    %v8281 = vcombine.high %v8265, %v8272
    %v8282 = vcombine.high %v8279, %v8279
    %v8284 = vunpack.c.l.s4 1966171168
    %v8285 = vunpack.c.0.s8 %v8284
    %v8286 = vlaneseq
    %v8287 = vshrl.u32 %v8286, 7
    %v8288 = vsub.s32 %v8285, %v8287
    %v8289 = vrot.slane %v8280, %v8288
    %v8291 = vunpack.c.l.s4 1966171168
    %v8292 = vunpack.c.0.s8 %v8291
    %v8293 = vlaneseq
    %v8294 = vshrl.u32 %v8293, 7
    %v8295 = vsub.s32 %v8292, %v8294
    %v8296 = vrot.slane %v8281, %v8295
    %v8298 = vunpack.c.l.s4 1966171168
    %v8299 = vunpack.c.0.s8 %v8298
    %v8300 = vlaneseq
    %v8301 = vshrl.u32 %v8300, 7
    %v8302 = vsub.s32 %v8299, %v8301
    %v8303 = vrot.slane %v8279, %v8302
    %v8305 = vunpack.c.l.s4 1966171168
    %v8306 = vunpack.c.0.s8 %v8305
    %v8307 = vlaneseq
    %v8308 = vshrl.u32 %v8307, 7
    %v8309 = vsub.s32 %v8306, %v8308
    %v8310 = vrot.slane %v8282, %v8309
    %v8311 = vcombine.low %v8289, %v8303
    %v8312 = vcombine.low %v8296, %v8310
    %v8315 = vmul.f32 %v8224, %v8311
    %v8316 = vmul.f32 %v8225, %v8312
    %v8317 = vlaneseq
    %v8318 = vshrl.u32 %v8317, 7
    %v8319 = vsub.s32 7, %v8318
    %v8320 = vrot.slane %v115, %v8319
    %v8321 = vlaneseq
    %v8322 = vshrl.u32 %v8321, 7
    %v8323 = vsub.s32 7, %v8322
    %v8324 = vrot.slane %v116, %v8323
    %v8325 = vlaneseq
    %v8326 = vshrl.u32 %v8325, 7
    %v8327 = vsub.s32 7, %v8326
    %v8328 = vrot.slane %v117, %v8327
    %v8329 = vlaneseq
    %v8330 = vshrl.u32 %v8329, 7
    %v8331 = vsub.s32 7, %v8330
    %v8332 = vrot.slane %v118, %v8331
    %v8333 = vlaneseq
    %v8334 = vshrl.u32 %v8333, 7
    %v8335 = vsub.s32 7, %v8334
    %v8336 = vrot.slane %v119, %v8335
    %v8337 = vlaneseq
    %v8338 = vshrl.u32 %v8337, 7
    %v8339 = vsub.s32 7, %v8338
    %v8340 = vrot.slane %v120, %v8339
    %v8347 = vcombine.low %v8320, %v8324
    %v8348 = vcombine.low %v8328, %v8332
    %v8349 = vcombine.low %v8336, %v8340
    %v8351 = vunpack.c.l.s4 1966171168
    %v8352 = vunpack.c.0.s8 %v8351
    %v8353 = vlaneseq
    %v8354 = vshrl.u32 %v8353, 7
    %v8355 = vsub.s32 %v8352, %v8354
    %v8356 = vrot.slane %v8347, %v8355
    %v8358 = vunpack.c.l.s4 1966171168
    %v8359 = vunpack.c.0.s8 %v8358
    %v8360 = vlaneseq
    %v8361 = vshrl.u32 %v8360, 7
    %v8362 = vsub.s32 %v8359, %v8361
    %v8363 = vrot.slane %v8348, %v8362
    %v8365 = vunpack.c.l.s4 1966171168
    %v8366 = vunpack.c.0.s8 %v8365
    %v8367 = vlaneseq
    %v8368 = vshrl.u32 %v8367, 7
    %v8369 = vsub.s32 %v8366, %v8368
    %v8370 = vrot.slane %v8349, %v8369
    %v8371 = vcombine.low %v8356, %v8363
    %v8372 = vcombine.high %v8356, %v8363
    %v8373 = vcombine.high %v8370, %v8370
    %v8375 = vunpack.c.l.s4 1966171168
    %v8376 = vunpack.c.0.s8 %v8375
    %v8377 = vlaneseq
    %v8378 = vshrl.u32 %v8377, 7
    %v8379 = vsub.s32 %v8376, %v8378
    %v8380 = vrot.slane %v8371, %v8379
    %v8382 = vunpack.c.l.s4 1966171168
    %v8383 = vunpack.c.0.s8 %v8382
    %v8384 = vlaneseq
    %v8385 = vshrl.u32 %v8384, 7
    %v8386 = vsub.s32 %v8383, %v8385
    %v8387 = vrot.slane %v8372, %v8386
    %v8389 = vunpack.c.l.s4 1966171168
    %v8390 = vunpack.c.0.s8 %v8389
    %v8391 = vlaneseq
    %v8392 = vshrl.u32 %v8391, 7
    %v8393 = vsub.s32 %v8390, %v8392
    %v8394 = vrot.slane %v8370, %v8393
    %v8396 = vunpack.c.l.s4 1966171168
    %v8397 = vunpack.c.0.s8 %v8396
    %v8398 = vlaneseq
    %v8399 = vshrl.u32 %v8398, 7
    %v8400 = vsub.s32 %v8397, %v8399
    %v8401 = vrot.slane %v8373, %v8400
    %v8402 = vcombine.low %v8380, %v8394
    %v8403 = vcombine.low %v8387, %v8401
    %v8406 = vadd.f32 %v8315, %v8402
    %v8407 = vadd.f32 %v8316, %v8403
    %v8410 = vcombine.low %v8406, %v8407
    %v8411 = vcombine.high %v8406, %v8407
    %v8413 = vunpack.c.l.s4 1966171168
    %v8414 = vunpack.c.0.s8 %v8413
    %v8415 = vlaneseq
    %v8416 = vshrl.u32 %v8415, 7
    %v8417 = vsub.s32 %v8414, %v8416
    %v8418 = vrot.slane %v8410, %v8417
    %v8420 = vunpack.c.l.s4 1966171168
    %v8421 = vunpack.c.0.s8 %v8420
    %v8422 = vlaneseq
    %v8423 = vshrl.u32 %v8422, 7
    %v8424 = vsub.s32 %v8421, %v8423
    %v8425 = vrot.slane %v8411, %v8424
    %v8426 = vcombine.high %v8418, %v8418
    %v8427 = vcombine.high %v8425, %v8425
    %v8429 = vunpack.c.l.s4 1966171168
    %v8430 = vunpack.c.0.s8 %v8429
    %v8431 = vlaneseq
    %v8432 = vshrl.u32 %v8431, 7
    %v8433 = vsub.s32 %v8430, %v8432
    %v8434 = vrot.slane %v8418, %v8433
    %v8436 = vunpack.c.l.s4 1966171168
    %v8437 = vunpack.c.0.s8 %v8436
    %v8438 = vlaneseq
    %v8439 = vshrl.u32 %v8438, 7
    %v8440 = vsub.s32 %v8437, %v8439
    %v8441 = vrot.slane %v8425, %v8440
    %v8443 = vunpack.c.l.s4 1966171168
    %v8444 = vunpack.c.0.s8 %v8443
    %v8445 = vlaneseq
    %v8446 = vshrl.u32 %v8445, 7
    %v8447 = vsub.s32 %v8444, %v8446
    %v8448 = vrot.slane %v8426, %v8447
    %v8450 = vunpack.c.l.s4 1966171168
    %v8451 = vunpack.c.0.s8 %v8450
    %v8452 = vlaneseq
    %v8453 = vshrl.u32 %v8452, 7
    %v8454 = vsub.s32 %v8451, %v8453
    %v8455 = vrot.slane %v8427, %v8454
    %v8456 = vcombine.high %v8434, %v8434
    %v8457 = vcombine.high %v8448, %v8448
    %v8464 = vsel %vm4621, %v8434, 0.0
    %v8465 = vsel %vm4621, %v8448, 0.0
    %v8466 = vadd.f32 %v8464, %v8465
    %v8467 = vsel %vm4621, %v8456, 0.0
    %v8468 = vadd.f32 %v8466, %v8467
    %v8469 = vsel %vm4621, %v8457, 0.0
    %v8470 = vadd.f32 %v8468, %v8469
    %v8471 = vsel %vm4621, %v8441, 0.0
    %v8472 = vadd.f32 %v8470, %v8471
    %v8473 = vsel %vm4621, %v8455, 0.0
    %v8474 = vadd.f32 %v8472, %v8473
    %8475 = vadd.xlane.f32.xlu0 %v8474
    %v8476 = vpop.xlane.xlu0 %8475
    %v8477 = vmul.f32 %v8476, %v4635
    %v8479 = vlaneseq
    %v8480 = vshrl.u32 %v8479, 7
    %v8481 = vsub.s32 0, %v8480
    %v8482 = vrot.slane %v8477, %v8481
    %v8483 = vlaneseq
    %v8484 = vshrl.u32 %v8483, 7
    %v8485 = vsub.s32 1, %v8484
    %v8486 = vrot.slane %v8477, %v8485
    %v8489 = vsub.f32 %v8406, %v8482
    %v8490 = vsub.f32 %v8407, %v8486
    %v8491 = vmul.f32 %v8489, %v8489
    %v8492 = vmul.f32 %v8490, %v8490
    %v8495 = vcombine.low %v8491, %v8492
    %v8496 = vcombine.high %v8491, %v8492
    %v8498 = vunpack.c.l.s4 1966171168
    %v8499 = vunpack.c.0.s8 %v8498
    %v8500 = vlaneseq
    %v8501 = vshrl.u32 %v8500, 7
    %v8502 = vsub.s32 %v8499, %v8501
    %v8503 = vrot.slane %v8495, %v8502
    %v8505 = vunpack.c.l.s4 1966171168
    %v8506 = vunpack.c.0.s8 %v8505
    %v8507 = vlaneseq
    %v8508 = vshrl.u32 %v8507, 7
    %v8509 = vsub.s32 %v8506, %v8508
    %v8510 = vrot.slane %v8496, %v8509
    %v8511 = vcombine.high %v8503, %v8503
    %v8512 = vcombine.high %v8510, %v8510
    %v8514 = vunpack.c.l.s4 1966171168
    %v8515 = vunpack.c.0.s8 %v8514
    %v8516 = vlaneseq
    %v8517 = vshrl.u32 %v8516, 7
    %v8518 = vsub.s32 %v8515, %v8517
    %v8519 = vrot.slane %v8503, %v8518
    %v8521 = vunpack.c.l.s4 1966171168
    %v8522 = vunpack.c.0.s8 %v8521
    %v8523 = vlaneseq
    %v8524 = vshrl.u32 %v8523, 7
    %v8525 = vsub.s32 %v8522, %v8524
    %v8526 = vrot.slane %v8510, %v8525
    %v8528 = vunpack.c.l.s4 1966171168
    %v8529 = vunpack.c.0.s8 %v8528
    %v8530 = vlaneseq
    %v8531 = vshrl.u32 %v8530, 7
    %v8532 = vsub.s32 %v8529, %v8531
    %v8533 = vrot.slane %v8511, %v8532
    %v8535 = vunpack.c.l.s4 1966171168
    %v8536 = vunpack.c.0.s8 %v8535
    %v8537 = vlaneseq
    %v8538 = vshrl.u32 %v8537, 7
    %v8539 = vsub.s32 %v8536, %v8538
    %v8540 = vrot.slane %v8512, %v8539
    %v8541 = vcombine.high %v8519, %v8519
    %v8542 = vcombine.high %v8533, %v8533
    %v8549 = vsel %vm4621, %v8519, 0.0
    %v8550 = vsel %vm4621, %v8533, 0.0
    %v8551 = vadd.f32 %v8549, %v8550
    %v8552 = vsel %vm4621, %v8541, 0.0
    %v8553 = vadd.f32 %v8551, %v8552
    %v8554 = vsel %vm4621, %v8542, 0.0
    %v8555 = vadd.f32 %v8553, %v8554
    %v8556 = vsel %vm4621, %v8526, 0.0
    %v8557 = vadd.f32 %v8555, %v8556
    %v8558 = vsel %vm4621, %v8540, 0.0
    %v8559 = vadd.f32 %v8557, %v8558
    %8560 = vadd.xlane.f32.xlu0 %v8559
    %v8561 = vpop.xlane.xlu0 %8560
    %v8562 = vmul.f32 %v8561, %v4635
    %v8563 = vadd.f32 %v8562, 1e-05
    %v8564 = vrsqrt.pop %v8563
    %v8566 = vlaneseq
    %v8567 = vshrl.u32 %v8566, 7
    %v8568 = vsub.s32 0, %v8567
    %v8569 = vrot.slane %v8564, %v8568
    %v8570 = vlaneseq
    %v8571 = vshrl.u32 %v8570, 7
    %v8572 = vsub.s32 1, %v8571
    %v8573 = vrot.slane %v8564, %v8572
    %v8576 = vmul.f32 %v8489, %v8569
    %v8577 = vmul.f32 %v8490, %v8573
    %v8578 = vlaneseq
    %v8579 = vshrl.u32 %v8578, 7
    %v8580 = vsub.s32 0, %v8579
    %v8581 = vrot.slane %v121, %v8580
    %v8582 = vlaneseq
    %v8583 = vshrl.u32 %v8582, 7
    %v8584 = vsub.s32 0, %v8583
    %v8585 = vrot.slane %v122, %v8584
    %v8586 = vlaneseq
    %v8587 = vshrl.u32 %v8586, 7
    %v8588 = vsub.s32 0, %v8587
    %v8589 = vrot.slane %v123, %v8588
    %v8590 = vlaneseq
    %v8591 = vshrl.u32 %v8590, 7
    %v8592 = vsub.s32 0, %v8591
    %v8593 = vrot.slane %v124, %v8592
    %v8594 = vlaneseq
    %v8595 = vshrl.u32 %v8594, 7
    %v8596 = vsub.s32 0, %v8595
    %v8597 = vrot.slane %v125, %v8596
    %v8598 = vlaneseq
    %v8599 = vshrl.u32 %v8598, 7
    %v8600 = vsub.s32 0, %v8599
    %v8601 = vrot.slane %v126, %v8600
    %v8608 = vcombine.low %v8581, %v8585
    %v8609 = vcombine.low %v8589, %v8593
    %v8610 = vcombine.low %v8597, %v8601
    %v8612 = vunpack.c.l.s4 1966171168
    %v8613 = vunpack.c.0.s8 %v8612
    %v8614 = vlaneseq
    %v8615 = vshrl.u32 %v8614, 7
    %v8616 = vsub.s32 %v8613, %v8615
    %v8617 = vrot.slane %v8608, %v8616
    %v8619 = vunpack.c.l.s4 1966171168
    %v8620 = vunpack.c.0.s8 %v8619
    %v8621 = vlaneseq
    %v8622 = vshrl.u32 %v8621, 7
    %v8623 = vsub.s32 %v8620, %v8622
    %v8624 = vrot.slane %v8609, %v8623
    %v8626 = vunpack.c.l.s4 1966171168
    %v8627 = vunpack.c.0.s8 %v8626
    %v8628 = vlaneseq
    %v8629 = vshrl.u32 %v8628, 7
    %v8630 = vsub.s32 %v8627, %v8629
    %v8631 = vrot.slane %v8610, %v8630
    %v8632 = vcombine.low %v8617, %v8624
    %v8633 = vcombine.high %v8617, %v8624
    %v8634 = vcombine.high %v8631, %v8631
    %v8636 = vunpack.c.l.s4 1966171168
    %v8637 = vunpack.c.0.s8 %v8636
    %v8638 = vlaneseq
    %v8639 = vshrl.u32 %v8638, 7
    %v8640 = vsub.s32 %v8637, %v8639
    %v8641 = vrot.slane %v8632, %v8640
    %v8643 = vunpack.c.l.s4 1966171168
    %v8644 = vunpack.c.0.s8 %v8643
    %v8645 = vlaneseq
    %v8646 = vshrl.u32 %v8645, 7
    %v8647 = vsub.s32 %v8644, %v8646
    %v8648 = vrot.slane %v8633, %v8647
    %v8650 = vunpack.c.l.s4 1966171168
    %v8651 = vunpack.c.0.s8 %v8650
    %v8652 = vlaneseq
    %v8653 = vshrl.u32 %v8652, 7
    %v8654 = vsub.s32 %v8651, %v8653
    %v8655 = vrot.slane %v8631, %v8654
    %v8657 = vunpack.c.l.s4 1966171168
    %v8658 = vunpack.c.0.s8 %v8657
    %v8659 = vlaneseq
    %v8660 = vshrl.u32 %v8659, 7
    %v8661 = vsub.s32 %v8658, %v8660
    %v8662 = vrot.slane %v8634, %v8661
    %v8663 = vcombine.low %v8641, %v8655
    %v8664 = vcombine.low %v8648, %v8662
    %v8667 = vmul.f32 %v8576, %v8663
    %v8668 = vmul.f32 %v8577, %v8664
    %v8669 = vlaneseq
    %v8670 = vshrl.u32 %v8669, 7
    %v8671 = vsub.s32 1, %v8670
    %v8672 = vrot.slane %v121, %v8671
    %v8673 = vlaneseq
    %v8674 = vshrl.u32 %v8673, 7
    %v8675 = vsub.s32 1, %v8674
    %v8676 = vrot.slane %v122, %v8675
    %v8677 = vlaneseq
    %v8678 = vshrl.u32 %v8677, 7
    %v8679 = vsub.s32 1, %v8678
    %v8680 = vrot.slane %v123, %v8679
    %v8681 = vlaneseq
    %v8682 = vshrl.u32 %v8681, 7
    %v8683 = vsub.s32 1, %v8682
    %v8684 = vrot.slane %v124, %v8683
    %v8685 = vlaneseq
    %v8686 = vshrl.u32 %v8685, 7
    %v8687 = vsub.s32 1, %v8686
    %v8688 = vrot.slane %v125, %v8687
    %v8689 = vlaneseq
    %v8690 = vshrl.u32 %v8689, 7
    %v8691 = vsub.s32 1, %v8690
    %v8692 = vrot.slane %v126, %v8691
    %v8699 = vcombine.low %v8672, %v8676
    %v8700 = vcombine.low %v8680, %v8684
    %v8701 = vcombine.low %v8688, %v8692
    %v8703 = vunpack.c.l.s4 1966171168
    %v8704 = vunpack.c.0.s8 %v8703
    %v8705 = vlaneseq
    %v8706 = vshrl.u32 %v8705, 7
    %v8707 = vsub.s32 %v8704, %v8706
    %v8708 = vrot.slane %v8699, %v8707
    %v8710 = vunpack.c.l.s4 1966171168
    %v8711 = vunpack.c.0.s8 %v8710
    %v8712 = vlaneseq
    %v8713 = vshrl.u32 %v8712, 7
    %v8714 = vsub.s32 %v8711, %v8713
    %v8715 = vrot.slane %v8700, %v8714
    %v8717 = vunpack.c.l.s4 1966171168
    %v8718 = vunpack.c.0.s8 %v8717
    %v8719 = vlaneseq
    %v8720 = vshrl.u32 %v8719, 7
    %v8721 = vsub.s32 %v8718, %v8720
    %v8722 = vrot.slane %v8701, %v8721
    %v8723 = vcombine.low %v8708, %v8715
    %v8724 = vcombine.high %v8708, %v8715
    %v8725 = vcombine.high %v8722, %v8722
    %v8727 = vunpack.c.l.s4 1966171168
    %v8728 = vunpack.c.0.s8 %v8727
    %v8729 = vlaneseq
    %v8730 = vshrl.u32 %v8729, 7
    %v8731 = vsub.s32 %v8728, %v8730
    %v8732 = vrot.slane %v8723, %v8731
    %v8734 = vunpack.c.l.s4 1966171168
    %v8735 = vunpack.c.0.s8 %v8734
    %v8736 = vlaneseq
    %v8737 = vshrl.u32 %v8736, 7
    %v8738 = vsub.s32 %v8735, %v8737
    %v8739 = vrot.slane %v8724, %v8738
    %v8741 = vunpack.c.l.s4 1966171168
    %v8742 = vunpack.c.0.s8 %v8741
    %v8743 = vlaneseq
    %v8744 = vshrl.u32 %v8743, 7
    %v8745 = vsub.s32 %v8742, %v8744
    %v8746 = vrot.slane %v8722, %v8745
    %v8748 = vunpack.c.l.s4 1966171168
    %v8749 = vunpack.c.0.s8 %v8748
    %v8750 = vlaneseq
    %v8751 = vshrl.u32 %v8750, 7
    %v8752 = vsub.s32 %v8749, %v8751
    %v8753 = vrot.slane %v8725, %v8752
    %v8754 = vcombine.low %v8732, %v8746
    %v8755 = vcombine.low %v8739, %v8753
    %v8758 = vadd.f32 %v8667, %v8754
    %v8759 = vadd.f32 %v8668, %v8755
    %v8762 = vlaneseq
    %v8763 = vshrl.u32 %v8762, 7
    %v8764 = vsub.s32 0, %v8763
    %v8765 = vrot.slane %v8758, %v8764
    %v8766 = vlaneseq
    %v8767 = vshrl.u32 %v8766, 7
    %v8768 = vsub.s32 1, %v8767
    %v8769 = vrot.slane %v8758, %v8768
    %v8770 = vlaneseq
    %v8771 = vshrl.u32 %v8770, 7
    %v8772 = vsub.s32 2, %v8771
    %v8773 = vrot.slane %v8758, %v8772
    %v8774 = vlaneseq
    %v8775 = vshrl.u32 %v8774, 7
    %v8776 = vsub.s32 3, %v8775
    %v8777 = vrot.slane %v8758, %v8776
    %v8778 = vlaneseq
    %v8779 = vshrl.u32 %v8778, 7
    %v8780 = vsub.s32 4, %v8779
    %v8781 = vrot.slane %v8758, %v8780
    %v8782 = vlaneseq
    %v8783 = vshrl.u32 %v8782, 7
    %v8784 = vsub.s32 5, %v8783
    %v8785 = vrot.slane %v8758, %v8784
    %v8786 = vlaneseq
    %v8787 = vshrl.u32 %v8786, 7
    %v8788 = vsub.s32 0, %v8787
    %v8789 = vrot.slane %v8759, %v8788
    %v8790 = vlaneseq
    %v8791 = vshrl.u32 %v8790, 7
    %v8792 = vsub.s32 1, %v8791
    %v8793 = vrot.slane %v8759, %v8792
    %v8794 = vlaneseq
    %v8795 = vshrl.u32 %v8794, 7
    %v8796 = vsub.s32 2, %v8795
    %v8797 = vrot.slane %v8759, %v8796
    %v8798 = vlaneseq
    %v8799 = vshrl.u32 %v8798, 7
    %v8800 = vsub.s32 3, %v8799
    %v8801 = vrot.slane %v8759, %v8800
    %v8802 = vlaneseq
    %v8803 = vshrl.u32 %v8802, 7
    %v8804 = vsub.s32 4, %v8803
    %v8805 = vrot.slane %v8759, %v8804
    %v8806 = vlaneseq
    %v8807 = vshrl.u32 %v8806, 7
    %v8808 = vsub.s32 5, %v8807
    %v8809 = vrot.slane %v8759, %v8808
    %v8822 = vpack.c.bf16 %v8765, %v8765
    %v8823 = vpack.c.bf16 %v8769, %v8769
    %v8824 = vpack.c.bf16 %v8773, %v8773
    %v8825 = vpack.c.bf16 %v8777, %v8777
    %v8826 = vpack.c.bf16 %v8781, %v8781
    %v8827 = vpack.c.bf16 %v8785, %v8785
    %v8828 = vpack.c.bf16 %v8789, %v8789
    %v8829 = vpack.c.bf16 %v8793, %v8793
    %v8830 = vpack.c.bf16 %v8797, %v8797
    %v8831 = vpack.c.bf16 %v8801, %v8801
    %v8832 = vpack.c.bf16 %v8805, %v8805
    %v8833 = vpack.c.bf16 %v8809, %v8809
    %v8834 = vld [vmem:[#allocation10] sm:$0xff]
    %v8835 = vld [vmem:[#allocation10 + $0x8] sm:$0xff]
    %v8836 = vld [vmem:[#allocation10 + $0x10] sm:$0xff]
    %v8837 = vld [vmem:[#allocation10 + $0x18] sm:$0xff]
    %v8838 = vld [vmem:[#allocation10 + $0x20] sm:$0xff]
    %v8839 = vld [vmem:[#allocation10 + $0x28] sm:$0xff]
    %v8840 = vld [vmem:[#allocation10 + $0x30] sm:$0xff]
    %v8841 = vld [vmem:[#allocation10 + $0x38] sm:$0xff]
    %v8842 = vld [vmem:[#allocation10 + $0x40] sm:$0xff]
    %v8843 = vld [vmem:[#allocation10 + $0x48] sm:$0xff]
    %v8844 = vld [vmem:[#allocation10 + $0x50] sm:$0xff]
    %v8845 = vld [vmem:[#allocation10 + $0x58] sm:$0xff]
    %v8846 = vld [vmem:[#allocation10 + $0x60] sm:$0xff]
    %v8847 = vld [vmem:[#allocation10 + $0x68] sm:$0xff]
    %v8848 = vld [vmem:[#allocation10 + $0x70] sm:$0xff]
    %v8849 = vld [vmem:[#allocation10 + $0x78] sm:$0xff]
    %v8850 = vld [vmem:[#allocation10 + $0x80] sm:$0xff]
    %v8851 = vld [vmem:[#allocation10 + $0x88] sm:$0xff]
    %v8852 = vld [vmem:[#allocation10 + $0x90] sm:$0xff]
    %v8853 = vld [vmem:[#allocation10 + $0x98] sm:$0xff]
    %v8854 = vld [vmem:[#allocation10 + $0xa0] sm:$0xff]
    %v8855 = vld [vmem:[#allocation10 + $0xa8] sm:$0xff]
    %v8856 = vld [vmem:[#allocation10 + $0xb0] sm:$0xff]
    %v8857 = vld [vmem:[#allocation10 + $0xb8] sm:$0xff]
    %v8858 = vld [vmem:[#allocation10 + $0xc0] sm:$0xff]
    %v8859 = vld [vmem:[#allocation10 + $0xc8] sm:$0xff]
    %v8860 = vld [vmem:[#allocation10 + $0xd0] sm:$0xff]
    %v8861 = vld [vmem:[#allocation10 + $0xd8] sm:$0xff]
    %v8862 = vld [vmem:[#allocation10 + $0xe0] sm:$0xff]
    %v8863 = vld [vmem:[#allocation10 + $0xe8] sm:$0xff]
    %v8864 = vld [vmem:[#allocation10 + $0xf0] sm:$0xff]
    %v8865 = vld [vmem:[#allocation10 + $0xf8] sm:$0xff]
    %v8866 = vld [vmem:[#allocation10 + $0x100] sm:$0xff]
    %v8867 = vld [vmem:[#allocation10 + $0x108] sm:$0xff]
    %v8868 = vld [vmem:[#allocation10 + $0x110] sm:$0xff]
    %v8869 = vld [vmem:[#allocation10 + $0x118] sm:$0xff]
    %v8870 = vld [vmem:[#allocation10 + $0x120] sm:$0xff]
    %v8871 = vld [vmem:[#allocation10 + $0x128] sm:$0xff]
    %v8872 = vld [vmem:[#allocation10 + $0x130] sm:$0xff]
    %v8873 = vld [vmem:[#allocation10 + $0x138] sm:$0xff]
    %v8874 = vld [vmem:[#allocation10 + $0x140] sm:$0xff]
    %v8875 = vld [vmem:[#allocation10 + $0x148] sm:$0xff]
    %v8876 = vld [vmem:[#allocation10 + $0x150] sm:$0xff]
    %v8877 = vld [vmem:[#allocation10 + $0x158] sm:$0xff]
    %v8878 = vld [vmem:[#allocation10 + $0x160] sm:$0xff]
    %v8879 = vld [vmem:[#allocation10 + $0x168] sm:$0xff]
    %v8880 = vld [vmem:[#allocation10 + $0x170] sm:$0xff]
    %v8881 = vld [vmem:[#allocation10 + $0x178] sm:$0xff]
    %v8882 = vld [vmem:[#allocation10 + $0x180] sm:$0xff]
    %v8883 = vld [vmem:[#allocation10 + $0x188] sm:$0xff]
    %v8884 = vld [vmem:[#allocation10 + $0x190] sm:$0xff]
    %v8885 = vld [vmem:[#allocation10 + $0x198] sm:$0xff]
    %v8886 = vld [vmem:[#allocation10 + $0x1a0] sm:$0xff]
    %v8887 = vld [vmem:[#allocation10 + $0x1a8] sm:$0xff]
    %v8888 = vld [vmem:[#allocation10 + $0x1b0] sm:$0xff]
    %v8889 = vld [vmem:[#allocation10 + $0x1b8] sm:$0xff]
    %v8890 = vld [vmem:[#allocation10 + $0x1c0] sm:$0xff]
    %v8891 = vld [vmem:[#allocation10 + $0x1c8] sm:$0xff]
    %v8892 = vld [vmem:[#allocation10 + $0x1d0] sm:$0xff]
    %v8893 = vld [vmem:[#allocation10 + $0x1d8] sm:$0xff]
    %v8894 = vld [vmem:[#allocation10 + $0x1e0] sm:$0xff]
    %v8895 = vld [vmem:[#allocation10 + $0x1e8] sm:$0xff]
    %v8896 = vld [vmem:[#allocation10 + $0x1f0] sm:$0xff]
    %v8897 = vld [vmem:[#allocation10 + $0x1f8] sm:$0xff]
    %v8898 = vld [vmem:[#allocation10 + $0x200] sm:$0xff]
    %v8899 = vld [vmem:[#allocation10 + $0x208] sm:$0xff]
    %v8900 = vld [vmem:[#allocation10 + $0x210] sm:$0xff]
    %v8901 = vld [vmem:[#allocation10 + $0x218] sm:$0xff]
    %v8902 = vld [vmem:[#allocation10 + $0x220] sm:$0xff]
    %v8903 = vld [vmem:[#allocation10 + $0x228] sm:$0xff]
    %v8904 = vld [vmem:[#allocation10 + $0x230] sm:$0xff]
    %v8905 = vld [vmem:[#allocation10 + $0x238] sm:$0xff]
    %v8906 = vld [vmem:[#allocation10 + $0x240] sm:$0xff]
    %v8907 = vld [vmem:[#allocation10 + $0x248] sm:$0xff]
    %v8908 = vld [vmem:[#allocation10 + $0x250] sm:$0xff]
    %v8909 = vld [vmem:[#allocation10 + $0x258] sm:$0xff]
    %v8910 = vld [vmem:[#allocation10 + $0x260] sm:$0xff]
    %v8911 = vld [vmem:[#allocation10 + $0x268] sm:$0xff]
    %v8912 = vld [vmem:[#allocation10 + $0x270] sm:$0xff]
    %v8913 = vld [vmem:[#allocation10 + $0x278] sm:$0xff]
    %v8914 = vld [vmem:[#allocation10 + $0x280] sm:$0xff]
    %v8915 = vld [vmem:[#allocation10 + $0x288] sm:$0xff]
    %v8916 = vld [vmem:[#allocation10 + $0x290] sm:$0xff]
    %v8917 = vld [vmem:[#allocation10 + $0x298] sm:$0xff]
    %v8918 = vld [vmem:[#allocation10 + $0x2a0] sm:$0xff]
    %v8919 = vld [vmem:[#allocation10 + $0x2a8] sm:$0xff]
    %v8920 = vld [vmem:[#allocation10 + $0x2b0] sm:$0xff]
    %v8921 = vld [vmem:[#allocation10 + $0x2b8] sm:$0xff]
    %v8922 = vld [vmem:[#allocation10 + $0x2c0] sm:$0xff]
    %v8923 = vld [vmem:[#allocation10 + $0x2c8] sm:$0xff]
    %v8924 = vld [vmem:[#allocation10 + $0x2d0] sm:$0xff]
    %v8925 = vld [vmem:[#allocation10 + $0x2d8] sm:$0xff]
    %v8926 = vld [vmem:[#allocation10 + $0x2e0] sm:$0xff]
    %v8927 = vld [vmem:[#allocation10 + $0x2e8] sm:$0xff]
    %v8928 = vld [vmem:[#allocation10 + $0x2f0] sm:$0xff]
    %v8929 = vld [vmem:[#allocation10 + $0x2f8] sm:$0xff]
    %v8930 = vlaneseq
    %v8931 = vshrl.u32 %v8930, 7
    %v8932 = vsub.s32 2, %v8931
    %v8933 = vrot.slane %v121, %v8932
    %v8934 = vlaneseq
    %v8935 = vshrl.u32 %v8934, 7
    %v8936 = vsub.s32 2, %v8935
    %v8937 = vrot.slane %v122, %v8936
    %v8950 = vunpack.c.l.b16 %v8822
    %v8951 = vunpack.c.l.b16 %v8823
    %v8952 = vunpack.c.l.b16 %v8824
    %v8953 = vunpack.c.l.b16 %v8825
    %v8954 = vunpack.c.l.b16 %v8826
    %v8955 = vunpack.c.l.b16 %v8827
    %v8956 = vunpack.c.l.b16 %v8828
    %v8957 = vunpack.c.l.b16 %v8829
    %v8958 = vunpack.c.l.b16 %v8830
    %v8959 = vunpack.c.l.b16 %v8831
    %v8960 = vunpack.c.l.b16 %v8832
    %v8961 = vunpack.c.l.b16 %v8833
    %v8962 = vrot.slane %v8956, 7
    %v8963 = vsel %vm538, %v8962, %v8950
    %v8964 = vrot.slane %v8957, 7
    %v8965 = vsel %vm538, %v8964, %v8951
    %v8966 = vrot.slane %v8958, 7
    %v8967 = vsel %vm538, %v8966, %v8952
    %v8968 = vrot.slane %v8959, 7
    %v8969 = vsel %vm538, %v8968, %v8953
    %v8970 = vrot.slane %v8960, 7
    %v8971 = vsel %vm538, %v8970, %v8954
    %v8972 = vrot.slane %v8961, 7
    %v8973 = vsel %vm538, %v8972, %v8955
    %v8974 = vpack.c.b16 %v8963, %v8963
    %v8975 = vpack.c.b16 %v8965, %v8965
    %v8976 = vpack.c.b16 %v8967, %v8967
    %v8977 = vpack.c.b16 %v8969, %v8969
    %v8978 = vpack.c.b16 %v8971, %v8971
    %v8979 = vpack.c.b16 %v8973, %v8973
    %v9082 = vunpack.c.l.b16 %v8834
    %v9083 = vunpack.c.h.b16 %v8834
    %v9084 = vunpack.c.l.b16 %v8835
    %v9085 = vunpack.c.h.b16 %v8835
    %v9086 = vunpack.c.l.b16 %v8836
    %v9087 = vunpack.c.h.b16 %v8836
    %v9088 = vunpack.c.l.b16 %v8837
    %v9089 = vunpack.c.h.b16 %v8837
    %v9090 = vunpack.c.l.b16 %v8838
    %v9091 = vunpack.c.h.b16 %v8838
    %v9092 = vunpack.c.l.b16 %v8839
    %v9093 = vunpack.c.h.b16 %v8839
    %v9094 = vunpack.c.l.b16 %v8840
    %v9095 = vunpack.c.h.b16 %v8840
    %v9096 = vunpack.c.l.b16 %v8841
    %v9097 = vunpack.c.h.b16 %v8841
    %v9098 = vunpack.c.l.b16 %v8842
    %v9099 = vunpack.c.h.b16 %v8842
    %v9100 = vunpack.c.l.b16 %v8843
    %v9101 = vunpack.c.h.b16 %v8843
    %v9102 = vunpack.c.l.b16 %v8844
    %v9103 = vunpack.c.h.b16 %v8844
    %v9104 = vunpack.c.l.b16 %v8845
    %v9105 = vunpack.c.h.b16 %v8845
    %v9106 = vunpack.c.l.b16 %v8846
    %v9107 = vunpack.c.h.b16 %v8846
    %v9108 = vunpack.c.l.b16 %v8847
    %v9109 = vunpack.c.h.b16 %v8847
    %v9110 = vunpack.c.l.b16 %v8848
    %v9111 = vunpack.c.h.b16 %v8848
    %v9112 = vunpack.c.l.b16 %v8849
    %v9113 = vunpack.c.h.b16 %v8849
    %v9114 = vunpack.c.l.b16 %v8850
    %v9115 = vunpack.c.h.b16 %v8850
    %v9116 = vunpack.c.l.b16 %v8851
    %v9117 = vunpack.c.h.b16 %v8851
    %v9118 = vunpack.c.l.b16 %v8852
    %v9119 = vunpack.c.h.b16 %v8852
    %v9120 = vunpack.c.l.b16 %v8853
    %v9121 = vunpack.c.h.b16 %v8853
    %v9122 = vunpack.c.l.b16 %v8854
    %v9123 = vunpack.c.h.b16 %v8854
    %v9124 = vunpack.c.l.b16 %v8855
    %v9125 = vunpack.c.h.b16 %v8855
    %v9126 = vunpack.c.l.b16 %v8856
    %v9127 = vunpack.c.h.b16 %v8856
    %v9128 = vunpack.c.l.b16 %v8857
    %v9129 = vunpack.c.h.b16 %v8857
    %v9130 = vunpack.c.l.b16 %v8858
    %v9131 = vunpack.c.h.b16 %v8858
    %v9132 = vunpack.c.l.b16 %v8859
    %v9133 = vunpack.c.h.b16 %v8859
    %v9134 = vunpack.c.l.b16 %v8860
    %v9135 = vunpack.c.h.b16 %v8860
    %v9136 = vunpack.c.l.b16 %v8861
    %v9137 = vunpack.c.h.b16 %v8861
    %v9138 = vunpack.c.l.b16 %v8862
    %v9139 = vunpack.c.h.b16 %v8862
    %v9140 = vunpack.c.l.b16 %v8863
    %v9141 = vunpack.c.h.b16 %v8863
    %v9142 = vunpack.c.l.b16 %v8864
    %v9143 = vunpack.c.h.b16 %v8864
    %v9144 = vunpack.c.l.b16 %v8865
    %v9145 = vunpack.c.h.b16 %v8865
    %v9146 = vunpack.c.l.b16 %v8866
    %v9147 = vunpack.c.h.b16 %v8866
    %v9148 = vunpack.c.l.b16 %v8867
    %v9149 = vunpack.c.h.b16 %v8867
    %v9150 = vunpack.c.l.b16 %v8868
    %v9151 = vunpack.c.h.b16 %v8868
    %v9152 = vunpack.c.l.b16 %v8869
    %v9153 = vunpack.c.h.b16 %v8869
    %v9154 = vunpack.c.l.b16 %v8870
    %v9155 = vunpack.c.h.b16 %v8870
    %v9156 = vunpack.c.l.b16 %v8871
    %v9157 = vunpack.c.h.b16 %v8871
    %v9158 = vunpack.c.l.b16 %v8872
    %v9159 = vunpack.c.h.b16 %v8872
    %v9160 = vunpack.c.l.b16 %v8873
    %v9161 = vunpack.c.h.b16 %v8873
    %v9162 = vunpack.c.l.b16 %v8874
    %v9163 = vunpack.c.h.b16 %v8874
    %v9164 = vunpack.c.l.b16 %v8875
    %v9165 = vunpack.c.h.b16 %v8875
    %v9166 = vunpack.c.l.b16 %v8876
    %v9167 = vunpack.c.h.b16 %v8876
    %v9168 = vunpack.c.l.b16 %v8877
    %v9169 = vunpack.c.h.b16 %v8877
    %v9170 = vunpack.c.l.b16 %v8878
    %v9171 = vunpack.c.h.b16 %v8878
    %v9172 = vunpack.c.l.b16 %v8879
    %v9173 = vunpack.c.h.b16 %v8879
    %v9174 = vunpack.c.l.b16 %v8880
    %v9175 = vunpack.c.h.b16 %v8880
    %v9176 = vunpack.c.l.b16 %v8881
    %v9177 = vunpack.c.h.b16 %v8881
    %v9178 = vunpack.c.l.b16 %v8882
    %v9179 = vunpack.c.h.b16 %v8882
    %v9180 = vunpack.c.l.b16 %v8883
    %v9181 = vunpack.c.h.b16 %v8883
    %v9182 = vunpack.c.l.b16 %v8884
    %v9183 = vunpack.c.h.b16 %v8884
    %v9184 = vunpack.c.l.b16 %v8885
    %v9185 = vunpack.c.h.b16 %v8885
    %v9186 = vunpack.c.l.b16 %v8886
    %v9187 = vunpack.c.h.b16 %v8886
    %v9188 = vunpack.c.l.b16 %v8887
    %v9189 = vunpack.c.h.b16 %v8887
    %v9190 = vunpack.c.l.b16 %v8888
    %v9191 = vunpack.c.h.b16 %v8888
    %v9192 = vunpack.c.l.b16 %v8889
    %v9193 = vunpack.c.h.b16 %v8889
    %v9194 = vunpack.c.l.b16 %v8890
    %v9195 = vunpack.c.h.b16 %v8890
    %v9196 = vunpack.c.l.b16 %v8891
    %v9197 = vunpack.c.h.b16 %v8891
    %v9198 = vunpack.c.l.b16 %v8892
    %v9199 = vunpack.c.h.b16 %v8892
    %v9200 = vunpack.c.l.b16 %v8893
    %v9201 = vunpack.c.h.b16 %v8893
    %v9202 = vunpack.c.l.b16 %v8894
    %v9203 = vunpack.c.h.b16 %v8894
    %v9204 = vunpack.c.l.b16 %v8895
    %v9205 = vunpack.c.h.b16 %v8895
    %v9206 = vunpack.c.l.b16 %v8896
    %v9207 = vunpack.c.h.b16 %v8896
    %v9208 = vunpack.c.l.b16 %v8897
    %v9209 = vunpack.c.h.b16 %v8897
    %v9210 = vunpack.c.l.b16 %v8898
    %v9211 = vunpack.c.h.b16 %v8898
    %v9212 = vunpack.c.l.b16 %v8899
    %v9213 = vunpack.c.h.b16 %v8899
    %v9214 = vunpack.c.l.b16 %v8900
    %v9215 = vunpack.c.h.b16 %v8900
    %v9216 = vunpack.c.l.b16 %v8901
    %v9217 = vunpack.c.h.b16 %v8901
    %v9218 = vunpack.c.l.b16 %v8902
    %v9219 = vunpack.c.h.b16 %v8902
    %v9220 = vunpack.c.l.b16 %v8903
    %v9221 = vunpack.c.h.b16 %v8903
    %v9222 = vunpack.c.l.b16 %v8904
    %v9223 = vunpack.c.h.b16 %v8904
    %v9224 = vunpack.c.l.b16 %v8905
    %v9225 = vunpack.c.h.b16 %v8905
    %v9226 = vunpack.c.l.b16 %v8906
    %v9227 = vunpack.c.h.b16 %v8906
    %v9228 = vunpack.c.l.b16 %v8907
    %v9229 = vunpack.c.h.b16 %v8907
    %v9230 = vunpack.c.l.b16 %v8908
    %v9231 = vunpack.c.h.b16 %v8908
    %v9232 = vunpack.c.l.b16 %v8909
    %v9233 = vunpack.c.h.b16 %v8909
    %v9234 = vunpack.c.l.b16 %v8910
    %v9235 = vunpack.c.h.b16 %v8910
    %v9236 = vunpack.c.l.b16 %v8911
    %v9237 = vunpack.c.h.b16 %v8911
    %v9238 = vunpack.c.l.b16 %v8912
    %v9239 = vunpack.c.h.b16 %v8912
    %v9240 = vunpack.c.l.b16 %v8913
    %v9241 = vunpack.c.h.b16 %v8913
    %v9242 = vunpack.c.l.b16 %v8914
    %v9243 = vunpack.c.h.b16 %v8914
    %v9244 = vunpack.c.l.b16 %v8915
    %v9245 = vunpack.c.h.b16 %v8915
    %v9246 = vunpack.c.l.b16 %v8916
    %v9247 = vunpack.c.h.b16 %v8916
    %v9248 = vunpack.c.l.b16 %v8917
    %v9249 = vunpack.c.h.b16 %v8917
    %v9250 = vunpack.c.l.b16 %v8918
    %v9251 = vunpack.c.h.b16 %v8918
    %v9252 = vunpack.c.l.b16 %v8919
    %v9253 = vunpack.c.h.b16 %v8919
    %v9254 = vunpack.c.l.b16 %v8920
    %v9255 = vunpack.c.h.b16 %v8920
    %v9256 = vunpack.c.l.b16 %v8921
    %v9257 = vunpack.c.h.b16 %v8921
    %v9258 = vunpack.c.l.b16 %v8922
    %v9259 = vunpack.c.h.b16 %v8922
    %v9260 = vunpack.c.l.b16 %v8923
    %v9261 = vunpack.c.h.b16 %v8923
    %v9262 = vunpack.c.l.b16 %v8924
    %v9263 = vunpack.c.h.b16 %v8924
    %v9264 = vunpack.c.l.b16 %v8925
    %v9265 = vunpack.c.h.b16 %v8925
    %v9266 = vunpack.c.l.b16 %v8926
    %v9267 = vunpack.c.h.b16 %v8926
    %v9268 = vunpack.c.l.b16 %v8927
    %v9269 = vunpack.c.h.b16 %v8927
    %v9270 = vunpack.c.l.b16 %v8928
    %v9271 = vunpack.c.h.b16 %v8928
    %v9272 = vunpack.c.l.b16 %v8929
    %v9273 = vunpack.c.h.b16 %v8929
    %v9274 = vpack.c.b16 %v9084, %v9082
    %v9275 = vpack.c.b16 %v9085, %v9083
    %v9276 = vpack.c.b16 %v9088, %v9086
    %v9277 = vpack.c.b16 %v9089, %v9087
    %v9278 = vpack.c.b16 %v9092, %v9090
    %v9279 = vpack.c.b16 %v9093, %v9091
    %v9280 = vpack.c.b16 %v9096, %v9094
    %v9281 = vpack.c.b16 %v9097, %v9095
    %v9282 = vpack.c.b16 %v9100, %v9098
    %v9283 = vpack.c.b16 %v9101, %v9099
    %v9284 = vpack.c.b16 %v9104, %v9102
    %v9285 = vpack.c.b16 %v9105, %v9103
    %v9286 = vpack.c.b16 %v9108, %v9106
    %v9287 = vpack.c.b16 %v9109, %v9107
    %v9288 = vpack.c.b16 %v9112, %v9110
    %v9289 = vpack.c.b16 %v9113, %v9111
    %v9290 = vpack.c.b16 %v9116, %v9114
    %v9291 = vpack.c.b16 %v9117, %v9115
    %v9292 = vpack.c.b16 %v9120, %v9118
    %v9293 = vpack.c.b16 %v9121, %v9119
    %v9294 = vpack.c.b16 %v9124, %v9122
    %v9295 = vpack.c.b16 %v9125, %v9123
    %v9296 = vpack.c.b16 %v9128, %v9126
    %v9297 = vpack.c.b16 %v9129, %v9127
    %v9298 = vpack.c.b16 %v9132, %v9130
    %v9299 = vpack.c.b16 %v9133, %v9131
    %v9300 = vpack.c.b16 %v9136, %v9134
    %v9301 = vpack.c.b16 %v9137, %v9135
    %v9302 = vpack.c.b16 %v9140, %v9138
    %v9303 = vpack.c.b16 %v9141, %v9139
    %v9304 = vpack.c.b16 %v9144, %v9142
    %v9305 = vpack.c.b16 %v9145, %v9143
    %v9306 = vpack.c.b16 %v9148, %v9146
    %v9307 = vpack.c.b16 %v9149, %v9147
    %v9308 = vpack.c.b16 %v9152, %v9150
    %v9309 = vpack.c.b16 %v9153, %v9151
    %v9310 = vpack.c.b16 %v9156, %v9154
    %v9311 = vpack.c.b16 %v9157, %v9155
    %v9312 = vpack.c.b16 %v9160, %v9158
    %v9313 = vpack.c.b16 %v9161, %v9159
    %v9314 = vpack.c.b16 %v9164, %v9162
    %v9315 = vpack.c.b16 %v9165, %v9163
    %v9316 = vpack.c.b16 %v9168, %v9166
    %v9317 = vpack.c.b16 %v9169, %v9167
    %v9318 = vpack.c.b16 %v9172, %v9170
    %v9319 = vpack.c.b16 %v9173, %v9171
    %v9320 = vpack.c.b16 %v9176, %v9174
    %v9321 = vpack.c.b16 %v9177, %v9175
    %v9322 = vpack.c.b16 %v9180, %v9178
    %v9323 = vpack.c.b16 %v9181, %v9179
    %v9324 = vpack.c.b16 %v9184, %v9182
    %v9325 = vpack.c.b16 %v9185, %v9183
    %v9326 = vpack.c.b16 %v9188, %v9186
    %v9327 = vpack.c.b16 %v9189, %v9187
    %v9328 = vpack.c.b16 %v9192, %v9190
    %v9329 = vpack.c.b16 %v9193, %v9191
    %v9330 = vpack.c.b16 %v9196, %v9194
    %v9331 = vpack.c.b16 %v9197, %v9195
    %v9332 = vpack.c.b16 %v9200, %v9198
    %v9333 = vpack.c.b16 %v9201, %v9199
    %v9334 = vpack.c.b16 %v9204, %v9202
    %v9335 = vpack.c.b16 %v9205, %v9203
    %v9336 = vpack.c.b16 %v9208, %v9206
    %v9337 = vpack.c.b16 %v9209, %v9207
    %v9338 = vpack.c.b16 %v9212, %v9210
    %v9339 = vpack.c.b16 %v9213, %v9211
    %v9340 = vpack.c.b16 %v9216, %v9214
    %v9341 = vpack.c.b16 %v9217, %v9215
    %v9342 = vpack.c.b16 %v9220, %v9218
    %v9343 = vpack.c.b16 %v9221, %v9219
    %v9344 = vpack.c.b16 %v9224, %v9222
    %v9345 = vpack.c.b16 %v9225, %v9223
    %v9346 = vpack.c.b16 %v9228, %v9226
    %v9347 = vpack.c.b16 %v9229, %v9227
    %v9348 = vpack.c.b16 %v9232, %v9230
    %v9349 = vpack.c.b16 %v9233, %v9231
    %v9350 = vpack.c.b16 %v9236, %v9234
    %v9351 = vpack.c.b16 %v9237, %v9235
    %v9352 = vpack.c.b16 %v9240, %v9238
    %v9353 = vpack.c.b16 %v9241, %v9239
    %v9354 = vpack.c.b16 %v9244, %v9242
    %v9355 = vpack.c.b16 %v9245, %v9243
    %v9356 = vpack.c.b16 %v9248, %v9246
    %v9357 = vpack.c.b16 %v9249, %v9247
    %v9358 = vpack.c.b16 %v9252, %v9250
    %v9359 = vpack.c.b16 %v9253, %v9251
    %v9360 = vpack.c.b16 %v9256, %v9254
    %v9361 = vpack.c.b16 %v9257, %v9255
    %v9362 = vpack.c.b16 %v9260, %v9258
    %v9363 = vpack.c.b16 %v9261, %v9259
    %v9364 = vpack.c.b16 %v9264, %v9262
    %v9365 = vpack.c.b16 %v9265, %v9263
    %v9366 = vpack.c.b16 %v9268, %v9266
    %v9367 = vpack.c.b16 %v9269, %v9267
    %v9368 = vpack.c.b16 %v9272, %v9270
    %v9369 = vpack.c.b16 %v9273, %v9271
    %9466 = vmatprep.subr.bf16.mxu0 %v9289
    %9467 = vmatpush1.bf16.msra.mxu0 %v9288
    %9468 = vmatprep.subr.bf16.mxu0 %v9287
    %9469 = vmatpush1.bf16.msra.mxu0 %v9286
    %9470 = vmatprep.subr.bf16.mxu0 %v9285
    %9471 = vmatpush1.bf16.msra.mxu0 %v9284
    %9472 = vmatprep.subr.bf16.mxu0 %v9283
    %9473 = vmatpush1.bf16.msra.mxu0 %v9282
    %9474 = vmatprep.subr.bf16.mxu0 %v9281
    %9475 = vmatpush1.bf16.msra.mxu0 %v9280
    %9476 = vmatprep.subr.bf16.mxu0 %v9279
    %9477 = vmatpush1.bf16.msra.mxu0 %v9278
    %9478 = vmatprep.subr.bf16.mxu0 %v9277
    %9479 = vmatpush1.bf16.msra.mxu0 %v9276
    %9480 = vmatprep.subr.bf16.mxu0 %v9275
    %9481 = vmatpush1.bf16.msra.mxu0 %v9274
    %9482 = vmatprep.subr.bf16.mxu0 %v9305
    %9483 = vmatpush2.bf16.msra.mxu0 %v9304
    %9484 = vmatprep.subr.bf16.mxu0 %v9303
    %9485 = vmatpush2.bf16.msra.mxu0 %v9302
    %9486 = vmatprep.subr.bf16.mxu0 %v9301
    %9487 = vmatpush2.bf16.msra.mxu0 %v9300
    %9488 = vmatprep.subr.bf16.mxu0 %v9299
    %9489 = vmatpush2.bf16.msra.mxu0 %v9298
    %9490 = vmatprep.subr.bf16.mxu0 %v9297
    %9491 = vmatpush2.bf16.msra.mxu0 %v9296
    %9492 = vmatprep.subr.bf16.mxu0 %v9295
    %9493 = vmatpush2.bf16.msra.mxu0 %v9294
    %9494 = vmatprep.subr.bf16.mxu0 %v9293
    %9495 = vmatpush2.bf16.msra.mxu0 %v9292
    %9496 = vmatprep.subr.bf16.mxu0 %v9291
    %9497 = vmatpush2.bf16.msra.mxu0 %v9290
    %9498 = vmatprep.mubr.bf16.mxu0 %v8975
    %9499 = vmatmul.mubr.bf16.gmra.mxu0 %v8974
    %v9500 = vpop.f32.mrf.mxu0
    %v9501 = vadd.f32 %v8933, %v9500
    %v9502 = vpop.f32.mrf.mxu0
    %v9503 = vadd.f32 %v8937, %v9502
    %v9504 = vpop.f32.mrf.mxu0
    %v9505 = vpop.f32.mrf.mxu0
    %9506 = vdwg.mxu0
    %9507 = vmatprep.subr.bf16.mxu0 %v9321
    %9508 = vmatpush1.bf16.msra.mxu0 %v9320
    %9509 = vmatprep.subr.bf16.mxu0 %v9319
    %9510 = vmatpush1.bf16.msra.mxu0 %v9318
    %9511 = vmatprep.subr.bf16.mxu0 %v9317
    %9512 = vmatpush1.bf16.msra.mxu0 %v9316
    %9513 = vmatprep.subr.bf16.mxu0 %v9315
    %9514 = vmatpush1.bf16.msra.mxu0 %v9314
    %9515 = vmatprep.subr.bf16.mxu0 %v9313
    %9516 = vmatpush1.bf16.msra.mxu0 %v9312
    %9517 = vmatprep.subr.bf16.mxu0 %v9311
    %9518 = vmatpush1.bf16.msra.mxu0 %v9310
    %9519 = vmatprep.subr.bf16.mxu0 %v9309
    %9520 = vmatpush1.bf16.msra.mxu0 %v9308
    %9521 = vmatprep.subr.bf16.mxu0 %v9307
    %9522 = vmatpush1.bf16.msra.mxu0 %v9306
    %9523 = vmatprep.subr.bf16.mxu0 %v9337
    %9524 = vmatpush2.bf16.msra.mxu0 %v9336
    %9525 = vmatprep.subr.bf16.mxu0 %v9335
    %9526 = vmatpush2.bf16.msra.mxu0 %v9334
    %9527 = vmatprep.subr.bf16.mxu0 %v9333
    %9528 = vmatpush2.bf16.msra.mxu0 %v9332
    %9529 = vmatprep.subr.bf16.mxu0 %v9331
    %9530 = vmatpush2.bf16.msra.mxu0 %v9330
    %9531 = vmatprep.subr.bf16.mxu0 %v9329
    %9532 = vmatpush2.bf16.msra.mxu0 %v9328
    %9533 = vmatprep.subr.bf16.mxu0 %v9327
    %9534 = vmatpush2.bf16.msra.mxu0 %v9326
    %9535 = vmatprep.subr.bf16.mxu0 %v9325
    %9536 = vmatpush2.bf16.msra.mxu0 %v9324
    %9537 = vmatprep.subr.bf16.mxu0 %v9323
    %9538 = vmatpush2.bf16.msra.mxu0 %v9322
    %9539 = vmatprep.mubr.bf16.mxu0 %v8977
    %9540 = vmatmul.mubr.bf16.gmra.mxu0 %v8976
    %v9541 = vpop.f32.mrf.mxu0
    %v9542 = vadd.f32 %v9501, %v9541
    %v9543 = vpop.f32.mrf.mxu0
    %v9544 = vadd.f32 %v9503, %v9543
    %v9545 = vpop.f32.mrf.mxu0
    %v9546 = vpop.f32.mrf.mxu0
    %9547 = vdwg.mxu0
    %9548 = vmatprep.subr.bf16.mxu0 %v9353
    %9549 = vmatpush1.bf16.msra.mxu0 %v9352
    %9550 = vmatprep.subr.bf16.mxu0 %v9351
    %9551 = vmatpush1.bf16.msra.mxu0 %v9350
    %9552 = vmatprep.subr.bf16.mxu0 %v9349
    %9553 = vmatpush1.bf16.msra.mxu0 %v9348
    %9554 = vmatprep.subr.bf16.mxu0 %v9347
    %9555 = vmatpush1.bf16.msra.mxu0 %v9346
    %9556 = vmatprep.subr.bf16.mxu0 %v9345
    %9557 = vmatpush1.bf16.msra.mxu0 %v9344
    %9558 = vmatprep.subr.bf16.mxu0 %v9343
    %9559 = vmatpush1.bf16.msra.mxu0 %v9342
    %9560 = vmatprep.subr.bf16.mxu0 %v9341
    %9561 = vmatpush1.bf16.msra.mxu0 %v9340
    %9562 = vmatprep.subr.bf16.mxu0 %v9339
    %9563 = vmatpush1.bf16.msra.mxu0 %v9338
    %9564 = vmatprep.subr.bf16.mxu0 %v9369
    %9565 = vmatpush2.bf16.msra.mxu0 %v9368
    %9566 = vmatprep.subr.bf16.mxu0 %v9367
    %9567 = vmatpush2.bf16.msra.mxu0 %v9366
    %9568 = vmatprep.subr.bf16.mxu0 %v9365
    %9569 = vmatpush2.bf16.msra.mxu0 %v9364
    %9570 = vmatprep.subr.bf16.mxu0 %v9363
    %9571 = vmatpush2.bf16.msra.mxu0 %v9362
    %9572 = vmatprep.subr.bf16.mxu0 %v9361
    %9573 = vmatpush2.bf16.msra.mxu0 %v9360
    %9574 = vmatprep.subr.bf16.mxu0 %v9359
    %9575 = vmatpush2.bf16.msra.mxu0 %v9358
    %9576 = vmatprep.subr.bf16.mxu0 %v9357
    %9577 = vmatpush2.bf16.msra.mxu0 %v9356
    %9578 = vmatprep.subr.bf16.mxu0 %v9355
    %9579 = vmatpush2.bf16.msra.mxu0 %v9354
    %9580 = vmatprep.mubr.bf16.mxu0 %v8979
    %9581 = vmatmul.mubr.bf16.gmra.mxu0 %v8978
    %v9582 = vpop.f32.mrf.mxu0
    %v9583 = vadd.f32 %v9542, %v9582
    %v9584 = vpop.f32.mrf.mxu0
    %v9585 = vadd.f32 %v9544, %v9584
    %v9586 = vpop.f32.mrf.mxu0
    %v9587 = vpop.f32.mrf.mxu0
    %9588 = vdwg.mxu0
    %v9589 = vmax.f32 %v9583, 0.0
    %v9590 = vmax.f32 %v9585, 0.0
    %v9591 = vpack.c.bf16 %v9589, %v9589
    %v9592 = vpack.c.bf16 %v9590, %v9590
    %v9593 = vld [vmem:[%s6] sm:$0xf]
    %v9594 = vld [vmem:[%s6 + $0x4] sm:$0xf]
    %v9595 = vld [vmem:[%s6 + $0x8] sm:$0xf]
    %v9596 = vld [vmem:[%s6 + $0xc] sm:$0xf]
    %v9597 = vld [vmem:[%s6 + $0x10] sm:$0xf]
    %v9598 = vld [vmem:[%s6 + $0x14] sm:$0xf]
    %v9599 = vld [vmem:[%s6 + $0x18] sm:$0xf]
    %v9600 = vld [vmem:[%s6 + $0x1c] sm:$0xf]
    %v9601 = vld [vmem:[%s6 + $0x20] sm:$0xf]
    %v9602 = vld [vmem:[%s6 + $0x24] sm:$0xf]
    %v9603 = vld [vmem:[%s6 + $0x28] sm:$0xf]
    %v9604 = vld [vmem:[%s6 + $0x2c] sm:$0xf]
    %v9605 = vld [vmem:[%s6 + $0x30] sm:$0xf]
    %v9606 = vld [vmem:[%s6 + $0x34] sm:$0xf]
    %v9607 = vld [vmem:[%s6 + $0x38] sm:$0xf]
    %v9608 = vld [vmem:[%s6 + $0x3c] sm:$0xf]
    %v9609 = vld [vmem:[%s6 + $0x40] sm:$0xf]
    %v9610 = vld [vmem:[%s6 + $0x44] sm:$0xf]
    %v9611 = vld [vmem:[%s6 + $0x48] sm:$0xf]
    %v9612 = vld [vmem:[%s6 + $0x4c] sm:$0xf]
    %v9613 = vld [vmem:[%s6 + $0x50] sm:$0xf]
    %v9614 = vld [vmem:[%s6 + $0x54] sm:$0xf]
    %v9615 = vld [vmem:[%s6 + $0x58] sm:$0xf]
    %v9616 = vld [vmem:[%s6 + $0x5c] sm:$0xf]
    %v9617 = vld [vmem:[%s6 + $0x60] sm:$0xf]
    %v9618 = vld [vmem:[%s6 + $0x64] sm:$0xf]
    %v9619 = vld [vmem:[%s6 + $0x68] sm:$0xf]
    %v9620 = vld [vmem:[%s6 + $0x6c] sm:$0xf]
    %v9621 = vld [vmem:[%s6 + $0x70] sm:$0xf]
    %v9622 = vld [vmem:[%s6 + $0x74] sm:$0xf]
    %v9623 = vld [vmem:[%s6 + $0x78] sm:$0xf]
    %v9624 = vld [vmem:[%s6 + $0x7c] sm:$0xf]
    %v9625 = vlaneseq
    %v9626 = vshrl.u32 %v9625, 7
    %v9627 = vsub.s32 3, %v9626
    %v9628 = vrot.slane %v121, %v9627
    %v9661 = vunpack.c.l.b16 %v9593
    %v9662 = vunpack.c.l.b16 %v9594
    %v9663 = vunpack.c.l.b16 %v9595
    %v9664 = vunpack.c.l.b16 %v9596
    %v9665 = vunpack.c.l.b16 %v9597
    %v9666 = vunpack.c.l.b16 %v9598
    %v9667 = vunpack.c.l.b16 %v9599
    %v9668 = vunpack.c.l.b16 %v9600
    %v9669 = vunpack.c.l.b16 %v9601
    %v9670 = vunpack.c.l.b16 %v9602
    %v9671 = vunpack.c.l.b16 %v9603
    %v9672 = vunpack.c.l.b16 %v9604
    %v9673 = vunpack.c.l.b16 %v9605
    %v9674 = vunpack.c.l.b16 %v9606
    %v9675 = vunpack.c.l.b16 %v9607
    %v9676 = vunpack.c.l.b16 %v9608
    %v9677 = vunpack.c.l.b16 %v9609
    %v9678 = vunpack.c.l.b16 %v9610
    %v9679 = vunpack.c.l.b16 %v9611
    %v9680 = vunpack.c.l.b16 %v9612
    %v9681 = vunpack.c.l.b16 %v9613
    %v9682 = vunpack.c.l.b16 %v9614
    %v9683 = vunpack.c.l.b16 %v9615
    %v9684 = vunpack.c.l.b16 %v9616
    %v9685 = vunpack.c.l.b16 %v9617
    %v9686 = vunpack.c.l.b16 %v9618
    %v9687 = vunpack.c.l.b16 %v9619
    %v9688 = vunpack.c.l.b16 %v9620
    %v9689 = vunpack.c.l.b16 %v9621
    %v9690 = vunpack.c.l.b16 %v9622
    %v9691 = vunpack.c.l.b16 %v9623
    %v9692 = vunpack.c.l.b16 %v9624
    %v9693 = vpack.c.b16 %v9662, %v9661
    %v9694 = vpack.c.b16 %v9664, %v9663
    %v9695 = vpack.c.b16 %v9666, %v9665
    %v9696 = vpack.c.b16 %v9668, %v9667
    %v9697 = vpack.c.b16 %v9670, %v9669
    %v9698 = vpack.c.b16 %v9672, %v9671
    %v9699 = vpack.c.b16 %v9674, %v9673
    %v9700 = vpack.c.b16 %v9676, %v9675
    %v9701 = vpack.c.b16 %v9678, %v9677
    %v9702 = vpack.c.b16 %v9680, %v9679
    %v9703 = vpack.c.b16 %v9682, %v9681
    %v9704 = vpack.c.b16 %v9684, %v9683
    %v9705 = vpack.c.b16 %v9686, %v9685
    %v9706 = vpack.c.b16 %v9688, %v9687
    %v9707 = vpack.c.b16 %v9690, %v9689
    %v9708 = vpack.c.b16 %v9692, %v9691
    %9725 = vmatprep.subr.bf16.mxu0 0
    %9726 = vmatpush1.bf16.msra.mxu0 %v9700
    %9727 = vmatprep.subr.bf16.mxu0 0
    %9728 = vmatpush1.bf16.msra.mxu0 %v9699
    %9729 = vmatprep.subr.bf16.mxu0 0
    %9730 = vmatpush1.bf16.msra.mxu0 %v9698
    %9731 = vmatprep.subr.bf16.mxu0 0
    %9732 = vmatpush1.bf16.msra.mxu0 %v9697
    %9733 = vmatprep.subr.bf16.mxu0 0
    %9734 = vmatpush1.bf16.msra.mxu0 %v9696
    %9735 = vmatprep.subr.bf16.mxu0 0
    %9736 = vmatpush1.bf16.msra.mxu0 %v9695
    %9737 = vmatprep.subr.bf16.mxu0 0
    %9738 = vmatpush1.bf16.msra.mxu0 %v9694
    %9739 = vmatprep.subr.bf16.mxu0 0
    %9740 = vmatpush1.bf16.msra.mxu0 %v9693
    %9741 = vmatprep.subr.bf16.mxu0 0
    %9742 = vmatpush2.bf16.msra.mxu0 %v9708
    %9743 = vmatprep.subr.bf16.mxu0 0
    %9744 = vmatpush2.bf16.msra.mxu0 %v9707
    %9745 = vmatprep.subr.bf16.mxu0 0
    %9746 = vmatpush2.bf16.msra.mxu0 %v9706
    %9747 = vmatprep.subr.bf16.mxu0 0
    %9748 = vmatpush2.bf16.msra.mxu0 %v9705
    %9749 = vmatprep.subr.bf16.mxu0 0
    %9750 = vmatpush2.bf16.msra.mxu0 %v9704
    %9751 = vmatprep.subr.bf16.mxu0 0
    %9752 = vmatpush2.bf16.msra.mxu0 %v9703
    %9753 = vmatprep.subr.bf16.mxu0 0
    %9754 = vmatpush2.bf16.msra.mxu0 %v9702
    %9755 = vmatprep.subr.bf16.mxu0 0
    %9756 = vmatpush2.bf16.msra.mxu0 %v9701
    %9757 = vmatprep.mubr.bf16.mxu0 %v9592
    %9758 = vmatmul.mubr.bf16.gmra.mxu0 %v9591
    %v9759 = vpop.f32.mrf.mxu0
    %v9760 = vadd.f32 %v9628, %v9759
    %v9761 = vpop.f32.mrf.mxu0
    %v9762 = vpop.f32.mrf.mxu0
    %v9763 = vpop.f32.mrf.mxu0
    %9764 = vdwg.mxu0
    %vm9765 = vcmask 74752
    %v9766 = vsel %vm9765, %v9760, -inf
    %9767 = vmax.xlane.f32.xlu0 %v9766
    %v9768 = vpop.xlane.xlu0 %9767
    %v9769 = vsub.f32 %v9760, %v9768
    %v9770 = vmul.f32 %v9769, 1.442695
    %v9771 = vpow.pop %v9770
    %v9772 = vsel %vm9765, %v9771, 0.0
    %9773 = vadd.xlane.f32.xlu0 %v9772
    %v9774 = vpop.xlane.xlu0 %9773
    %v9775 = vrcp.pop %v9774
    %v9776 = vmul.f32 %v9771, %v9775
    %9777 = vst.msk [vmem:[#allocation13] sm:$0x3] %vm9765, %v9776
    // Predicated region
    $region58: #{convnext_vit_forward.3} parent=1 // pred_check
      _
    $region59: #{convnext_vit_forward.3} parent=1 // pred_check_branch
      %9779 = sbr.rel (0) target = $region61
    $region60: #{convnext_vit_forward.3} parent=1 // pred_region
      %s9781 = ssub.s32 32, 32
      %9782 = vsyncadd [#allocation4], %s9781
      %s9784 = sshll.u32 [#allocation13], 4
      %s9785 = int_to_ptr.vmem [resolvable:$true] %s9784
      %9787 = dma.vmem_to_hbm [thread:$0]  %s9785, 32, %s8, [#allocation4]
    $region61: #{convnext_vit_forward.3} parent=1 // pred_fallthru
      _
    // Predicated region
    $region62: #{convnext_vit_forward.3} parent=1 // pred_check
      _
    $region63: #{convnext_vit_forward.3} parent=1 // pred_check_branch
      %9789 = sbr.rel (0) target = $region65
    $region64: #{convnext_vit_forward.3} parent=1 // pred_region
      %9790 = dma.done [#allocation4], 32
    $region65: #{convnext_vit_forward.3} parent=1 // pred_fallthru
      _
    %9791 = vsyncpa [#allocation3], 1
    %9792 = vsyncpa [#allocation6], 1
    %9793 = vsyncpa [#allocation9], 1
    %9794 = vsyncpa [#allocation12], 1
    %9795 = vsyncpa [#allocation4], 1

</llo_original>
